<compile_context>
chip_gen: v7x
topology: tpu7x:2x2x1
jax: 0.10.0
libtpu: 0.0.40
codegen_flags: <defaults>
</compile_context>

<pallas_src>
import functools

import jax
import jax.numpy as jnp
from jax import lax
from jax.experimental import pallas as pl
from jax.experimental.pallas import tpu as pltpu

BN_EPS = 1e-5
HIDDEN = 100          # fixed by the module: 100 * num_cnns hidden channels per unit
LANE = 128


def _round_up(x, m):
    return (x + m - 1) // m * m


# --------------------------------------------------------------------------- kernel
def len_kernel(patches_ref, wc_ref, bc_ref, w1_ref, b1_ref, w2_ref, b2_ref,
               wf_ref, bf_ref, out_ref, *, pool):
    T, TB, _ = patches_ref.shape
    N = wc_ref.shape[1]
    P = (T - pool) // pool + 1

    # Grouped Conv1d(4N->N, k=19) + folded BN1 as ONE lane-dense MXU matmul over
    # im2col patches.  The concat is tile-aligned (TB is a multiple of 8).
    rows = jnp.concatenate([patches_ref[t] for t in range(T)], axis=0)   # (T*TB, 76)
    conv = jnp.dot(rows, wc_ref[...], preferred_element_type=jnp.float32)
    conv = conv + bc_ref[...]                                            # (T*TB, N)

    # MaxPool1d(pool, pool) over time, then exp (monotone => exp(max) == max(exp)).
    acts = []
    for p in range(P):
        m = conv[(p * pool) * TB:(p * pool + 1) * TB, :]
        for j in range(1, pool):
            t = p * pool + j
            m = jnp.maximum(m, conv[t * TB:(t + 1) * TB, :])
        acts.append(jnp.exp(m))                                          # (TB, N)
    act = jnp.concatenate(acts, axis=-1)                                 # (TB, P*N), (p, n) order

    # Grouped Conv1d(P*N -> 100N, k=1) + folded BN2, then ReLU (block-structured matmul).
    h = jnp.dot(act, w1_ref[...], preferred_element_type=jnp.float32) + b1_ref[...]
    h = jnp.maximum(h, 0.0)                                              # (TB, 100N)
    # TODO(synk): training-mode BatchNorm (batch statistics) and Dropout(0.3) masking
    # are not modeled; this kernel implements the eval-mode forward only.

    # Grouped Conv1d(100N -> N, k=1) + folded BN3, then ReLU.
    z = jnp.dot(h, w2_ref[...], preferred_element_type=jnp.float32) + b2_ref[...]
    z = jnp.maximum(z, 0.0)                                              # (TB, N)

    # Final Linear(N -> C); output padded to 128 lanes, sliced in the wrapper.
    out = jnp.dot(z, wf_ref[...], preferred_element_type=jnp.float32) + bf_ref[...]
    out_ref[...] = out.astype(out_ref.dtype)


# -------------------------------------------------------------------- param folding
def fold_params(p):
    """Fold eval-mode BatchNorms into adjacent conv/FC weights and build the
    lane-dense block-structured matrices consumed by the kernel."""
    N, cin, kf = p["conv_w"].shape
    nh, P = p["fc1_w"].shape
    H = nh // N
    C = p["lin_w"].shape[0]
    cp = _round_up(max(C, LANE), LANE)
    f32 = jnp.float32

    s1 = p["bn1_g"] * lax.rsqrt(p["bn1_v"] + BN_EPS)
    wc = p["conv_w"].transpose(1, 2, 0).reshape(cin * kf, N) * s1[None, :]
    bc = ((p["conv_b"] - p["bn1_m"]) * s1 + p["bn1_b"])[None, :]

    s2 = p["bn2_g"] * lax.rsqrt(p["bn2_v"] + BN_EPS)
    w1 = (p["fc1_w"] * s2[:, None]).reshape(N, H, P)            # (g, j, p)
    b1 = ((p["fc1_b"] - p["bn2_m"]) * s2 + p["bn2_b"])[None, :]
    eye = jnp.eye(N, dtype=f32)
    # w1bd[p*N + g, g*H + j] = w1[g, j, p]  (block structure, zeros elsewhere)
    w1bd = jnp.einsum("gjp,gh->pghj", w1, eye).reshape(P * N, N * H)

    s3 = p["bn3_g"] * lax.rsqrt(p["bn3_v"] + BN_EPS)
    w2 = p["fc2_w"] * s3[:, None]                               # (g, j)
    b2 = ((p["fc2_b"] - p["bn3_m"]) * s3 + p["bn3_b"])[None, :]
    # w2bd[g*H + j, g] = w2[g, j]
    w2bd = jnp.einsum("gj,gh->gjh", w2, eye).reshape(N * H, N)

    wf = jnp.zeros((N, cp), f32).at[:, :C].set(p["lin_w"].T)
    bf = jnp.zeros((1, cp), f32).at[:, :C].set(p["lin_b"][None, :])
    return dict(wc=wc, bc=bc, w1bd=w1bd, b1=b1, w2bd=w2bd, b2=b2, wf=wf, bf=bf,
                num_classes=C)


# -------------------------------------------------------------------------- wrapper
def len_forward(x, params, *, pool=7, tb=128):
    """x: (B, 4, L) float32.  Eval-mode LEN forward via a single Pallas kernel."""
    kp = fold_params(params)
    B, cin, L = x.shape
    N, _, kf = params["conv_w"].shape
    T = L - kf + 1
    KC = cin * kf
    P = (T - pool) // pool + 1
    NH = kp["w1bd"].shape[1]
    CP = kp["wf"].shape[1]

    # im2col (pure layout, no arithmetic): patches[t, b, c*kf + k] = x[b, c, t + k].
    # Time-major so the kernel only needs tile-aligned per-time slices (no reshapes).
    cols = jnp.stack([x[:, :, k:k + T] for k in range(kf)], axis=-1)     # (B, 4, T, kf)
    patches = cols.transpose(2, 0, 1, 3).reshape(T, B, KC)

    TB = min(tb, _round_up(B, 8))
    Bp = _round_up(B, TB)
    if Bp != B:
        patches = jnp.pad(patches, ((0, 0), (0, Bp - B), (0, 0)))
    grid = (Bp // TB,)

    flops = 2 * Bp * (T * KC * N + P * N * NH + NH * N + N * CP)
    weight_bytes = 4 * sum(int(v.size) for k, v in kp.items() if k != "num_classes")
    cost = pl.CostEstimate(flops=int(flops),
                           transcendentals=int(Bp * P * N),
                           bytes_accessed=int(4 * (patches.size + Bp * CP) + weight_bytes))

    res = lambda i: (0, 0)   # weights stay VMEM-resident across batch steps (no re-DMA)
    out = pl.pallas_call(
        functools.partial(len_kernel, pool=pool),
        out_shape=jax.ShapeDtypeStruct((Bp, CP), jnp.float32),
        grid=grid,
        in_specs=[
            pl.BlockSpec((T, TB, KC), lambda i: (0, i, 0)),
            pl.BlockSpec(kp["wc"].shape, res),
            pl.BlockSpec(kp["bc"].shape, res),
            pl.BlockSpec(kp["w1bd"].shape, res),
            pl.BlockSpec(kp["b1"].shape, res),
            pl.BlockSpec(kp["w2bd"].shape, res),
            pl.BlockSpec(kp["b2"].shape, res),
            pl.BlockSpec(kp["wf"].shape, res),
            pl.BlockSpec(kp["bf"].shape, res),
        ],
        out_specs=pl.BlockSpec((TB, CP), lambda i: (i, 0)),
        compiler_params=pltpu.CompilerParams(dimension_semantics=("parallel",)),
        cost_estimate=cost,
    )(patches, kp["wc"], kp["bc"], kp["w1bd"], kp["b1"], kp["w2bd"], kp["b2"],
      kp["wf"], kp["bf"])
    return out[:B, :kp["num_classes"]]


# ------------------------------------------------------------------ pure-JAX reference
def _bn_eval(v, g, b, m, var, axis):
    shp = [1] * v.ndim
    shp[axis] = -1
    s = g * lax.rsqrt(var + BN_EPS)
    return (v - m.reshape(shp)) * s.reshape(shp) + b.reshape(shp)


def len_ref(x, p, *, pool=7):
    """Un-folded pure-JAX eval-mode reference of the PyTorch LEN forward."""
    B, cin, L = x.shape
    N, _, kf = p["conv_w"].shape
    T = L - kf + 1
    H = p["fc1_w"].shape[0] // N
    P = p["fc1_w"].shape[1]

    patches = jnp.stack([x[:, :, k:k + T] for k in range(kf)], axis=-1)  # (B, 4, T, kf)
    conv = jnp.einsum("bctk,nck->bnt", patches, p["conv_w"]) + p["conv_b"][None, :, None]
    conv = _bn_eval(conv, p["bn1_g"], p["bn1_b"], p["bn1_m"], p["bn1_v"], axis=1)
    act = jnp.exp(conv)
    pooled = jnp.max(act[:, :, :P * pool].reshape(B, N, P, pool), axis=-1)   # (B, N, P)

    h = jnp.einsum("njp,bnp->bnj", p["fc1_w"].reshape(N, H, P), pooled) \
        + p["fc1_b"].reshape(N, H)[None]
    h = _bn_eval(h.reshape(B, N * H), p["bn2_g"], p["bn2_b"], p["bn2_m"], p["bn2_v"],
                 axis=1).reshape(B, N, H)
    h = jnp.maximum(h, 0.0)      # Dropout(0.3) is identity in eval mode

    z = jnp.einsum("nj,bnj->bn", p["fc2_w"], h) + p["fc2_b"][None, :]
    z = _bn_eval(z, p["bn3_g"], p["bn3_b"], p["bn3_m"], p["bn3_v"], axis=1)
    z = jnp.maximum(z, 0.0)
    return z @ p["lin_w"].T + p["lin_b"][None, :]


# ---------------------------------------------------------------------------- params
def init_params(key, num_cnns, input_length, num_classes, *, filter_size=19, pool=7):
    N, C, kf, H = num_cnns, num_classes, filter_size, HIDDEN
    T = input_length - kf + 1
    P = (T - pool) // pool + 1
    ks = jax.random.split(key, 24)
    u = lambda k, shape: jax.random.uniform(k, shape, jnp.float32, 0.5, 1.5)
    n = lambda k, shape, s: jax.random.normal(k, shape, jnp.float32) * s
    return {
        # Conv1d(4N -> N, k=19, groups=N): torch weight (N, 4, 19), bias (N,)
        "conv_w": n(ks[0], (N, 4, kf), 0.1), "conv_b": n(ks[1], (N,), 0.1),
        "bn1_g": u(ks[2], (N,)), "bn1_b": n(ks[3], (N,), 0.1),
        "bn1_m": n(ks[4], (N,), 0.1), "bn1_v": u(ks[5], (N,)),
        # Conv1d(P*N -> 100N, k=1, groups=N): torch weight (100N, P, 1) -> (100N, P)
        "fc1_w": n(ks[6], (N * H, P), 0.2), "fc1_b": n(ks[7], (N * H,), 0.1),
        "bn2_g": u(ks[8], (N * H,)), "bn2_b": n(ks[9], (N * H,), 0.1),
        "bn2_m": n(ks[10], (N * H,), 0.1), "bn2_v": u(ks[11], (N * H,)),
        # Conv1d(100N -> N, k=1, groups=N): torch weight (N, 100, 1) -> (N, 100)
        "fc2_w": n(ks[12], (N, H), 0.1), "fc2_b": n(ks[13], (N,), 0.1),
        "bn3_g": u(ks[14], (N,)), "bn3_b": n(ks[15], (N,), 0.1),
        "bn3_m": n(ks[16], (N,), 0.1), "bn3_v": u(ks[17], (N,)),
        # Linear(N -> C): torch weight (C, N), bias (C,)
        "lin_w": n(ks[18], (C, N), 0.5), "lin_b": n(ks[19], (C,), 0.1),
    }


if __name__ == "__main__":
    # Keep in-kernel and reference matmuls at full f32 precision for a tight compare.
    jax.config.update("jax_default_matmul_precision", "highest")

    B, num_cnns, input_length, num_classes = 4, 8, 46, 2   # k=19, pool=7 -> T=28, P=4
    key = jax.random.PRNGKey(0)
    kx, kparams = jax.random.split(key)

    x = jax.random.normal(kx, (B, 4, input_length), jnp.float32) * 0.5
    params = init_params(kparams, num_cnns, input_length, num_classes)

    out = jax.block_until_ready(len_forward(x, params))
    ref = len_ref(x, params)

    assert out.shape == (B, num_classes), out.shape
    assert jnp.allclose(out, ref, rtol=1e-4, atol=1e-4), \
        f"mismatch vs reference, max |diff| = {jnp.max(jnp.abs(out - ref))}"
    print("KERNEL_OK")
</pallas_src>

<mosaic_0001>
module attributes {stable_mosaic.version = 11 : i64} {
  func.func @len_kernel(%arg0: i32, %arg1: memref<28x8x76xf32, #tpu.memory_space<vmem>>, %arg2: memref<76x8xf32, #tpu.memory_space<vmem>>, %arg3: memref<1x8xf32, #tpu.memory_space<vmem>>, %arg4: memref<32x800xf32, #tpu.memory_space<vmem>>, %arg5: memref<1x800xf32, #tpu.memory_space<vmem>>, %arg6: memref<800x8xf32, #tpu.memory_space<vmem>>, %arg7: memref<1x8xf32, #tpu.memory_space<vmem>>, %arg8: memref<8x128xf32, #tpu.memory_space<vmem>>, %arg9: memref<1x128xf32, #tpu.memory_space<vmem>>, %arg10: memref<8x128xf32, #tpu.memory_space<vmem>>) attributes {dimension_semantics = [#tpu.dimension_semantics<parallel>], iteration_bounds = array<i64: 1>, scalar_prefetch = 0 : i64, scratch_operands = 0 : i64, tpu.core_type = #tpu.core_type<tc>, window_params = [{transform_indices = @transform_0, window_bounds = array<i64: 28, 8, 76>}, {pipeline_mode = #tpu.pipeline_mode<synchronous>, transform_indices = @transform_1, window_bounds = array<i64: 76, 8>}, {pipeline_mode = #tpu.pipeline_mode<synchronous>, transform_indices = @transform_2, window_bounds = array<i64: 1, 8>}, {pipeline_mode = #tpu.pipeline_mode<synchronous>, transform_indices = @transform_3, window_bounds = array<i64: 32, 800>}, {pipeline_mode = #tpu.pipeline_mode<synchronous>, transform_indices = @transform_4, window_bounds = array<i64: 1, 800>}, {pipeline_mode = #tpu.pipeline_mode<synchronous>, transform_indices = @transform_5, window_bounds = array<i64: 800, 8>}, {pipeline_mode = #tpu.pipeline_mode<synchronous>, transform_indices = @transform_6, window_bounds = array<i64: 1, 8>}, {pipeline_mode = #tpu.pipeline_mode<synchronous>, transform_indices = @transform_7, window_bounds = array<i64: 8, 128>}, {pipeline_mode = #tpu.pipeline_mode<synchronous>, transform_indices = @transform_8, window_bounds = array<i64: 1, 128>}, {transform_indices = @transform_9, window_bounds = array<i64: 8, 128>}]} {
    %c0 = arith.constant 0 : index
    %c0_0 = arith.constant 0 : index
    %c0_1 = arith.constant 0 : index
    %0 = vector.load %arg1[%c0, %c0_0, %c0_1] : memref<28x8x76xf32, #tpu.memory_space<vmem>>, vector<1x8x76xf32>
    %1 = vector.shape_cast %0 : vector<1x8x76xf32> to vector<8x76xf32>
    %c1 = arith.constant 1 : index
    %c0_2 = arith.constant 0 : index
    %c0_3 = arith.constant 0 : index
    %2 = vector.load %arg1[%c1, %c0_2, %c0_3] : memref<28x8x76xf32, #tpu.memory_space<vmem>>, vector<1x8x76xf32>
    %3 = vector.shape_cast %2 : vector<1x8x76xf32> to vector<8x76xf32>
    %c2 = arith.constant 2 : index
    %c0_4 = arith.constant 0 : index
    %c0_5 = arith.constant 0 : index
    %4 = vector.load %arg1[%c2, %c0_4, %c0_5] : memref<28x8x76xf32, #tpu.memory_space<vmem>>, vector<1x8x76xf32>
    %5 = vector.shape_cast %4 : vector<1x8x76xf32> to vector<8x76xf32>
    %c3 = arith.constant 3 : index
    %c0_6 = arith.constant 0 : index
    %c0_7 = arith.constant 0 : index
    %6 = vector.load %arg1[%c3, %c0_6, %c0_7] : memref<28x8x76xf32, #tpu.memory_space<vmem>>, vector<1x8x76xf32>
    %7 = vector.shape_cast %6 : vector<1x8x76xf32> to vector<8x76xf32>
    %c4 = arith.constant 4 : index
    %c0_8 = arith.constant 0 : index
    %c0_9 = arith.constant 0 : index
    %8 = vector.load %arg1[%c4, %c0_8, %c0_9] : memref<28x8x76xf32, #tpu.memory_space<vmem>>, vector<1x8x76xf32>
    %9 = vector.shape_cast %8 : vector<1x8x76xf32> to vector<8x76xf32>
    %c5 = arith.constant 5 : index
    %c0_10 = arith.constant 0 : index
    %c0_11 = arith.constant 0 : index
    %10 = vector.load %arg1[%c5, %c0_10, %c0_11] : memref<28x8x76xf32, #tpu.memory_space<vmem>>, vector<1x8x76xf32>
    %11 = vector.shape_cast %10 : vector<1x8x76xf32> to vector<8x76xf32>
    %c6 = arith.constant 6 : index
    %c0_12 = arith.constant 0 : index
    %c0_13 = arith.constant 0 : index
    %12 = vector.load %arg1[%c6, %c0_12, %c0_13] : memref<28x8x76xf32, #tpu.memory_space<vmem>>, vector<1x8x76xf32>
    %13 = vector.shape_cast %12 : vector<1x8x76xf32> to vector<8x76xf32>
    %c7 = arith.constant 7 : index
    %c0_14 = arith.constant 0 : index
    %c0_15 = arith.constant 0 : index
    %14 = vector.load %arg1[%c7, %c0_14, %c0_15] : memref<28x8x76xf32, #tpu.memory_space<vmem>>, vector<1x8x76xf32>
    %15 = vector.shape_cast %14 : vector<1x8x76xf32> to vector<8x76xf32>
    %c8 = arith.constant 8 : index
    %c0_16 = arith.constant 0 : index
    %c0_17 = arith.constant 0 : index
    %16 = vector.load %arg1[%c8, %c0_16, %c0_17] : memref<28x8x76xf32, #tpu.memory_space<vmem>>, vector<1x8x76xf32>
    %17 = vector.shape_cast %16 : vector<1x8x76xf32> to vector<8x76xf32>
    %c9 = arith.constant 9 : index
    %c0_18 = arith.constant 0 : index
    %c0_19 = arith.constant 0 : index
    %18 = vector.load %arg1[%c9, %c0_18, %c0_19] : memref<28x8x76xf32, #tpu.memory_space<vmem>>, vector<1x8x76xf32>
    %19 = vector.shape_cast %18 : vector<1x8x76xf32> to vector<8x76xf32>
    %c10 = arith.constant 10 : index
    %c0_20 = arith.constant 0 : index
    %c0_21 = arith.constant 0 : index
    %20 = vector.load %arg1[%c10, %c0_20, %c0_21] : memref<28x8x76xf32, #tpu.memory_space<vmem>>, vector<1x8x76xf32>
    %21 = vector.shape_cast %20 : vector<1x8x76xf32> to vector<8x76xf32>
    %c11 = arith.constant 11 : index
    %c0_22 = arith.constant 0 : index
    %c0_23 = arith.constant 0 : index
    %22 = vector.load %arg1[%c11, %c0_22, %c0_23] : memref<28x8x76xf32, #tpu.memory_space<vmem>>, vector<1x8x76xf32>
    %23 = vector.shape_cast %22 : vector<1x8x76xf32> to vector<8x76xf32>
    %c12 = arith.constant 12 : index
    %c0_24 = arith.constant 0 : index
    %c0_25 = arith.constant 0 : index
    %24 = vector.load %arg1[%c12, %c0_24, %c0_25] : memref<28x8x76xf32, #tpu.memory_space<vmem>>, vector<1x8x76xf32>
    %25 = vector.shape_cast %24 : vector<1x8x76xf32> to vector<8x76xf32>
    %c13 = arith.constant 13 : index
    %c0_26 = arith.constant 0 : index
    %c0_27 = arith.constant 0 : index
    %26 = vector.load %arg1[%c13, %c0_26, %c0_27] : memref<28x8x76xf32, #tpu.memory_space<vmem>>, vector<1x8x76xf32>
    %27 = vector.shape_cast %26 : vector<1x8x76xf32> to vector<8x76xf32>
    %c14 = arith.constant 14 : index
    %c0_28 = arith.constant 0 : index
    %c0_29 = arith.constant 0 : index
    %28 = vector.load %arg1[%c14, %c0_28, %c0_29] : memref<28x8x76xf32, #tpu.memory_space<vmem>>, vector<1x8x76xf32>
    %29 = vector.shape_cast %28 : vector<1x8x76xf32> to vector<8x76xf32>
    %c15 = arith.constant 15 : index
    %c0_30 = arith.constant 0 : index
    %c0_31 = arith.constant 0 : index
    %30 = vector.load %arg1[%c15, %c0_30, %c0_31] : memref<28x8x76xf32, #tpu.memory_space<vmem>>, vector<1x8x76xf32>
    %31 = vector.shape_cast %30 : vector<1x8x76xf32> to vector<8x76xf32>
    %c16 = arith.constant 16 : index
    %c0_32 = arith.constant 0 : index
    %c0_33 = arith.constant 0 : index
    %32 = vector.load %arg1[%c16, %c0_32, %c0_33] : memref<28x8x76xf32, #tpu.memory_space<vmem>>, vector<1x8x76xf32>
    %33 = vector.shape_cast %32 : vector<1x8x76xf32> to vector<8x76xf32>
    %c17 = arith.constant 17 : index
    %c0_34 = arith.constant 0 : index
    %c0_35 = arith.constant 0 : index
    %34 = vector.load %arg1[%c17, %c0_34, %c0_35] : memref<28x8x76xf32, #tpu.memory_space<vmem>>, vector<1x8x76xf32>
    %35 = vector.shape_cast %34 : vector<1x8x76xf32> to vector<8x76xf32>
    %c18 = arith.constant 18 : index
    %c0_36 = arith.constant 0 : index
    %c0_37 = arith.constant 0 : index
    %36 = vector.load %arg1[%c18, %c0_36, %c0_37] : memref<28x8x76xf32, #tpu.memory_space<vmem>>, vector<1x8x76xf32>
    %37 = vector.shape_cast %36 : vector<1x8x76xf32> to vector<8x76xf32>
    %c19 = arith.constant 19 : index
    %c0_38 = arith.constant 0 : index
    %c0_39 = arith.constant 0 : index
    %38 = vector.load %arg1[%c19, %c0_38, %c0_39] : memref<28x8x76xf32, #tpu.memory_space<vmem>>, vector<1x8x76xf32>
    %39 = vector.shape_cast %38 : vector<1x8x76xf32> to vector<8x76xf32>
    %c20 = arith.constant 20 : index
    %c0_40 = arith.constant 0 : index
    %c0_41 = arith.constant 0 : index
    %40 = vector.load %arg1[%c20, %c0_40, %c0_41] : memref<28x8x76xf32, #tpu.memory_space<vmem>>, vector<1x8x76xf32>
    %41 = vector.shape_cast %40 : vector<1x8x76xf32> to vector<8x76xf32>
    %c21 = arith.constant 21 : index
    %c0_42 = arith.constant 0 : index
    %c0_43 = arith.constant 0 : index
    %42 = vector.load %arg1[%c21, %c0_42, %c0_43] : memref<28x8x76xf32, #tpu.memory_space<vmem>>, vector<1x8x76xf32>
    %43 = vector.shape_cast %42 : vector<1x8x76xf32> to vector<8x76xf32>
    %c22 = arith.constant 22 : index
    %c0_44 = arith.constant 0 : index
    %c0_45 = arith.constant 0 : index
    %44 = vector.load %arg1[%c22, %c0_44, %c0_45] : memref<28x8x76xf32, #tpu.memory_space<vmem>>, vector<1x8x76xf32>
    %45 = vector.shape_cast %44 : vector<1x8x76xf32> to vector<8x76xf32>
    %c23 = arith.constant 23 : index
    %c0_46 = arith.constant 0 : index
    %c0_47 = arith.constant 0 : index
    %46 = vector.load %arg1[%c23, %c0_46, %c0_47] : memref<28x8x76xf32, #tpu.memory_space<vmem>>, vector<1x8x76xf32>
    %47 = vector.shape_cast %46 : vector<1x8x76xf32> to vector<8x76xf32>
    %c24 = arith.constant 24 : index
    %c0_48 = arith.constant 0 : index
    %c0_49 = arith.constant 0 : index
    %48 = vector.load %arg1[%c24, %c0_48, %c0_49] : memref<28x8x76xf32, #tpu.memory_space<vmem>>, vector<1x8x76xf32>
    %49 = vector.shape_cast %48 : vector<1x8x76xf32> to vector<8x76xf32>
    %c25 = arith.constant 25 : index
    %c0_50 = arith.constant 0 : index
    %c0_51 = arith.constant 0 : index
    %50 = vector.load %arg1[%c25, %c0_50, %c0_51] : memref<28x8x76xf32, #tpu.memory_space<vmem>>, vector<1x8x76xf32>
    %51 = vector.shape_cast %50 : vector<1x8x76xf32> to vector<8x76xf32>
    %c26 = arith.constant 26 : index
    %c0_52 = arith.constant 0 : index
    %c0_53 = arith.constant 0 : index
    %52 = vector.load %arg1[%c26, %c0_52, %c0_53] : memref<28x8x76xf32, #tpu.memory_space<vmem>>, vector<1x8x76xf32>
    %53 = vector.shape_cast %52 : vector<1x8x76xf32> to vector<8x76xf32>
    %c27 = arith.constant 27 : index
    %c0_54 = arith.constant 0 : index
    %c0_55 = arith.constant 0 : index
    %54 = vector.load %arg1[%c27, %c0_54, %c0_55] : memref<28x8x76xf32, #tpu.memory_space<vmem>>, vector<1x8x76xf32>
    %55 = vector.shape_cast %54 : vector<1x8x76xf32> to vector<8x76xf32>
    %56 = tpu.concatenate %1, %3, %5, %7, %9, %11, %13, %15, %17, %19, %21, %23, %25, %27, %29, %31 in 0 : vector<8x76xf32>, vector<8x76xf32>, vector<8x76xf32>, vector<8x76xf32>, vector<8x76xf32>, vector<8x76xf32>, vector<8x76xf32>, vector<8x76xf32>, vector<8x76xf32>, vector<8x76xf32>, vector<8x76xf32>, vector<8x76xf32>, vector<8x76xf32>, vector<8x76xf32>, vector<8x76xf32>, vector<8x76xf32> -> vector<128x76xf32>
    %57 = tpu.concatenate %33, %35, %37, %39, %41, %43, %45, %47, %49, %51, %53, %55 in 0 : vector<8x76xf32>, vector<8x76xf32>, vector<8x76xf32>, vector<8x76xf32>, vector<8x76xf32>, vector<8x76xf32>, vector<8x76xf32>, vector<8x76xf32>, vector<8x76xf32>, vector<8x76xf32>, vector<8x76xf32>, vector<8x76xf32> -> vector<96x76xf32>
    %58 = tpu.concatenate %56, %57 in 0 : vector<128x76xf32>, vector<96x76xf32> -> vector<224x76xf32>
    %c0_56 = arith.constant 0 : index
    %c0_57 = arith.constant 0 : index
    %59 = vector.load %arg2[%c0_56, %c0_57] : memref<76x8xf32, #tpu.memory_space<vmem>>, vector<76x8xf32>
    %cst = arith.constant dense<0.000000e+00> : vector<224x8xf32>
    %60 = tpu.matmul %58, %59, %cst {dimension_numbers = #tpu.dot_dimension_numbers<[1], [0], [0], [1], [0, 0, 1, 1], [], []>, precision = #tpu.contract_precision<fp32>} : vector<224x76xf32>, vector<76x8xf32>, vector<224x8xf32> -> vector<224x8xf32>
    %c0_58 = arith.constant 0 : index
    %c0_59 = arith.constant 0 : index
    %61 = vector.load %arg3[%c0_58, %c0_59] : memref<1x8xf32, #tpu.memory_space<vmem>>, vector<1x8xf32>
    %62 = vector.broadcast %61 : vector<1x8xf32> to vector<224x8xf32>
    %63 = arith.addf %60, %62 : vector<224x8xf32>
    %64 = vector.extract_strided_slice %63 {offsets = [0, 0], sizes = [8, 8], strides = [1, 1]} : vector<224x8xf32> to vector<8x8xf32>
    %65 = vector.extract_strided_slice %63 {offsets = [8, 0], sizes = [8, 8], strides = [1, 1]} : vector<224x8xf32> to vector<8x8xf32>
    %66 = arith.maximumf %64, %65 : vector<8x8xf32>
    %67 = vector.extract_strided_slice %63 {offsets = [16, 0], sizes = [8, 8], strides = [1, 1]} : vector<224x8xf32> to vector<8x8xf32>
    %68 = arith.maximumf %66, %67 : vector<8x8xf32>
    %69 = vector.extract_strided_slice %63 {offsets = [24, 0], sizes = [8, 8], strides = [1, 1]} : vector<224x8xf32> to vector<8x8xf32>
    %70 = arith.maximumf %68, %69 : vector<8x8xf32>
    %71 = vector.extract_strided_slice %63 {offsets = [32, 0], sizes = [8, 8], strides = [1, 1]} : vector<224x8xf32> to vector<8x8xf32>
    %72 = arith.maximumf %70, %71 : vector<8x8xf32>
    %73 = vector.extract_strided_slice %63 {offsets = [40, 0], sizes = [8, 8], strides = [1, 1]} : vector<224x8xf32> to vector<8x8xf32>
    %74 = arith.maximumf %72, %73 : vector<8x8xf32>
    %75 = vector.extract_strided_slice %63 {offsets = [48, 0], sizes = [8, 8], strides = [1, 1]} : vector<224x8xf32> to vector<8x8xf32>
    %76 = arith.maximumf %74, %75 : vector<8x8xf32>
    %77 = math.exp %76 : vector<8x8xf32>
    %78 = vector.extract_strided_slice %63 {offsets = [56, 0], sizes = [8, 8], strides = [1, 1]} : vector<224x8xf32> to vector<8x8xf32>
    %79 = vector.extract_strided_slice %63 {offsets = [64, 0], sizes = [8, 8], strides = [1, 1]} : vector<224x8xf32> to vector<8x8xf32>
    %80 = arith.maximumf %78, %79 : vector<8x8xf32>
    %81 = vector.extract_strided_slice %63 {offsets = [72, 0], sizes = [8, 8], strides = [1, 1]} : vector<224x8xf32> to vector<8x8xf32>
    %82 = arith.maximumf %80, %81 : vector<8x8xf32>
    %83 = vector.extract_strided_slice %63 {offsets = [80, 0], sizes = [8, 8], strides = [1, 1]} : vector<224x8xf32> to vector<8x8xf32>
    %84 = arith.maximumf %82, %83 : vector<8x8xf32>
    %85 = vector.extract_strided_slice %63 {offsets = [88, 0], sizes = [8, 8], strides = [1, 1]} : vector<224x8xf32> to vector<8x8xf32>
    %86 = arith.maximumf %84, %85 : vector<8x8xf32>
    %87 = vector.extract_strided_slice %63 {offsets = [96, 0], sizes = [8, 8], strides = [1, 1]} : vector<224x8xf32> to vector<8x8xf32>
    %88 = arith.maximumf %86, %87 : vector<8x8xf32>
    %89 = vector.extract_strided_slice %63 {offsets = [104, 0], sizes = [8, 8], strides = [1, 1]} : vector<224x8xf32> to vector<8x8xf32>
    %90 = arith.maximumf %88, %89 : vector<8x8xf32>
    %91 = math.exp %90 : vector<8x8xf32>
    %92 = vector.extract_strided_slice %63 {offsets = [112, 0], sizes = [8, 8], strides = [1, 1]} : vector<224x8xf32> to vector<8x8xf32>
    %93 = vector.extract_strided_slice %63 {offsets = [120, 0], sizes = [8, 8], strides = [1, 1]} : vector<224x8xf32> to vector<8x8xf32>
    %94 = arith.maximumf %92, %93 : vector<8x8xf32>
    %95 = vector.extract_strided_slice %63 {offsets = [128, 0], sizes = [8, 8], strides = [1, 1]} : vector<224x8xf32> to vector<8x8xf32>
    %96 = arith.maximumf %94, %95 : vector<8x8xf32>
    %97 = vector.extract_strided_slice %63 {offsets = [136, 0], sizes = [8, 8], strides = [1, 1]} : vector<224x8xf32> to vector<8x8xf32>
    %98 = arith.maximumf %96, %97 : vector<8x8xf32>
    %99 = vector.extract_strided_slice %63 {offsets = [144, 0], sizes = [8, 8], strides = [1, 1]} : vector<224x8xf32> to vector<8x8xf32>
    %100 = arith.maximumf %98, %99 : vector<8x8xf32>
    %101 = vector.extract_strided_slice %63 {offsets = [152, 0], sizes = [8, 8], strides = [1, 1]} : vector<224x8xf32> to vector<8x8xf32>
    %102 = arith.maximumf %100, %101 : vector<8x8xf32>
    %103 = vector.extract_strided_slice %63 {offsets = [160, 0], sizes = [8, 8], strides = [1, 1]} : vector<224x8xf32> to vector<8x8xf32>
    %104 = arith.maximumf %102, %103 : vector<8x8xf32>
    %105 = math.exp %104 : vector<8x8xf32>
    %106 = vector.extract_strided_slice %63 {offsets = [168, 0], sizes = [8, 8], strides = [1, 1]} : vector<224x8xf32> to vector<8x8xf32>
    %107 = vector.extract_strided_slice %63 {offsets = [176, 0], sizes = [8, 8], strides = [1, 1]} : vector<224x8xf32> to vector<8x8xf32>
    %108 = arith.maximumf %106, %107 : vector<8x8xf32>
    %109 = vector.extract_strided_slice %63 {offsets = [184, 0], sizes = [8, 8], strides = [1, 1]} : vector<224x8xf32> to vector<8x8xf32>
    %110 = arith.maximumf %108, %109 : vector<8x8xf32>
    %111 = vector.extract_strided_slice %63 {offsets = [192, 0], sizes = [8, 8], strides = [1, 1]} : vector<224x8xf32> to vector<8x8xf32>
    %112 = arith.maximumf %110, %111 : vector<8x8xf32>
    %113 = vector.extract_strided_slice %63 {offsets = [200, 0], sizes = [8, 8], strides = [1, 1]} : vector<224x8xf32> to vector<8x8xf32>
    %114 = arith.maximumf %112, %113 : vector<8x8xf32>
    %115 = vector.extract_strided_slice %63 {offsets = [208, 0], sizes = [8, 8], strides = [1, 1]} : vector<224x8xf32> to vector<8x8xf32>
    %116 = arith.maximumf %114, %115 : vector<8x8xf32>
    %117 = vector.extract_strided_slice %63 {offsets = [216, 0], sizes = [8, 8], strides = [1, 1]} : vector<224x8xf32> to vector<8x8xf32>
    %118 = arith.maximumf %116, %117 : vector<8x8xf32>
    %119 = math.exp %118 : vector<8x8xf32>
    %120 = tpu.concatenate %77, %91, %105, %119 in 1 : vector<8x8xf32>, vector<8x8xf32>, vector<8x8xf32>, vector<8x8xf32> -> vector<8x32xf32>
    %c0_60 = arith.constant 0 : index
    %c0_61 = arith.constant 0 : index
    %121 = vector.load %arg4[%c0_60, %c0_61] : memref<32x800xf32, #tpu.memory_space<vmem>>, vector<32x800xf32>
    %cst_62 = arith.constant dense<0.000000e+00> : vector<8x800xf32>
    %122 = tpu.matmul %120, %121, %cst_62 {dimension_numbers = #tpu.dot_dimension_numbers<[1], [0], [0], [1], [0, 0, 1, 1], [], []>, precision = #tpu.contract_precision<fp32>} : vector<8x32xf32>, vector<32x800xf32>, vector<8x800xf32> -> vector<8x800xf32>
    %c0_63 = arith.constant 0 : index
    %c0_64 = arith.constant 0 : index
    %123 = vector.load %arg5[%c0_63, %c0_64] : memref<1x800xf32, #tpu.memory_space<vmem>>, vector<1x800xf32>
    %124 = vector.broadcast %123 : vector<1x800xf32> to vector<8x800xf32>
    %125 = arith.addf %122, %124 : vector<8x800xf32>
    %cst_65 = arith.constant 0.000000e+00 : f32
    %126 = vector.broadcast %cst_65 : f32 to vector<8x800xf32>
    %127 = arith.maximumf %125, %126 : vector<8x800xf32>
    %c0_66 = arith.constant 0 : index
    %c0_67 = arith.constant 0 : index
    %128 = vector.load %arg6[%c0_66, %c0_67] : memref<800x8xf32, #tpu.memory_space<vmem>>, vector<800x8xf32>
    %cst_68 = arith.constant dense<0.000000e+00> : vector<8x8xf32>
    %129 = tpu.matmul %127, %128, %cst_68 {dimension_numbers = #tpu.dot_dimension_numbers<[1], [0], [0], [1], [0, 0, 1, 1], [], []>, precision = #tpu.contract_precision<fp32>} : vector<8x800xf32>, vector<800x8xf32>, vector<8x8xf32> -> vector<8x8xf32>
    %c0_69 = arith.constant 0 : index
    %c0_70 = arith.constant 0 : index
    %130 = vector.load %arg7[%c0_69, %c0_70] : memref<1x8xf32, #tpu.memory_space<vmem>>, vector<1x8xf32>
    %131 = vector.broadcast %130 : vector<1x8xf32> to vector<8x8xf32>
    %132 = arith.addf %129, %131 : vector<8x8xf32>
    %cst_71 = arith.constant 0.000000e+00 : f32
    %133 = vector.broadcast %cst_71 : f32 to vector<8x8xf32>
    %134 = arith.maximumf %132, %133 : vector<8x8xf32>
    %c0_72 = arith.constant 0 : index
    %c0_73 = arith.constant 0 : index
    %135 = vector.load %arg8[%c0_72, %c0_73] : memref<8x128xf32, #tpu.memory_space<vmem>>, vector<8x128xf32>
    %cst_74 = arith.constant dense<0.000000e+00> : vector<8x128xf32>
    %136 = tpu.matmul %134, %135, %cst_74 {dimension_numbers = #tpu.dot_dimension_numbers<[1], [0], [0], [1], [0, 0, 1, 1], [], []>, precision = #tpu.contract_precision<fp32>} : vector<8x8xf32>, vector<8x128xf32>, vector<8x128xf32> -> vector<8x128xf32>
    %c0_75 = arith.constant 0 : index
    %c0_76 = arith.constant 0 : index
    %137 = vector.load %arg9[%c0_75, %c0_76] : memref<1x128xf32, #tpu.memory_space<vmem>>, vector<1x128xf32>
    %138 = vector.broadcast %137 : vector<1x128xf32> to vector<8x128xf32>
    %139 = arith.addf %136, %138 : vector<8x128xf32>
    %c0_77 = arith.constant 0 : index
    %c0_78 = arith.constant 0 : index
    %140 = vector.load %arg10[%c0_77, %c0_78] : memref<8x128xf32, #tpu.memory_space<vmem>>, vector<8x128xf32>
    tpu.vector_store %arg10[%c0_77, %c0_78], %139 {strides = array<i32>} : memref<8x128xf32, #tpu.memory_space<vmem>>, vector<8x128xf32>,
    return
  }
  func.func @transform_0(%arg0: i32) -> (i32, i32, i32) {
    %c0_i32 = arith.constant 0 : i32
    %c0_i32_0 = arith.constant 0 : i32
    %c0_i32_1 = arith.constant 0 : i32
    return %c0_i32, %arg0, %c0_i32_0 : i32, i32, i32
  }
  func.func @transform_1(%arg0: i32) -> (i32, i32) {
    %c0_i32 = arith.constant 0 : i32
    %c0_i32_0 = arith.constant 0 : i32
    %c0_i32_1 = arith.constant 0 : i32
    return %c0_i32, %c0_i32_0 : i32, i32
  }
  func.func @transform_2(%arg0: i32) -> (i32, i32) {
    %c0_i32 = arith.constant 0 : i32
    %c0_i32_0 = arith.constant 0 : i32
    %c0_i32_1 = arith.constant 0 : i32
    return %c0_i32, %c0_i32_0 : i32, i32
  }
  func.func @transform_3(%arg0: i32) -> (i32, i32) {
    %c0_i32 = arith.constant 0 : i32
    %c0_i32_0 = arith.constant 0 : i32
    %c0_i32_1 = arith.constant 0 : i32
    return %c0_i32, %c0_i32_0 : i32, i32
  }
  func.func @transform_4(%arg0: i32) -> (i32, i32) {
    %c0_i32 = arith.constant 0 : i32
    %c0_i32_0 = arith.constant 0 : i32
    %c0_i32_1 = arith.constant 0 : i32
    return %c0_i32, %c0_i32_0 : i32, i32
  }
  func.func @transform_5(%arg0: i32) -> (i32, i32) {
    %c0_i32 = arith.constant 0 : i32
    %c0_i32_0 = arith.constant 0 : i32
    %c0_i32_1 = arith.constant 0 : i32
    return %c0_i32, %c0_i32_0 : i32, i32
  }
  func.func @transform_6(%arg0: i32) -> (i32, i32) {
    %c0_i32 = arith.constant 0 : i32
    %c0_i32_0 = arith.constant 0 : i32
    %c0_i32_1 = arith.constant 0 : i32
    return %c0_i32, %c0_i32_0 : i32, i32
  }
  func.func @transform_7(%arg0: i32) -> (i32, i32) {
    %c0_i32 = arith.constant 0 : i32
    %c0_i32_0 = arith.constant 0 : i32
    %c0_i32_1 = arith.constant 0 : i32
    return %c0_i32, %c0_i32_0 : i32, i32
  }
  func.func @transform_8(%arg0: i32) -> (i32, i32) {
    %c0_i32 = arith.constant 0 : i32
    %c0_i32_0 = arith.constant 0 : i32
    %c0_i32_1 = arith.constant 0 : i32
    return %c0_i32, %c0_i32_0 : i32, i32
  }
  func.func @transform_9(%arg0: i32) -> (i32, i32) {
    %c0_i32 = arith.constant 0 : i32
    %c0_i32_0 = arith.constant 0 : i32
    return %arg0, %c0_i32 : i32, i32
  }
}

</mosaic_0001>

<llo_original>
// kernel: tpu_custom_call.1
$region0: #{tpu_custom_call.1}
  #allocation0 [shape = 'u32[]', space=smem, size = 0x4, offset = 0x4, fixed_abs, tag = 'smem constant byte address 0x4 - core index']
  #allocation1 [shape = 'u32[144,128]{1,0:T(1,128)}', space=vmem, size = 0x12000, scoped, tag = 'internal scratch']
  %s0 = inlined_call_operand.vmem [shape: f32[28,8,76], index: 0, kind: input, shape index: {}]
  %s1 = inlined_call_operand.vmem [shape: f32[76,8], index: 1, kind: input, shape index: {}]
  %s2 = inlined_call_operand.vmem [shape: f32[1,8], index: 2, kind: input, shape index: {}]
  %s3 = inlined_call_operand.vmem [shape: f32[32,800], index: 3, kind: input, shape index: {}]
  %s4 = inlined_call_operand.vmem [shape: f32[1,800], index: 4, kind: input, shape index: {}]
  %s5 = inlined_call_operand.vmem [shape: f32[800,8], index: 5, kind: input, shape index: {}]
  %s6 = inlined_call_operand.vmem [shape: f32[1,8], index: 6, kind: input, shape index: {}]
  %s7 = inlined_call_operand.vmem [shape: f32[8,128], index: 7, kind: input, shape index: {}]
  %s8 = inlined_call_operand.vmem [shape: f32[1,128], index: 8, kind: input, shape index: {}]
  %s9 = inlined_call_operand.hbm [shape: f32[8,128], index: 9, kind: output, shape index: {}]
  %s10 = sld [smem:[#allocation0]]
  $region46: #{tpu_custom_call.1} parent=0
    _
  %s12 = ssub.s32 1, %s10
  %s13 = scalar_select 0, %s12, %s10
  $region1: #{tpu_custom_call.1} parent=0
    #allocation2 [shape = 'u8[4096]{0}', space=vmem, size = 0x1000, scoped, tag = 'output window, operand 0, single buffered']
    #allocation3 [shape = 's32[1]{0}', space=sflag, size = 0x4, scoped, tag = 'scoped memory for tpu_custom_call.1']
    %14 = vsyncpa [#allocation3], 0
    // Predicated region
    $region2: #{tpu_custom_call.1} parent=1 // pred_check
      _
    $region3: #{tpu_custom_call.1} parent=1 // pred_check_branch
      %16 = sbr.rel (0) target = $region5
    $region4: #{tpu_custom_call.1} parent=1 // pred_region
      _
    $region5: #{tpu_custom_call.1} parent=1 // pred_fallthru
      _
    // Predicated region
    $region6: #{tpu_custom_call.1} parent=1 // pred_check
      _
    $region7: #{tpu_custom_call.1} parent=1 // pred_check_branch
      %18 = sbr.rel (0) target = $region9
    $region8: #{tpu_custom_call.1} parent=1 // pred_region
      _
    $region9: #{tpu_custom_call.1} parent=1 // pred_fallthru
      _
    // Predicated region
    $region10: #{tpu_custom_call.1} parent=1 // pred_check
      _
    $region11: #{tpu_custom_call.1} parent=1 // pred_check_branch
      %20 = sbr.rel (0) target = $region13
    $region12: #{tpu_custom_call.1} parent=1 // pred_region
      _
    $region13: #{tpu_custom_call.1} parent=1 // pred_fallthru
      _
    // Predicated region
    $region14: #{tpu_custom_call.1} parent=1 // pred_check
      _
    $region15: #{tpu_custom_call.1} parent=1 // pred_check_branch
      %22 = sbr.rel (0) target = $region17
    $region16: #{tpu_custom_call.1} parent=1 // pred_region
      _
    $region17: #{tpu_custom_call.1} parent=1 // pred_fallthru
      _
    // Predicated region
    $region18: #{tpu_custom_call.1} parent=1 // pred_check
      _
    $region19: #{tpu_custom_call.1} parent=1 // pred_check_branch
      %24 = sbr.rel (0) target = $region21
    $region20: #{tpu_custom_call.1} parent=1 // pred_region
      _
    $region21: #{tpu_custom_call.1} parent=1 // pred_fallthru
      _
    // Predicated region
    $region22: #{tpu_custom_call.1} parent=1 // pred_check
      _
    $region23: #{tpu_custom_call.1} parent=1 // pred_check_branch
      %26 = sbr.rel (0) target = $region25
    $region24: #{tpu_custom_call.1} parent=1 // pred_region
      _
    $region25: #{tpu_custom_call.1} parent=1 // pred_fallthru
      _
    // Predicated region
    $region26: #{tpu_custom_call.1} parent=1 // pred_check
      _
    $region27: #{tpu_custom_call.1} parent=1 // pred_check_branch
      %28 = sbr.rel (0) target = $region29
    $region28: #{tpu_custom_call.1} parent=1 // pred_region
      _
    $region29: #{tpu_custom_call.1} parent=1 // pred_fallthru
      _
    // Predicated region
    $region30: #{tpu_custom_call.1} parent=1 // pred_check
      _
    $region31: #{tpu_custom_call.1} parent=1 // pred_check_branch
      %30 = sbr.rel (0) target = $region33
    $region32: #{tpu_custom_call.1} parent=1 // pred_region
      _
    $region33: #{tpu_custom_call.1} parent=1 // pred_fallthru
      _
    // Predicated region
    $region34: #{tpu_custom_call.1} parent=1 // pred_check
      _
    $region35: #{tpu_custom_call.1} parent=1 // pred_check_branch
      %32 = sbr.rel (0) target = $region37
    $region36: #{tpu_custom_call.1} parent=1 // pred_region
      _
    $region37: #{tpu_custom_call.1} parent=1 // pred_fallthru
      _
    %v33 = vld [vmem:[%s0] sm:$0xff]
    %s34 = scalar_lea.vmem %s0, 8
    %v35 = vld [vmem:[%s34] sm:$0xff]
    %s36 = scalar_lea.vmem %s0, 16
    %v37 = vld [vmem:[%s36] sm:$0xff]
    %s38 = scalar_lea.vmem %s0, 24
    %v39 = vld [vmem:[%s38] sm:$0xff]
    %s40 = scalar_lea.vmem %s0, 32
    %v41 = vld [vmem:[%s40] sm:$0xff]
    %s42 = scalar_lea.vmem %s0, 40
    %v43 = vld [vmem:[%s42] sm:$0xff]
    %s44 = scalar_lea.vmem %s0, 48
    %v45 = vld [vmem:[%s44] sm:$0xff]
    %s46 = scalar_lea.vmem %s0, 56
    %v47 = vld [vmem:[%s46] sm:$0xff]
    %s48 = scalar_lea.vmem %s0, 64
    %v49 = vld [vmem:[%s48] sm:$0xff]
    %s50 = scalar_lea.vmem %s0, 72
    %v51 = vld [vmem:[%s50] sm:$0xff]
    %s52 = scalar_lea.vmem %s0, 80
    %v53 = vld [vmem:[%s52] sm:$0xff]
    %s54 = scalar_lea.vmem %s0, 88
    %v55 = vld [vmem:[%s54] sm:$0xff]
    %s56 = scalar_lea.vmem %s0, 96
    %v57 = vld [vmem:[%s56] sm:$0xff]
    %s58 = scalar_lea.vmem %s0, 104
    %v59 = vld [vmem:[%s58] sm:$0xff]
    %s60 = scalar_lea.vmem %s0, 112
    %v61 = vld [vmem:[%s60] sm:$0xff]
    %s62 = scalar_lea.vmem %s0, 120
    %v63 = vld [vmem:[%s62] sm:$0xff]
    %s64 = scalar_lea.vmem %s0, 128
    %v65 = vld [vmem:[%s64] sm:$0xff]
    %s66 = scalar_lea.vmem %s0, 136
    %v67 = vld [vmem:[%s66] sm:$0xff]
    %s68 = scalar_lea.vmem %s0, 144
    %v69 = vld [vmem:[%s68] sm:$0xff]
    %s70 = scalar_lea.vmem %s0, 152
    %v71 = vld [vmem:[%s70] sm:$0xff]
    %s72 = scalar_lea.vmem %s0, 160
    %v73 = vld [vmem:[%s72] sm:$0xff]
    %s74 = scalar_lea.vmem %s0, 168
    %v75 = vld [vmem:[%s74] sm:$0xff]
    %s76 = scalar_lea.vmem %s0, 176
    %v77 = vld [vmem:[%s76] sm:$0xff]
    %s78 = scalar_lea.vmem %s0, 184
    %v79 = vld [vmem:[%s78] sm:$0xff]
    %s80 = scalar_lea.vmem %s0, 192
    %v81 = vld [vmem:[%s80] sm:$0xff]
    %s82 = scalar_lea.vmem %s0, 200
    %v83 = vld [vmem:[%s82] sm:$0xff]
    %s84 = scalar_lea.vmem %s0, 208
    %v85 = vld [vmem:[%s84] sm:$0xff]
    %s86 = scalar_lea.vmem %s0, 216
    %v87 = vld [vmem:[%s86] sm:$0xff]
    %v88 = vld [vmem:[%s1] sm:$0xff]
    %v89 = vld [vmem:[%s1 + $0x8] sm:$0xff]
    %v90 = vld [vmem:[%s1 + $0x10] sm:$0xff]
    %v91 = vld [vmem:[%s1 + $0x18] sm:$0xff]
    %v92 = vld [vmem:[%s1 + $0x20] sm:$0xff]
    %v93 = vld [vmem:[%s1 + $0x28] sm:$0xff]
    %v94 = vld [vmem:[%s1 + $0x30] sm:$0xff]
    %v95 = vld [vmem:[%s1 + $0x38] sm:$0xff]
    %v96 = vld [vmem:[%s1 + $0x40] sm:$0xff]
    %v97 = vld [vmem:[%s1 + $0x48] sm:$0xf]
    %v98 = vld [vmem:[%s2] sm:$0x1]
    %v100 = vlaneseq
    %v101 = vshrl.u32 %v100, 7
    %v102 = vsub.s32 0, %v101
    %v103 = vrot.slane %v98, %v102
    %vm105 = vcmask 621568
    %v107 = vsel %vm105, %v33, 0
    %v110 = vsel %vm105, %v35, 0
    %v113 = vsel %vm105, %v37, 0
    %v116 = vsel %vm105, %v39, 0
    %v119 = vsel %vm105, %v41, 0
    %v122 = vsel %vm105, %v43, 0
    %v125 = vsel %vm105, %v45, 0
    %v128 = vsel %vm105, %v47, 0
    %v131 = vsel %vm105, %v49, 0
    %v134 = vsel %vm105, %v51, 0
    %v137 = vsel %vm105, %v53, 0
    %v140 = vsel %vm105, %v55, 0
    %v143 = vsel %vm105, %v57, 0
    %v146 = vsel %vm105, %v59, 0
    %v149 = vsel %vm105, %v61, 0
    %v152 = vsel %vm105, %v63, 0
    %v155 = vsel %vm105, %v65, 0
    %v158 = vsel %vm105, %v67, 0
    %v161 = vsel %vm105, %v69, 0
    %v164 = vsel %vm105, %v71, 0
    %v167 = vsel %vm105, %v73, 0
    %v170 = vsel %vm105, %v75, 0
    %v173 = vsel %vm105, %v77, 0
    %v176 = vsel %vm105, %v79, 0
    %v179 = vsel %vm105, %v81, 0
    %v182 = vsel %vm105, %v83, 0
    %v185 = vsel %vm105, %v85, 0
    %v188 = vsel %vm105, %v87, 0
    %vm190 = vcmask 1043456
    %v192 = vsel %vm190, %v97, 0
    %194 = vmatprep.subr.mxu0 0.0
    %v195 = vand.u32 %v88, 4294901760
    %196 = vmatpush1.msra.mxu0 %v195
    %197 = vmatprep.subr.mxu0 0.0
    %v198 = vand.u32 %v89, 4294901760
    %199 = vmatpush1.msra.mxu0 %v198
    %200 = vmatprep.subr.mxu0 0.0
    %v201 = vand.u32 %v90, 4294901760
    %202 = vmatpush1.msra.mxu0 %v201
    %203 = vmatprep.subr.mxu0 0.0
    %v204 = vand.u32 %v91, 4294901760
    %205 = vmatpush1.msra.mxu0 %v204
    %206 = vmatprep.subr.mxu0 0.0
    %v207 = vand.u32 %v92, 4294901760
    %208 = vmatpush1.msra.mxu0 %v207
    %209 = vmatprep.subr.mxu0 0.0
    %v210 = vand.u32 %v93, 4294901760
    %211 = vmatpush1.msra.mxu0 %v210
    %212 = vmatprep.subr.mxu0 0.0
    %v213 = vand.u32 %v94, 4294901760
    %214 = vmatpush1.msra.mxu0 %v213
    %215 = vmatprep.subr.mxu0 0.0
    %v216 = vand.u32 %v95, 4294901760
    %217 = vmatpush1.msra.mxu0 %v216
    %218 = vmatprep.subr.mxu0 0.0
    %v219 = vand.u32 %v96, 4294901760
    %220 = vmatpush1.msra.mxu0 %v219
    %221 = vmatprep.subr.mxu0 0.0
    %v222 = vand.u32 %v192, 4294901760
    %223 = vmatpush1.msra.mxu0 %v222
    %224 = vmatprep.subr.mxu0 0.0
    %225 = vmatpush1.msra.mxu0 0.0
    %226 = vmatprep.subr.mxu0 0.0
    %227 = vmatpush1.msra.mxu0 0.0
    %228 = vmatprep.subr.mxu0 0.0
    %229 = vmatpush1.msra.mxu0 0.0
    %230 = vmatprep.subr.mxu0 0.0
    %231 = vmatpush1.msra.mxu0 0.0
    %232 = vmatprep.subr.mxu0 0.0
    %233 = vmatpush1.msra.mxu0 0.0
    %234 = vmatprep.subr.mxu0 0.0
    %235 = vmatpush1.msra.mxu0 0.0
    %236 = vmatprep.subr.mxu0 0.0
    %237 = vmatpush1.msra.mxu0 0.0
    %238 = vmatprep.subr.mxu0 0.0
    %239 = vmatpush1.msra.mxu0 0.0
    %240 = vmatprep.subr.mxu0 0.0
    %241 = vmatpush1.msra.mxu0 0.0
    %242 = vmatprep.subr.mxu0 0.0
    %243 = vmatpush1.msra.mxu0 0.0
    %244 = vmatprep.subr.mxu0 0.0
    %245 = vmatpush1.msra.mxu0 0.0
    %246 = vmatprep.subr.mxu0 0.0
    %247 = vmatpush1.msra.mxu0 0.0
    %248 = vmatprep.subr.mxu0 0.0
    %249 = vmatpush1.msra.mxu0 0.0
    %250 = vmatprep.subr.mxu0 0.0
    %251 = vmatpush1.msra.mxu0 0.0
    %252 = vmatprep.subr.mxu0 0.0
    %253 = vmatpush1.msra.mxu0 0.0
    %254 = vmatprep.subr.mxu0 0.0
    %255 = vmatpush1.msra.mxu0 0.0
    %256 = vmatprep.subr.mxu0 0.0
    %257 = vmatpush1.msra.mxu0 0.0
    %258 = vmatprep.subr.mxu0 0.0
    %259 = vmatpush1.msra.mxu0 0.0
    %260 = vmatprep.subr.mxu0 0.0
    %261 = vmatpush1.msra.mxu0 0.0
    %262 = vmatprep.subr.mxu0 0.0
    %263 = vmatpush1.msra.mxu0 0.0
    %264 = vmatprep.subr.mxu0 0.0
    %265 = vmatpush1.msra.mxu0 0.0
    %266 = vmatprep.subr.mxu0 0.0
    %267 = vmatpush1.msra.mxu0 0.0
    %268 = vmatprep.mubr.f32.mxu0 0.0
    %v269 = vand.u32 %v107, 4294901760
    %v270 = vsub.f32 %v107, %v269
    %v271 = vand.u32 %v270, 4294901760
    %v272 = vsub.f32 %v270, %v271
    %v273 = vand.u32 %v272, 4294901760
    %274 = vmatmul.mubr.f32.gmra.mrb[0].mxu0 %v273
    %v275 = vpop.f32.mrb[0].mxu0
    %v276 = vadd.f32 %v103, %v275
    %v277 = vpop.f32.mrb[0].mxu0
    %278 = vmatprep.mubr.f32.mxu0 0.0
    %v279 = vand.u32 %v110, 4294901760
    %v280 = vsub.f32 %v110, %v279
    %v281 = vand.u32 %v280, 4294901760
    %v282 = vsub.f32 %v280, %v281
    %v283 = vand.u32 %v282, 4294901760
    %284 = vmatmul.mubr.f32.gmra.mrb[0].mxu0 %v283
    %v285 = vpop.f32.mrb[0].mxu0
    %v286 = vadd.f32 %v103, %v285
    %v287 = vpop.f32.mrb[0].mxu0
    %288 = vmatprep.mubr.f32.mxu0 0.0
    %v289 = vand.u32 %v113, 4294901760
    %v290 = vsub.f32 %v113, %v289
    %v291 = vand.u32 %v290, 4294901760
    %v292 = vsub.f32 %v290, %v291
    %v293 = vand.u32 %v292, 4294901760
    %294 = vmatmul.mubr.f32.gmra.mrb[0].mxu0 %v293
    %v295 = vpop.f32.mrb[0].mxu0
    %v296 = vadd.f32 %v103, %v295
    %v297 = vpop.f32.mrb[0].mxu0
    %298 = vmatprep.mubr.f32.mxu0 0.0
    %v299 = vand.u32 %v116, 4294901760
    %v300 = vsub.f32 %v116, %v299
    %v301 = vand.u32 %v300, 4294901760
    %v302 = vsub.f32 %v300, %v301
    %v303 = vand.u32 %v302, 4294901760
    %304 = vmatmul.mubr.f32.gmra.mrb[0].mxu0 %v303
    %v305 = vpop.f32.mrb[0].mxu0
    %v306 = vadd.f32 %v103, %v305
    %v307 = vpop.f32.mrb[0].mxu0
    %308 = vmatprep.mubr.f32.mxu0 0.0
    %v309 = vand.u32 %v119, 4294901760
    %v310 = vsub.f32 %v119, %v309
    %v311 = vand.u32 %v310, 4294901760
    %v312 = vsub.f32 %v310, %v311
    %v313 = vand.u32 %v312, 4294901760
    %314 = vmatmul.mubr.f32.gmra.mrb[0].mxu0 %v313
    %v315 = vpop.f32.mrb[0].mxu0
    %v316 = vadd.f32 %v103, %v315
    %v317 = vpop.f32.mrb[0].mxu0
    %318 = vmatprep.mubr.f32.mxu0 0.0
    %v319 = vand.u32 %v122, 4294901760
    %v320 = vsub.f32 %v122, %v319
    %v321 = vand.u32 %v320, 4294901760
    %v322 = vsub.f32 %v320, %v321
    %v323 = vand.u32 %v322, 4294901760
    %324 = vmatmul.mubr.f32.gmra.mrb[0].mxu0 %v323
    %v325 = vpop.f32.mrb[0].mxu0
    %v326 = vadd.f32 %v103, %v325
    %v327 = vpop.f32.mrb[0].mxu0
    %328 = vmatprep.mubr.f32.mxu0 0.0
    %v329 = vand.u32 %v125, 4294901760
    %v330 = vsub.f32 %v125, %v329
    %v331 = vand.u32 %v330, 4294901760
    %v332 = vsub.f32 %v330, %v331
    %v333 = vand.u32 %v332, 4294901760
    %334 = vmatmul.mubr.f32.gmra.mrb[0].mxu0 %v333
    %v335 = vpop.f32.mrb[0].mxu0
    %v336 = vadd.f32 %v103, %v335
    %v337 = vpop.f32.mrb[0].mxu0
    %338 = vmatprep.mubr.f32.mxu0 0.0
    %v339 = vand.u32 %v128, 4294901760
    %v340 = vsub.f32 %v128, %v339
    %v341 = vand.u32 %v340, 4294901760
    %v342 = vsub.f32 %v340, %v341
    %v343 = vand.u32 %v342, 4294901760
    %344 = vmatmul.mubr.f32.gmra.mrb[0].mxu0 %v343
    %v345 = vpop.f32.mrb[0].mxu0
    %v346 = vadd.f32 %v103, %v345
    %v347 = vpop.f32.mrb[0].mxu0
    %348 = vmatprep.mubr.f32.mxu0 0.0
    %v349 = vand.u32 %v131, 4294901760
    %v350 = vsub.f32 %v131, %v349
    %v351 = vand.u32 %v350, 4294901760
    %v352 = vsub.f32 %v350, %v351
    %v353 = vand.u32 %v352, 4294901760
    %354 = vmatmul.mubr.f32.gmra.mrb[0].mxu0 %v353
    %v355 = vpop.f32.mrb[0].mxu0
    %v356 = vadd.f32 %v103, %v355
    %v357 = vpop.f32.mrb[0].mxu0
    %358 = vmatprep.mubr.f32.mxu0 0.0
    %v359 = vand.u32 %v134, 4294901760
    %v360 = vsub.f32 %v134, %v359
    %v361 = vand.u32 %v360, 4294901760
    %v362 = vsub.f32 %v360, %v361
    %v363 = vand.u32 %v362, 4294901760
    %364 = vmatmul.mubr.f32.gmra.mrb[0].mxu0 %v363
    %v365 = vpop.f32.mrb[0].mxu0
    %v366 = vadd.f32 %v103, %v365
    %v367 = vpop.f32.mrb[0].mxu0
    %368 = vmatprep.mubr.f32.mxu0 0.0
    %v369 = vand.u32 %v137, 4294901760
    %v370 = vsub.f32 %v137, %v369
    %v371 = vand.u32 %v370, 4294901760
    %v372 = vsub.f32 %v370, %v371
    %v373 = vand.u32 %v372, 4294901760
    %374 = vmatmul.mubr.f32.gmra.mrb[0].mxu0 %v373
    %v375 = vpop.f32.mrb[0].mxu0
    %v376 = vadd.f32 %v103, %v375
    %v377 = vpop.f32.mrb[0].mxu0
    %378 = vmatprep.mubr.f32.mxu0 0.0
    %v379 = vand.u32 %v140, 4294901760
    %v380 = vsub.f32 %v140, %v379
    %v381 = vand.u32 %v380, 4294901760
    %v382 = vsub.f32 %v380, %v381
    %v383 = vand.u32 %v382, 4294901760
    %384 = vmatmul.mubr.f32.gmra.mrb[0].mxu0 %v383
    %v385 = vpop.f32.mrb[0].mxu0
    %v386 = vadd.f32 %v103, %v385
    %v387 = vpop.f32.mrb[0].mxu0
    %388 = vmatprep.mubr.f32.mxu0 0.0
    %v389 = vand.u32 %v143, 4294901760
    %v390 = vsub.f32 %v143, %v389
    %v391 = vand.u32 %v390, 4294901760
    %v392 = vsub.f32 %v390, %v391
    %v393 = vand.u32 %v392, 4294901760
    %394 = vmatmul.mubr.f32.gmra.mrb[0].mxu0 %v393
    %v395 = vpop.f32.mrb[0].mxu0
    %v396 = vadd.f32 %v103, %v395
    %v397 = vpop.f32.mrb[0].mxu0
    %398 = vmatprep.mubr.f32.mxu0 0.0
    %v399 = vand.u32 %v146, 4294901760
    %v400 = vsub.f32 %v146, %v399
    %v401 = vand.u32 %v400, 4294901760
    %v402 = vsub.f32 %v400, %v401
    %v403 = vand.u32 %v402, 4294901760
    %404 = vmatmul.mubr.f32.gmra.mrb[0].mxu0 %v403
    %v405 = vpop.f32.mrb[0].mxu0
    %v406 = vadd.f32 %v103, %v405
    %v407 = vpop.f32.mrb[0].mxu0
    %408 = vmatprep.mubr.f32.mxu0 0.0
    %v409 = vand.u32 %v149, 4294901760
    %v410 = vsub.f32 %v149, %v409
    %v411 = vand.u32 %v410, 4294901760
    %v412 = vsub.f32 %v410, %v411
    %v413 = vand.u32 %v412, 4294901760
    %414 = vmatmul.mubr.f32.gmra.mrb[0].mxu0 %v413
    %v415 = vpop.f32.mrb[0].mxu0
    %v416 = vadd.f32 %v103, %v415
    %v417 = vpop.f32.mrb[0].mxu0
    %418 = vmatprep.mubr.f32.mxu0 0.0
    %v419 = vand.u32 %v152, 4294901760
    %v420 = vsub.f32 %v152, %v419
    %v421 = vand.u32 %v420, 4294901760
    %v422 = vsub.f32 %v420, %v421
    %v423 = vand.u32 %v422, 4294901760
    %424 = vmatmul.mubr.f32.gmra.mrb[0].mxu0 %v423
    %v425 = vpop.f32.mrb[0].mxu0
    %v426 = vadd.f32 %v103, %v425
    %v427 = vpop.f32.mrb[0].mxu0
    %428 = vmatprep.mubr.f32.mxu0 0.0
    %v429 = vand.u32 %v155, 4294901760
    %v430 = vsub.f32 %v155, %v429
    %v431 = vand.u32 %v430, 4294901760
    %v432 = vsub.f32 %v430, %v431
    %v433 = vand.u32 %v432, 4294901760
    %434 = vmatmul.mubr.f32.gmra.mrb[0].mxu0 %v433
    %v435 = vpop.f32.mrb[0].mxu0
    %v436 = vadd.f32 %v103, %v435
    %v437 = vpop.f32.mrb[0].mxu0
    %438 = vmatprep.mubr.f32.mxu0 0.0
    %v439 = vand.u32 %v158, 4294901760
    %v440 = vsub.f32 %v158, %v439
    %v441 = vand.u32 %v440, 4294901760
    %v442 = vsub.f32 %v440, %v441
    %v443 = vand.u32 %v442, 4294901760
    %444 = vmatmul.mubr.f32.gmra.mrb[0].mxu0 %v443
    %v445 = vpop.f32.mrb[0].mxu0
    %v446 = vadd.f32 %v103, %v445
    %v447 = vpop.f32.mrb[0].mxu0
    %448 = vmatprep.mubr.f32.mxu0 0.0
    %v449 = vand.u32 %v161, 4294901760
    %v450 = vsub.f32 %v161, %v449
    %v451 = vand.u32 %v450, 4294901760
    %v452 = vsub.f32 %v450, %v451
    %v453 = vand.u32 %v452, 4294901760
    %454 = vmatmul.mubr.f32.gmra.mrb[0].mxu0 %v453
    %v455 = vpop.f32.mrb[0].mxu0
    %v456 = vadd.f32 %v103, %v455
    %v457 = vpop.f32.mrb[0].mxu0
    %458 = vmatprep.mubr.f32.mxu0 0.0
    %v459 = vand.u32 %v164, 4294901760
    %v460 = vsub.f32 %v164, %v459
    %v461 = vand.u32 %v460, 4294901760
    %v462 = vsub.f32 %v460, %v461
    %v463 = vand.u32 %v462, 4294901760
    %464 = vmatmul.mubr.f32.gmra.mrb[0].mxu0 %v463
    %v465 = vpop.f32.mrb[0].mxu0
    %v466 = vadd.f32 %v103, %v465
    %v467 = vpop.f32.mrb[0].mxu0
    %468 = vmatprep.mubr.f32.mxu0 0.0
    %v469 = vand.u32 %v167, 4294901760
    %v470 = vsub.f32 %v167, %v469
    %v471 = vand.u32 %v470, 4294901760
    %v472 = vsub.f32 %v470, %v471
    %v473 = vand.u32 %v472, 4294901760
    %474 = vmatmul.mubr.f32.gmra.mrb[0].mxu0 %v473
    %v475 = vpop.f32.mrb[0].mxu0
    %v476 = vadd.f32 %v103, %v475
    %v477 = vpop.f32.mrb[0].mxu0
    %478 = vmatprep.mubr.f32.mxu0 0.0
    %v479 = vand.u32 %v170, 4294901760
    %v480 = vsub.f32 %v170, %v479
    %v481 = vand.u32 %v480, 4294901760
    %v482 = vsub.f32 %v480, %v481
    %v483 = vand.u32 %v482, 4294901760
    %484 = vmatmul.mubr.f32.gmra.mrb[0].mxu0 %v483
    %v485 = vpop.f32.mrb[0].mxu0
    %v486 = vadd.f32 %v103, %v485
    %v487 = vpop.f32.mrb[0].mxu0
    %488 = vmatprep.mubr.f32.mxu0 0.0
    %v489 = vand.u32 %v173, 4294901760
    %v490 = vsub.f32 %v173, %v489
    %v491 = vand.u32 %v490, 4294901760
    %v492 = vsub.f32 %v490, %v491
    %v493 = vand.u32 %v492, 4294901760
    %494 = vmatmul.mubr.f32.gmra.mrb[0].mxu0 %v493
    %v495 = vpop.f32.mrb[0].mxu0
    %v496 = vadd.f32 %v103, %v495
    %v497 = vpop.f32.mrb[0].mxu0
    %498 = vmatprep.mubr.f32.mxu0 0.0
    %v499 = vand.u32 %v176, 4294901760
    %v500 = vsub.f32 %v176, %v499
    %v501 = vand.u32 %v500, 4294901760
    %v502 = vsub.f32 %v500, %v501
    %v503 = vand.u32 %v502, 4294901760
    %504 = vmatmul.mubr.f32.gmra.mrb[0].mxu0 %v503
    %v505 = vpop.f32.mrb[0].mxu0
    %v506 = vadd.f32 %v103, %v505
    %v507 = vpop.f32.mrb[0].mxu0
    %508 = vmatprep.mubr.f32.mxu0 0.0
    %v509 = vand.u32 %v179, 4294901760
    %v510 = vsub.f32 %v179, %v509
    %v511 = vand.u32 %v510, 4294901760
    %v512 = vsub.f32 %v510, %v511
    %v513 = vand.u32 %v512, 4294901760
    %514 = vmatmul.mubr.f32.gmra.mrb[0].mxu0 %v513
    %v515 = vpop.f32.mrb[0].mxu0
    %v516 = vadd.f32 %v103, %v515
    %v517 = vpop.f32.mrb[0].mxu0
    %518 = vmatprep.mubr.f32.mxu0 0.0
    %v519 = vand.u32 %v182, 4294901760
    %v520 = vsub.f32 %v182, %v519
    %v521 = vand.u32 %v520, 4294901760
    %v522 = vsub.f32 %v520, %v521
    %v523 = vand.u32 %v522, 4294901760
    %524 = vmatmul.mubr.f32.gmra.mrb[0].mxu0 %v523
    %v525 = vpop.f32.mrb[0].mxu0
    %v526 = vadd.f32 %v103, %v525
    %v527 = vpop.f32.mrb[0].mxu0
    %528 = vmatprep.mubr.f32.mxu0 0.0
    %v529 = vand.u32 %v185, 4294901760
    %v530 = vsub.f32 %v185, %v529
    %v531 = vand.u32 %v530, 4294901760
    %v532 = vsub.f32 %v530, %v531
    %v533 = vand.u32 %v532, 4294901760
    %534 = vmatmul.mubr.f32.gmra.mrb[0].mxu0 %v533
    %v535 = vpop.f32.mrb[0].mxu0
    %v536 = vadd.f32 %v103, %v535
    %v537 = vpop.f32.mrb[0].mxu0
    %538 = vmatprep.mubr.f32.mxu0 0.0
    %v539 = vand.u32 %v188, 4294901760
    %v540 = vsub.f32 %v188, %v539
    %v541 = vand.u32 %v540, 4294901760
    %v542 = vsub.f32 %v540, %v541
    %v543 = vand.u32 %v542, 4294901760
    %544 = vmatmul.mubr.f32.gmra.mrb[0].mxu0 %v543
    %v545 = vpop.f32.mrb[0].mxu0
    %v546 = vadd.f32 %v103, %v545
    %v547 = vpop.f32.mrb[0].mxu0
    %548 = vdwg.mxu0
    %549 = vmatprep.subr.mxu0 0.0
    %v550 = vand.u32 %v88, 4294901760
    %v551 = vsub.f32 %v88, %v550
    %v552 = vand.u32 %v551, 4294901760
    %v553 = vsub.f32 %v551, %v552
    %v554 = vand.u32 %v553, 4294901760
    %555 = vmatpush1.msra.mxu0 %v554
    %556 = vmatprep.subr.mxu0 0.0
    %v557 = vand.u32 %v89, 4294901760
    %v558 = vsub.f32 %v89, %v557
    %v559 = vand.u32 %v558, 4294901760
    %v560 = vsub.f32 %v558, %v559
    %v561 = vand.u32 %v560, 4294901760
    %562 = vmatpush1.msra.mxu0 %v561
    %563 = vmatprep.subr.mxu0 0.0
    %v564 = vand.u32 %v90, 4294901760
    %v565 = vsub.f32 %v90, %v564
    %v566 = vand.u32 %v565, 4294901760
    %v567 = vsub.f32 %v565, %v566
    %v568 = vand.u32 %v567, 4294901760
    %569 = vmatpush1.msra.mxu0 %v568
    %570 = vmatprep.subr.mxu0 0.0
    %v571 = vand.u32 %v91, 4294901760
    %v572 = vsub.f32 %v91, %v571
    %v573 = vand.u32 %v572, 4294901760
    %v574 = vsub.f32 %v572, %v573
    %v575 = vand.u32 %v574, 4294901760
    %576 = vmatpush1.msra.mxu0 %v575
    %577 = vmatprep.subr.mxu0 0.0
    %v578 = vand.u32 %v92, 4294901760
    %v579 = vsub.f32 %v92, %v578
    %v580 = vand.u32 %v579, 4294901760
    %v581 = vsub.f32 %v579, %v580
    %v582 = vand.u32 %v581, 4294901760
    %583 = vmatpush1.msra.mxu0 %v582
    %584 = vmatprep.subr.mxu0 0.0
    %v585 = vand.u32 %v93, 4294901760
    %v586 = vsub.f32 %v93, %v585
    %v587 = vand.u32 %v586, 4294901760
    %v588 = vsub.f32 %v586, %v587
    %v589 = vand.u32 %v588, 4294901760
    %590 = vmatpush1.msra.mxu0 %v589
    %591 = vmatprep.subr.mxu0 0.0
    %v592 = vand.u32 %v94, 4294901760
    %v593 = vsub.f32 %v94, %v592
    %v594 = vand.u32 %v593, 4294901760
    %v595 = vsub.f32 %v593, %v594
    %v596 = vand.u32 %v595, 4294901760
    %597 = vmatpush1.msra.mxu0 %v596
    %598 = vmatprep.subr.mxu0 0.0
    %v599 = vand.u32 %v95, 4294901760
    %v600 = vsub.f32 %v95, %v599
    %v601 = vand.u32 %v600, 4294901760
    %v602 = vsub.f32 %v600, %v601
    %v603 = vand.u32 %v602, 4294901760
    %604 = vmatpush1.msra.mxu0 %v603
    %605 = vmatprep.subr.mxu0 0.0
    %v606 = vand.u32 %v96, 4294901760
    %v607 = vsub.f32 %v96, %v606
    %v608 = vand.u32 %v607, 4294901760
    %v609 = vsub.f32 %v607, %v608
    %v610 = vand.u32 %v609, 4294901760
    %611 = vmatpush1.msra.mxu0 %v610
    %612 = vmatprep.subr.mxu0 0.0
    %v613 = vand.u32 %v192, 4294901760
    %v614 = vsub.f32 %v192, %v613
    %v615 = vand.u32 %v614, 4294901760
    %v616 = vsub.f32 %v614, %v615
    %v617 = vand.u32 %v616, 4294901760
    %618 = vmatpush1.msra.mxu0 %v617
    %619 = vmatprep.subr.mxu0 0.0
    %620 = vmatpush1.msra.mxu0 0.0
    %621 = vmatprep.subr.mxu0 0.0
    %622 = vmatpush1.msra.mxu0 0.0
    %623 = vmatprep.subr.mxu0 0.0
    %624 = vmatpush1.msra.mxu0 0.0
    %625 = vmatprep.subr.mxu0 0.0
    %626 = vmatpush1.msra.mxu0 0.0
    %627 = vmatprep.subr.mxu0 0.0
    %628 = vmatpush1.msra.mxu0 0.0
    %629 = vmatprep.subr.mxu0 0.0
    %630 = vmatpush1.msra.mxu0 0.0
    %631 = vmatprep.subr.mxu0 0.0
    %632 = vmatpush1.msra.mxu0 0.0
    %633 = vmatprep.subr.mxu0 0.0
    %634 = vmatpush1.msra.mxu0 0.0
    %635 = vmatprep.subr.mxu0 0.0
    %636 = vmatpush1.msra.mxu0 0.0
    %637 = vmatprep.subr.mxu0 0.0
    %638 = vmatpush1.msra.mxu0 0.0
    %639 = vmatprep.subr.mxu0 0.0
    %640 = vmatpush1.msra.mxu0 0.0
    %641 = vmatprep.subr.mxu0 0.0
    %642 = vmatpush1.msra.mxu0 0.0
    %643 = vmatprep.subr.mxu0 0.0
    %644 = vmatpush1.msra.mxu0 0.0
    %645 = vmatprep.subr.mxu0 0.0
    %646 = vmatpush1.msra.mxu0 0.0
    %647 = vmatprep.subr.mxu0 0.0
    %648 = vmatpush1.msra.mxu0 0.0
    %649 = vmatprep.subr.mxu0 0.0
    %650 = vmatpush1.msra.mxu0 0.0
    %651 = vmatprep.subr.mxu0 0.0
    %652 = vmatpush1.msra.mxu0 0.0
    %653 = vmatprep.subr.mxu0 0.0
    %654 = vmatpush1.msra.mxu0 0.0
    %655 = vmatprep.subr.mxu0 0.0
    %656 = vmatpush1.msra.mxu0 0.0
    %657 = vmatprep.subr.mxu0 0.0
    %658 = vmatpush1.msra.mxu0 0.0
    %659 = vmatprep.subr.mxu0 0.0
    %660 = vmatpush1.msra.mxu0 0.0
    %661 = vmatprep.subr.mxu0 0.0
    %662 = vmatpush1.msra.mxu0 0.0
    %663 = vmatprep.mubr.f32.mxu0 0.0
    %v664 = vand.u32 %v107, 4294901760
    %665 = vmatmul.mubr.f32.gmra.mrb[0].mxu0 %v664
    %v666 = vpop.f32.mrb[0].mxu0
    %v667 = vadd.f32 %v276, %v666
    %v668 = vpop.f32.mrb[0].mxu0
    %669 = vmatprep.mubr.f32.mxu0 0.0
    %v670 = vand.u32 %v110, 4294901760
    %671 = vmatmul.mubr.f32.gmra.mrb[0].mxu0 %v670
    %v672 = vpop.f32.mrb[0].mxu0
    %v673 = vadd.f32 %v286, %v672
    %v674 = vpop.f32.mrb[0].mxu0
    %675 = vmatprep.mubr.f32.mxu0 0.0
    %v676 = vand.u32 %v113, 4294901760
    %677 = vmatmul.mubr.f32.gmra.mrb[0].mxu0 %v676
    %v678 = vpop.f32.mrb[0].mxu0
    %v679 = vadd.f32 %v296, %v678
    %v680 = vpop.f32.mrb[0].mxu0
    %681 = vmatprep.mubr.f32.mxu0 0.0
    %v682 = vand.u32 %v116, 4294901760
    %683 = vmatmul.mubr.f32.gmra.mrb[0].mxu0 %v682
    %v684 = vpop.f32.mrb[0].mxu0
    %v685 = vadd.f32 %v306, %v684
    %v686 = vpop.f32.mrb[0].mxu0
    %687 = vmatprep.mubr.f32.mxu0 0.0
    %v688 = vand.u32 %v119, 4294901760
    %689 = vmatmul.mubr.f32.gmra.mrb[0].mxu0 %v688
    %v690 = vpop.f32.mrb[0].mxu0
    %v691 = vadd.f32 %v316, %v690
    %v692 = vpop.f32.mrb[0].mxu0
    %693 = vmatprep.mubr.f32.mxu0 0.0
    %v694 = vand.u32 %v122, 4294901760
    %695 = vmatmul.mubr.f32.gmra.mrb[0].mxu0 %v694
    %v696 = vpop.f32.mrb[0].mxu0
    %v697 = vadd.f32 %v326, %v696
    %v698 = vpop.f32.mrb[0].mxu0
    %699 = vmatprep.mubr.f32.mxu0 0.0
    %v700 = vand.u32 %v125, 4294901760
    %701 = vmatmul.mubr.f32.gmra.mrb[0].mxu0 %v700
    %v702 = vpop.f32.mrb[0].mxu0
    %v703 = vadd.f32 %v336, %v702
    %v704 = vpop.f32.mrb[0].mxu0
    %705 = vmatprep.mubr.f32.mxu0 0.0
    %v706 = vand.u32 %v128, 4294901760
    %707 = vmatmul.mubr.f32.gmra.mrb[0].mxu0 %v706
    %v708 = vpop.f32.mrb[0].mxu0
    %v709 = vadd.f32 %v346, %v708
    %v710 = vpop.f32.mrb[0].mxu0
    %711 = vmatprep.mubr.f32.mxu0 0.0
    %v712 = vand.u32 %v131, 4294901760
    %713 = vmatmul.mubr.f32.gmra.mrb[0].mxu0 %v712
    %v714 = vpop.f32.mrb[0].mxu0
    %v715 = vadd.f32 %v356, %v714
    %v716 = vpop.f32.mrb[0].mxu0
    %717 = vmatprep.mubr.f32.mxu0 0.0
    %v718 = vand.u32 %v134, 4294901760
    %719 = vmatmul.mubr.f32.gmra.mrb[0].mxu0 %v718
    %v720 = vpop.f32.mrb[0].mxu0
    %v721 = vadd.f32 %v366, %v720
    %v722 = vpop.f32.mrb[0].mxu0
    %723 = vmatprep.mubr.f32.mxu0 0.0
    %v724 = vand.u32 %v137, 4294901760
    %725 = vmatmul.mubr.f32.gmra.mrb[0].mxu0 %v724
    %v726 = vpop.f32.mrb[0].mxu0
    %v727 = vadd.f32 %v376, %v726
    %v728 = vpop.f32.mrb[0].mxu0
    %729 = vmatprep.mubr.f32.mxu0 0.0
    %v730 = vand.u32 %v140, 4294901760
    %731 = vmatmul.mubr.f32.gmra.mrb[0].mxu0 %v730
    %v732 = vpop.f32.mrb[0].mxu0
    %v733 = vadd.f32 %v386, %v732
    %v734 = vpop.f32.mrb[0].mxu0
    %735 = vmatprep.mubr.f32.mxu0 0.0
    %v736 = vand.u32 %v143, 4294901760
    %737 = vmatmul.mubr.f32.gmra.mrb[0].mxu0 %v736
    %v738 = vpop.f32.mrb[0].mxu0
    %v739 = vadd.f32 %v396, %v738
    %v740 = vpop.f32.mrb[0].mxu0
    %741 = vmatprep.mubr.f32.mxu0 0.0
    %v742 = vand.u32 %v146, 4294901760
    %743 = vmatmul.mubr.f32.gmra.mrb[0].mxu0 %v742
    %v744 = vpop.f32.mrb[0].mxu0
    %v745 = vadd.f32 %v406, %v744
    %v746 = vpop.f32.mrb[0].mxu0
    %747 = vmatprep.mubr.f32.mxu0 0.0
    %v748 = vand.u32 %v149, 4294901760
    %749 = vmatmul.mubr.f32.gmra.mrb[0].mxu0 %v748
    %v750 = vpop.f32.mrb[0].mxu0
    %v751 = vadd.f32 %v416, %v750
    %v752 = vpop.f32.mrb[0].mxu0
    %753 = vmatprep.mubr.f32.mxu0 0.0
    %v754 = vand.u32 %v152, 4294901760
    %755 = vmatmul.mubr.f32.gmra.mrb[0].mxu0 %v754
    %v756 = vpop.f32.mrb[0].mxu0
    %v757 = vadd.f32 %v426, %v756
    %v758 = vpop.f32.mrb[0].mxu0
    %759 = vmatprep.mubr.f32.mxu0 0.0
    %v760 = vand.u32 %v155, 4294901760
    %761 = vmatmul.mubr.f32.gmra.mrb[0].mxu0 %v760
    %v762 = vpop.f32.mrb[0].mxu0
    %v763 = vadd.f32 %v436, %v762
    %v764 = vpop.f32.mrb[0].mxu0
    %765 = vmatprep.mubr.f32.mxu0 0.0
    %v766 = vand.u32 %v158, 4294901760
    %767 = vmatmul.mubr.f32.gmra.mrb[0].mxu0 %v766
    %v768 = vpop.f32.mrb[0].mxu0
    %v769 = vadd.f32 %v446, %v768
    %v770 = vpop.f32.mrb[0].mxu0
    %771 = vmatprep.mubr.f32.mxu0 0.0
    %v772 = vand.u32 %v161, 4294901760
    %773 = vmatmul.mubr.f32.gmra.mrb[0].mxu0 %v772
    %v774 = vpop.f32.mrb[0].mxu0
    %v775 = vadd.f32 %v456, %v774
    %v776 = vpop.f32.mrb[0].mxu0
    %777 = vmatprep.mubr.f32.mxu0 0.0
    %v778 = vand.u32 %v164, 4294901760
    %779 = vmatmul.mubr.f32.gmra.mrb[0].mxu0 %v778
    %v780 = vpop.f32.mrb[0].mxu0
    %v781 = vadd.f32 %v466, %v780
    %v782 = vpop.f32.mrb[0].mxu0
    %783 = vmatprep.mubr.f32.mxu0 0.0
    %v784 = vand.u32 %v167, 4294901760
    %785 = vmatmul.mubr.f32.gmra.mrb[0].mxu0 %v784
    %v786 = vpop.f32.mrb[0].mxu0
    %v787 = vadd.f32 %v476, %v786
    %v788 = vpop.f32.mrb[0].mxu0
    %789 = vmatprep.mubr.f32.mxu0 0.0
    %v790 = vand.u32 %v170, 4294901760
    %791 = vmatmul.mubr.f32.gmra.mrb[0].mxu0 %v790
    %v792 = vpop.f32.mrb[0].mxu0
    %v793 = vadd.f32 %v486, %v792
    %v794 = vpop.f32.mrb[0].mxu0
    %795 = vmatprep.mubr.f32.mxu0 0.0
    %v796 = vand.u32 %v173, 4294901760
    %797 = vmatmul.mubr.f32.gmra.mrb[0].mxu0 %v796
    %v798 = vpop.f32.mrb[0].mxu0
    %v799 = vadd.f32 %v496, %v798
    %v800 = vpop.f32.mrb[0].mxu0
    %801 = vmatprep.mubr.f32.mxu0 0.0
    %v802 = vand.u32 %v176, 4294901760
    %803 = vmatmul.mubr.f32.gmra.mrb[0].mxu0 %v802
    %v804 = vpop.f32.mrb[0].mxu0
    %v805 = vadd.f32 %v506, %v804
    %v806 = vpop.f32.mrb[0].mxu0
    %807 = vmatprep.mubr.f32.mxu0 0.0
    %v808 = vand.u32 %v179, 4294901760
    %809 = vmatmul.mubr.f32.gmra.mrb[0].mxu0 %v808
    %v810 = vpop.f32.mrb[0].mxu0
    %v811 = vadd.f32 %v516, %v810
    %v812 = vpop.f32.mrb[0].mxu0
    %813 = vmatprep.mubr.f32.mxu0 0.0
    %v814 = vand.u32 %v182, 4294901760
    %815 = vmatmul.mubr.f32.gmra.mrb[0].mxu0 %v814
    %v816 = vpop.f32.mrb[0].mxu0
    %v817 = vadd.f32 %v526, %v816
    %v818 = vpop.f32.mrb[0].mxu0
    %819 = vmatprep.mubr.f32.mxu0 0.0
    %v820 = vand.u32 %v185, 4294901760
    %821 = vmatmul.mubr.f32.gmra.mrb[0].mxu0 %v820
    %v822 = vpop.f32.mrb[0].mxu0
    %v823 = vadd.f32 %v536, %v822
    %v824 = vpop.f32.mrb[0].mxu0
    %825 = vmatprep.mubr.f32.mxu0 0.0
    %v826 = vand.u32 %v188, 4294901760
    %827 = vmatmul.mubr.f32.gmra.mrb[0].mxu0 %v826
    %v828 = vpop.f32.mrb[0].mxu0
    %v829 = vadd.f32 %v546, %v828
    %v830 = vpop.f32.mrb[0].mxu0
    %831 = vdwg.mxu0
    %832 = vmatprep.subr.mxu0 0.0
    %v833 = vand.u32 %v88, 4294901760
    %v834 = vsub.f32 %v88, %v833
    %835 = vmatpush1.msra.mxu0 %v834
    %836 = vmatprep.subr.mxu0 0.0
    %v837 = vand.u32 %v89, 4294901760
    %v838 = vsub.f32 %v89, %v837
    %839 = vmatpush1.msra.mxu0 %v838
    %840 = vmatprep.subr.mxu0 0.0
    %v841 = vand.u32 %v90, 4294901760
    %v842 = vsub.f32 %v90, %v841
    %843 = vmatpush1.msra.mxu0 %v842
    %844 = vmatprep.subr.mxu0 0.0
    %v845 = vand.u32 %v91, 4294901760
    %v846 = vsub.f32 %v91, %v845
    %847 = vmatpush1.msra.mxu0 %v846
    %848 = vmatprep.subr.mxu0 0.0
    %v849 = vand.u32 %v92, 4294901760
    %v850 = vsub.f32 %v92, %v849
    %851 = vmatpush1.msra.mxu0 %v850
    %852 = vmatprep.subr.mxu0 0.0
    %v853 = vand.u32 %v93, 4294901760
    %v854 = vsub.f32 %v93, %v853
    %855 = vmatpush1.msra.mxu0 %v854
    %856 = vmatprep.subr.mxu0 0.0
    %v857 = vand.u32 %v94, 4294901760
    %v858 = vsub.f32 %v94, %v857
    %859 = vmatpush1.msra.mxu0 %v858
    %860 = vmatprep.subr.mxu0 0.0
    %v861 = vand.u32 %v95, 4294901760
    %v862 = vsub.f32 %v95, %v861
    %863 = vmatpush1.msra.mxu0 %v862
    %864 = vmatprep.subr.mxu0 0.0
    %v865 = vand.u32 %v96, 4294901760
    %v866 = vsub.f32 %v96, %v865
    %867 = vmatpush1.msra.mxu0 %v866
    %868 = vmatprep.subr.mxu0 0.0
    %v869 = vand.u32 %v192, 4294901760
    %v870 = vsub.f32 %v192, %v869
    %871 = vmatpush1.msra.mxu0 %v870
    %872 = vmatprep.subr.mxu0 0.0
    %873 = vmatpush1.msra.mxu0 0.0
    %874 = vmatprep.subr.mxu0 0.0
    %875 = vmatpush1.msra.mxu0 0.0
    %876 = vmatprep.subr.mxu0 0.0
    %877 = vmatpush1.msra.mxu0 0.0
    %878 = vmatprep.subr.mxu0 0.0
    %879 = vmatpush1.msra.mxu0 0.0
    %880 = vmatprep.subr.mxu0 0.0
    %881 = vmatpush1.msra.mxu0 0.0
    %882 = vmatprep.subr.mxu0 0.0
    %883 = vmatpush1.msra.mxu0 0.0
    %884 = vmatprep.subr.mxu0 0.0
    %885 = vmatpush1.msra.mxu0 0.0
    %886 = vmatprep.subr.mxu0 0.0
    %887 = vmatpush1.msra.mxu0 0.0
    %888 = vmatprep.subr.mxu0 0.0
    %889 = vmatpush1.msra.mxu0 0.0
    %890 = vmatprep.subr.mxu0 0.0
    %891 = vmatpush1.msra.mxu0 0.0
    %892 = vmatprep.subr.mxu0 0.0
    %893 = vmatpush1.msra.mxu0 0.0
    %894 = vmatprep.subr.mxu0 0.0
    %895 = vmatpush1.msra.mxu0 0.0
    %896 = vmatprep.subr.mxu0 0.0
    %897 = vmatpush1.msra.mxu0 0.0
    %898 = vmatprep.subr.mxu0 0.0
    %899 = vmatpush1.msra.mxu0 0.0
    %900 = vmatprep.subr.mxu0 0.0
    %901 = vmatpush1.msra.mxu0 0.0
    %902 = vmatprep.subr.mxu0 0.0
    %903 = vmatpush1.msra.mxu0 0.0
    %904 = vmatprep.subr.mxu0 0.0
    %905 = vmatpush1.msra.mxu0 0.0
    %906 = vmatprep.subr.mxu0 0.0
    %907 = vmatpush1.msra.mxu0 0.0
    %908 = vmatprep.subr.mxu0 0.0
    %909 = vmatpush1.msra.mxu0 0.0
    %910 = vmatprep.subr.mxu0 0.0
    %911 = vmatpush1.msra.mxu0 0.0
    %912 = vmatprep.subr.mxu0 0.0
    %913 = vmatpush1.msra.mxu0 0.0
    %914 = vmatprep.subr.mxu0 0.0
    %915 = vmatpush1.msra.mxu0 0.0
    %916 = vmatprep.mubr.f32.mxu0 0.0
    %v917 = vand.u32 %v107, 4294901760
    %v918 = vsub.f32 %v107, %v917
    %919 = vmatmul.mubr.f32.gmra.mrb[0].mxu0 %v918
    %v920 = vpop.f32.mrb[0].mxu0
    %v921 = vadd.f32 %v667, %v920
    %v922 = vpop.f32.mrb[0].mxu0
    %923 = vmatprep.mubr.f32.mxu0 0.0
    %v924 = vand.u32 %v110, 4294901760
    %v925 = vsub.f32 %v110, %v924
    %926 = vmatmul.mubr.f32.gmra.mrb[0].mxu0 %v925
    %v927 = vpop.f32.mrb[0].mxu0
    %v928 = vadd.f32 %v673, %v927
    %v929 = vpop.f32.mrb[0].mxu0
    %930 = vmatprep.mubr.f32.mxu0 0.0
    %v931 = vand.u32 %v113, 4294901760
    %v932 = vsub.f32 %v113, %v931
    %933 = vmatmul.mubr.f32.gmra.mrb[0].mxu0 %v932
    %v934 = vpop.f32.mrb[0].mxu0
    %v935 = vadd.f32 %v679, %v934
    %v936 = vpop.f32.mrb[0].mxu0
    %937 = vmatprep.mubr.f32.mxu0 0.0
    %v938 = vand.u32 %v116, 4294901760
    %v939 = vsub.f32 %v116, %v938
    %940 = vmatmul.mubr.f32.gmra.mrb[0].mxu0 %v939
    %v941 = vpop.f32.mrb[0].mxu0
    %v942 = vadd.f32 %v685, %v941
    %v943 = vpop.f32.mrb[0].mxu0
    %944 = vmatprep.mubr.f32.mxu0 0.0
    %v945 = vand.u32 %v119, 4294901760
    %v946 = vsub.f32 %v119, %v945
    %947 = vmatmul.mubr.f32.gmra.mrb[0].mxu0 %v946
    %v948 = vpop.f32.mrb[0].mxu0
    %v949 = vadd.f32 %v691, %v948
    %v950 = vpop.f32.mrb[0].mxu0
    %951 = vmatprep.mubr.f32.mxu0 0.0
    %v952 = vand.u32 %v122, 4294901760
    %v953 = vsub.f32 %v122, %v952
    %954 = vmatmul.mubr.f32.gmra.mrb[0].mxu0 %v953
    %v955 = vpop.f32.mrb[0].mxu0
    %v956 = vadd.f32 %v697, %v955
    %v957 = vpop.f32.mrb[0].mxu0
    %958 = vmatprep.mubr.f32.mxu0 0.0
    %v959 = vand.u32 %v125, 4294901760
    %v960 = vsub.f32 %v125, %v959
    %961 = vmatmul.mubr.f32.gmra.mrb[0].mxu0 %v960
    %v962 = vpop.f32.mrb[0].mxu0
    %v963 = vadd.f32 %v703, %v962
    %v964 = vpop.f32.mrb[0].mxu0
    %965 = vmatprep.mubr.f32.mxu0 0.0
    %v966 = vand.u32 %v128, 4294901760
    %v967 = vsub.f32 %v128, %v966
    %968 = vmatmul.mubr.f32.gmra.mrb[0].mxu0 %v967
    %v969 = vpop.f32.mrb[0].mxu0
    %v970 = vadd.f32 %v709, %v969
    %v971 = vpop.f32.mrb[0].mxu0
    %972 = vmatprep.mubr.f32.mxu0 0.0
    %v973 = vand.u32 %v131, 4294901760
    %v974 = vsub.f32 %v131, %v973
    %975 = vmatmul.mubr.f32.gmra.mrb[0].mxu0 %v974
    %v976 = vpop.f32.mrb[0].mxu0
    %v977 = vadd.f32 %v715, %v976
    %v978 = vpop.f32.mrb[0].mxu0
    %979 = vmatprep.mubr.f32.mxu0 0.0
    %v980 = vand.u32 %v134, 4294901760
    %v981 = vsub.f32 %v134, %v980
    %982 = vmatmul.mubr.f32.gmra.mrb[0].mxu0 %v981
    %v983 = vpop.f32.mrb[0].mxu0
    %v984 = vadd.f32 %v721, %v983
    %v985 = vpop.f32.mrb[0].mxu0
    %986 = vmatprep.mubr.f32.mxu0 0.0
    %v987 = vand.u32 %v137, 4294901760
    %v988 = vsub.f32 %v137, %v987
    %989 = vmatmul.mubr.f32.gmra.mrb[0].mxu0 %v988
    %v990 = vpop.f32.mrb[0].mxu0
    %v991 = vadd.f32 %v727, %v990
    %v992 = vpop.f32.mrb[0].mxu0
    %993 = vmatprep.mubr.f32.mxu0 0.0
    %v994 = vand.u32 %v140, 4294901760
    %v995 = vsub.f32 %v140, %v994
    %996 = vmatmul.mubr.f32.gmra.mrb[0].mxu0 %v995
    %v997 = vpop.f32.mrb[0].mxu0
    %v998 = vadd.f32 %v733, %v997
    %v999 = vpop.f32.mrb[0].mxu0
    %1000 = vmatprep.mubr.f32.mxu0 0.0
    %v1001 = vand.u32 %v143, 4294901760
    %v1002 = vsub.f32 %v143, %v1001
    %1003 = vmatmul.mubr.f32.gmra.mrb[0].mxu0 %v1002
    %v1004 = vpop.f32.mrb[0].mxu0
    %v1005 = vadd.f32 %v739, %v1004
    %v1006 = vpop.f32.mrb[0].mxu0
    %1007 = vmatprep.mubr.f32.mxu0 0.0
    %v1008 = vand.u32 %v146, 4294901760
    %v1009 = vsub.f32 %v146, %v1008
    %1010 = vmatmul.mubr.f32.gmra.mrb[0].mxu0 %v1009
    %v1011 = vpop.f32.mrb[0].mxu0
    %v1012 = vadd.f32 %v745, %v1011
    %v1013 = vpop.f32.mrb[0].mxu0
    %1014 = vmatprep.mubr.f32.mxu0 0.0
    %v1015 = vand.u32 %v149, 4294901760
    %v1016 = vsub.f32 %v149, %v1015
    %1017 = vmatmul.mubr.f32.gmra.mrb[0].mxu0 %v1016
    %v1018 = vpop.f32.mrb[0].mxu0
    %v1019 = vadd.f32 %v751, %v1018
    %v1020 = vpop.f32.mrb[0].mxu0
    %1021 = vmatprep.mubr.f32.mxu0 0.0
    %v1022 = vand.u32 %v152, 4294901760
    %v1023 = vsub.f32 %v152, %v1022
    %1024 = vmatmul.mubr.f32.gmra.mrb[0].mxu0 %v1023
    %v1025 = vpop.f32.mrb[0].mxu0
    %v1026 = vadd.f32 %v757, %v1025
    %v1027 = vpop.f32.mrb[0].mxu0
    %1028 = vmatprep.mubr.f32.mxu0 0.0
    %v1029 = vand.u32 %v155, 4294901760
    %v1030 = vsub.f32 %v155, %v1029
    %1031 = vmatmul.mubr.f32.gmra.mrb[0].mxu0 %v1030
    %v1032 = vpop.f32.mrb[0].mxu0
    %v1033 = vadd.f32 %v763, %v1032
    %v1034 = vpop.f32.mrb[0].mxu0
    %1035 = vmatprep.mubr.f32.mxu0 0.0
    %v1036 = vand.u32 %v158, 4294901760
    %v1037 = vsub.f32 %v158, %v1036
    %1038 = vmatmul.mubr.f32.gmra.mrb[0].mxu0 %v1037
    %v1039 = vpop.f32.mrb[0].mxu0
    %v1040 = vadd.f32 %v769, %v1039
    %v1041 = vpop.f32.mrb[0].mxu0
    %1042 = vmatprep.mubr.f32.mxu0 0.0
    %v1043 = vand.u32 %v161, 4294901760
    %v1044 = vsub.f32 %v161, %v1043
    %1045 = vmatmul.mubr.f32.gmra.mrb[0].mxu0 %v1044
    %v1046 = vpop.f32.mrb[0].mxu0
    %v1047 = vadd.f32 %v775, %v1046
    %v1048 = vpop.f32.mrb[0].mxu0
    %1049 = vmatprep.mubr.f32.mxu0 0.0
    %v1050 = vand.u32 %v164, 4294901760
    %v1051 = vsub.f32 %v164, %v1050
    %1052 = vmatmul.mubr.f32.gmra.mrb[0].mxu0 %v1051
    %v1053 = vpop.f32.mrb[0].mxu0
    %v1054 = vadd.f32 %v781, %v1053
    %v1055 = vpop.f32.mrb[0].mxu0
    %1056 = vmatprep.mubr.f32.mxu0 0.0
    %v1057 = vand.u32 %v167, 4294901760
    %v1058 = vsub.f32 %v167, %v1057
    %1059 = vmatmul.mubr.f32.gmra.mrb[0].mxu0 %v1058
    %v1060 = vpop.f32.mrb[0].mxu0
    %v1061 = vadd.f32 %v787, %v1060
    %v1062 = vpop.f32.mrb[0].mxu0
    %1063 = vmatprep.mubr.f32.mxu0 0.0
    %v1064 = vand.u32 %v170, 4294901760
    %v1065 = vsub.f32 %v170, %v1064
    %1066 = vmatmul.mubr.f32.gmra.mrb[0].mxu0 %v1065
    %v1067 = vpop.f32.mrb[0].mxu0
    %v1068 = vadd.f32 %v793, %v1067
    %v1069 = vpop.f32.mrb[0].mxu0
    %1070 = vmatprep.mubr.f32.mxu0 0.0
    %v1071 = vand.u32 %v173, 4294901760
    %v1072 = vsub.f32 %v173, %v1071
    %1073 = vmatmul.mubr.f32.gmra.mrb[0].mxu0 %v1072
    %v1074 = vpop.f32.mrb[0].mxu0
    %v1075 = vadd.f32 %v799, %v1074
    %v1076 = vpop.f32.mrb[0].mxu0
    %1077 = vmatprep.mubr.f32.mxu0 0.0
    %v1078 = vand.u32 %v176, 4294901760
    %v1079 = vsub.f32 %v176, %v1078
    %1080 = vmatmul.mubr.f32.gmra.mrb[0].mxu0 %v1079
    %v1081 = vpop.f32.mrb[0].mxu0
    %v1082 = vadd.f32 %v805, %v1081
    %v1083 = vpop.f32.mrb[0].mxu0
    %1084 = vmatprep.mubr.f32.mxu0 0.0
    %v1085 = vand.u32 %v179, 4294901760
    %v1086 = vsub.f32 %v179, %v1085
    %1087 = vmatmul.mubr.f32.gmra.mrb[0].mxu0 %v1086
    %v1088 = vpop.f32.mrb[0].mxu0
    %v1089 = vadd.f32 %v811, %v1088
    %v1090 = vpop.f32.mrb[0].mxu0
    %1091 = vmatprep.mubr.f32.mxu0 0.0
    %v1092 = vand.u32 %v182, 4294901760
    %v1093 = vsub.f32 %v182, %v1092
    %1094 = vmatmul.mubr.f32.gmra.mrb[0].mxu0 %v1093
    %v1095 = vpop.f32.mrb[0].mxu0
    %v1096 = vadd.f32 %v817, %v1095
    %v1097 = vpop.f32.mrb[0].mxu0
    %1098 = vmatprep.mubr.f32.mxu0 0.0
    %v1099 = vand.u32 %v185, 4294901760
    %v1100 = vsub.f32 %v185, %v1099
    %1101 = vmatmul.mubr.f32.gmra.mrb[0].mxu0 %v1100
    %v1102 = vpop.f32.mrb[0].mxu0
    %v1103 = vadd.f32 %v823, %v1102
    %v1104 = vpop.f32.mrb[0].mxu0
    %1105 = vmatprep.mubr.f32.mxu0 0.0
    %v1106 = vand.u32 %v188, 4294901760
    %v1107 = vsub.f32 %v188, %v1106
    %1108 = vmatmul.mubr.f32.gmra.mrb[0].mxu0 %v1107
    %v1109 = vpop.f32.mrb[0].mxu0
    %v1110 = vadd.f32 %v829, %v1109
    %v1111 = vpop.f32.mrb[0].mxu0
    %1112 = vdwg.mxu0
    %1113 = vmatprep.subr.mxu0 0.0
    %v1114 = vand.u32 %v88, 4294901760
    %1115 = vmatpush1.msra.mxu0 %v1114
    %1116 = vmatprep.subr.mxu0 0.0
    %v1117 = vand.u32 %v89, 4294901760
    %1118 = vmatpush1.msra.mxu0 %v1117
    %1119 = vmatprep.subr.mxu0 0.0
    %v1120 = vand.u32 %v90, 4294901760
    %1121 = vmatpush1.msra.mxu0 %v1120
    %1122 = vmatprep.subr.mxu0 0.0
    %v1123 = vand.u32 %v91, 4294901760
    %1124 = vmatpush1.msra.mxu0 %v1123
    %1125 = vmatprep.subr.mxu0 0.0
    %v1126 = vand.u32 %v92, 4294901760
    %1127 = vmatpush1.msra.mxu0 %v1126
    %1128 = vmatprep.subr.mxu0 0.0
    %v1129 = vand.u32 %v93, 4294901760
    %1130 = vmatpush1.msra.mxu0 %v1129
    %1131 = vmatprep.subr.mxu0 0.0
    %v1132 = vand.u32 %v94, 4294901760
    %1133 = vmatpush1.msra.mxu0 %v1132
    %1134 = vmatprep.subr.mxu0 0.0
    %v1135 = vand.u32 %v95, 4294901760
    %1136 = vmatpush1.msra.mxu0 %v1135
    %1137 = vmatprep.subr.mxu0 0.0
    %v1138 = vand.u32 %v96, 4294901760
    %1139 = vmatpush1.msra.mxu0 %v1138
    %1140 = vmatprep.subr.mxu0 0.0
    %v1141 = vand.u32 %v192, 4294901760
    %1142 = vmatpush1.msra.mxu0 %v1141
    %1143 = vmatprep.subr.mxu0 0.0
    %1144 = vmatpush1.msra.mxu0 0.0
    %1145 = vmatprep.subr.mxu0 0.0
    %1146 = vmatpush1.msra.mxu0 0.0
    %1147 = vmatprep.subr.mxu0 0.0
    %1148 = vmatpush1.msra.mxu0 0.0
    %1149 = vmatprep.subr.mxu0 0.0
    %1150 = vmatpush1.msra.mxu0 0.0
    %1151 = vmatprep.subr.mxu0 0.0
    %1152 = vmatpush1.msra.mxu0 0.0
    %1153 = vmatprep.subr.mxu0 0.0
    %1154 = vmatpush1.msra.mxu0 0.0
    %1155 = vmatprep.subr.mxu0 0.0
    %1156 = vmatpush1.msra.mxu0 0.0
    %1157 = vmatprep.subr.mxu0 0.0
    %1158 = vmatpush1.msra.mxu0 0.0
    %1159 = vmatprep.subr.mxu0 0.0
    %1160 = vmatpush1.msra.mxu0 0.0
    %1161 = vmatprep.subr.mxu0 0.0
    %1162 = vmatpush1.msra.mxu0 0.0
    %1163 = vmatprep.subr.mxu0 0.0
    %1164 = vmatpush1.msra.mxu0 0.0
    %1165 = vmatprep.subr.mxu0 0.0
    %1166 = vmatpush1.msra.mxu0 0.0
    %1167 = vmatprep.subr.mxu0 0.0
    %1168 = vmatpush1.msra.mxu0 0.0
    %1169 = vmatprep.subr.mxu0 0.0
    %1170 = vmatpush1.msra.mxu0 0.0
    %1171 = vmatprep.subr.mxu0 0.0
    %1172 = vmatpush1.msra.mxu0 0.0
    %1173 = vmatprep.subr.mxu0 0.0
    %1174 = vmatpush1.msra.mxu0 0.0
    %1175 = vmatprep.subr.mxu0 0.0
    %1176 = vmatpush1.msra.mxu0 0.0
    %1177 = vmatprep.subr.mxu0 0.0
    %1178 = vmatpush1.msra.mxu0 0.0
    %1179 = vmatprep.subr.mxu0 0.0
    %1180 = vmatpush1.msra.mxu0 0.0
    %1181 = vmatprep.subr.mxu0 0.0
    %1182 = vmatpush1.msra.mxu0 0.0
    %1183 = vmatprep.subr.mxu0 0.0
    %1184 = vmatpush1.msra.mxu0 0.0
    %1185 = vmatprep.subr.mxu0 0.0
    %1186 = vmatpush1.msra.mxu0 0.0
    %1187 = vmatprep.mubr.f32.mxu0 0.0
    %v1188 = vand.u32 %v107, 4294901760
    %v1189 = vsub.f32 %v107, %v1188
    %v1190 = vand.u32 %v1189, 4294901760
    %1191 = vmatmul.mubr.f32.gmra.mrb[0].mxu0 %v1190
    %v1192 = vpop.f32.mrb[0].mxu0
    %v1193 = vadd.f32 %v921, %v1192
    %v1194 = vpop.f32.mrb[0].mxu0
    %1195 = vmatprep.mubr.f32.mxu0 0.0
    %v1196 = vand.u32 %v110, 4294901760
    %v1197 = vsub.f32 %v110, %v1196
    %v1198 = vand.u32 %v1197, 4294901760
    %1199 = vmatmul.mubr.f32.gmra.mrb[0].mxu0 %v1198
    %v1200 = vpop.f32.mrb[0].mxu0
    %v1201 = vadd.f32 %v928, %v1200
    %v1202 = vpop.f32.mrb[0].mxu0
    %1203 = vmatprep.mubr.f32.mxu0 0.0
    %v1204 = vand.u32 %v113, 4294901760
    %v1205 = vsub.f32 %v113, %v1204
    %v1206 = vand.u32 %v1205, 4294901760
    %1207 = vmatmul.mubr.f32.gmra.mrb[0].mxu0 %v1206
    %v1208 = vpop.f32.mrb[0].mxu0
    %v1209 = vadd.f32 %v935, %v1208
    %v1210 = vpop.f32.mrb[0].mxu0
    %1211 = vmatprep.mubr.f32.mxu0 0.0
    %v1212 = vand.u32 %v116, 4294901760
    %v1213 = vsub.f32 %v116, %v1212
    %v1214 = vand.u32 %v1213, 4294901760
    %1215 = vmatmul.mubr.f32.gmra.mrb[0].mxu0 %v1214
    %v1216 = vpop.f32.mrb[0].mxu0
    %v1217 = vadd.f32 %v942, %v1216
    %v1218 = vpop.f32.mrb[0].mxu0
    %1219 = vmatprep.mubr.f32.mxu0 0.0
    %v1220 = vand.u32 %v119, 4294901760
    %v1221 = vsub.f32 %v119, %v1220
    %v1222 = vand.u32 %v1221, 4294901760
    %1223 = vmatmul.mubr.f32.gmra.mrb[0].mxu0 %v1222
    %v1224 = vpop.f32.mrb[0].mxu0
    %v1225 = vadd.f32 %v949, %v1224
    %v1226 = vpop.f32.mrb[0].mxu0
    %1227 = vmatprep.mubr.f32.mxu0 0.0
    %v1228 = vand.u32 %v122, 4294901760
    %v1229 = vsub.f32 %v122, %v1228
    %v1230 = vand.u32 %v1229, 4294901760
    %1231 = vmatmul.mubr.f32.gmra.mrb[0].mxu0 %v1230
    %v1232 = vpop.f32.mrb[0].mxu0
    %v1233 = vadd.f32 %v956, %v1232
    %v1234 = vpop.f32.mrb[0].mxu0
    %1235 = vmatprep.mubr.f32.mxu0 0.0
    %v1236 = vand.u32 %v125, 4294901760
    %v1237 = vsub.f32 %v125, %v1236
    %v1238 = vand.u32 %v1237, 4294901760
    %1239 = vmatmul.mubr.f32.gmra.mrb[0].mxu0 %v1238
    %v1240 = vpop.f32.mrb[0].mxu0
    %v1241 = vadd.f32 %v963, %v1240
    %v1242 = vpop.f32.mrb[0].mxu0
    %1243 = vmatprep.mubr.f32.mxu0 0.0
    %v1244 = vand.u32 %v128, 4294901760
    %v1245 = vsub.f32 %v128, %v1244
    %v1246 = vand.u32 %v1245, 4294901760
    %1247 = vmatmul.mubr.f32.gmra.mrb[0].mxu0 %v1246
    %v1248 = vpop.f32.mrb[0].mxu0
    %v1249 = vadd.f32 %v970, %v1248
    %v1250 = vpop.f32.mrb[0].mxu0
    %1251 = vmatprep.mubr.f32.mxu0 0.0
    %v1252 = vand.u32 %v131, 4294901760
    %v1253 = vsub.f32 %v131, %v1252
    %v1254 = vand.u32 %v1253, 4294901760
    %1255 = vmatmul.mubr.f32.gmra.mrb[0].mxu0 %v1254
    %v1256 = vpop.f32.mrb[0].mxu0
    %v1257 = vadd.f32 %v977, %v1256
    %v1258 = vpop.f32.mrb[0].mxu0
    %1259 = vmatprep.mubr.f32.mxu0 0.0
    %v1260 = vand.u32 %v134, 4294901760
    %v1261 = vsub.f32 %v134, %v1260
    %v1262 = vand.u32 %v1261, 4294901760
    %1263 = vmatmul.mubr.f32.gmra.mrb[0].mxu0 %v1262
    %v1264 = vpop.f32.mrb[0].mxu0
    %v1265 = vadd.f32 %v984, %v1264
    %v1266 = vpop.f32.mrb[0].mxu0
    %1267 = vmatprep.mubr.f32.mxu0 0.0
    %v1268 = vand.u32 %v137, 4294901760
    %v1269 = vsub.f32 %v137, %v1268
    %v1270 = vand.u32 %v1269, 4294901760
    %1271 = vmatmul.mubr.f32.gmra.mrb[0].mxu0 %v1270
    %v1272 = vpop.f32.mrb[0].mxu0
    %v1273 = vadd.f32 %v991, %v1272
    %v1274 = vpop.f32.mrb[0].mxu0
    %1275 = vmatprep.mubr.f32.mxu0 0.0
    %v1276 = vand.u32 %v140, 4294901760
    %v1277 = vsub.f32 %v140, %v1276
    %v1278 = vand.u32 %v1277, 4294901760
    %1279 = vmatmul.mubr.f32.gmra.mrb[0].mxu0 %v1278
    %v1280 = vpop.f32.mrb[0].mxu0
    %v1281 = vadd.f32 %v998, %v1280
    %v1282 = vpop.f32.mrb[0].mxu0
    %1283 = vmatprep.mubr.f32.mxu0 0.0
    %v1284 = vand.u32 %v143, 4294901760
    %v1285 = vsub.f32 %v143, %v1284
    %v1286 = vand.u32 %v1285, 4294901760
    %1287 = vmatmul.mubr.f32.gmra.mrb[0].mxu0 %v1286
    %v1288 = vpop.f32.mrb[0].mxu0
    %v1289 = vadd.f32 %v1005, %v1288
    %v1290 = vpop.f32.mrb[0].mxu0
    %1291 = vmatprep.mubr.f32.mxu0 0.0
    %v1292 = vand.u32 %v146, 4294901760
    %v1293 = vsub.f32 %v146, %v1292
    %v1294 = vand.u32 %v1293, 4294901760
    %1295 = vmatmul.mubr.f32.gmra.mrb[0].mxu0 %v1294
    %v1296 = vpop.f32.mrb[0].mxu0
    %v1297 = vadd.f32 %v1012, %v1296
    %v1298 = vpop.f32.mrb[0].mxu0
    %1299 = vmatprep.mubr.f32.mxu0 0.0
    %v1300 = vand.u32 %v149, 4294901760
    %v1301 = vsub.f32 %v149, %v1300
    %v1302 = vand.u32 %v1301, 4294901760
    %1303 = vmatmul.mubr.f32.gmra.mrb[0].mxu0 %v1302
    %v1304 = vpop.f32.mrb[0].mxu0
    %v1305 = vadd.f32 %v1019, %v1304
    %v1306 = vpop.f32.mrb[0].mxu0
    %1307 = vmatprep.mubr.f32.mxu0 0.0
    %v1308 = vand.u32 %v152, 4294901760
    %v1309 = vsub.f32 %v152, %v1308
    %v1310 = vand.u32 %v1309, 4294901760
    %1311 = vmatmul.mubr.f32.gmra.mrb[0].mxu0 %v1310
    %v1312 = vpop.f32.mrb[0].mxu0
    %v1313 = vadd.f32 %v1026, %v1312
    %v1314 = vpop.f32.mrb[0].mxu0
    %1315 = vmatprep.mubr.f32.mxu0 0.0
    %v1316 = vand.u32 %v155, 4294901760
    %v1317 = vsub.f32 %v155, %v1316
    %v1318 = vand.u32 %v1317, 4294901760
    %1319 = vmatmul.mubr.f32.gmra.mrb[0].mxu0 %v1318
    %v1320 = vpop.f32.mrb[0].mxu0
    %v1321 = vadd.f32 %v1033, %v1320
    %v1322 = vpop.f32.mrb[0].mxu0
    %1323 = vmatprep.mubr.f32.mxu0 0.0
    %v1324 = vand.u32 %v158, 4294901760
    %v1325 = vsub.f32 %v158, %v1324
    %v1326 = vand.u32 %v1325, 4294901760
    %1327 = vmatmul.mubr.f32.gmra.mrb[0].mxu0 %v1326
    %v1328 = vpop.f32.mrb[0].mxu0
    %v1329 = vadd.f32 %v1040, %v1328
    %v1330 = vpop.f32.mrb[0].mxu0
    %1331 = vmatprep.mubr.f32.mxu0 0.0
    %v1332 = vand.u32 %v161, 4294901760
    %v1333 = vsub.f32 %v161, %v1332
    %v1334 = vand.u32 %v1333, 4294901760
    %1335 = vmatmul.mubr.f32.gmra.mrb[0].mxu0 %v1334
    %v1336 = vpop.f32.mrb[0].mxu0
    %v1337 = vadd.f32 %v1047, %v1336
    %v1338 = vpop.f32.mrb[0].mxu0
    %1339 = vmatprep.mubr.f32.mxu0 0.0
    %v1340 = vand.u32 %v164, 4294901760
    %v1341 = vsub.f32 %v164, %v1340
    %v1342 = vand.u32 %v1341, 4294901760
    %1343 = vmatmul.mubr.f32.gmra.mrb[0].mxu0 %v1342
    %v1344 = vpop.f32.mrb[0].mxu0
    %v1345 = vadd.f32 %v1054, %v1344
    %v1346 = vpop.f32.mrb[0].mxu0
    %1347 = vmatprep.mubr.f32.mxu0 0.0
    %v1348 = vand.u32 %v167, 4294901760
    %v1349 = vsub.f32 %v167, %v1348
    %v1350 = vand.u32 %v1349, 4294901760
    %1351 = vmatmul.mubr.f32.gmra.mrb[0].mxu0 %v1350
    %v1352 = vpop.f32.mrb[0].mxu0
    %v1353 = vadd.f32 %v1061, %v1352
    %v1354 = vpop.f32.mrb[0].mxu0
    %1355 = vmatprep.mubr.f32.mxu0 0.0
    %v1356 = vand.u32 %v170, 4294901760
    %v1357 = vsub.f32 %v170, %v1356
    %v1358 = vand.u32 %v1357, 4294901760
    %1359 = vmatmul.mubr.f32.gmra.mrb[0].mxu0 %v1358
    %v1360 = vpop.f32.mrb[0].mxu0
    %v1361 = vadd.f32 %v1068, %v1360
    %v1362 = vpop.f32.mrb[0].mxu0
    %1363 = vmatprep.mubr.f32.mxu0 0.0
    %v1364 = vand.u32 %v173, 4294901760
    %v1365 = vsub.f32 %v173, %v1364
    %v1366 = vand.u32 %v1365, 4294901760
    %1367 = vmatmul.mubr.f32.gmra.mrb[0].mxu0 %v1366
    %v1368 = vpop.f32.mrb[0].mxu0
    %v1369 = vadd.f32 %v1075, %v1368
    %v1370 = vpop.f32.mrb[0].mxu0
    %1371 = vmatprep.mubr.f32.mxu0 0.0
    %v1372 = vand.u32 %v176, 4294901760
    %v1373 = vsub.f32 %v176, %v1372
    %v1374 = vand.u32 %v1373, 4294901760
    %1375 = vmatmul.mubr.f32.gmra.mrb[0].mxu0 %v1374
    %v1376 = vpop.f32.mrb[0].mxu0
    %v1377 = vadd.f32 %v1082, %v1376
    %v1378 = vpop.f32.mrb[0].mxu0
    %1379 = vmatprep.mubr.f32.mxu0 0.0
    %v1380 = vand.u32 %v179, 4294901760
    %v1381 = vsub.f32 %v179, %v1380
    %v1382 = vand.u32 %v1381, 4294901760
    %1383 = vmatmul.mubr.f32.gmra.mrb[0].mxu0 %v1382
    %v1384 = vpop.f32.mrb[0].mxu0
    %v1385 = vadd.f32 %v1089, %v1384
    %v1386 = vpop.f32.mrb[0].mxu0
    %1387 = vmatprep.mubr.f32.mxu0 0.0
    %v1388 = vand.u32 %v182, 4294901760
    %v1389 = vsub.f32 %v182, %v1388
    %v1390 = vand.u32 %v1389, 4294901760
    %1391 = vmatmul.mubr.f32.gmra.mrb[0].mxu0 %v1390
    %v1392 = vpop.f32.mrb[0].mxu0
    %v1393 = vadd.f32 %v1096, %v1392
    %v1394 = vpop.f32.mrb[0].mxu0
    %1395 = vmatprep.mubr.f32.mxu0 0.0
    %v1396 = vand.u32 %v185, 4294901760
    %v1397 = vsub.f32 %v185, %v1396
    %v1398 = vand.u32 %v1397, 4294901760
    %1399 = vmatmul.mubr.f32.gmra.mrb[0].mxu0 %v1398
    %v1400 = vpop.f32.mrb[0].mxu0
    %v1401 = vadd.f32 %v1103, %v1400
    %v1402 = vpop.f32.mrb[0].mxu0
    %1403 = vmatprep.mubr.f32.mxu0 0.0
    %v1404 = vand.u32 %v188, 4294901760
    %v1405 = vsub.f32 %v188, %v1404
    %v1406 = vand.u32 %v1405, 4294901760
    %1407 = vmatmul.mubr.f32.gmra.mrb[0].mxu0 %v1406
    %v1408 = vpop.f32.mrb[0].mxu0
    %v1409 = vadd.f32 %v1110, %v1408
    %v1410 = vpop.f32.mrb[0].mxu0
    %1411 = vdwg.mxu0
    %1412 = vmatprep.subr.mxu0 0.0
    %v1413 = vand.u32 %v88, 4294901760
    %v1414 = vsub.f32 %v88, %v1413
    %v1415 = vand.u32 %v1414, 4294901760
    %1416 = vmatpush1.msra.mxu0 %v1415
    %1417 = vmatprep.subr.mxu0 0.0
    %v1418 = vand.u32 %v89, 4294901760
    %v1419 = vsub.f32 %v89, %v1418
    %v1420 = vand.u32 %v1419, 4294901760
    %1421 = vmatpush1.msra.mxu0 %v1420
    %1422 = vmatprep.subr.mxu0 0.0
    %v1423 = vand.u32 %v90, 4294901760
    %v1424 = vsub.f32 %v90, %v1423
    %v1425 = vand.u32 %v1424, 4294901760
    %1426 = vmatpush1.msra.mxu0 %v1425
    %1427 = vmatprep.subr.mxu0 0.0
    %v1428 = vand.u32 %v91, 4294901760
    %v1429 = vsub.f32 %v91, %v1428
    %v1430 = vand.u32 %v1429, 4294901760
    %1431 = vmatpush1.msra.mxu0 %v1430
    %1432 = vmatprep.subr.mxu0 0.0
    %v1433 = vand.u32 %v92, 4294901760
    %v1434 = vsub.f32 %v92, %v1433
    %v1435 = vand.u32 %v1434, 4294901760
    %1436 = vmatpush1.msra.mxu0 %v1435
    %1437 = vmatprep.subr.mxu0 0.0
    %v1438 = vand.u32 %v93, 4294901760
    %v1439 = vsub.f32 %v93, %v1438
    %v1440 = vand.u32 %v1439, 4294901760
    %1441 = vmatpush1.msra.mxu0 %v1440
    %1442 = vmatprep.subr.mxu0 0.0
    %v1443 = vand.u32 %v94, 4294901760
    %v1444 = vsub.f32 %v94, %v1443
    %v1445 = vand.u32 %v1444, 4294901760
    %1446 = vmatpush1.msra.mxu0 %v1445
    %1447 = vmatprep.subr.mxu0 0.0
    %v1448 = vand.u32 %v95, 4294901760
    %v1449 = vsub.f32 %v95, %v1448
    %v1450 = vand.u32 %v1449, 4294901760
    %1451 = vmatpush1.msra.mxu0 %v1450
    %1452 = vmatprep.subr.mxu0 0.0
    %v1453 = vand.u32 %v96, 4294901760
    %v1454 = vsub.f32 %v96, %v1453
    %v1455 = vand.u32 %v1454, 4294901760
    %1456 = vmatpush1.msra.mxu0 %v1455
    %1457 = vmatprep.subr.mxu0 0.0
    %v1458 = vand.u32 %v192, 4294901760
    %v1459 = vsub.f32 %v192, %v1458
    %v1460 = vand.u32 %v1459, 4294901760
    %1461 = vmatpush1.msra.mxu0 %v1460
    %1462 = vmatprep.subr.mxu0 0.0
    %1463 = vmatpush1.msra.mxu0 0.0
    %1464 = vmatprep.subr.mxu0 0.0
    %1465 = vmatpush1.msra.mxu0 0.0
    %1466 = vmatprep.subr.mxu0 0.0
    %1467 = vmatpush1.msra.mxu0 0.0
    %1468 = vmatprep.subr.mxu0 0.0
    %1469 = vmatpush1.msra.mxu0 0.0
    %1470 = vmatprep.subr.mxu0 0.0
    %1471 = vmatpush1.msra.mxu0 0.0
    %1472 = vmatprep.subr.mxu0 0.0
    %1473 = vmatpush1.msra.mxu0 0.0
    %1474 = vmatprep.subr.mxu0 0.0
    %1475 = vmatpush1.msra.mxu0 0.0
    %1476 = vmatprep.subr.mxu0 0.0
    %1477 = vmatpush1.msra.mxu0 0.0
    %1478 = vmatprep.subr.mxu0 0.0
    %1479 = vmatpush1.msra.mxu0 0.0
    %1480 = vmatprep.subr.mxu0 0.0
    %1481 = vmatpush1.msra.mxu0 0.0
    %1482 = vmatprep.subr.mxu0 0.0
    %1483 = vmatpush1.msra.mxu0 0.0
    %1484 = vmatprep.subr.mxu0 0.0
    %1485 = vmatpush1.msra.mxu0 0.0
    %1486 = vmatprep.subr.mxu0 0.0
    %1487 = vmatpush1.msra.mxu0 0.0
    %1488 = vmatprep.subr.mxu0 0.0
    %1489 = vmatpush1.msra.mxu0 0.0
    %1490 = vmatprep.subr.mxu0 0.0
    %1491 = vmatpush1.msra.mxu0 0.0
    %1492 = vmatprep.subr.mxu0 0.0
    %1493 = vmatpush1.msra.mxu0 0.0
    %1494 = vmatprep.subr.mxu0 0.0
    %1495 = vmatpush1.msra.mxu0 0.0
    %1496 = vmatprep.subr.mxu0 0.0
    %1497 = vmatpush1.msra.mxu0 0.0
    %1498 = vmatprep.subr.mxu0 0.0
    %1499 = vmatpush1.msra.mxu0 0.0
    %1500 = vmatprep.subr.mxu0 0.0
    %1501 = vmatpush1.msra.mxu0 0.0
    %1502 = vmatprep.subr.mxu0 0.0
    %1503 = vmatpush1.msra.mxu0 0.0
    %1504 = vmatprep.subr.mxu0 0.0
    %1505 = vmatpush1.msra.mxu0 0.0
    %1506 = vmatprep.mubr.f32.mxu0 0.0
    %v1507 = vand.u32 %v107, 4294901760
    %1508 = vmatmul.mubr.f32.gmra.mrb[0].mxu0 %v1507
    %v1509 = vpop.f32.mrb[0].mxu0
    %v1510 = vadd.f32 %v1193, %v1509
    %v1511 = vpop.f32.mrb[0].mxu0
    %1512 = vmatprep.mubr.f32.mxu0 0.0
    %v1513 = vand.u32 %v110, 4294901760
    %1514 = vmatmul.mubr.f32.gmra.mrb[0].mxu0 %v1513
    %v1515 = vpop.f32.mrb[0].mxu0
    %v1516 = vadd.f32 %v1201, %v1515
    %v1517 = vpop.f32.mrb[0].mxu0
    %1518 = vmatprep.mubr.f32.mxu0 0.0
    %v1519 = vand.u32 %v113, 4294901760
    %1520 = vmatmul.mubr.f32.gmra.mrb[0].mxu0 %v1519
    %v1521 = vpop.f32.mrb[0].mxu0
    %v1522 = vadd.f32 %v1209, %v1521
    %v1523 = vpop.f32.mrb[0].mxu0
    %1524 = vmatprep.mubr.f32.mxu0 0.0
    %v1525 = vand.u32 %v116, 4294901760
    %1526 = vmatmul.mubr.f32.gmra.mrb[0].mxu0 %v1525
    %v1527 = vpop.f32.mrb[0].mxu0
    %v1528 = vadd.f32 %v1217, %v1527
    %v1529 = vpop.f32.mrb[0].mxu0
    %1530 = vmatprep.mubr.f32.mxu0 0.0
    %v1531 = vand.u32 %v119, 4294901760
    %1532 = vmatmul.mubr.f32.gmra.mrb[0].mxu0 %v1531
    %v1533 = vpop.f32.mrb[0].mxu0
    %v1534 = vadd.f32 %v1225, %v1533
    %v1535 = vpop.f32.mrb[0].mxu0
    %1536 = vmatprep.mubr.f32.mxu0 0.0
    %v1537 = vand.u32 %v122, 4294901760
    %1538 = vmatmul.mubr.f32.gmra.mrb[0].mxu0 %v1537
    %v1539 = vpop.f32.mrb[0].mxu0
    %v1540 = vadd.f32 %v1233, %v1539
    %v1541 = vpop.f32.mrb[0].mxu0
    %1542 = vmatprep.mubr.f32.mxu0 0.0
    %v1543 = vand.u32 %v125, 4294901760
    %1544 = vmatmul.mubr.f32.gmra.mrb[0].mxu0 %v1543
    %v1545 = vpop.f32.mrb[0].mxu0
    %v1546 = vadd.f32 %v1241, %v1545
    %v1547 = vpop.f32.mrb[0].mxu0
    %1548 = vmatprep.mubr.f32.mxu0 0.0
    %v1549 = vand.u32 %v128, 4294901760
    %1550 = vmatmul.mubr.f32.gmra.mrb[0].mxu0 %v1549
    %v1551 = vpop.f32.mrb[0].mxu0
    %v1552 = vadd.f32 %v1249, %v1551
    %v1553 = vpop.f32.mrb[0].mxu0
    %1554 = vmatprep.mubr.f32.mxu0 0.0
    %v1555 = vand.u32 %v131, 4294901760
    %1556 = vmatmul.mubr.f32.gmra.mrb[0].mxu0 %v1555
    %v1557 = vpop.f32.mrb[0].mxu0
    %v1558 = vadd.f32 %v1257, %v1557
    %v1559 = vpop.f32.mrb[0].mxu0
    %1560 = vmatprep.mubr.f32.mxu0 0.0
    %v1561 = vand.u32 %v134, 4294901760
    %1562 = vmatmul.mubr.f32.gmra.mrb[0].mxu0 %v1561
    %v1563 = vpop.f32.mrb[0].mxu0
    %v1564 = vadd.f32 %v1265, %v1563
    %v1565 = vpop.f32.mrb[0].mxu0
    %1566 = vmatprep.mubr.f32.mxu0 0.0
    %v1567 = vand.u32 %v137, 4294901760
    %1568 = vmatmul.mubr.f32.gmra.mrb[0].mxu0 %v1567
    %v1569 = vpop.f32.mrb[0].mxu0
    %v1570 = vadd.f32 %v1273, %v1569
    %v1571 = vpop.f32.mrb[0].mxu0
    %1572 = vmatprep.mubr.f32.mxu0 0.0
    %v1573 = vand.u32 %v140, 4294901760
    %1574 = vmatmul.mubr.f32.gmra.mrb[0].mxu0 %v1573
    %v1575 = vpop.f32.mrb[0].mxu0
    %v1576 = vadd.f32 %v1281, %v1575
    %v1577 = vpop.f32.mrb[0].mxu0
    %1578 = vmatprep.mubr.f32.mxu0 0.0
    %v1579 = vand.u32 %v143, 4294901760
    %1580 = vmatmul.mubr.f32.gmra.mrb[0].mxu0 %v1579
    %v1581 = vpop.f32.mrb[0].mxu0
    %v1582 = vadd.f32 %v1289, %v1581
    %v1583 = vpop.f32.mrb[0].mxu0
    %1584 = vmatprep.mubr.f32.mxu0 0.0
    %v1585 = vand.u32 %v146, 4294901760
    %1586 = vmatmul.mubr.f32.gmra.mrb[0].mxu0 %v1585
    %v1587 = vpop.f32.mrb[0].mxu0
    %v1588 = vadd.f32 %v1297, %v1587
    %v1589 = vpop.f32.mrb[0].mxu0
    %1590 = vmatprep.mubr.f32.mxu0 0.0
    %v1591 = vand.u32 %v149, 4294901760
    %1592 = vmatmul.mubr.f32.gmra.mrb[0].mxu0 %v1591
    %v1593 = vpop.f32.mrb[0].mxu0
    %v1594 = vadd.f32 %v1305, %v1593
    %v1595 = vpop.f32.mrb[0].mxu0
    %1596 = vmatprep.mubr.f32.mxu0 0.0
    %v1597 = vand.u32 %v152, 4294901760
    %1598 = vmatmul.mubr.f32.gmra.mrb[0].mxu0 %v1597
    %v1599 = vpop.f32.mrb[0].mxu0
    %v1600 = vadd.f32 %v1313, %v1599
    %v1601 = vpop.f32.mrb[0].mxu0
    %1602 = vmatprep.mubr.f32.mxu0 0.0
    %v1603 = vand.u32 %v155, 4294901760
    %1604 = vmatmul.mubr.f32.gmra.mrb[0].mxu0 %v1603
    %v1605 = vpop.f32.mrb[0].mxu0
    %v1606 = vadd.f32 %v1321, %v1605
    %v1607 = vpop.f32.mrb[0].mxu0
    %1608 = vmatprep.mubr.f32.mxu0 0.0
    %v1609 = vand.u32 %v158, 4294901760
    %1610 = vmatmul.mubr.f32.gmra.mrb[0].mxu0 %v1609
    %v1611 = vpop.f32.mrb[0].mxu0
    %v1612 = vadd.f32 %v1329, %v1611
    %v1613 = vpop.f32.mrb[0].mxu0
    %1614 = vmatprep.mubr.f32.mxu0 0.0
    %v1615 = vand.u32 %v161, 4294901760
    %1616 = vmatmul.mubr.f32.gmra.mrb[0].mxu0 %v1615
    %v1617 = vpop.f32.mrb[0].mxu0
    %v1618 = vadd.f32 %v1337, %v1617
    %v1619 = vpop.f32.mrb[0].mxu0
    %1620 = vmatprep.mubr.f32.mxu0 0.0
    %v1621 = vand.u32 %v164, 4294901760
    %1622 = vmatmul.mubr.f32.gmra.mrb[0].mxu0 %v1621
    %v1623 = vpop.f32.mrb[0].mxu0
    %v1624 = vadd.f32 %v1345, %v1623
    %v1625 = vpop.f32.mrb[0].mxu0
    %1626 = vmatprep.mubr.f32.mxu0 0.0
    %v1627 = vand.u32 %v167, 4294901760
    %1628 = vmatmul.mubr.f32.gmra.mrb[0].mxu0 %v1627
    %v1629 = vpop.f32.mrb[0].mxu0
    %v1630 = vadd.f32 %v1353, %v1629
    %v1631 = vpop.f32.mrb[0].mxu0
    %1632 = vmatprep.mubr.f32.mxu0 0.0
    %v1633 = vand.u32 %v170, 4294901760
    %1634 = vmatmul.mubr.f32.gmra.mrb[0].mxu0 %v1633
    %v1635 = vpop.f32.mrb[0].mxu0
    %v1636 = vadd.f32 %v1361, %v1635
    %v1637 = vpop.f32.mrb[0].mxu0
    %1638 = vmatprep.mubr.f32.mxu0 0.0
    %v1639 = vand.u32 %v173, 4294901760
    %1640 = vmatmul.mubr.f32.gmra.mrb[0].mxu0 %v1639
    %v1641 = vpop.f32.mrb[0].mxu0
    %v1642 = vadd.f32 %v1369, %v1641
    %v1643 = vpop.f32.mrb[0].mxu0
    %1644 = vmatprep.mubr.f32.mxu0 0.0
    %v1645 = vand.u32 %v176, 4294901760
    %1646 = vmatmul.mubr.f32.gmra.mrb[0].mxu0 %v1645
    %v1647 = vpop.f32.mrb[0].mxu0
    %v1648 = vadd.f32 %v1377, %v1647
    %v1649 = vpop.f32.mrb[0].mxu0
    %1650 = vmatprep.mubr.f32.mxu0 0.0
    %v1651 = vand.u32 %v179, 4294901760
    %1652 = vmatmul.mubr.f32.gmra.mrb[0].mxu0 %v1651
    %v1653 = vpop.f32.mrb[0].mxu0
    %v1654 = vadd.f32 %v1385, %v1653
    %v1655 = vpop.f32.mrb[0].mxu0
    %1656 = vmatprep.mubr.f32.mxu0 0.0
    %v1657 = vand.u32 %v182, 4294901760
    %1658 = vmatmul.mubr.f32.gmra.mrb[0].mxu0 %v1657
    %v1659 = vpop.f32.mrb[0].mxu0
    %v1660 = vadd.f32 %v1393, %v1659
    %v1661 = vpop.f32.mrb[0].mxu0
    %1662 = vmatprep.mubr.f32.mxu0 0.0
    %v1663 = vand.u32 %v185, 4294901760
    %1664 = vmatmul.mubr.f32.gmra.mrb[0].mxu0 %v1663
    %v1665 = vpop.f32.mrb[0].mxu0
    %v1666 = vadd.f32 %v1401, %v1665
    %v1667 = vpop.f32.mrb[0].mxu0
    %1668 = vmatprep.mubr.f32.mxu0 0.0
    %v1669 = vand.u32 %v188, 4294901760
    %1670 = vmatmul.mubr.f32.gmra.mrb[0].mxu0 %v1669
    %v1671 = vpop.f32.mrb[0].mxu0
    %v1672 = vadd.f32 %v1409, %v1671
    %v1673 = vpop.f32.mrb[0].mxu0
    %1674 = vdwg.mxu0
    %1675 = vmatprep.subr.mxu0 0.0
    %v1676 = vand.u32 %v88, 4294901760
    %1677 = vmatpush1.msra.mxu0 %v1676
    %1678 = vmatprep.subr.mxu0 0.0
    %v1679 = vand.u32 %v89, 4294901760
    %1680 = vmatpush1.msra.mxu0 %v1679
    %1681 = vmatprep.subr.mxu0 0.0
    %v1682 = vand.u32 %v90, 4294901760
    %1683 = vmatpush1.msra.mxu0 %v1682
    %1684 = vmatprep.subr.mxu0 0.0
    %v1685 = vand.u32 %v91, 4294901760
    %1686 = vmatpush1.msra.mxu0 %v1685
    %1687 = vmatprep.subr.mxu0 0.0
    %v1688 = vand.u32 %v92, 4294901760
    %1689 = vmatpush1.msra.mxu0 %v1688
    %1690 = vmatprep.subr.mxu0 0.0
    %v1691 = vand.u32 %v93, 4294901760
    %1692 = vmatpush1.msra.mxu0 %v1691
    %1693 = vmatprep.subr.mxu0 0.0
    %v1694 = vand.u32 %v94, 4294901760
    %1695 = vmatpush1.msra.mxu0 %v1694
    %1696 = vmatprep.subr.mxu0 0.0
    %v1697 = vand.u32 %v95, 4294901760
    %1698 = vmatpush1.msra.mxu0 %v1697
    %1699 = vmatprep.subr.mxu0 0.0
    %v1700 = vand.u32 %v96, 4294901760
    %1701 = vmatpush1.msra.mxu0 %v1700
    %1702 = vmatprep.subr.mxu0 0.0
    %v1703 = vand.u32 %v192, 4294901760
    %1704 = vmatpush1.msra.mxu0 %v1703
    %1705 = vmatprep.subr.mxu0 0.0
    %1706 = vmatpush1.msra.mxu0 0.0
    %1707 = vmatprep.subr.mxu0 0.0
    %1708 = vmatpush1.msra.mxu0 0.0
    %1709 = vmatprep.subr.mxu0 0.0
    %1710 = vmatpush1.msra.mxu0 0.0
    %1711 = vmatprep.subr.mxu0 0.0
    %1712 = vmatpush1.msra.mxu0 0.0
    %1713 = vmatprep.subr.mxu0 0.0
    %1714 = vmatpush1.msra.mxu0 0.0
    %1715 = vmatprep.subr.mxu0 0.0
    %1716 = vmatpush1.msra.mxu0 0.0
    %1717 = vmatprep.subr.mxu0 0.0
    %1718 = vmatpush1.msra.mxu0 0.0
    %1719 = vmatprep.subr.mxu0 0.0
    %1720 = vmatpush1.msra.mxu0 0.0
    %1721 = vmatprep.subr.mxu0 0.0
    %1722 = vmatpush1.msra.mxu0 0.0
    %1723 = vmatprep.subr.mxu0 0.0
    %1724 = vmatpush1.msra.mxu0 0.0
    %1725 = vmatprep.subr.mxu0 0.0
    %1726 = vmatpush1.msra.mxu0 0.0
    %1727 = vmatprep.subr.mxu0 0.0
    %1728 = vmatpush1.msra.mxu0 0.0
    %1729 = vmatprep.subr.mxu0 0.0
    %1730 = vmatpush1.msra.mxu0 0.0
    %1731 = vmatprep.subr.mxu0 0.0
    %1732 = vmatpush1.msra.mxu0 0.0
    %1733 = vmatprep.subr.mxu0 0.0
    %1734 = vmatpush1.msra.mxu0 0.0
    %1735 = vmatprep.subr.mxu0 0.0
    %1736 = vmatpush1.msra.mxu0 0.0
    %1737 = vmatprep.subr.mxu0 0.0
    %1738 = vmatpush1.msra.mxu0 0.0
    %1739 = vmatprep.subr.mxu0 0.0
    %1740 = vmatpush1.msra.mxu0 0.0
    %1741 = vmatprep.subr.mxu0 0.0
    %1742 = vmatpush1.msra.mxu0 0.0
    %1743 = vmatprep.subr.mxu0 0.0
    %1744 = vmatpush1.msra.mxu0 0.0
    %1745 = vmatprep.subr.mxu0 0.0
    %1746 = vmatpush1.msra.mxu0 0.0
    %1747 = vmatprep.subr.mxu0 0.0
    %1748 = vmatpush1.msra.mxu0 0.0
    %1749 = vmatprep.mubr.f32.mxu0 0.0
    %v1750 = vand.u32 %v107, 4294901760
    %1751 = vmatmul.mubr.f32.gmra.mrb[0].mxu0 %v1750
    %v1752 = vpop.f32.mrb[0].mxu0
    %v1753 = vadd.f32 %v1510, %v1752
    %v1754 = vpop.f32.mrb[0].mxu0
    %1755 = vmatprep.mubr.f32.mxu0 0.0
    %v1756 = vand.u32 %v110, 4294901760
    %1757 = vmatmul.mubr.f32.gmra.mrb[0].mxu0 %v1756
    %v1758 = vpop.f32.mrb[0].mxu0
    %v1759 = vadd.f32 %v1516, %v1758
    %v1760 = vpop.f32.mrb[0].mxu0
    %1761 = vmatprep.mubr.f32.mxu0 0.0
    %v1762 = vand.u32 %v113, 4294901760
    %1763 = vmatmul.mubr.f32.gmra.mrb[0].mxu0 %v1762
    %v1764 = vpop.f32.mrb[0].mxu0
    %v1765 = vadd.f32 %v1522, %v1764
    %v1766 = vpop.f32.mrb[0].mxu0
    %1767 = vmatprep.mubr.f32.mxu0 0.0
    %v1768 = vand.u32 %v116, 4294901760
    %1769 = vmatmul.mubr.f32.gmra.mrb[0].mxu0 %v1768
    %v1770 = vpop.f32.mrb[0].mxu0
    %v1771 = vadd.f32 %v1528, %v1770
    %v1772 = vpop.f32.mrb[0].mxu0
    %1773 = vmatprep.mubr.f32.mxu0 0.0
    %v1774 = vand.u32 %v119, 4294901760
    %1775 = vmatmul.mubr.f32.gmra.mrb[0].mxu0 %v1774
    %v1776 = vpop.f32.mrb[0].mxu0
    %v1777 = vadd.f32 %v1534, %v1776
    %v1778 = vpop.f32.mrb[0].mxu0
    %1779 = vmatprep.mubr.f32.mxu0 0.0
    %v1780 = vand.u32 %v122, 4294901760
    %1781 = vmatmul.mubr.f32.gmra.mrb[0].mxu0 %v1780
    %v1782 = vpop.f32.mrb[0].mxu0
    %v1783 = vadd.f32 %v1540, %v1782
    %v1784 = vpop.f32.mrb[0].mxu0
    %1785 = vmatprep.mubr.f32.mxu0 0.0
    %v1786 = vand.u32 %v125, 4294901760
    %1787 = vmatmul.mubr.f32.gmra.mrb[0].mxu0 %v1786
    %v1788 = vpop.f32.mrb[0].mxu0
    %v1789 = vadd.f32 %v1546, %v1788
    %v1790 = vpop.f32.mrb[0].mxu0
    %1791 = vmatprep.mubr.f32.mxu0 0.0
    %v1792 = vand.u32 %v128, 4294901760
    %1793 = vmatmul.mubr.f32.gmra.mrb[0].mxu0 %v1792
    %v1794 = vpop.f32.mrb[0].mxu0
    %v1795 = vadd.f32 %v1552, %v1794
    %v1796 = vpop.f32.mrb[0].mxu0
    %1797 = vmatprep.mubr.f32.mxu0 0.0
    %v1798 = vand.u32 %v131, 4294901760
    %1799 = vmatmul.mubr.f32.gmra.mrb[0].mxu0 %v1798
    %v1800 = vpop.f32.mrb[0].mxu0
    %v1801 = vadd.f32 %v1558, %v1800
    %v1802 = vpop.f32.mrb[0].mxu0
    %1803 = vmatprep.mubr.f32.mxu0 0.0
    %v1804 = vand.u32 %v134, 4294901760
    %1805 = vmatmul.mubr.f32.gmra.mrb[0].mxu0 %v1804
    %v1806 = vpop.f32.mrb[0].mxu0
    %v1807 = vadd.f32 %v1564, %v1806
    %v1808 = vpop.f32.mrb[0].mxu0
    %1809 = vmatprep.mubr.f32.mxu0 0.0
    %v1810 = vand.u32 %v137, 4294901760
    %1811 = vmatmul.mubr.f32.gmra.mrb[0].mxu0 %v1810
    %v1812 = vpop.f32.mrb[0].mxu0
    %v1813 = vadd.f32 %v1570, %v1812
    %v1814 = vpop.f32.mrb[0].mxu0
    %1815 = vmatprep.mubr.f32.mxu0 0.0
    %v1816 = vand.u32 %v140, 4294901760
    %1817 = vmatmul.mubr.f32.gmra.mrb[0].mxu0 %v1816
    %v1818 = vpop.f32.mrb[0].mxu0
    %v1819 = vadd.f32 %v1576, %v1818
    %v1820 = vpop.f32.mrb[0].mxu0
    %1821 = vmatprep.mubr.f32.mxu0 0.0
    %v1822 = vand.u32 %v143, 4294901760
    %1823 = vmatmul.mubr.f32.gmra.mrb[0].mxu0 %v1822
    %v1824 = vpop.f32.mrb[0].mxu0
    %v1825 = vadd.f32 %v1582, %v1824
    %v1826 = vpop.f32.mrb[0].mxu0
    %1827 = vmatprep.mubr.f32.mxu0 0.0
    %v1828 = vand.u32 %v146, 4294901760
    %1829 = vmatmul.mubr.f32.gmra.mrb[0].mxu0 %v1828
    %v1830 = vpop.f32.mrb[0].mxu0
    %v1831 = vadd.f32 %v1588, %v1830
    %v1832 = vpop.f32.mrb[0].mxu0
    %1833 = vmatprep.mubr.f32.mxu0 0.0
    %v1834 = vand.u32 %v149, 4294901760
    %1835 = vmatmul.mubr.f32.gmra.mrb[0].mxu0 %v1834
    %v1836 = vpop.f32.mrb[0].mxu0
    %v1837 = vadd.f32 %v1594, %v1836
    %v1838 = vpop.f32.mrb[0].mxu0
    %1839 = vmatprep.mubr.f32.mxu0 0.0
    %v1840 = vand.u32 %v152, 4294901760
    %1841 = vmatmul.mubr.f32.gmra.mrb[0].mxu0 %v1840
    %v1842 = vpop.f32.mrb[0].mxu0
    %v1843 = vadd.f32 %v1600, %v1842
    %v1844 = vpop.f32.mrb[0].mxu0
    %1845 = vmatprep.mubr.f32.mxu0 0.0
    %v1846 = vand.u32 %v155, 4294901760
    %1847 = vmatmul.mubr.f32.gmra.mrb[0].mxu0 %v1846
    %v1848 = vpop.f32.mrb[0].mxu0
    %v1849 = vadd.f32 %v1606, %v1848
    %v1850 = vpop.f32.mrb[0].mxu0
    %1851 = vmatprep.mubr.f32.mxu0 0.0
    %v1852 = vand.u32 %v158, 4294901760
    %1853 = vmatmul.mubr.f32.gmra.mrb[0].mxu0 %v1852
    %v1854 = vpop.f32.mrb[0].mxu0
    %v1855 = vadd.f32 %v1612, %v1854
    %v1856 = vpop.f32.mrb[0].mxu0
    %1857 = vmatprep.mubr.f32.mxu0 0.0
    %v1858 = vand.u32 %v161, 4294901760
    %1859 = vmatmul.mubr.f32.gmra.mrb[0].mxu0 %v1858
    %v1860 = vpop.f32.mrb[0].mxu0
    %v1861 = vadd.f32 %v1618, %v1860
    %v1862 = vpop.f32.mrb[0].mxu0
    %1863 = vmatprep.mubr.f32.mxu0 0.0
    %v1864 = vand.u32 %v164, 4294901760
    %1865 = vmatmul.mubr.f32.gmra.mrb[0].mxu0 %v1864
    %v1866 = vpop.f32.mrb[0].mxu0
    %v1867 = vadd.f32 %v1624, %v1866
    %v1868 = vpop.f32.mrb[0].mxu0
    %1869 = vmatprep.mubr.f32.mxu0 0.0
    %v1870 = vand.u32 %v167, 4294901760
    %1871 = vmatmul.mubr.f32.gmra.mrb[0].mxu0 %v1870
    %v1872 = vpop.f32.mrb[0].mxu0
    %v1873 = vadd.f32 %v1630, %v1872
    %v1874 = vpop.f32.mrb[0].mxu0
    %1875 = vmatprep.mubr.f32.mxu0 0.0
    %v1876 = vand.u32 %v170, 4294901760
    %1877 = vmatmul.mubr.f32.gmra.mrb[0].mxu0 %v1876
    %v1878 = vpop.f32.mrb[0].mxu0
    %v1879 = vadd.f32 %v1636, %v1878
    %v1880 = vpop.f32.mrb[0].mxu0
    %1881 = vmatprep.mubr.f32.mxu0 0.0
    %v1882 = vand.u32 %v173, 4294901760
    %1883 = vmatmul.mubr.f32.gmra.mrb[0].mxu0 %v1882
    %v1884 = vpop.f32.mrb[0].mxu0
    %v1885 = vadd.f32 %v1642, %v1884
    %v1886 = vpop.f32.mrb[0].mxu0
    %1887 = vmatprep.mubr.f32.mxu0 0.0
    %v1888 = vand.u32 %v176, 4294901760
    %1889 = vmatmul.mubr.f32.gmra.mrb[0].mxu0 %v1888
    %v1890 = vpop.f32.mrb[0].mxu0
    %v1891 = vadd.f32 %v1648, %v1890
    %v1892 = vpop.f32.mrb[0].mxu0
    %1893 = vmatprep.mubr.f32.mxu0 0.0
    %v1894 = vand.u32 %v179, 4294901760
    %1895 = vmatmul.mubr.f32.gmra.mrb[0].mxu0 %v1894
    %v1896 = vpop.f32.mrb[0].mxu0
    %v1897 = vadd.f32 %v1654, %v1896
    %v1898 = vpop.f32.mrb[0].mxu0
    %1899 = vmatprep.mubr.f32.mxu0 0.0
    %v1900 = vand.u32 %v182, 4294901760
    %1901 = vmatmul.mubr.f32.gmra.mrb[0].mxu0 %v1900
    %v1902 = vpop.f32.mrb[0].mxu0
    %v1903 = vadd.f32 %v1660, %v1902
    %v1904 = vpop.f32.mrb[0].mxu0
    %1905 = vmatprep.mubr.f32.mxu0 0.0
    %v1906 = vand.u32 %v185, 4294901760
    %1907 = vmatmul.mubr.f32.gmra.mrb[0].mxu0 %v1906
    %v1908 = vpop.f32.mrb[0].mxu0
    %v1909 = vadd.f32 %v1666, %v1908
    %v1910 = vpop.f32.mrb[0].mxu0
    %1911 = vmatprep.mubr.f32.mxu0 0.0
    %v1912 = vand.u32 %v188, 4294901760
    %1913 = vmatmul.mubr.f32.gmra.mrb[0].mxu0 %v1912
    %v1914 = vpop.f32.mrb[0].mxu0
    %v1915 = vadd.f32 %v1672, %v1914
    %v1916 = vpop.f32.mrb[0].mxu0
    %1917 = vdwg.mxu0
    %v1918 = vmax.f32 %v1753, %v1759
    %v1919 = vmax.f32 %v1918, %v1765
    %v1920 = vmax.f32 %v1919, %v1771
    %v1921 = vmax.f32 %v1920, %v1777
    %v1922 = vmax.f32 %v1921, %v1783
    %v1923 = vmax.f32 %v1922, %v1789
    %v1924 = vmul.f32 %v1923, 1.442695
    %v1925 = vpow.pop %v1924
    %v1926 = vmax.f32 %v1795, %v1801
    %v1927 = vmax.f32 %v1926, %v1807
    %v1928 = vmax.f32 %v1927, %v1813
    %v1929 = vmax.f32 %v1928, %v1819
    %v1930 = vmax.f32 %v1929, %v1825
    %v1931 = vmax.f32 %v1930, %v1831
    %v1932 = vmul.f32 %v1931, 1.442695
    %v1933 = vpow.pop %v1932
    %v1934 = vmax.f32 %v1837, %v1843
    %v1935 = vmax.f32 %v1934, %v1849
    %v1936 = vmax.f32 %v1935, %v1855
    %v1937 = vmax.f32 %v1936, %v1861
    %v1938 = vmax.f32 %v1937, %v1867
    %v1939 = vmax.f32 %v1938, %v1873
    %v1940 = vmul.f32 %v1939, 1.442695
    %v1941 = vpow.pop %v1940
    %v1942 = vmax.f32 %v1879, %v1885
    %v1943 = vmax.f32 %v1942, %v1891
    %v1944 = vmax.f32 %v1943, %v1897
    %v1945 = vmax.f32 %v1944, %v1903
    %v1946 = vmax.f32 %v1945, %v1909
    %v1947 = vmax.f32 %v1946, %v1915
    %v1948 = vmul.f32 %v1947, 1.442695
    %v1949 = vpow.pop %v1948
    %1951 = vrot.lane.b32.xlu0 %v1933, 8
    %v1952 = vpop.permute.xlu0 %1951
    %1955 = vrot.lane.b32.xlu0 %v1941, 16
    %v1956 = vpop.permute.xlu0 %1955
    %1959 = vrot.lane.b32.xlu0 %v1949, 24
    %v1960 = vpop.permute.xlu0 %1959
    %vm1962 = vcmask 64512
    %v1963 = vsel %vm1962, %v1925, %v1952
    %vm1964 = vcmask 130048
    %v1965 = vsel %vm1964, %v1963, %v1956
    %vm1966 = vcmask 195584
    %v1967 = vsel %vm1966, %v1965, %v1960
    %v1968 = vld [vmem:[%s3] sm:$0xff]
    %v1969 = vld [vmem:[%s3 + $0x8] sm:$0xff]
    %v1970 = vld [vmem:[%s3 + $0x10] sm:$0xff]
    %v1971 = vld [vmem:[%s3 + $0x18] sm:$0xff]
    %v1972 = vld [vmem:[%s3 + $0x20] sm:$0xff]
    %v1973 = vld [vmem:[%s3 + $0x28] sm:$0xff]
    %v1974 = vld [vmem:[%s3 + $0x30] sm:$0xff]
    %v1975 = vld [vmem:[%s3 + $0x38] sm:$0xff]
    %v1976 = vld [vmem:[%s3 + $0x40] sm:$0xff]
    %v1977 = vld [vmem:[%s3 + $0x48] sm:$0xff]
    %v1978 = vld [vmem:[%s3 + $0x50] sm:$0xff]
    %v1979 = vld [vmem:[%s3 + $0x58] sm:$0xff]
    %v1980 = vld [vmem:[%s3 + $0x60] sm:$0xff]
    %v1981 = vld [vmem:[%s3 + $0x68] sm:$0xff]
    %v1982 = vld [vmem:[%s3 + $0x70] sm:$0xff]
    %v1983 = vld [vmem:[%s3 + $0x78] sm:$0xff]
    %v1984 = vld [vmem:[%s3 + $0x80] sm:$0xff]
    %v1985 = vld [vmem:[%s3 + $0x88] sm:$0xff]
    %v1986 = vld [vmem:[%s3 + $0x90] sm:$0xff]
    %v1987 = vld [vmem:[%s3 + $0x98] sm:$0xff]
    %v1988 = vld [vmem:[%s3 + $0xa0] sm:$0xff]
    %v1989 = vld [vmem:[%s3 + $0xa8] sm:$0xff]
    %v1990 = vld [vmem:[%s3 + $0xb0] sm:$0xff]
    %v1991 = vld [vmem:[%s3 + $0xb8] sm:$0xff]
    %v1992 = vld [vmem:[%s3 + $0xc0] sm:$0xff]
    %v1993 = vld [vmem:[%s3 + $0xc8] sm:$0xff]
    %v1994 = vld [vmem:[%s3 + $0xd0] sm:$0xff]
    %v1995 = vld [vmem:[%s3 + $0xd8] sm:$0xff]
    %v1996 = vld [vmem:[%s4] sm:$0x7f]
    %v1998 = vlaneseq
    %v1999 = vshrl.u32 %v1998, 7
    %v2000 = vsub.s32 0, %v1999
    %v2001 = vrot.slane %v1996, %v2000
    %v2002 = vlaneseq
    %v2003 = vshrl.u32 %v2002, 7
    %v2004 = vsub.s32 1, %v2003
    %v2005 = vrot.slane %v1996, %v2004
    %v2006 = vlaneseq
    %v2007 = vshrl.u32 %v2006, 7
    %v2008 = vsub.s32 2, %v2007
    %v2009 = vrot.slane %v1996, %v2008
    %v2010 = vlaneseq
    %v2011 = vshrl.u32 %v2010, 7
    %v2012 = vsub.s32 3, %v2011
    %v2013 = vrot.slane %v1996, %v2012
    %v2014 = vlaneseq
    %v2015 = vshrl.u32 %v2014, 7
    %v2016 = vsub.s32 4, %v2015
    %v2017 = vrot.slane %v1996, %v2016
    %v2018 = vlaneseq
    %v2019 = vshrl.u32 %v2018, 7
    %v2020 = vsub.s32 5, %v2019
    %v2021 = vrot.slane %v1996, %v2020
    %v2022 = vlaneseq
    %v2023 = vshrl.u32 %v2022, 7
    %v2024 = vsub.s32 6, %v2023
    %v2025 = vrot.slane %v1996, %v2024
    %vm2033 = vcmask 261120
    %v2035 = vsel %vm2033, %v1967, 0
    %v2037 = vand.u32 %v1969, 4294901760
    %2038 = vmatprep.subr.mxu0 %v2037
    %v2039 = vand.u32 %v1968, 4294901760
    %2040 = vmatpush1.msra.mxu0 %v2039
    %v2041 = vand.u32 %v1976, 4294901760
    %2042 = vmatprep.subr.mxu0 %v2041
    %v2043 = vand.u32 %v1975, 4294901760
    %2044 = vmatpush1.msra.mxu0 %v2043
    %v2045 = vand.u32 %v1983, 4294901760
    %2046 = vmatprep.subr.mxu0 %v2045
    %v2047 = vand.u32 %v1982, 4294901760
    %2048 = vmatpush1.msra.mxu0 %v2047
    %v2049 = vand.u32 %v1990, 4294901760
    %2050 = vmatprep.subr.mxu0 %v2049
    %v2051 = vand.u32 %v1989, 4294901760
    %2052 = vmatpush1.msra.mxu0 %v2051
    %2053 = vmatprep.subr.mxu0 0.0
    %2054 = vmatpush1.msra.mxu0 0.0
    %2055 = vmatprep.subr.mxu0 0.0
    %2056 = vmatpush1.msra.mxu0 0.0
    %2057 = vmatprep.subr.mxu0 0.0
    %2058 = vmatpush1.msra.mxu0 0.0
    %2059 = vmatprep.subr.mxu0 0.0
    %2060 = vmatpush1.msra.mxu0 0.0
    %2061 = vmatprep.subr.mxu0 0.0
    %2062 = vmatpush1.msra.mxu0 0.0
    %2063 = vmatprep.subr.mxu0 0.0
    %2064 = vmatpush1.msra.mxu0 0.0
    %2065 = vmatprep.subr.mxu0 0.0
    %2066 = vmatpush1.msra.mxu0 0.0
    %2067 = vmatprep.subr.mxu0 0.0
    %2068 = vmatpush1.msra.mxu0 0.0
    %2069 = vmatprep.subr.mxu0 0.0
    %2070 = vmatpush1.msra.mxu0 0.0
    %2071 = vmatprep.subr.mxu0 0.0
    %2072 = vmatpush1.msra.mxu0 0.0
    %2073 = vmatprep.subr.mxu0 0.0
    %2074 = vmatpush1.msra.mxu0 0.0
    %2075 = vmatprep.subr.mxu0 0.0
    %2076 = vmatpush1.msra.mxu0 0.0
    %2077 = vmatprep.subr.mxu0 0.0
    %2078 = vmatpush1.msra.mxu0 0.0
    %2079 = vmatprep.subr.mxu0 0.0
    %2080 = vmatpush1.msra.mxu0 0.0
    %2081 = vmatprep.subr.mxu0 0.0
    %2082 = vmatpush1.msra.mxu0 0.0
    %2083 = vmatprep.subr.mxu0 0.0
    %2084 = vmatpush1.msra.mxu0 0.0
    %2085 = vmatprep.subr.mxu0 0.0
    %2086 = vmatpush1.msra.mxu0 0.0
    %2087 = vmatprep.subr.mxu0 0.0
    %2088 = vmatpush1.msra.mxu0 0.0
    %2089 = vmatprep.subr.mxu0 0.0
    %2090 = vmatpush1.msra.mxu0 0.0
    %2091 = vmatprep.subr.mxu0 0.0
    %2092 = vmatpush1.msra.mxu0 0.0
    %2093 = vmatprep.subr.mxu0 0.0
    %2094 = vmatpush1.msra.mxu0 0.0
    %2095 = vmatprep.subr.mxu0 0.0
    %2096 = vmatpush1.msra.mxu0 0.0
    %2097 = vmatprep.subr.mxu0 0.0
    %2098 = vmatpush1.msra.mxu0 0.0
    %2099 = vmatprep.subr.mxu0 0.0
    %2100 = vmatpush1.msra.mxu0 0.0
    %2101 = vmatprep.subr.mxu0 0.0
    %2102 = vmatpush1.msra.mxu0 0.0
    %2103 = vmatprep.subr.mxu0 0.0
    %2104 = vmatpush1.msra.mxu0 0.0
    %2105 = vmatprep.subr.mxu0 0.0
    %2106 = vmatpush1.msra.mxu0 0.0
    %2107 = vmatprep.subr.mxu0 0.0
    %2108 = vmatpush1.msra.mxu0 0.0
    %2109 = vmatprep.mubr.f32.mxu0 0.0
    %v2110 = vand.u32 %v2035, 4294901760
    %v2111 = vsub.f32 %v2035, %v2110
    %v2112 = vand.u32 %v2111, 4294901760
    %v2113 = vsub.f32 %v2111, %v2112
    %v2114 = vand.u32 %v2113, 4294901760
    %2115 = vmatmul.mubr.f32.gmra.mrb[0].mxu0 %v2114
    %v2116 = vpop.f32.mrb[0].mxu0
    %v2117 = vadd.f32 %v2001, %v2116
    %v2118 = vpop.f32.mrb[0].mxu0
    %v2119 = vadd.f32 %v2005, %v2118
    %2120 = vdwg.mxu0
    %v2121 = vand.u32 %v1969, 4294901760
    %v2122 = vsub.f32 %v1969, %v2121
    %v2123 = vand.u32 %v2122, 4294901760
    %v2124 = vsub.f32 %v2122, %v2123
    %v2125 = vand.u32 %v2124, 4294901760
    %2126 = vmatprep.subr.mxu0 %v2125
    %v2127 = vand.u32 %v1968, 4294901760
    %v2128 = vsub.f32 %v1968, %v2127
    %v2129 = vand.u32 %v2128, 4294901760
    %v2130 = vsub.f32 %v2128, %v2129
    %v2131 = vand.u32 %v2130, 4294901760
    %2132 = vmatpush1.msra.mxu0 %v2131
    %v2133 = vand.u32 %v1976, 4294901760
    %v2134 = vsub.f32 %v1976, %v2133
    %v2135 = vand.u32 %v2134, 4294901760
    %v2136 = vsub.f32 %v2134, %v2135
    %v2137 = vand.u32 %v2136, 4294901760
    %2138 = vmatprep.subr.mxu0 %v2137
    %v2139 = vand.u32 %v1975, 4294901760
    %v2140 = vsub.f32 %v1975, %v2139
    %v2141 = vand.u32 %v2140, 4294901760
    %v2142 = vsub.f32 %v2140, %v2141
    %v2143 = vand.u32 %v2142, 4294901760
    %2144 = vmatpush1.msra.mxu0 %v2143
    %v2145 = vand.u32 %v1983, 4294901760
    %v2146 = vsub.f32 %v1983, %v2145
    %v2147 = vand.u32 %v2146, 4294901760
    %v2148 = vsub.f32 %v2146, %v2147
    %v2149 = vand.u32 %v2148, 4294901760
    %2150 = vmatprep.subr.mxu0 %v2149
    %v2151 = vand.u32 %v1982, 4294901760
    %v2152 = vsub.f32 %v1982, %v2151
    %v2153 = vand.u32 %v2152, 4294901760
    %v2154 = vsub.f32 %v2152, %v2153
    %v2155 = vand.u32 %v2154, 4294901760
    %2156 = vmatpush1.msra.mxu0 %v2155
    %v2157 = vand.u32 %v1990, 4294901760
    %v2158 = vsub.f32 %v1990, %v2157
    %v2159 = vand.u32 %v2158, 4294901760
    %v2160 = vsub.f32 %v2158, %v2159
    %v2161 = vand.u32 %v2160, 4294901760
    %2162 = vmatprep.subr.mxu0 %v2161
    %v2163 = vand.u32 %v1989, 4294901760
    %v2164 = vsub.f32 %v1989, %v2163
    %v2165 = vand.u32 %v2164, 4294901760
    %v2166 = vsub.f32 %v2164, %v2165
    %v2167 = vand.u32 %v2166, 4294901760
    %2168 = vmatpush1.msra.mxu0 %v2167
    %2169 = vmatprep.subr.mxu0 0.0
    %2170 = vmatpush1.msra.mxu0 0.0
    %2171 = vmatprep.subr.mxu0 0.0
    %2172 = vmatpush1.msra.mxu0 0.0
    %2173 = vmatprep.subr.mxu0 0.0
    %2174 = vmatpush1.msra.mxu0 0.0
    %2175 = vmatprep.subr.mxu0 0.0
    %2176 = vmatpush1.msra.mxu0 0.0
    %2177 = vmatprep.subr.mxu0 0.0
    %2178 = vmatpush1.msra.mxu0 0.0
    %2179 = vmatprep.subr.mxu0 0.0
    %2180 = vmatpush1.msra.mxu0 0.0
    %2181 = vmatprep.subr.mxu0 0.0
    %2182 = vmatpush1.msra.mxu0 0.0
    %2183 = vmatprep.subr.mxu0 0.0
    %2184 = vmatpush1.msra.mxu0 0.0
    %2185 = vmatprep.subr.mxu0 0.0
    %2186 = vmatpush1.msra.mxu0 0.0
    %2187 = vmatprep.subr.mxu0 0.0
    %2188 = vmatpush1.msra.mxu0 0.0
    %2189 = vmatprep.subr.mxu0 0.0
    %2190 = vmatpush1.msra.mxu0 0.0
    %2191 = vmatprep.subr.mxu0 0.0
    %2192 = vmatpush1.msra.mxu0 0.0
    %2193 = vmatprep.subr.mxu0 0.0
    %2194 = vmatpush1.msra.mxu0 0.0
    %2195 = vmatprep.subr.mxu0 0.0
    %2196 = vmatpush1.msra.mxu0 0.0
    %2197 = vmatprep.subr.mxu0 0.0
    %2198 = vmatpush1.msra.mxu0 0.0
    %2199 = vmatprep.subr.mxu0 0.0
    %2200 = vmatpush1.msra.mxu0 0.0
    %2201 = vmatprep.subr.mxu0 0.0
    %2202 = vmatpush1.msra.mxu0 0.0
    %2203 = vmatprep.subr.mxu0 0.0
    %2204 = vmatpush1.msra.mxu0 0.0
    %2205 = vmatprep.subr.mxu0 0.0
    %2206 = vmatpush1.msra.mxu0 0.0
    %2207 = vmatprep.subr.mxu0 0.0
    %2208 = vmatpush1.msra.mxu0 0.0
    %2209 = vmatprep.subr.mxu0 0.0
    %2210 = vmatpush1.msra.mxu0 0.0
    %2211 = vmatprep.subr.mxu0 0.0
    %2212 = vmatpush1.msra.mxu0 0.0
    %2213 = vmatprep.subr.mxu0 0.0
    %2214 = vmatpush1.msra.mxu0 0.0
    %2215 = vmatprep.subr.mxu0 0.0
    %2216 = vmatpush1.msra.mxu0 0.0
    %2217 = vmatprep.subr.mxu0 0.0
    %2218 = vmatpush1.msra.mxu0 0.0
    %2219 = vmatprep.subr.mxu0 0.0
    %2220 = vmatpush1.msra.mxu0 0.0
    %2221 = vmatprep.subr.mxu0 0.0
    %2222 = vmatpush1.msra.mxu0 0.0
    %2223 = vmatprep.subr.mxu0 0.0
    %2224 = vmatpush1.msra.mxu0 0.0
    %2225 = vmatprep.mubr.f32.mxu0 0.0
    %v2226 = vand.u32 %v2035, 4294901760
    %2227 = vmatmul.mubr.f32.gmra.mrb[0].mxu0 %v2226
    %v2228 = vpop.f32.mrb[0].mxu0
    %v2229 = vadd.f32 %v2117, %v2228
    %v2230 = vpop.f32.mrb[0].mxu0
    %v2231 = vadd.f32 %v2119, %v2230
    %2232 = vdwg.mxu0
    %v2233 = vand.u32 %v1969, 4294901760
    %v2234 = vsub.f32 %v1969, %v2233
    %2235 = vmatprep.subr.mxu0 %v2234
    %v2236 = vand.u32 %v1968, 4294901760
    %v2237 = vsub.f32 %v1968, %v2236
    %2238 = vmatpush1.msra.mxu0 %v2237
    %v2239 = vand.u32 %v1976, 4294901760
    %v2240 = vsub.f32 %v1976, %v2239
    %2241 = vmatprep.subr.mxu0 %v2240
    %v2242 = vand.u32 %v1975, 4294901760
    %v2243 = vsub.f32 %v1975, %v2242
    %2244 = vmatpush1.msra.mxu0 %v2243
    %v2245 = vand.u32 %v1983, 4294901760
    %v2246 = vsub.f32 %v1983, %v2245
    %2247 = vmatprep.subr.mxu0 %v2246
    %v2248 = vand.u32 %v1982, 4294901760
    %v2249 = vsub.f32 %v1982, %v2248
    %2250 = vmatpush1.msra.mxu0 %v2249
    %v2251 = vand.u32 %v1990, 4294901760
    %v2252 = vsub.f32 %v1990, %v2251
    %2253 = vmatprep.subr.mxu0 %v2252
    %v2254 = vand.u32 %v1989, 4294901760
    %v2255 = vsub.f32 %v1989, %v2254
    %2256 = vmatpush1.msra.mxu0 %v2255
    %2257 = vmatprep.subr.mxu0 0.0
    %2258 = vmatpush1.msra.mxu0 0.0
    %2259 = vmatprep.subr.mxu0 0.0
    %2260 = vmatpush1.msra.mxu0 0.0
    %2261 = vmatprep.subr.mxu0 0.0
    %2262 = vmatpush1.msra.mxu0 0.0
    %2263 = vmatprep.subr.mxu0 0.0
    %2264 = vmatpush1.msra.mxu0 0.0
    %2265 = vmatprep.subr.mxu0 0.0
    %2266 = vmatpush1.msra.mxu0 0.0
    %2267 = vmatprep.subr.mxu0 0.0
    %2268 = vmatpush1.msra.mxu0 0.0
    %2269 = vmatprep.subr.mxu0 0.0
    %2270 = vmatpush1.msra.mxu0 0.0
    %2271 = vmatprep.subr.mxu0 0.0
    %2272 = vmatpush1.msra.mxu0 0.0
    %2273 = vmatprep.subr.mxu0 0.0
    %2274 = vmatpush1.msra.mxu0 0.0
    %2275 = vmatprep.subr.mxu0 0.0
    %2276 = vmatpush1.msra.mxu0 0.0
    %2277 = vmatprep.subr.mxu0 0.0
    %2278 = vmatpush1.msra.mxu0 0.0
    %2279 = vmatprep.subr.mxu0 0.0
    %2280 = vmatpush1.msra.mxu0 0.0
    %2281 = vmatprep.subr.mxu0 0.0
    %2282 = vmatpush1.msra.mxu0 0.0
    %2283 = vmatprep.subr.mxu0 0.0
    %2284 = vmatpush1.msra.mxu0 0.0
    %2285 = vmatprep.subr.mxu0 0.0
    %2286 = vmatpush1.msra.mxu0 0.0
    %2287 = vmatprep.subr.mxu0 0.0
    %2288 = vmatpush1.msra.mxu0 0.0
    %2289 = vmatprep.subr.mxu0 0.0
    %2290 = vmatpush1.msra.mxu0 0.0
    %2291 = vmatprep.subr.mxu0 0.0
    %2292 = vmatpush1.msra.mxu0 0.0
    %2293 = vmatprep.subr.mxu0 0.0
    %2294 = vmatpush1.msra.mxu0 0.0
    %2295 = vmatprep.subr.mxu0 0.0
    %2296 = vmatpush1.msra.mxu0 0.0
    %2297 = vmatprep.subr.mxu0 0.0
    %2298 = vmatpush1.msra.mxu0 0.0
    %2299 = vmatprep.subr.mxu0 0.0
    %2300 = vmatpush1.msra.mxu0 0.0
    %2301 = vmatprep.subr.mxu0 0.0
    %2302 = vmatpush1.msra.mxu0 0.0
    %2303 = vmatprep.subr.mxu0 0.0
    %2304 = vmatpush1.msra.mxu0 0.0
    %2305 = vmatprep.subr.mxu0 0.0
    %2306 = vmatpush1.msra.mxu0 0.0
    %2307 = vmatprep.subr.mxu0 0.0
    %2308 = vmatpush1.msra.mxu0 0.0
    %2309 = vmatprep.subr.mxu0 0.0
    %2310 = vmatpush1.msra.mxu0 0.0
    %2311 = vmatprep.subr.mxu0 0.0
    %2312 = vmatpush1.msra.mxu0 0.0
    %2313 = vmatprep.mubr.f32.mxu0 0.0
    %v2314 = vand.u32 %v2035, 4294901760
    %v2315 = vsub.f32 %v2035, %v2314
    %2316 = vmatmul.mubr.f32.gmra.mrb[0].mxu0 %v2315
    %v2317 = vpop.f32.mrb[0].mxu0
    %v2318 = vadd.f32 %v2229, %v2317
    %v2319 = vpop.f32.mrb[0].mxu0
    %v2320 = vadd.f32 %v2231, %v2319
    %2321 = vdwg.mxu0
    %v2322 = vand.u32 %v1969, 4294901760
    %2323 = vmatprep.subr.mxu0 %v2322
    %v2324 = vand.u32 %v1968, 4294901760
    %2325 = vmatpush1.msra.mxu0 %v2324
    %v2326 = vand.u32 %v1976, 4294901760
    %2327 = vmatprep.subr.mxu0 %v2326
    %v2328 = vand.u32 %v1975, 4294901760
    %2329 = vmatpush1.msra.mxu0 %v2328
    %v2330 = vand.u32 %v1983, 4294901760
    %2331 = vmatprep.subr.mxu0 %v2330
    %v2332 = vand.u32 %v1982, 4294901760
    %2333 = vmatpush1.msra.mxu0 %v2332
    %v2334 = vand.u32 %v1990, 4294901760
    %2335 = vmatprep.subr.mxu0 %v2334
    %v2336 = vand.u32 %v1989, 4294901760
    %2337 = vmatpush1.msra.mxu0 %v2336
    %2338 = vmatprep.subr.mxu0 0.0
    %2339 = vmatpush1.msra.mxu0 0.0
    %2340 = vmatprep.subr.mxu0 0.0
    %2341 = vmatpush1.msra.mxu0 0.0
    %2342 = vmatprep.subr.mxu0 0.0
    %2343 = vmatpush1.msra.mxu0 0.0
    %2344 = vmatprep.subr.mxu0 0.0
    %2345 = vmatpush1.msra.mxu0 0.0
    %2346 = vmatprep.subr.mxu0 0.0
    %2347 = vmatpush1.msra.mxu0 0.0
    %2348 = vmatprep.subr.mxu0 0.0
    %2349 = vmatpush1.msra.mxu0 0.0
    %2350 = vmatprep.subr.mxu0 0.0
    %2351 = vmatpush1.msra.mxu0 0.0
    %2352 = vmatprep.subr.mxu0 0.0
    %2353 = vmatpush1.msra.mxu0 0.0
    %2354 = vmatprep.subr.mxu0 0.0
    %2355 = vmatpush1.msra.mxu0 0.0
    %2356 = vmatprep.subr.mxu0 0.0
    %2357 = vmatpush1.msra.mxu0 0.0
    %2358 = vmatprep.subr.mxu0 0.0
    %2359 = vmatpush1.msra.mxu0 0.0
    %2360 = vmatprep.subr.mxu0 0.0
    %2361 = vmatpush1.msra.mxu0 0.0
    %2362 = vmatprep.subr.mxu0 0.0
    %2363 = vmatpush1.msra.mxu0 0.0
    %2364 = vmatprep.subr.mxu0 0.0
    %2365 = vmatpush1.msra.mxu0 0.0
    %2366 = vmatprep.subr.mxu0 0.0
    %2367 = vmatpush1.msra.mxu0 0.0
    %2368 = vmatprep.subr.mxu0 0.0
    %2369 = vmatpush1.msra.mxu0 0.0
    %2370 = vmatprep.subr.mxu0 0.0
    %2371 = vmatpush1.msra.mxu0 0.0
    %2372 = vmatprep.subr.mxu0 0.0
    %2373 = vmatpush1.msra.mxu0 0.0
    %2374 = vmatprep.subr.mxu0 0.0
    %2375 = vmatpush1.msra.mxu0 0.0
    %2376 = vmatprep.subr.mxu0 0.0
    %2377 = vmatpush1.msra.mxu0 0.0
    %2378 = vmatprep.subr.mxu0 0.0
    %2379 = vmatpush1.msra.mxu0 0.0
    %2380 = vmatprep.subr.mxu0 0.0
    %2381 = vmatpush1.msra.mxu0 0.0
    %2382 = vmatprep.subr.mxu0 0.0
    %2383 = vmatpush1.msra.mxu0 0.0
    %2384 = vmatprep.subr.mxu0 0.0
    %2385 = vmatpush1.msra.mxu0 0.0
    %2386 = vmatprep.subr.mxu0 0.0
    %2387 = vmatpush1.msra.mxu0 0.0
    %2388 = vmatprep.subr.mxu0 0.0
    %2389 = vmatpush1.msra.mxu0 0.0
    %2390 = vmatprep.subr.mxu0 0.0
    %2391 = vmatpush1.msra.mxu0 0.0
    %2392 = vmatprep.subr.mxu0 0.0
    %2393 = vmatpush1.msra.mxu0 0.0
    %2394 = vmatprep.mubr.f32.mxu0 0.0
    %v2395 = vand.u32 %v2035, 4294901760
    %v2396 = vsub.f32 %v2035, %v2395
    %v2397 = vand.u32 %v2396, 4294901760
    %2398 = vmatmul.mubr.f32.gmra.mrb[0].mxu0 %v2397
    %v2399 = vpop.f32.mrb[0].mxu0
    %v2400 = vadd.f32 %v2318, %v2399
    %v2401 = vpop.f32.mrb[0].mxu0
    %v2402 = vadd.f32 %v2320, %v2401
    %2403 = vdwg.mxu0
    %v2404 = vand.u32 %v1969, 4294901760
    %v2405 = vsub.f32 %v1969, %v2404
    %v2406 = vand.u32 %v2405, 4294901760
    %2407 = vmatprep.subr.mxu0 %v2406
    %v2408 = vand.u32 %v1968, 4294901760
    %v2409 = vsub.f32 %v1968, %v2408
    %v2410 = vand.u32 %v2409, 4294901760
    %2411 = vmatpush1.msra.mxu0 %v2410
    %v2412 = vand.u32 %v1976, 4294901760
    %v2413 = vsub.f32 %v1976, %v2412
    %v2414 = vand.u32 %v2413, 4294901760
    %2415 = vmatprep.subr.mxu0 %v2414
    %v2416 = vand.u32 %v1975, 4294901760
    %v2417 = vsub.f32 %v1975, %v2416
    %v2418 = vand.u32 %v2417, 4294901760
    %2419 = vmatpush1.msra.mxu0 %v2418
    %v2420 = vand.u32 %v1983, 4294901760
    %v2421 = vsub.f32 %v1983, %v2420
    %v2422 = vand.u32 %v2421, 4294901760
    %2423 = vmatprep.subr.mxu0 %v2422
    %v2424 = vand.u32 %v1982, 4294901760
    %v2425 = vsub.f32 %v1982, %v2424
    %v2426 = vand.u32 %v2425, 4294901760
    %2427 = vmatpush1.msra.mxu0 %v2426
    %v2428 = vand.u32 %v1990, 4294901760
    %v2429 = vsub.f32 %v1990, %v2428
    %v2430 = vand.u32 %v2429, 4294901760
    %2431 = vmatprep.subr.mxu0 %v2430
    %v2432 = vand.u32 %v1989, 4294901760
    %v2433 = vsub.f32 %v1989, %v2432
    %v2434 = vand.u32 %v2433, 4294901760
    %2435 = vmatpush1.msra.mxu0 %v2434
    %2436 = vmatprep.subr.mxu0 0.0
    %2437 = vmatpush1.msra.mxu0 0.0
    %2438 = vmatprep.subr.mxu0 0.0
    %2439 = vmatpush1.msra.mxu0 0.0
    %2440 = vmatprep.subr.mxu0 0.0
    %2441 = vmatpush1.msra.mxu0 0.0
    %2442 = vmatprep.subr.mxu0 0.0
    %2443 = vmatpush1.msra.mxu0 0.0
    %2444 = vmatprep.subr.mxu0 0.0
    %2445 = vmatpush1.msra.mxu0 0.0
    %2446 = vmatprep.subr.mxu0 0.0
    %2447 = vmatpush1.msra.mxu0 0.0
    %2448 = vmatprep.subr.mxu0 0.0
    %2449 = vmatpush1.msra.mxu0 0.0
    %2450 = vmatprep.subr.mxu0 0.0
    %2451 = vmatpush1.msra.mxu0 0.0
    %2452 = vmatprep.subr.mxu0 0.0
    %2453 = vmatpush1.msra.mxu0 0.0
    %2454 = vmatprep.subr.mxu0 0.0
    %2455 = vmatpush1.msra.mxu0 0.0
    %2456 = vmatprep.subr.mxu0 0.0
    %2457 = vmatpush1.msra.mxu0 0.0
    %2458 = vmatprep.subr.mxu0 0.0
    %2459 = vmatpush1.msra.mxu0 0.0
    %2460 = vmatprep.subr.mxu0 0.0
    %2461 = vmatpush1.msra.mxu0 0.0
    %2462 = vmatprep.subr.mxu0 0.0
    %2463 = vmatpush1.msra.mxu0 0.0
    %2464 = vmatprep.subr.mxu0 0.0
    %2465 = vmatpush1.msra.mxu0 0.0
    %2466 = vmatprep.subr.mxu0 0.0
    %2467 = vmatpush1.msra.mxu0 0.0
    %2468 = vmatprep.subr.mxu0 0.0
    %2469 = vmatpush1.msra.mxu0 0.0
    %2470 = vmatprep.subr.mxu0 0.0
    %2471 = vmatpush1.msra.mxu0 0.0
    %2472 = vmatprep.subr.mxu0 0.0
    %2473 = vmatpush1.msra.mxu0 0.0
    %2474 = vmatprep.subr.mxu0 0.0
    %2475 = vmatpush1.msra.mxu0 0.0
    %2476 = vmatprep.subr.mxu0 0.0
    %2477 = vmatpush1.msra.mxu0 0.0
    %2478 = vmatprep.subr.mxu0 0.0
    %2479 = vmatpush1.msra.mxu0 0.0
    %2480 = vmatprep.subr.mxu0 0.0
    %2481 = vmatpush1.msra.mxu0 0.0
    %2482 = vmatprep.subr.mxu0 0.0
    %2483 = vmatpush1.msra.mxu0 0.0
    %2484 = vmatprep.subr.mxu0 0.0
    %2485 = vmatpush1.msra.mxu0 0.0
    %2486 = vmatprep.subr.mxu0 0.0
    %2487 = vmatpush1.msra.mxu0 0.0
    %2488 = vmatprep.subr.mxu0 0.0
    %2489 = vmatpush1.msra.mxu0 0.0
    %2490 = vmatprep.subr.mxu0 0.0
    %2491 = vmatpush1.msra.mxu0 0.0
    %2492 = vmatprep.mubr.f32.mxu0 0.0
    %v2493 = vand.u32 %v2035, 4294901760
    %2494 = vmatmul.mubr.f32.gmra.mrb[0].mxu0 %v2493
    %v2495 = vpop.f32.mrb[0].mxu0
    %v2496 = vadd.f32 %v2400, %v2495
    %v2497 = vpop.f32.mrb[0].mxu0
    %v2498 = vadd.f32 %v2402, %v2497
    %2499 = vdwg.mxu0
    %v2500 = vand.u32 %v1969, 4294901760
    %2501 = vmatprep.subr.mxu0 %v2500
    %v2502 = vand.u32 %v1968, 4294901760
    %2503 = vmatpush1.msra.mxu0 %v2502
    %v2504 = vand.u32 %v1976, 4294901760
    %2505 = vmatprep.subr.mxu0 %v2504
    %v2506 = vand.u32 %v1975, 4294901760
    %2507 = vmatpush1.msra.mxu0 %v2506
    %v2508 = vand.u32 %v1983, 4294901760
    %2509 = vmatprep.subr.mxu0 %v2508
    %v2510 = vand.u32 %v1982, 4294901760
    %2511 = vmatpush1.msra.mxu0 %v2510
    %v2512 = vand.u32 %v1990, 4294901760
    %2513 = vmatprep.subr.mxu0 %v2512
    %v2514 = vand.u32 %v1989, 4294901760
    %2515 = vmatpush1.msra.mxu0 %v2514
    %2516 = vmatprep.subr.mxu0 0.0
    %2517 = vmatpush1.msra.mxu0 0.0
    %2518 = vmatprep.subr.mxu0 0.0
    %2519 = vmatpush1.msra.mxu0 0.0
    %2520 = vmatprep.subr.mxu0 0.0
    %2521 = vmatpush1.msra.mxu0 0.0
    %2522 = vmatprep.subr.mxu0 0.0
    %2523 = vmatpush1.msra.mxu0 0.0
    %2524 = vmatprep.subr.mxu0 0.0
    %2525 = vmatpush1.msra.mxu0 0.0
    %2526 = vmatprep.subr.mxu0 0.0
    %2527 = vmatpush1.msra.mxu0 0.0
    %2528 = vmatprep.subr.mxu0 0.0
    %2529 = vmatpush1.msra.mxu0 0.0
    %2530 = vmatprep.subr.mxu0 0.0
    %2531 = vmatpush1.msra.mxu0 0.0
    %2532 = vmatprep.subr.mxu0 0.0
    %2533 = vmatpush1.msra.mxu0 0.0
    %2534 = vmatprep.subr.mxu0 0.0
    %2535 = vmatpush1.msra.mxu0 0.0
    %2536 = vmatprep.subr.mxu0 0.0
    %2537 = vmatpush1.msra.mxu0 0.0
    %2538 = vmatprep.subr.mxu0 0.0
    %2539 = vmatpush1.msra.mxu0 0.0
    %2540 = vmatprep.subr.mxu0 0.0
    %2541 = vmatpush1.msra.mxu0 0.0
    %2542 = vmatprep.subr.mxu0 0.0
    %2543 = vmatpush1.msra.mxu0 0.0
    %2544 = vmatprep.subr.mxu0 0.0
    %2545 = vmatpush1.msra.mxu0 0.0
    %2546 = vmatprep.subr.mxu0 0.0
    %2547 = vmatpush1.msra.mxu0 0.0
    %2548 = vmatprep.subr.mxu0 0.0
    %2549 = vmatpush1.msra.mxu0 0.0
    %2550 = vmatprep.subr.mxu0 0.0
    %2551 = vmatpush1.msra.mxu0 0.0
    %2552 = vmatprep.subr.mxu0 0.0
    %2553 = vmatpush1.msra.mxu0 0.0
    %2554 = vmatprep.subr.mxu0 0.0
    %2555 = vmatpush1.msra.mxu0 0.0
    %2556 = vmatprep.subr.mxu0 0.0
    %2557 = vmatpush1.msra.mxu0 0.0
    %2558 = vmatprep.subr.mxu0 0.0
    %2559 = vmatpush1.msra.mxu0 0.0
    %2560 = vmatprep.subr.mxu0 0.0
    %2561 = vmatpush1.msra.mxu0 0.0
    %2562 = vmatprep.subr.mxu0 0.0
    %2563 = vmatpush1.msra.mxu0 0.0
    %2564 = vmatprep.subr.mxu0 0.0
    %2565 = vmatpush1.msra.mxu0 0.0
    %2566 = vmatprep.subr.mxu0 0.0
    %2567 = vmatpush1.msra.mxu0 0.0
    %2568 = vmatprep.subr.mxu0 0.0
    %2569 = vmatpush1.msra.mxu0 0.0
    %2570 = vmatprep.subr.mxu0 0.0
    %2571 = vmatpush1.msra.mxu0 0.0
    %2572 = vmatprep.mubr.f32.mxu0 0.0
    %v2573 = vand.u32 %v2035, 4294901760
    %2574 = vmatmul.mubr.f32.gmra.mrb[0].mxu0 %v2573
    %v2575 = vpop.f32.mrb[0].mxu0
    %v2576 = vadd.f32 %v2496, %v2575
    %v2577 = vpop.f32.mrb[0].mxu0
    %v2578 = vadd.f32 %v2498, %v2577
    %2579 = vdwg.mxu0
    %v2580 = vand.u32 %v1971, 4294901760
    %2581 = vmatprep.subr.mxu0 %v2580
    %v2582 = vand.u32 %v1970, 4294901760
    %2583 = vmatpush1.msra.mxu0 %v2582
    %v2584 = vand.u32 %v1978, 4294901760
    %2585 = vmatprep.subr.mxu0 %v2584
    %v2586 = vand.u32 %v1977, 4294901760
    %2587 = vmatpush1.msra.mxu0 %v2586
    %v2588 = vand.u32 %v1985, 4294901760
    %2589 = vmatprep.subr.mxu0 %v2588
    %v2590 = vand.u32 %v1984, 4294901760
    %2591 = vmatpush1.msra.mxu0 %v2590
    %v2592 = vand.u32 %v1992, 4294901760
    %2593 = vmatprep.subr.mxu0 %v2592
    %v2594 = vand.u32 %v1991, 4294901760
    %2595 = vmatpush1.msra.mxu0 %v2594
    %2596 = vmatprep.subr.mxu0 0.0
    %2597 = vmatpush1.msra.mxu0 0.0
    %2598 = vmatprep.subr.mxu0 0.0
    %2599 = vmatpush1.msra.mxu0 0.0
    %2600 = vmatprep.subr.mxu0 0.0
    %2601 = vmatpush1.msra.mxu0 0.0
    %2602 = vmatprep.subr.mxu0 0.0
    %2603 = vmatpush1.msra.mxu0 0.0
    %2604 = vmatprep.subr.mxu0 0.0
    %2605 = vmatpush1.msra.mxu0 0.0
    %2606 = vmatprep.subr.mxu0 0.0
    %2607 = vmatpush1.msra.mxu0 0.0
    %2608 = vmatprep.subr.mxu0 0.0
    %2609 = vmatpush1.msra.mxu0 0.0
    %2610 = vmatprep.subr.mxu0 0.0
    %2611 = vmatpush1.msra.mxu0 0.0
    %2612 = vmatprep.subr.mxu0 0.0
    %2613 = vmatpush1.msra.mxu0 0.0
    %2614 = vmatprep.subr.mxu0 0.0
    %2615 = vmatpush1.msra.mxu0 0.0
    %2616 = vmatprep.subr.mxu0 0.0
    %2617 = vmatpush1.msra.mxu0 0.0
    %2618 = vmatprep.subr.mxu0 0.0
    %2619 = vmatpush1.msra.mxu0 0.0
    %2620 = vmatprep.subr.mxu0 0.0
    %2621 = vmatpush1.msra.mxu0 0.0
    %2622 = vmatprep.subr.mxu0 0.0
    %2623 = vmatpush1.msra.mxu0 0.0
    %2624 = vmatprep.subr.mxu0 0.0
    %2625 = vmatpush1.msra.mxu0 0.0
    %2626 = vmatprep.subr.mxu0 0.0
    %2627 = vmatpush1.msra.mxu0 0.0
    %2628 = vmatprep.subr.mxu0 0.0
    %2629 = vmatpush1.msra.mxu0 0.0
    %2630 = vmatprep.subr.mxu0 0.0
    %2631 = vmatpush1.msra.mxu0 0.0
    %2632 = vmatprep.subr.mxu0 0.0
    %2633 = vmatpush1.msra.mxu0 0.0
    %2634 = vmatprep.subr.mxu0 0.0
    %2635 = vmatpush1.msra.mxu0 0.0
    %2636 = vmatprep.subr.mxu0 0.0
    %2637 = vmatpush1.msra.mxu0 0.0
    %2638 = vmatprep.subr.mxu0 0.0
    %2639 = vmatpush1.msra.mxu0 0.0
    %2640 = vmatprep.subr.mxu0 0.0
    %2641 = vmatpush1.msra.mxu0 0.0
    %2642 = vmatprep.subr.mxu0 0.0
    %2643 = vmatpush1.msra.mxu0 0.0
    %2644 = vmatprep.subr.mxu0 0.0
    %2645 = vmatpush1.msra.mxu0 0.0
    %2646 = vmatprep.subr.mxu0 0.0
    %2647 = vmatpush1.msra.mxu0 0.0
    %2648 = vmatprep.subr.mxu0 0.0
    %2649 = vmatpush1.msra.mxu0 0.0
    %2650 = vmatprep.subr.mxu0 0.0
    %2651 = vmatpush1.msra.mxu0 0.0
    %2652 = vmatprep.mubr.f32.mxu0 0.0
    %v2653 = vand.u32 %v2035, 4294901760
    %v2654 = vsub.f32 %v2035, %v2653
    %v2655 = vand.u32 %v2654, 4294901760
    %v2656 = vsub.f32 %v2654, %v2655
    %v2657 = vand.u32 %v2656, 4294901760
    %2658 = vmatmul.mubr.f32.gmra.mrb[0].mxu0 %v2657
    %v2659 = vpop.f32.mrb[0].mxu0
    %v2660 = vadd.f32 %v2009, %v2659
    %v2661 = vpop.f32.mrb[0].mxu0
    %v2662 = vadd.f32 %v2013, %v2661
    %2663 = vdwg.mxu0
    %v2664 = vand.u32 %v1971, 4294901760
    %v2665 = vsub.f32 %v1971, %v2664
    %v2666 = vand.u32 %v2665, 4294901760
    %v2667 = vsub.f32 %v2665, %v2666
    %v2668 = vand.u32 %v2667, 4294901760
    %2669 = vmatprep.subr.mxu0 %v2668
    %v2670 = vand.u32 %v1970, 4294901760
    %v2671 = vsub.f32 %v1970, %v2670
    %v2672 = vand.u32 %v2671, 4294901760
    %v2673 = vsub.f32 %v2671, %v2672
    %v2674 = vand.u32 %v2673, 4294901760
    %2675 = vmatpush1.msra.mxu0 %v2674
    %v2676 = vand.u32 %v1978, 4294901760
    %v2677 = vsub.f32 %v1978, %v2676
    %v2678 = vand.u32 %v2677, 4294901760
    %v2679 = vsub.f32 %v2677, %v2678
    %v2680 = vand.u32 %v2679, 4294901760
    %2681 = vmatprep.subr.mxu0 %v2680
    %v2682 = vand.u32 %v1977, 4294901760
    %v2683 = vsub.f32 %v1977, %v2682
    %v2684 = vand.u32 %v2683, 4294901760
    %v2685 = vsub.f32 %v2683, %v2684
    %v2686 = vand.u32 %v2685, 4294901760
    %2687 = vmatpush1.msra.mxu0 %v2686
    %v2688 = vand.u32 %v1985, 4294901760
    %v2689 = vsub.f32 %v1985, %v2688
    %v2690 = vand.u32 %v2689, 4294901760
    %v2691 = vsub.f32 %v2689, %v2690
    %v2692 = vand.u32 %v2691, 4294901760
    %2693 = vmatprep.subr.mxu0 %v2692
    %v2694 = vand.u32 %v1984, 4294901760
    %v2695 = vsub.f32 %v1984, %v2694
    %v2696 = vand.u32 %v2695, 4294901760
    %v2697 = vsub.f32 %v2695, %v2696
    %v2698 = vand.u32 %v2697, 4294901760
    %2699 = vmatpush1.msra.mxu0 %v2698
    %v2700 = vand.u32 %v1992, 4294901760
    %v2701 = vsub.f32 %v1992, %v2700
    %v2702 = vand.u32 %v2701, 4294901760
    %v2703 = vsub.f32 %v2701, %v2702
    %v2704 = vand.u32 %v2703, 4294901760
    %2705 = vmatprep.subr.mxu0 %v2704
    %v2706 = vand.u32 %v1991, 4294901760
    %v2707 = vsub.f32 %v1991, %v2706
    %v2708 = vand.u32 %v2707, 4294901760
    %v2709 = vsub.f32 %v2707, %v2708
    %v2710 = vand.u32 %v2709, 4294901760
    %2711 = vmatpush1.msra.mxu0 %v2710
    %2712 = vmatprep.subr.mxu0 0.0
    %2713 = vmatpush1.msra.mxu0 0.0
    %2714 = vmatprep.subr.mxu0 0.0
    %2715 = vmatpush1.msra.mxu0 0.0
    %2716 = vmatprep.subr.mxu0 0.0
    %2717 = vmatpush1.msra.mxu0 0.0
    %2718 = vmatprep.subr.mxu0 0.0
    %2719 = vmatpush1.msra.mxu0 0.0
    %2720 = vmatprep.subr.mxu0 0.0
    %2721 = vmatpush1.msra.mxu0 0.0
    %2722 = vmatprep.subr.mxu0 0.0
    %2723 = vmatpush1.msra.mxu0 0.0
    %2724 = vmatprep.subr.mxu0 0.0
    %2725 = vmatpush1.msra.mxu0 0.0
    %2726 = vmatprep.subr.mxu0 0.0
    %2727 = vmatpush1.msra.mxu0 0.0
    %2728 = vmatprep.subr.mxu0 0.0
    %2729 = vmatpush1.msra.mxu0 0.0
    %2730 = vmatprep.subr.mxu0 0.0
    %2731 = vmatpush1.msra.mxu0 0.0
    %2732 = vmatprep.subr.mxu0 0.0
    %2733 = vmatpush1.msra.mxu0 0.0
    %2734 = vmatprep.subr.mxu0 0.0
    %2735 = vmatpush1.msra.mxu0 0.0
    %2736 = vmatprep.subr.mxu0 0.0
    %2737 = vmatpush1.msra.mxu0 0.0
    %2738 = vmatprep.subr.mxu0 0.0
    %2739 = vmatpush1.msra.mxu0 0.0
    %2740 = vmatprep.subr.mxu0 0.0
    %2741 = vmatpush1.msra.mxu0 0.0
    %2742 = vmatprep.subr.mxu0 0.0
    %2743 = vmatpush1.msra.mxu0 0.0
    %2744 = vmatprep.subr.mxu0 0.0
    %2745 = vmatpush1.msra.mxu0 0.0
    %2746 = vmatprep.subr.mxu0 0.0
    %2747 = vmatpush1.msra.mxu0 0.0
    %2748 = vmatprep.subr.mxu0 0.0
    %2749 = vmatpush1.msra.mxu0 0.0
    %2750 = vmatprep.subr.mxu0 0.0
    %2751 = vmatpush1.msra.mxu0 0.0
    %2752 = vmatprep.subr.mxu0 0.0
    %2753 = vmatpush1.msra.mxu0 0.0
    %2754 = vmatprep.subr.mxu0 0.0
    %2755 = vmatpush1.msra.mxu0 0.0
    %2756 = vmatprep.subr.mxu0 0.0
    %2757 = vmatpush1.msra.mxu0 0.0
    %2758 = vmatprep.subr.mxu0 0.0
    %2759 = vmatpush1.msra.mxu0 0.0
    %2760 = vmatprep.subr.mxu0 0.0
    %2761 = vmatpush1.msra.mxu0 0.0
    %2762 = vmatprep.subr.mxu0 0.0
    %2763 = vmatpush1.msra.mxu0 0.0
    %2764 = vmatprep.subr.mxu0 0.0
    %2765 = vmatpush1.msra.mxu0 0.0
    %2766 = vmatprep.subr.mxu0 0.0
    %2767 = vmatpush1.msra.mxu0 0.0
    %2768 = vmatprep.mubr.f32.mxu0 0.0
    %v2769 = vand.u32 %v2035, 4294901760
    %2770 = vmatmul.mubr.f32.gmra.mrb[0].mxu0 %v2769
    %v2771 = vpop.f32.mrb[0].mxu0
    %v2772 = vadd.f32 %v2660, %v2771
    %v2773 = vpop.f32.mrb[0].mxu0
    %v2774 = vadd.f32 %v2662, %v2773
    %2775 = vdwg.mxu0
    %v2776 = vand.u32 %v1971, 4294901760
    %v2777 = vsub.f32 %v1971, %v2776
    %2778 = vmatprep.subr.mxu0 %v2777
    %v2779 = vand.u32 %v1970, 4294901760
    %v2780 = vsub.f32 %v1970, %v2779
    %2781 = vmatpush1.msra.mxu0 %v2780
    %v2782 = vand.u32 %v1978, 4294901760
    %v2783 = vsub.f32 %v1978, %v2782
    %2784 = vmatprep.subr.mxu0 %v2783
    %v2785 = vand.u32 %v1977, 4294901760
    %v2786 = vsub.f32 %v1977, %v2785
    %2787 = vmatpush1.msra.mxu0 %v2786
    %v2788 = vand.u32 %v1985, 4294901760
    %v2789 = vsub.f32 %v1985, %v2788
    %2790 = vmatprep.subr.mxu0 %v2789
    %v2791 = vand.u32 %v1984, 4294901760
    %v2792 = vsub.f32 %v1984, %v2791
    %2793 = vmatpush1.msra.mxu0 %v2792
    %v2794 = vand.u32 %v1992, 4294901760
    %v2795 = vsub.f32 %v1992, %v2794
    %2796 = vmatprep.subr.mxu0 %v2795
    %v2797 = vand.u32 %v1991, 4294901760
    %v2798 = vsub.f32 %v1991, %v2797
    %2799 = vmatpush1.msra.mxu0 %v2798
    %2800 = vmatprep.subr.mxu0 0.0
    %2801 = vmatpush1.msra.mxu0 0.0
    %2802 = vmatprep.subr.mxu0 0.0
    %2803 = vmatpush1.msra.mxu0 0.0
    %2804 = vmatprep.subr.mxu0 0.0
    %2805 = vmatpush1.msra.mxu0 0.0
    %2806 = vmatprep.subr.mxu0 0.0
    %2807 = vmatpush1.msra.mxu0 0.0
    %2808 = vmatprep.subr.mxu0 0.0
    %2809 = vmatpush1.msra.mxu0 0.0
    %2810 = vmatprep.subr.mxu0 0.0
    %2811 = vmatpush1.msra.mxu0 0.0
    %2812 = vmatprep.subr.mxu0 0.0
    %2813 = vmatpush1.msra.mxu0 0.0
    %2814 = vmatprep.subr.mxu0 0.0
    %2815 = vmatpush1.msra.mxu0 0.0
    %2816 = vmatprep.subr.mxu0 0.0
    %2817 = vmatpush1.msra.mxu0 0.0
    %2818 = vmatprep.subr.mxu0 0.0
    %2819 = vmatpush1.msra.mxu0 0.0
    %2820 = vmatprep.subr.mxu0 0.0
    %2821 = vmatpush1.msra.mxu0 0.0
    %2822 = vmatprep.subr.mxu0 0.0
    %2823 = vmatpush1.msra.mxu0 0.0
    %2824 = vmatprep.subr.mxu0 0.0
    %2825 = vmatpush1.msra.mxu0 0.0
    %2826 = vmatprep.subr.mxu0 0.0
    %2827 = vmatpush1.msra.mxu0 0.0
    %2828 = vmatprep.subr.mxu0 0.0
    %2829 = vmatpush1.msra.mxu0 0.0
    %2830 = vmatprep.subr.mxu0 0.0
    %2831 = vmatpush1.msra.mxu0 0.0
    %2832 = vmatprep.subr.mxu0 0.0
    %2833 = vmatpush1.msra.mxu0 0.0
    %2834 = vmatprep.subr.mxu0 0.0
    %2835 = vmatpush1.msra.mxu0 0.0
    %2836 = vmatprep.subr.mxu0 0.0
    %2837 = vmatpush1.msra.mxu0 0.0
    %2838 = vmatprep.subr.mxu0 0.0
    %2839 = vmatpush1.msra.mxu0 0.0
    %2840 = vmatprep.subr.mxu0 0.0
    %2841 = vmatpush1.msra.mxu0 0.0
    %2842 = vmatprep.subr.mxu0 0.0
    %2843 = vmatpush1.msra.mxu0 0.0
    %2844 = vmatprep.subr.mxu0 0.0
    %2845 = vmatpush1.msra.mxu0 0.0
    %2846 = vmatprep.subr.mxu0 0.0
    %2847 = vmatpush1.msra.mxu0 0.0
    %2848 = vmatprep.subr.mxu0 0.0
    %2849 = vmatpush1.msra.mxu0 0.0
    %2850 = vmatprep.subr.mxu0 0.0
    %2851 = vmatpush1.msra.mxu0 0.0
    %2852 = vmatprep.subr.mxu0 0.0
    %2853 = vmatpush1.msra.mxu0 0.0
    %2854 = vmatprep.subr.mxu0 0.0
    %2855 = vmatpush1.msra.mxu0 0.0
    %2856 = vmatprep.mubr.f32.mxu0 0.0
    %v2857 = vand.u32 %v2035, 4294901760
    %v2858 = vsub.f32 %v2035, %v2857
    %2859 = vmatmul.mubr.f32.gmra.mrb[0].mxu0 %v2858
    %v2860 = vpop.f32.mrb[0].mxu0
    %v2861 = vadd.f32 %v2772, %v2860
    %v2862 = vpop.f32.mrb[0].mxu0
    %v2863 = vadd.f32 %v2774, %v2862
    %2864 = vdwg.mxu0
    %v2865 = vand.u32 %v1971, 4294901760
    %2866 = vmatprep.subr.mxu0 %v2865
    %v2867 = vand.u32 %v1970, 4294901760
    %2868 = vmatpush1.msra.mxu0 %v2867
    %v2869 = vand.u32 %v1978, 4294901760
    %2870 = vmatprep.subr.mxu0 %v2869
    %v2871 = vand.u32 %v1977, 4294901760
    %2872 = vmatpush1.msra.mxu0 %v2871
    %v2873 = vand.u32 %v1985, 4294901760
    %2874 = vmatprep.subr.mxu0 %v2873
    %v2875 = vand.u32 %v1984, 4294901760
    %2876 = vmatpush1.msra.mxu0 %v2875
    %v2877 = vand.u32 %v1992, 4294901760
    %2878 = vmatprep.subr.mxu0 %v2877
    %v2879 = vand.u32 %v1991, 4294901760
    %2880 = vmatpush1.msra.mxu0 %v2879
    %2881 = vmatprep.subr.mxu0 0.0
    %2882 = vmatpush1.msra.mxu0 0.0
    %2883 = vmatprep.subr.mxu0 0.0
    %2884 = vmatpush1.msra.mxu0 0.0
    %2885 = vmatprep.subr.mxu0 0.0
    %2886 = vmatpush1.msra.mxu0 0.0
    %2887 = vmatprep.subr.mxu0 0.0
    %2888 = vmatpush1.msra.mxu0 0.0
    %2889 = vmatprep.subr.mxu0 0.0
    %2890 = vmatpush1.msra.mxu0 0.0
    %2891 = vmatprep.subr.mxu0 0.0
    %2892 = vmatpush1.msra.mxu0 0.0
    %2893 = vmatprep.subr.mxu0 0.0
    %2894 = vmatpush1.msra.mxu0 0.0
    %2895 = vmatprep.subr.mxu0 0.0
    %2896 = vmatpush1.msra.mxu0 0.0
    %2897 = vmatprep.subr.mxu0 0.0
    %2898 = vmatpush1.msra.mxu0 0.0
    %2899 = vmatprep.subr.mxu0 0.0
    %2900 = vmatpush1.msra.mxu0 0.0
    %2901 = vmatprep.subr.mxu0 0.0
    %2902 = vmatpush1.msra.mxu0 0.0
    %2903 = vmatprep.subr.mxu0 0.0
    %2904 = vmatpush1.msra.mxu0 0.0
    %2905 = vmatprep.subr.mxu0 0.0
    %2906 = vmatpush1.msra.mxu0 0.0
    %2907 = vmatprep.subr.mxu0 0.0
    %2908 = vmatpush1.msra.mxu0 0.0
    %2909 = vmatprep.subr.mxu0 0.0
    %2910 = vmatpush1.msra.mxu0 0.0
    %2911 = vmatprep.subr.mxu0 0.0
    %2912 = vmatpush1.msra.mxu0 0.0
    %2913 = vmatprep.subr.mxu0 0.0
    %2914 = vmatpush1.msra.mxu0 0.0
    %2915 = vmatprep.subr.mxu0 0.0
    %2916 = vmatpush1.msra.mxu0 0.0
    %2917 = vmatprep.subr.mxu0 0.0
    %2918 = vmatpush1.msra.mxu0 0.0
    %2919 = vmatprep.subr.mxu0 0.0
    %2920 = vmatpush1.msra.mxu0 0.0
    %2921 = vmatprep.subr.mxu0 0.0
    %2922 = vmatpush1.msra.mxu0 0.0
    %2923 = vmatprep.subr.mxu0 0.0
    %2924 = vmatpush1.msra.mxu0 0.0
    %2925 = vmatprep.subr.mxu0 0.0
    %2926 = vmatpush1.msra.mxu0 0.0
    %2927 = vmatprep.subr.mxu0 0.0
    %2928 = vmatpush1.msra.mxu0 0.0
    %2929 = vmatprep.subr.mxu0 0.0
    %2930 = vmatpush1.msra.mxu0 0.0
    %2931 = vmatprep.subr.mxu0 0.0
    %2932 = vmatpush1.msra.mxu0 0.0
    %2933 = vmatprep.subr.mxu0 0.0
    %2934 = vmatpush1.msra.mxu0 0.0
    %2935 = vmatprep.subr.mxu0 0.0
    %2936 = vmatpush1.msra.mxu0 0.0
    %2937 = vmatprep.mubr.f32.mxu0 0.0
    %v2938 = vand.u32 %v2035, 4294901760
    %v2939 = vsub.f32 %v2035, %v2938
    %v2940 = vand.u32 %v2939, 4294901760
    %2941 = vmatmul.mubr.f32.gmra.mrb[0].mxu0 %v2940
    %v2942 = vpop.f32.mrb[0].mxu0
    %v2943 = vadd.f32 %v2861, %v2942
    %v2944 = vpop.f32.mrb[0].mxu0
    %v2945 = vadd.f32 %v2863, %v2944
    %2946 = vdwg.mxu0
    %v2947 = vand.u32 %v1971, 4294901760
    %v2948 = vsub.f32 %v1971, %v2947
    %v2949 = vand.u32 %v2948, 4294901760
    %2950 = vmatprep.subr.mxu0 %v2949
    %v2951 = vand.u32 %v1970, 4294901760
    %v2952 = vsub.f32 %v1970, %v2951
    %v2953 = vand.u32 %v2952, 4294901760
    %2954 = vmatpush1.msra.mxu0 %v2953
    %v2955 = vand.u32 %v1978, 4294901760
    %v2956 = vsub.f32 %v1978, %v2955
    %v2957 = vand.u32 %v2956, 4294901760
    %2958 = vmatprep.subr.mxu0 %v2957
    %v2959 = vand.u32 %v1977, 4294901760
    %v2960 = vsub.f32 %v1977, %v2959
    %v2961 = vand.u32 %v2960, 4294901760
    %2962 = vmatpush1.msra.mxu0 %v2961
    %v2963 = vand.u32 %v1985, 4294901760
    %v2964 = vsub.f32 %v1985, %v2963
    %v2965 = vand.u32 %v2964, 4294901760
    %2966 = vmatprep.subr.mxu0 %v2965
    %v2967 = vand.u32 %v1984, 4294901760
    %v2968 = vsub.f32 %v1984, %v2967
    %v2969 = vand.u32 %v2968, 4294901760
    %2970 = vmatpush1.msra.mxu0 %v2969
    %v2971 = vand.u32 %v1992, 4294901760
    %v2972 = vsub.f32 %v1992, %v2971
    %v2973 = vand.u32 %v2972, 4294901760
    %2974 = vmatprep.subr.mxu0 %v2973
    %v2975 = vand.u32 %v1991, 4294901760
    %v2976 = vsub.f32 %v1991, %v2975
    %v2977 = vand.u32 %v2976, 4294901760
    %2978 = vmatpush1.msra.mxu0 %v2977
    %2979 = vmatprep.subr.mxu0 0.0
    %2980 = vmatpush1.msra.mxu0 0.0
    %2981 = vmatprep.subr.mxu0 0.0
    %2982 = vmatpush1.msra.mxu0 0.0
    %2983 = vmatprep.subr.mxu0 0.0
    %2984 = vmatpush1.msra.mxu0 0.0
    %2985 = vmatprep.subr.mxu0 0.0
    %2986 = vmatpush1.msra.mxu0 0.0
    %2987 = vmatprep.subr.mxu0 0.0
    %2988 = vmatpush1.msra.mxu0 0.0
    %2989 = vmatprep.subr.mxu0 0.0
    %2990 = vmatpush1.msra.mxu0 0.0
    %2991 = vmatprep.subr.mxu0 0.0
    %2992 = vmatpush1.msra.mxu0 0.0
    %2993 = vmatprep.subr.mxu0 0.0
    %2994 = vmatpush1.msra.mxu0 0.0
    %2995 = vmatprep.subr.mxu0 0.0
    %2996 = vmatpush1.msra.mxu0 0.0
    %2997 = vmatprep.subr.mxu0 0.0
    %2998 = vmatpush1.msra.mxu0 0.0
    %2999 = vmatprep.subr.mxu0 0.0
    %3000 = vmatpush1.msra.mxu0 0.0
    %3001 = vmatprep.subr.mxu0 0.0
    %3002 = vmatpush1.msra.mxu0 0.0
    %3003 = vmatprep.subr.mxu0 0.0
    %3004 = vmatpush1.msra.mxu0 0.0
    %3005 = vmatprep.subr.mxu0 0.0
    %3006 = vmatpush1.msra.mxu0 0.0
    %3007 = vmatprep.subr.mxu0 0.0
    %3008 = vmatpush1.msra.mxu0 0.0
    %3009 = vmatprep.subr.mxu0 0.0
    %3010 = vmatpush1.msra.mxu0 0.0
    %3011 = vmatprep.subr.mxu0 0.0
    %3012 = vmatpush1.msra.mxu0 0.0
    %3013 = vmatprep.subr.mxu0 0.0
    %3014 = vmatpush1.msra.mxu0 0.0
    %3015 = vmatprep.subr.mxu0 0.0
    %3016 = vmatpush1.msra.mxu0 0.0
    %3017 = vmatprep.subr.mxu0 0.0
    %3018 = vmatpush1.msra.mxu0 0.0
    %3019 = vmatprep.subr.mxu0 0.0
    %3020 = vmatpush1.msra.mxu0 0.0
    %3021 = vmatprep.subr.mxu0 0.0
    %3022 = vmatpush1.msra.mxu0 0.0
    %3023 = vmatprep.subr.mxu0 0.0
    %3024 = vmatpush1.msra.mxu0 0.0
    %3025 = vmatprep.subr.mxu0 0.0
    %3026 = vmatpush1.msra.mxu0 0.0
    %3027 = vmatprep.subr.mxu0 0.0
    %3028 = vmatpush1.msra.mxu0 0.0
    %3029 = vmatprep.subr.mxu0 0.0
    %3030 = vmatpush1.msra.mxu0 0.0
    %3031 = vmatprep.subr.mxu0 0.0
    %3032 = vmatpush1.msra.mxu0 0.0
    %3033 = vmatprep.subr.mxu0 0.0
    %3034 = vmatpush1.msra.mxu0 0.0
    %3035 = vmatprep.mubr.f32.mxu0 0.0
    %v3036 = vand.u32 %v2035, 4294901760
    %3037 = vmatmul.mubr.f32.gmra.mrb[0].mxu0 %v3036
    %v3038 = vpop.f32.mrb[0].mxu0
    %v3039 = vadd.f32 %v2943, %v3038
    %v3040 = vpop.f32.mrb[0].mxu0
    %v3041 = vadd.f32 %v2945, %v3040
    %3042 = vdwg.mxu0
    %v3043 = vand.u32 %v1971, 4294901760
    %3044 = vmatprep.subr.mxu0 %v3043
    %v3045 = vand.u32 %v1970, 4294901760
    %3046 = vmatpush1.msra.mxu0 %v3045
    %v3047 = vand.u32 %v1978, 4294901760
    %3048 = vmatprep.subr.mxu0 %v3047
    %v3049 = vand.u32 %v1977, 4294901760
    %3050 = vmatpush1.msra.mxu0 %v3049
    %v3051 = vand.u32 %v1985, 4294901760
    %3052 = vmatprep.subr.mxu0 %v3051
    %v3053 = vand.u32 %v1984, 4294901760
    %3054 = vmatpush1.msra.mxu0 %v3053
    %v3055 = vand.u32 %v1992, 4294901760
    %3056 = vmatprep.subr.mxu0 %v3055
    %v3057 = vand.u32 %v1991, 4294901760
    %3058 = vmatpush1.msra.mxu0 %v3057
    %3059 = vmatprep.subr.mxu0 0.0
    %3060 = vmatpush1.msra.mxu0 0.0
    %3061 = vmatprep.subr.mxu0 0.0
    %3062 = vmatpush1.msra.mxu0 0.0
    %3063 = vmatprep.subr.mxu0 0.0
    %3064 = vmatpush1.msra.mxu0 0.0
    %3065 = vmatprep.subr.mxu0 0.0
    %3066 = vmatpush1.msra.mxu0 0.0
    %3067 = vmatprep.subr.mxu0 0.0
    %3068 = vmatpush1.msra.mxu0 0.0
    %3069 = vmatprep.subr.mxu0 0.0
    %3070 = vmatpush1.msra.mxu0 0.0
    %3071 = vmatprep.subr.mxu0 0.0
    %3072 = vmatpush1.msra.mxu0 0.0
    %3073 = vmatprep.subr.mxu0 0.0
    %3074 = vmatpush1.msra.mxu0 0.0
    %3075 = vmatprep.subr.mxu0 0.0
    %3076 = vmatpush1.msra.mxu0 0.0
    %3077 = vmatprep.subr.mxu0 0.0
    %3078 = vmatpush1.msra.mxu0 0.0
    %3079 = vmatprep.subr.mxu0 0.0
    %3080 = vmatpush1.msra.mxu0 0.0
    %3081 = vmatprep.subr.mxu0 0.0
    %3082 = vmatpush1.msra.mxu0 0.0
    %3083 = vmatprep.subr.mxu0 0.0
    %3084 = vmatpush1.msra.mxu0 0.0
    %3085 = vmatprep.subr.mxu0 0.0
    %3086 = vmatpush1.msra.mxu0 0.0
    %3087 = vmatprep.subr.mxu0 0.0
    %3088 = vmatpush1.msra.mxu0 0.0
    %3089 = vmatprep.subr.mxu0 0.0
    %3090 = vmatpush1.msra.mxu0 0.0
    %3091 = vmatprep.subr.mxu0 0.0
    %3092 = vmatpush1.msra.mxu0 0.0
    %3093 = vmatprep.subr.mxu0 0.0
    %3094 = vmatpush1.msra.mxu0 0.0
    %3095 = vmatprep.subr.mxu0 0.0
    %3096 = vmatpush1.msra.mxu0 0.0
    %3097 = vmatprep.subr.mxu0 0.0
    %3098 = vmatpush1.msra.mxu0 0.0
    %3099 = vmatprep.subr.mxu0 0.0
    %3100 = vmatpush1.msra.mxu0 0.0
    %3101 = vmatprep.subr.mxu0 0.0
    %3102 = vmatpush1.msra.mxu0 0.0
    %3103 = vmatprep.subr.mxu0 0.0
    %3104 = vmatpush1.msra.mxu0 0.0
    %3105 = vmatprep.subr.mxu0 0.0
    %3106 = vmatpush1.msra.mxu0 0.0
    %3107 = vmatprep.subr.mxu0 0.0
    %3108 = vmatpush1.msra.mxu0 0.0
    %3109 = vmatprep.subr.mxu0 0.0
    %3110 = vmatpush1.msra.mxu0 0.0
    %3111 = vmatprep.subr.mxu0 0.0
    %3112 = vmatpush1.msra.mxu0 0.0
    %3113 = vmatprep.subr.mxu0 0.0
    %3114 = vmatpush1.msra.mxu0 0.0
    %3115 = vmatprep.mubr.f32.mxu0 0.0
    %v3116 = vand.u32 %v2035, 4294901760
    %3117 = vmatmul.mubr.f32.gmra.mrb[0].mxu0 %v3116
    %v3118 = vpop.f32.mrb[0].mxu0
    %v3119 = vadd.f32 %v3039, %v3118
    %v3120 = vpop.f32.mrb[0].mxu0
    %v3121 = vadd.f32 %v3041, %v3120
    %3122 = vdwg.mxu0
    %v3123 = vand.u32 %v1973, 4294901760
    %3124 = vmatprep.subr.mxu0 %v3123
    %v3125 = vand.u32 %v1972, 4294901760
    %3126 = vmatpush1.msra.mxu0 %v3125
    %v3127 = vand.u32 %v1980, 4294901760
    %3128 = vmatprep.subr.mxu0 %v3127
    %v3129 = vand.u32 %v1979, 4294901760
    %3130 = vmatpush1.msra.mxu0 %v3129
    %v3131 = vand.u32 %v1987, 4294901760
    %3132 = vmatprep.subr.mxu0 %v3131
    %v3133 = vand.u32 %v1986, 4294901760
    %3134 = vmatpush1.msra.mxu0 %v3133
    %v3135 = vand.u32 %v1994, 4294901760
    %3136 = vmatprep.subr.mxu0 %v3135
    %v3137 = vand.u32 %v1993, 4294901760
    %3138 = vmatpush1.msra.mxu0 %v3137
    %3139 = vmatprep.subr.mxu0 0.0
    %3140 = vmatpush1.msra.mxu0 0.0
    %3141 = vmatprep.subr.mxu0 0.0
    %3142 = vmatpush1.msra.mxu0 0.0
    %3143 = vmatprep.subr.mxu0 0.0
    %3144 = vmatpush1.msra.mxu0 0.0
    %3145 = vmatprep.subr.mxu0 0.0
    %3146 = vmatpush1.msra.mxu0 0.0
    %3147 = vmatprep.subr.mxu0 0.0
    %3148 = vmatpush1.msra.mxu0 0.0
    %3149 = vmatprep.subr.mxu0 0.0
    %3150 = vmatpush1.msra.mxu0 0.0
    %3151 = vmatprep.subr.mxu0 0.0
    %3152 = vmatpush1.msra.mxu0 0.0
    %3153 = vmatprep.subr.mxu0 0.0
    %3154 = vmatpush1.msra.mxu0 0.0
    %3155 = vmatprep.subr.mxu0 0.0
    %3156 = vmatpush1.msra.mxu0 0.0
    %3157 = vmatprep.subr.mxu0 0.0
    %3158 = vmatpush1.msra.mxu0 0.0
    %3159 = vmatprep.subr.mxu0 0.0
    %3160 = vmatpush1.msra.mxu0 0.0
    %3161 = vmatprep.subr.mxu0 0.0
    %3162 = vmatpush1.msra.mxu0 0.0
    %3163 = vmatprep.subr.mxu0 0.0
    %3164 = vmatpush1.msra.mxu0 0.0
    %3165 = vmatprep.subr.mxu0 0.0
    %3166 = vmatpush1.msra.mxu0 0.0
    %3167 = vmatprep.subr.mxu0 0.0
    %3168 = vmatpush1.msra.mxu0 0.0
    %3169 = vmatprep.subr.mxu0 0.0
    %3170 = vmatpush1.msra.mxu0 0.0
    %3171 = vmatprep.subr.mxu0 0.0
    %3172 = vmatpush1.msra.mxu0 0.0
    %3173 = vmatprep.subr.mxu0 0.0
    %3174 = vmatpush1.msra.mxu0 0.0
    %3175 = vmatprep.subr.mxu0 0.0
    %3176 = vmatpush1.msra.mxu0 0.0
    %3177 = vmatprep.subr.mxu0 0.0
    %3178 = vmatpush1.msra.mxu0 0.0
    %3179 = vmatprep.subr.mxu0 0.0
    %3180 = vmatpush1.msra.mxu0 0.0
    %3181 = vmatprep.subr.mxu0 0.0
    %3182 = vmatpush1.msra.mxu0 0.0
    %3183 = vmatprep.subr.mxu0 0.0
    %3184 = vmatpush1.msra.mxu0 0.0
    %3185 = vmatprep.subr.mxu0 0.0
    %3186 = vmatpush1.msra.mxu0 0.0
    %3187 = vmatprep.subr.mxu0 0.0
    %3188 = vmatpush1.msra.mxu0 0.0
    %3189 = vmatprep.subr.mxu0 0.0
    %3190 = vmatpush1.msra.mxu0 0.0
    %3191 = vmatprep.subr.mxu0 0.0
    %3192 = vmatpush1.msra.mxu0 0.0
    %3193 = vmatprep.subr.mxu0 0.0
    %3194 = vmatpush1.msra.mxu0 0.0
    %3195 = vmatprep.mubr.f32.mxu0 0.0
    %v3196 = vand.u32 %v2035, 4294901760
    %v3197 = vsub.f32 %v2035, %v3196
    %v3198 = vand.u32 %v3197, 4294901760
    %v3199 = vsub.f32 %v3197, %v3198
    %v3200 = vand.u32 %v3199, 4294901760
    %3201 = vmatmul.mubr.f32.gmra.mrb[0].mxu0 %v3200
    %v3202 = vpop.f32.mrb[0].mxu0
    %v3203 = vadd.f32 %v2017, %v3202
    %v3204 = vpop.f32.mrb[0].mxu0
    %v3205 = vadd.f32 %v2021, %v3204
    %3206 = vdwg.mxu0
    %v3207 = vand.u32 %v1973, 4294901760
    %v3208 = vsub.f32 %v1973, %v3207
    %v3209 = vand.u32 %v3208, 4294901760
    %v3210 = vsub.f32 %v3208, %v3209
    %v3211 = vand.u32 %v3210, 4294901760
    %3212 = vmatprep.subr.mxu0 %v3211
    %v3213 = vand.u32 %v1972, 4294901760
    %v3214 = vsub.f32 %v1972, %v3213
    %v3215 = vand.u32 %v3214, 4294901760
    %v3216 = vsub.f32 %v3214, %v3215
    %v3217 = vand.u32 %v3216, 4294901760
    %3218 = vmatpush1.msra.mxu0 %v3217
    %v3219 = vand.u32 %v1980, 4294901760
    %v3220 = vsub.f32 %v1980, %v3219
    %v3221 = vand.u32 %v3220, 4294901760
    %v3222 = vsub.f32 %v3220, %v3221
    %v3223 = vand.u32 %v3222, 4294901760
    %3224 = vmatprep.subr.mxu0 %v3223
    %v3225 = vand.u32 %v1979, 4294901760
    %v3226 = vsub.f32 %v1979, %v3225
    %v3227 = vand.u32 %v3226, 4294901760
    %v3228 = vsub.f32 %v3226, %v3227
    %v3229 = vand.u32 %v3228, 4294901760
    %3230 = vmatpush1.msra.mxu0 %v3229
    %v3231 = vand.u32 %v1987, 4294901760
    %v3232 = vsub.f32 %v1987, %v3231
    %v3233 = vand.u32 %v3232, 4294901760
    %v3234 = vsub.f32 %v3232, %v3233
    %v3235 = vand.u32 %v3234, 4294901760
    %3236 = vmatprep.subr.mxu0 %v3235
    %v3237 = vand.u32 %v1986, 4294901760
    %v3238 = vsub.f32 %v1986, %v3237
    %v3239 = vand.u32 %v3238, 4294901760
    %v3240 = vsub.f32 %v3238, %v3239
    %v3241 = vand.u32 %v3240, 4294901760
    %3242 = vmatpush1.msra.mxu0 %v3241
    %v3243 = vand.u32 %v1994, 4294901760
    %v3244 = vsub.f32 %v1994, %v3243
    %v3245 = vand.u32 %v3244, 4294901760
    %v3246 = vsub.f32 %v3244, %v3245
    %v3247 = vand.u32 %v3246, 4294901760
    %3248 = vmatprep.subr.mxu0 %v3247
    %v3249 = vand.u32 %v1993, 4294901760
    %v3250 = vsub.f32 %v1993, %v3249
    %v3251 = vand.u32 %v3250, 4294901760
    %v3252 = vsub.f32 %v3250, %v3251
    %v3253 = vand.u32 %v3252, 4294901760
    %3254 = vmatpush1.msra.mxu0 %v3253
    %3255 = vmatprep.subr.mxu0 0.0
    %3256 = vmatpush1.msra.mxu0 0.0
    %3257 = vmatprep.subr.mxu0 0.0
    %3258 = vmatpush1.msra.mxu0 0.0
    %3259 = vmatprep.subr.mxu0 0.0
    %3260 = vmatpush1.msra.mxu0 0.0
    %3261 = vmatprep.subr.mxu0 0.0
    %3262 = vmatpush1.msra.mxu0 0.0
    %3263 = vmatprep.subr.mxu0 0.0
    %3264 = vmatpush1.msra.mxu0 0.0
    %3265 = vmatprep.subr.mxu0 0.0
    %3266 = vmatpush1.msra.mxu0 0.0
    %3267 = vmatprep.subr.mxu0 0.0
    %3268 = vmatpush1.msra.mxu0 0.0
    %3269 = vmatprep.subr.mxu0 0.0
    %3270 = vmatpush1.msra.mxu0 0.0
    %3271 = vmatprep.subr.mxu0 0.0
    %3272 = vmatpush1.msra.mxu0 0.0
    %3273 = vmatprep.subr.mxu0 0.0
    %3274 = vmatpush1.msra.mxu0 0.0
    %3275 = vmatprep.subr.mxu0 0.0
    %3276 = vmatpush1.msra.mxu0 0.0
    %3277 = vmatprep.subr.mxu0 0.0
    %3278 = vmatpush1.msra.mxu0 0.0
    %3279 = vmatprep.subr.mxu0 0.0
    %3280 = vmatpush1.msra.mxu0 0.0
    %3281 = vmatprep.subr.mxu0 0.0
    %3282 = vmatpush1.msra.mxu0 0.0
    %3283 = vmatprep.subr.mxu0 0.0
    %3284 = vmatpush1.msra.mxu0 0.0
    %3285 = vmatprep.subr.mxu0 0.0
    %3286 = vmatpush1.msra.mxu0 0.0
    %3287 = vmatprep.subr.mxu0 0.0
    %3288 = vmatpush1.msra.mxu0 0.0
    %3289 = vmatprep.subr.mxu0 0.0
    %3290 = vmatpush1.msra.mxu0 0.0
    %3291 = vmatprep.subr.mxu0 0.0
    %3292 = vmatpush1.msra.mxu0 0.0
    %3293 = vmatprep.subr.mxu0 0.0
    %3294 = vmatpush1.msra.mxu0 0.0
    %3295 = vmatprep.subr.mxu0 0.0
    %3296 = vmatpush1.msra.mxu0 0.0
    %3297 = vmatprep.subr.mxu0 0.0
    %3298 = vmatpush1.msra.mxu0 0.0
    %3299 = vmatprep.subr.mxu0 0.0
    %3300 = vmatpush1.msra.mxu0 0.0
    %3301 = vmatprep.subr.mxu0 0.0
    %3302 = vmatpush1.msra.mxu0 0.0
    %3303 = vmatprep.subr.mxu0 0.0
    %3304 = vmatpush1.msra.mxu0 0.0
    %3305 = vmatprep.subr.mxu0 0.0
    %3306 = vmatpush1.msra.mxu0 0.0
    %3307 = vmatprep.subr.mxu0 0.0
    %3308 = vmatpush1.msra.mxu0 0.0
    %3309 = vmatprep.subr.mxu0 0.0
    %3310 = vmatpush1.msra.mxu0 0.0
    %3311 = vmatprep.mubr.f32.mxu0 0.0
    %v3312 = vand.u32 %v2035, 4294901760
    %3313 = vmatmul.mubr.f32.gmra.mrb[0].mxu0 %v3312
    %v3314 = vpop.f32.mrb[0].mxu0
    %v3315 = vadd.f32 %v3203, %v3314
    %v3316 = vpop.f32.mrb[0].mxu0
    %v3317 = vadd.f32 %v3205, %v3316
    %3318 = vdwg.mxu0
    %v3319 = vand.u32 %v1973, 4294901760
    %v3320 = vsub.f32 %v1973, %v3319
    %3321 = vmatprep.subr.mxu0 %v3320
    %v3322 = vand.u32 %v1972, 4294901760
    %v3323 = vsub.f32 %v1972, %v3322
    %3324 = vmatpush1.msra.mxu0 %v3323
    %v3325 = vand.u32 %v1980, 4294901760
    %v3326 = vsub.f32 %v1980, %v3325
    %3327 = vmatprep.subr.mxu0 %v3326
    %v3328 = vand.u32 %v1979, 4294901760
    %v3329 = vsub.f32 %v1979, %v3328
    %3330 = vmatpush1.msra.mxu0 %v3329
    %v3331 = vand.u32 %v1987, 4294901760
    %v3332 = vsub.f32 %v1987, %v3331
    %3333 = vmatprep.subr.mxu0 %v3332
    %v3334 = vand.u32 %v1986, 4294901760
    %v3335 = vsub.f32 %v1986, %v3334
    %3336 = vmatpush1.msra.mxu0 %v3335
    %v3337 = vand.u32 %v1994, 4294901760
    %v3338 = vsub.f32 %v1994, %v3337
    %3339 = vmatprep.subr.mxu0 %v3338
    %v3340 = vand.u32 %v1993, 4294901760
    %v3341 = vsub.f32 %v1993, %v3340
    %3342 = vmatpush1.msra.mxu0 %v3341
    %3343 = vmatprep.subr.mxu0 0.0
    %3344 = vmatpush1.msra.mxu0 0.0
    %3345 = vmatprep.subr.mxu0 0.0
    %3346 = vmatpush1.msra.mxu0 0.0
    %3347 = vmatprep.subr.mxu0 0.0
    %3348 = vmatpush1.msra.mxu0 0.0
    %3349 = vmatprep.subr.mxu0 0.0
    %3350 = vmatpush1.msra.mxu0 0.0
    %3351 = vmatprep.subr.mxu0 0.0
    %3352 = vmatpush1.msra.mxu0 0.0
    %3353 = vmatprep.subr.mxu0 0.0
    %3354 = vmatpush1.msra.mxu0 0.0
    %3355 = vmatprep.subr.mxu0 0.0
    %3356 = vmatpush1.msra.mxu0 0.0
    %3357 = vmatprep.subr.mxu0 0.0
    %3358 = vmatpush1.msra.mxu0 0.0
    %3359 = vmatprep.subr.mxu0 0.0
    %3360 = vmatpush1.msra.mxu0 0.0
    %3361 = vmatprep.subr.mxu0 0.0
    %3362 = vmatpush1.msra.mxu0 0.0
    %3363 = vmatprep.subr.mxu0 0.0
    %3364 = vmatpush1.msra.mxu0 0.0
    %3365 = vmatprep.subr.mxu0 0.0
    %3366 = vmatpush1.msra.mxu0 0.0
    %3367 = vmatprep.subr.mxu0 0.0
    %3368 = vmatpush1.msra.mxu0 0.0
    %3369 = vmatprep.subr.mxu0 0.0
    %3370 = vmatpush1.msra.mxu0 0.0
    %3371 = vmatprep.subr.mxu0 0.0
    %3372 = vmatpush1.msra.mxu0 0.0
    %3373 = vmatprep.subr.mxu0 0.0
    %3374 = vmatpush1.msra.mxu0 0.0
    %3375 = vmatprep.subr.mxu0 0.0
    %3376 = vmatpush1.msra.mxu0 0.0
    %3377 = vmatprep.subr.mxu0 0.0
    %3378 = vmatpush1.msra.mxu0 0.0
    %3379 = vmatprep.subr.mxu0 0.0
    %3380 = vmatpush1.msra.mxu0 0.0
    %3381 = vmatprep.subr.mxu0 0.0
    %3382 = vmatpush1.msra.mxu0 0.0
    %3383 = vmatprep.subr.mxu0 0.0
    %3384 = vmatpush1.msra.mxu0 0.0
    %3385 = vmatprep.subr.mxu0 0.0
    %3386 = vmatpush1.msra.mxu0 0.0
    %3387 = vmatprep.subr.mxu0 0.0
    %3388 = vmatpush1.msra.mxu0 0.0
    %3389 = vmatprep.subr.mxu0 0.0
    %3390 = vmatpush1.msra.mxu0 0.0
    %3391 = vmatprep.subr.mxu0 0.0
    %3392 = vmatpush1.msra.mxu0 0.0
    %3393 = vmatprep.subr.mxu0 0.0
    %3394 = vmatpush1.msra.mxu0 0.0
    %3395 = vmatprep.subr.mxu0 0.0
    %3396 = vmatpush1.msra.mxu0 0.0
    %3397 = vmatprep.subr.mxu0 0.0
    %3398 = vmatpush1.msra.mxu0 0.0
    %3399 = vmatprep.mubr.f32.mxu0 0.0
    %v3400 = vand.u32 %v2035, 4294901760
    %v3401 = vsub.f32 %v2035, %v3400
    %3402 = vmatmul.mubr.f32.gmra.mrb[0].mxu0 %v3401
    %v3403 = vpop.f32.mrb[0].mxu0
    %v3404 = vadd.f32 %v3315, %v3403
    %v3405 = vpop.f32.mrb[0].mxu0
    %v3406 = vadd.f32 %v3317, %v3405
    %3407 = vdwg.mxu0
    %v3408 = vand.u32 %v1973, 4294901760
    %3409 = vmatprep.subr.mxu0 %v3408
    %v3410 = vand.u32 %v1972, 4294901760
    %3411 = vmatpush1.msra.mxu0 %v3410
    %v3412 = vand.u32 %v1980, 4294901760
    %3413 = vmatprep.subr.mxu0 %v3412
    %v3414 = vand.u32 %v1979, 4294901760
    %3415 = vmatpush1.msra.mxu0 %v3414
    %v3416 = vand.u32 %v1987, 4294901760
    %3417 = vmatprep.subr.mxu0 %v3416
    %v3418 = vand.u32 %v1986, 4294901760
    %3419 = vmatpush1.msra.mxu0 %v3418
    %v3420 = vand.u32 %v1994, 4294901760
    %3421 = vmatprep.subr.mxu0 %v3420
    %v3422 = vand.u32 %v1993, 4294901760
    %3423 = vmatpush1.msra.mxu0 %v3422
    %3424 = vmatprep.subr.mxu0 0.0
    %3425 = vmatpush1.msra.mxu0 0.0
    %3426 = vmatprep.subr.mxu0 0.0
    %3427 = vmatpush1.msra.mxu0 0.0
    %3428 = vmatprep.subr.mxu0 0.0
    %3429 = vmatpush1.msra.mxu0 0.0
    %3430 = vmatprep.subr.mxu0 0.0
    %3431 = vmatpush1.msra.mxu0 0.0
    %3432 = vmatprep.subr.mxu0 0.0
    %3433 = vmatpush1.msra.mxu0 0.0
    %3434 = vmatprep.subr.mxu0 0.0
    %3435 = vmatpush1.msra.mxu0 0.0
    %3436 = vmatprep.subr.mxu0 0.0
    %3437 = vmatpush1.msra.mxu0 0.0
    %3438 = vmatprep.subr.mxu0 0.0
    %3439 = vmatpush1.msra.mxu0 0.0
    %3440 = vmatprep.subr.mxu0 0.0
    %3441 = vmatpush1.msra.mxu0 0.0
    %3442 = vmatprep.subr.mxu0 0.0
    %3443 = vmatpush1.msra.mxu0 0.0
    %3444 = vmatprep.subr.mxu0 0.0
    %3445 = vmatpush1.msra.mxu0 0.0
    %3446 = vmatprep.subr.mxu0 0.0
    %3447 = vmatpush1.msra.mxu0 0.0
    %3448 = vmatprep.subr.mxu0 0.0
    %3449 = vmatpush1.msra.mxu0 0.0
    %3450 = vmatprep.subr.mxu0 0.0
    %3451 = vmatpush1.msra.mxu0 0.0
    %3452 = vmatprep.subr.mxu0 0.0
    %3453 = vmatpush1.msra.mxu0 0.0
    %3454 = vmatprep.subr.mxu0 0.0
    %3455 = vmatpush1.msra.mxu0 0.0
    %3456 = vmatprep.subr.mxu0 0.0
    %3457 = vmatpush1.msra.mxu0 0.0
    %3458 = vmatprep.subr.mxu0 0.0
    %3459 = vmatpush1.msra.mxu0 0.0
    %3460 = vmatprep.subr.mxu0 0.0
    %3461 = vmatpush1.msra.mxu0 0.0
    %3462 = vmatprep.subr.mxu0 0.0
    %3463 = vmatpush1.msra.mxu0 0.0
    %3464 = vmatprep.subr.mxu0 0.0
    %3465 = vmatpush1.msra.mxu0 0.0
    %3466 = vmatprep.subr.mxu0 0.0
    %3467 = vmatpush1.msra.mxu0 0.0
    %3468 = vmatprep.subr.mxu0 0.0
    %3469 = vmatpush1.msra.mxu0 0.0
    %3470 = vmatprep.subr.mxu0 0.0
    %3471 = vmatpush1.msra.mxu0 0.0
    %3472 = vmatprep.subr.mxu0 0.0
    %3473 = vmatpush1.msra.mxu0 0.0
    %3474 = vmatprep.subr.mxu0 0.0
    %3475 = vmatpush1.msra.mxu0 0.0
    %3476 = vmatprep.subr.mxu0 0.0
    %3477 = vmatpush1.msra.mxu0 0.0
    %3478 = vmatprep.subr.mxu0 0.0
    %3479 = vmatpush1.msra.mxu0 0.0
    %3480 = vmatprep.mubr.f32.mxu0 0.0
    %v3481 = vand.u32 %v2035, 4294901760
    %v3482 = vsub.f32 %v2035, %v3481
    %v3483 = vand.u32 %v3482, 4294901760
    %3484 = vmatmul.mubr.f32.gmra.mrb[0].mxu0 %v3483
    %v3485 = vpop.f32.mrb[0].mxu0
    %v3486 = vadd.f32 %v3404, %v3485
    %v3487 = vpop.f32.mrb[0].mxu0
    %v3488 = vadd.f32 %v3406, %v3487
    %3489 = vdwg.mxu0
    %v3490 = vand.u32 %v1973, 4294901760
    %v3491 = vsub.f32 %v1973, %v3490
    %v3492 = vand.u32 %v3491, 4294901760
    %3493 = vmatprep.subr.mxu0 %v3492
    %v3494 = vand.u32 %v1972, 4294901760
    %v3495 = vsub.f32 %v1972, %v3494
    %v3496 = vand.u32 %v3495, 4294901760
    %3497 = vmatpush1.msra.mxu0 %v3496
    %v3498 = vand.u32 %v1980, 4294901760
    %v3499 = vsub.f32 %v1980, %v3498
    %v3500 = vand.u32 %v3499, 4294901760
    %3501 = vmatprep.subr.mxu0 %v3500
    %v3502 = vand.u32 %v1979, 4294901760
    %v3503 = vsub.f32 %v1979, %v3502
    %v3504 = vand.u32 %v3503, 4294901760
    %3505 = vmatpush1.msra.mxu0 %v3504
    %v3506 = vand.u32 %v1987, 4294901760
    %v3507 = vsub.f32 %v1987, %v3506
    %v3508 = vand.u32 %v3507, 4294901760
    %3509 = vmatprep.subr.mxu0 %v3508
    %v3510 = vand.u32 %v1986, 4294901760
    %v3511 = vsub.f32 %v1986, %v3510
    %v3512 = vand.u32 %v3511, 4294901760
    %3513 = vmatpush1.msra.mxu0 %v3512
    %v3514 = vand.u32 %v1994, 4294901760
    %v3515 = vsub.f32 %v1994, %v3514
    %v3516 = vand.u32 %v3515, 4294901760
    %3517 = vmatprep.subr.mxu0 %v3516
    %v3518 = vand.u32 %v1993, 4294901760
    %v3519 = vsub.f32 %v1993, %v3518
    %v3520 = vand.u32 %v3519, 4294901760
    %3521 = vmatpush1.msra.mxu0 %v3520
    %3522 = vmatprep.subr.mxu0 0.0
    %3523 = vmatpush1.msra.mxu0 0.0
    %3524 = vmatprep.subr.mxu0 0.0
    %3525 = vmatpush1.msra.mxu0 0.0
    %3526 = vmatprep.subr.mxu0 0.0
    %3527 = vmatpush1.msra.mxu0 0.0
    %3528 = vmatprep.subr.mxu0 0.0
    %3529 = vmatpush1.msra.mxu0 0.0
    %3530 = vmatprep.subr.mxu0 0.0
    %3531 = vmatpush1.msra.mxu0 0.0
    %3532 = vmatprep.subr.mxu0 0.0
    %3533 = vmatpush1.msra.mxu0 0.0
    %3534 = vmatprep.subr.mxu0 0.0
    %3535 = vmatpush1.msra.mxu0 0.0
    %3536 = vmatprep.subr.mxu0 0.0
    %3537 = vmatpush1.msra.mxu0 0.0
    %3538 = vmatprep.subr.mxu0 0.0
    %3539 = vmatpush1.msra.mxu0 0.0
    %3540 = vmatprep.subr.mxu0 0.0
    %3541 = vmatpush1.msra.mxu0 0.0
    %3542 = vmatprep.subr.mxu0 0.0
    %3543 = vmatpush1.msra.mxu0 0.0
    %3544 = vmatprep.subr.mxu0 0.0
    %3545 = vmatpush1.msra.mxu0 0.0
    %3546 = vmatprep.subr.mxu0 0.0
    %3547 = vmatpush1.msra.mxu0 0.0
    %3548 = vmatprep.subr.mxu0 0.0
    %3549 = vmatpush1.msra.mxu0 0.0
    %3550 = vmatprep.subr.mxu0 0.0
    %3551 = vmatpush1.msra.mxu0 0.0
    %3552 = vmatprep.subr.mxu0 0.0
    %3553 = vmatpush1.msra.mxu0 0.0
    %3554 = vmatprep.subr.mxu0 0.0
    %3555 = vmatpush1.msra.mxu0 0.0
    %3556 = vmatprep.subr.mxu0 0.0
    %3557 = vmatpush1.msra.mxu0 0.0
    %3558 = vmatprep.subr.mxu0 0.0
    %3559 = vmatpush1.msra.mxu0 0.0
    %3560 = vmatprep.subr.mxu0 0.0
    %3561 = vmatpush1.msra.mxu0 0.0
    %3562 = vmatprep.subr.mxu0 0.0
    %3563 = vmatpush1.msra.mxu0 0.0
    %3564 = vmatprep.subr.mxu0 0.0
    %3565 = vmatpush1.msra.mxu0 0.0
    %3566 = vmatprep.subr.mxu0 0.0
    %3567 = vmatpush1.msra.mxu0 0.0
    %3568 = vmatprep.subr.mxu0 0.0
    %3569 = vmatpush1.msra.mxu0 0.0
    %3570 = vmatprep.subr.mxu0 0.0
    %3571 = vmatpush1.msra.mxu0 0.0
    %3572 = vmatprep.subr.mxu0 0.0
    %3573 = vmatpush1.msra.mxu0 0.0
    %3574 = vmatprep.subr.mxu0 0.0
    %3575 = vmatpush1.msra.mxu0 0.0
    %3576 = vmatprep.subr.mxu0 0.0
    %3577 = vmatpush1.msra.mxu0 0.0
    %3578 = vmatprep.mubr.f32.mxu0 0.0
    %v3579 = vand.u32 %v2035, 4294901760
    %3580 = vmatmul.mubr.f32.gmra.mrb[0].mxu0 %v3579
    %v3581 = vpop.f32.mrb[0].mxu0
    %v3582 = vadd.f32 %v3486, %v3581
    %v3583 = vpop.f32.mrb[0].mxu0
    %v3584 = vadd.f32 %v3488, %v3583
    %3585 = vdwg.mxu0
    %v3586 = vand.u32 %v1973, 4294901760
    %3587 = vmatprep.subr.mxu0 %v3586
    %v3588 = vand.u32 %v1972, 4294901760
    %3589 = vmatpush1.msra.mxu0 %v3588
    %v3590 = vand.u32 %v1980, 4294901760
    %3591 = vmatprep.subr.mxu0 %v3590
    %v3592 = vand.u32 %v1979, 4294901760
    %3593 = vmatpush1.msra.mxu0 %v3592
    %v3594 = vand.u32 %v1987, 4294901760
    %3595 = vmatprep.subr.mxu0 %v3594
    %v3596 = vand.u32 %v1986, 4294901760
    %3597 = vmatpush1.msra.mxu0 %v3596
    %v3598 = vand.u32 %v1994, 4294901760
    %3599 = vmatprep.subr.mxu0 %v3598
    %v3600 = vand.u32 %v1993, 4294901760
    %3601 = vmatpush1.msra.mxu0 %v3600
    %3602 = vmatprep.subr.mxu0 0.0
    %3603 = vmatpush1.msra.mxu0 0.0
    %3604 = vmatprep.subr.mxu0 0.0
    %3605 = vmatpush1.msra.mxu0 0.0
    %3606 = vmatprep.subr.mxu0 0.0
    %3607 = vmatpush1.msra.mxu0 0.0
    %3608 = vmatprep.subr.mxu0 0.0
    %3609 = vmatpush1.msra.mxu0 0.0
    %3610 = vmatprep.subr.mxu0 0.0
    %3611 = vmatpush1.msra.mxu0 0.0
    %3612 = vmatprep.subr.mxu0 0.0
    %3613 = vmatpush1.msra.mxu0 0.0
    %3614 = vmatprep.subr.mxu0 0.0
    %3615 = vmatpush1.msra.mxu0 0.0
    %3616 = vmatprep.subr.mxu0 0.0
    %3617 = vmatpush1.msra.mxu0 0.0
    %3618 = vmatprep.subr.mxu0 0.0
    %3619 = vmatpush1.msra.mxu0 0.0
    %3620 = vmatprep.subr.mxu0 0.0
    %3621 = vmatpush1.msra.mxu0 0.0
    %3622 = vmatprep.subr.mxu0 0.0
    %3623 = vmatpush1.msra.mxu0 0.0
    %3624 = vmatprep.subr.mxu0 0.0
    %3625 = vmatpush1.msra.mxu0 0.0
    %3626 = vmatprep.subr.mxu0 0.0
    %3627 = vmatpush1.msra.mxu0 0.0
    %3628 = vmatprep.subr.mxu0 0.0
    %3629 = vmatpush1.msra.mxu0 0.0
    %3630 = vmatprep.subr.mxu0 0.0
    %3631 = vmatpush1.msra.mxu0 0.0
    %3632 = vmatprep.subr.mxu0 0.0
    %3633 = vmatpush1.msra.mxu0 0.0
    %3634 = vmatprep.subr.mxu0 0.0
    %3635 = vmatpush1.msra.mxu0 0.0
    %3636 = vmatprep.subr.mxu0 0.0
    %3637 = vmatpush1.msra.mxu0 0.0
    %3638 = vmatprep.subr.mxu0 0.0
    %3639 = vmatpush1.msra.mxu0 0.0
    %3640 = vmatprep.subr.mxu0 0.0
    %3641 = vmatpush1.msra.mxu0 0.0
    %3642 = vmatprep.subr.mxu0 0.0
    %3643 = vmatpush1.msra.mxu0 0.0
    %3644 = vmatprep.subr.mxu0 0.0
    %3645 = vmatpush1.msra.mxu0 0.0
    %3646 = vmatprep.subr.mxu0 0.0
    %3647 = vmatpush1.msra.mxu0 0.0
    %3648 = vmatprep.subr.mxu0 0.0
    %3649 = vmatpush1.msra.mxu0 0.0
    %3650 = vmatprep.subr.mxu0 0.0
    %3651 = vmatpush1.msra.mxu0 0.0
    %3652 = vmatprep.subr.mxu0 0.0
    %3653 = vmatpush1.msra.mxu0 0.0
    %3654 = vmatprep.subr.mxu0 0.0
    %3655 = vmatpush1.msra.mxu0 0.0
    %3656 = vmatprep.subr.mxu0 0.0
    %3657 = vmatpush1.msra.mxu0 0.0
    %3658 = vmatprep.mubr.f32.mxu0 0.0
    %v3659 = vand.u32 %v2035, 4294901760
    %3660 = vmatmul.mubr.f32.gmra.mrb[0].mxu0 %v3659
    %v3661 = vpop.f32.mrb[0].mxu0
    %v3662 = vadd.f32 %v3582, %v3661
    %v3663 = vpop.f32.mrb[0].mxu0
    %v3664 = vadd.f32 %v3584, %v3663
    %3665 = vdwg.mxu0
    %3666 = vmatprep.subr.mxu0 0.0
    %v3667 = vand.u32 %v1974, 4294901760
    %3668 = vmatpush1.msra.mxu0 %v3667
    %3669 = vmatprep.subr.mxu0 0.0
    %v3670 = vand.u32 %v1981, 4294901760
    %3671 = vmatpush1.msra.mxu0 %v3670
    %3672 = vmatprep.subr.mxu0 0.0
    %v3673 = vand.u32 %v1988, 4294901760
    %3674 = vmatpush1.msra.mxu0 %v3673
    %3675 = vmatprep.subr.mxu0 0.0
    %v3676 = vand.u32 %v1995, 4294901760
    %3677 = vmatpush1.msra.mxu0 %v3676
    %3678 = vmatprep.subr.mxu0 0.0
    %3679 = vmatpush1.msra.mxu0 0.0
    %3680 = vmatprep.subr.mxu0 0.0
    %3681 = vmatpush1.msra.mxu0 0.0
    %3682 = vmatprep.subr.mxu0 0.0
    %3683 = vmatpush1.msra.mxu0 0.0
    %3684 = vmatprep.subr.mxu0 0.0
    %3685 = vmatpush1.msra.mxu0 0.0
    %3686 = vmatprep.subr.mxu0 0.0
    %3687 = vmatpush1.msra.mxu0 0.0
    %3688 = vmatprep.subr.mxu0 0.0
    %3689 = vmatpush1.msra.mxu0 0.0
    %3690 = vmatprep.subr.mxu0 0.0
    %3691 = vmatpush1.msra.mxu0 0.0
    %3692 = vmatprep.subr.mxu0 0.0
    %3693 = vmatpush1.msra.mxu0 0.0
    %3694 = vmatprep.subr.mxu0 0.0
    %3695 = vmatpush1.msra.mxu0 0.0
    %3696 = vmatprep.subr.mxu0 0.0
    %3697 = vmatpush1.msra.mxu0 0.0
    %3698 = vmatprep.subr.mxu0 0.0
    %3699 = vmatpush1.msra.mxu0 0.0
    %3700 = vmatprep.subr.mxu0 0.0
    %3701 = vmatpush1.msra.mxu0 0.0
    %3702 = vmatprep.subr.mxu0 0.0
    %3703 = vmatpush1.msra.mxu0 0.0
    %3704 = vmatprep.subr.mxu0 0.0
    %3705 = vmatpush1.msra.mxu0 0.0
    %3706 = vmatprep.subr.mxu0 0.0
    %3707 = vmatpush1.msra.mxu0 0.0
    %3708 = vmatprep.subr.mxu0 0.0
    %3709 = vmatpush1.msra.mxu0 0.0
    %3710 = vmatprep.subr.mxu0 0.0
    %3711 = vmatpush1.msra.mxu0 0.0
    %3712 = vmatprep.subr.mxu0 0.0
    %3713 = vmatpush1.msra.mxu0 0.0
    %3714 = vmatprep.subr.mxu0 0.0
    %3715 = vmatpush1.msra.mxu0 0.0
    %3716 = vmatprep.subr.mxu0 0.0
    %3717 = vmatpush1.msra.mxu0 0.0
    %3718 = vmatprep.subr.mxu0 0.0
    %3719 = vmatpush1.msra.mxu0 0.0
    %3720 = vmatprep.subr.mxu0 0.0
    %3721 = vmatpush1.msra.mxu0 0.0
    %3722 = vmatprep.subr.mxu0 0.0
    %3723 = vmatpush1.msra.mxu0 0.0
    %3724 = vmatprep.subr.mxu0 0.0
    %3725 = vmatpush1.msra.mxu0 0.0
    %3726 = vmatprep.subr.mxu0 0.0
    %3727 = vmatpush1.msra.mxu0 0.0
    %3728 = vmatprep.subr.mxu0 0.0
    %3729 = vmatpush1.msra.mxu0 0.0
    %3730 = vmatprep.subr.mxu0 0.0
    %3731 = vmatpush1.msra.mxu0 0.0
    %3732 = vmatprep.subr.mxu0 0.0
    %3733 = vmatpush1.msra.mxu0 0.0
    %3734 = vmatprep.mubr.f32.mxu0 0.0
    %v3735 = vand.u32 %v2035, 4294901760
    %v3736 = vsub.f32 %v2035, %v3735
    %v3737 = vand.u32 %v3736, 4294901760
    %v3738 = vsub.f32 %v3736, %v3737
    %v3739 = vand.u32 %v3738, 4294901760
    %3740 = vmatmul.mubr.f32.gmra.mrb[0].mxu0 %v3739
    %v3741 = vpop.f32.mrb[0].mxu0
    %v3742 = vadd.f32 %v2025, %v3741
    %v3743 = vpop.f32.mrb[0].mxu0
    %3744 = vdwg.mxu0
    %3745 = vmatprep.subr.mxu0 0.0
    %v3746 = vand.u32 %v1974, 4294901760
    %v3747 = vsub.f32 %v1974, %v3746
    %v3748 = vand.u32 %v3747, 4294901760
    %v3749 = vsub.f32 %v3747, %v3748
    %v3750 = vand.u32 %v3749, 4294901760
    %3751 = vmatpush1.msra.mxu0 %v3750
    %3752 = vmatprep.subr.mxu0 0.0
    %v3753 = vand.u32 %v1981, 4294901760
    %v3754 = vsub.f32 %v1981, %v3753
    %v3755 = vand.u32 %v3754, 4294901760
    %v3756 = vsub.f32 %v3754, %v3755
    %v3757 = vand.u32 %v3756, 4294901760
    %3758 = vmatpush1.msra.mxu0 %v3757
    %3759 = vmatprep.subr.mxu0 0.0
    %v3760 = vand.u32 %v1988, 4294901760
    %v3761 = vsub.f32 %v1988, %v3760
    %v3762 = vand.u32 %v3761, 4294901760
    %v3763 = vsub.f32 %v3761, %v3762
    %v3764 = vand.u32 %v3763, 4294901760
    %3765 = vmatpush1.msra.mxu0 %v3764
    %3766 = vmatprep.subr.mxu0 0.0
    %v3767 = vand.u32 %v1995, 4294901760
    %v3768 = vsub.f32 %v1995, %v3767
    %v3769 = vand.u32 %v3768, 4294901760
    %v3770 = vsub.f32 %v3768, %v3769
    %v3771 = vand.u32 %v3770, 4294901760
    %3772 = vmatpush1.msra.mxu0 %v3771
    %3773 = vmatprep.subr.mxu0 0.0
    %3774 = vmatpush1.msra.mxu0 0.0
    %3775 = vmatprep.subr.mxu0 0.0
    %3776 = vmatpush1.msra.mxu0 0.0
    %3777 = vmatprep.subr.mxu0 0.0
    %3778 = vmatpush1.msra.mxu0 0.0
    %3779 = vmatprep.subr.mxu0 0.0
    %3780 = vmatpush1.msra.mxu0 0.0
    %3781 = vmatprep.subr.mxu0 0.0
    %3782 = vmatpush1.msra.mxu0 0.0
    %3783 = vmatprep.subr.mxu0 0.0
    %3784 = vmatpush1.msra.mxu0 0.0
    %3785 = vmatprep.subr.mxu0 0.0
    %3786 = vmatpush1.msra.mxu0 0.0
    %3787 = vmatprep.subr.mxu0 0.0
    %3788 = vmatpush1.msra.mxu0 0.0
    %3789 = vmatprep.subr.mxu0 0.0
    %3790 = vmatpush1.msra.mxu0 0.0
    %3791 = vmatprep.subr.mxu0 0.0
    %3792 = vmatpush1.msra.mxu0 0.0
    %3793 = vmatprep.subr.mxu0 0.0
    %3794 = vmatpush1.msra.mxu0 0.0
    %3795 = vmatprep.subr.mxu0 0.0
    %3796 = vmatpush1.msra.mxu0 0.0
    %3797 = vmatprep.subr.mxu0 0.0
    %3798 = vmatpush1.msra.mxu0 0.0
    %3799 = vmatprep.subr.mxu0 0.0
    %3800 = vmatpush1.msra.mxu0 0.0
    %3801 = vmatprep.subr.mxu0 0.0
    %3802 = vmatpush1.msra.mxu0 0.0
    %3803 = vmatprep.subr.mxu0 0.0
    %3804 = vmatpush1.msra.mxu0 0.0
    %3805 = vmatprep.subr.mxu0 0.0
    %3806 = vmatpush1.msra.mxu0 0.0
    %3807 = vmatprep.subr.mxu0 0.0
    %3808 = vmatpush1.msra.mxu0 0.0
    %3809 = vmatprep.subr.mxu0 0.0
    %3810 = vmatpush1.msra.mxu0 0.0
    %3811 = vmatprep.subr.mxu0 0.0
    %3812 = vmatpush1.msra.mxu0 0.0
    %3813 = vmatprep.subr.mxu0 0.0
    %3814 = vmatpush1.msra.mxu0 0.0
    %3815 = vmatprep.subr.mxu0 0.0
    %3816 = vmatpush1.msra.mxu0 0.0
    %3817 = vmatprep.subr.mxu0 0.0
    %3818 = vmatpush1.msra.mxu0 0.0
    %3819 = vmatprep.subr.mxu0 0.0
    %3820 = vmatpush1.msra.mxu0 0.0
    %3821 = vmatprep.subr.mxu0 0.0
    %3822 = vmatpush1.msra.mxu0 0.0
    %3823 = vmatprep.subr.mxu0 0.0
    %3824 = vmatpush1.msra.mxu0 0.0
    %3825 = vmatprep.subr.mxu0 0.0
    %3826 = vmatpush1.msra.mxu0 0.0
    %3827 = vmatprep.subr.mxu0 0.0
    %3828 = vmatpush1.msra.mxu0 0.0
    %3829 = vmatprep.mubr.f32.mxu0 0.0
    %v3830 = vand.u32 %v2035, 4294901760
    %3831 = vmatmul.mubr.f32.gmra.mrb[0].mxu0 %v3830
    %v3832 = vpop.f32.mrb[0].mxu0
    %v3833 = vadd.f32 %v3742, %v3832
    %v3834 = vpop.f32.mrb[0].mxu0
    %3835 = vdwg.mxu0
    %3836 = vmatprep.subr.mxu0 0.0
    %v3837 = vand.u32 %v1974, 4294901760
    %v3838 = vsub.f32 %v1974, %v3837
    %3839 = vmatpush1.msra.mxu0 %v3838
    %3840 = vmatprep.subr.mxu0 0.0
    %v3841 = vand.u32 %v1981, 4294901760
    %v3842 = vsub.f32 %v1981, %v3841
    %3843 = vmatpush1.msra.mxu0 %v3842
    %3844 = vmatprep.subr.mxu0 0.0
    %v3845 = vand.u32 %v1988, 4294901760
    %v3846 = vsub.f32 %v1988, %v3845
    %3847 = vmatpush1.msra.mxu0 %v3846
    %3848 = vmatprep.subr.mxu0 0.0
    %v3849 = vand.u32 %v1995, 4294901760
    %v3850 = vsub.f32 %v1995, %v3849
    %3851 = vmatpush1.msra.mxu0 %v3850
    %3852 = vmatprep.subr.mxu0 0.0
    %3853 = vmatpush1.msra.mxu0 0.0
    %3854 = vmatprep.subr.mxu0 0.0
    %3855 = vmatpush1.msra.mxu0 0.0
    %3856 = vmatprep.subr.mxu0 0.0
    %3857 = vmatpush1.msra.mxu0 0.0
    %3858 = vmatprep.subr.mxu0 0.0
    %3859 = vmatpush1.msra.mxu0 0.0
    %3860 = vmatprep.subr.mxu0 0.0
    %3861 = vmatpush1.msra.mxu0 0.0
    %3862 = vmatprep.subr.mxu0 0.0
    %3863 = vmatpush1.msra.mxu0 0.0
    %3864 = vmatprep.subr.mxu0 0.0
    %3865 = vmatpush1.msra.mxu0 0.0
    %3866 = vmatprep.subr.mxu0 0.0
    %3867 = vmatpush1.msra.mxu0 0.0
    %3868 = vmatprep.subr.mxu0 0.0
    %3869 = vmatpush1.msra.mxu0 0.0
    %3870 = vmatprep.subr.mxu0 0.0
    %3871 = vmatpush1.msra.mxu0 0.0
    %3872 = vmatprep.subr.mxu0 0.0
    %3873 = vmatpush1.msra.mxu0 0.0
    %3874 = vmatprep.subr.mxu0 0.0
    %3875 = vmatpush1.msra.mxu0 0.0
    %3876 = vmatprep.subr.mxu0 0.0
    %3877 = vmatpush1.msra.mxu0 0.0
    %3878 = vmatprep.subr.mxu0 0.0
    %3879 = vmatpush1.msra.mxu0 0.0
    %3880 = vmatprep.subr.mxu0 0.0
    %3881 = vmatpush1.msra.mxu0 0.0
    %3882 = vmatprep.subr.mxu0 0.0
    %3883 = vmatpush1.msra.mxu0 0.0
    %3884 = vmatprep.subr.mxu0 0.0
    %3885 = vmatpush1.msra.mxu0 0.0
    %3886 = vmatprep.subr.mxu0 0.0
    %3887 = vmatpush1.msra.mxu0 0.0
    %3888 = vmatprep.subr.mxu0 0.0
    %3889 = vmatpush1.msra.mxu0 0.0
    %3890 = vmatprep.subr.mxu0 0.0
    %3891 = vmatpush1.msra.mxu0 0.0
    %3892 = vmatprep.subr.mxu0 0.0
    %3893 = vmatpush1.msra.mxu0 0.0
    %3894 = vmatprep.subr.mxu0 0.0
    %3895 = vmatpush1.msra.mxu0 0.0
    %3896 = vmatprep.subr.mxu0 0.0
    %3897 = vmatpush1.msra.mxu0 0.0
    %3898 = vmatprep.subr.mxu0 0.0
    %3899 = vmatpush1.msra.mxu0 0.0
    %3900 = vmatprep.subr.mxu0 0.0
    %3901 = vmatpush1.msra.mxu0 0.0
    %3902 = vmatprep.subr.mxu0 0.0
    %3903 = vmatpush1.msra.mxu0 0.0
    %3904 = vmatprep.subr.mxu0 0.0
    %3905 = vmatpush1.msra.mxu0 0.0
    %3906 = vmatprep.subr.mxu0 0.0
    %3907 = vmatpush1.msra.mxu0 0.0
    %3908 = vmatprep.mubr.f32.mxu0 0.0
    %v3909 = vand.u32 %v2035, 4294901760
    %v3910 = vsub.f32 %v2035, %v3909
    %3911 = vmatmul.mubr.f32.gmra.mrb[0].mxu0 %v3910
    %v3912 = vpop.f32.mrb[0].mxu0
    %v3913 = vadd.f32 %v3833, %v3912
    %v3914 = vpop.f32.mrb[0].mxu0
    %3915 = vdwg.mxu0
    %3916 = vmatprep.subr.mxu0 0.0
    %v3917 = vand.u32 %v1974, 4294901760
    %3918 = vmatpush1.msra.mxu0 %v3917
    %3919 = vmatprep.subr.mxu0 0.0
    %v3920 = vand.u32 %v1981, 4294901760
    %3921 = vmatpush1.msra.mxu0 %v3920
    %3922 = vmatprep.subr.mxu0 0.0
    %v3923 = vand.u32 %v1988, 4294901760
    %3924 = vmatpush1.msra.mxu0 %v3923
    %3925 = vmatprep.subr.mxu0 0.0
    %v3926 = vand.u32 %v1995, 4294901760
    %3927 = vmatpush1.msra.mxu0 %v3926
    %3928 = vmatprep.subr.mxu0 0.0
    %3929 = vmatpush1.msra.mxu0 0.0
    %3930 = vmatprep.subr.mxu0 0.0
    %3931 = vmatpush1.msra.mxu0 0.0
    %3932 = vmatprep.subr.mxu0 0.0
    %3933 = vmatpush1.msra.mxu0 0.0
    %3934 = vmatprep.subr.mxu0 0.0
    %3935 = vmatpush1.msra.mxu0 0.0
    %3936 = vmatprep.subr.mxu0 0.0
    %3937 = vmatpush1.msra.mxu0 0.0
    %3938 = vmatprep.subr.mxu0 0.0
    %3939 = vmatpush1.msra.mxu0 0.0
    %3940 = vmatprep.subr.mxu0 0.0
    %3941 = vmatpush1.msra.mxu0 0.0
    %3942 = vmatprep.subr.mxu0 0.0
    %3943 = vmatpush1.msra.mxu0 0.0
    %3944 = vmatprep.subr.mxu0 0.0
    %3945 = vmatpush1.msra.mxu0 0.0
    %3946 = vmatprep.subr.mxu0 0.0
    %3947 = vmatpush1.msra.mxu0 0.0
    %3948 = vmatprep.subr.mxu0 0.0
    %3949 = vmatpush1.msra.mxu0 0.0
    %3950 = vmatprep.subr.mxu0 0.0
    %3951 = vmatpush1.msra.mxu0 0.0
    %3952 = vmatprep.subr.mxu0 0.0
    %3953 = vmatpush1.msra.mxu0 0.0
    %3954 = vmatprep.subr.mxu0 0.0
    %3955 = vmatpush1.msra.mxu0 0.0
    %3956 = vmatprep.subr.mxu0 0.0
    %3957 = vmatpush1.msra.mxu0 0.0
    %3958 = vmatprep.subr.mxu0 0.0
    %3959 = vmatpush1.msra.mxu0 0.0
    %3960 = vmatprep.subr.mxu0 0.0
    %3961 = vmatpush1.msra.mxu0 0.0
    %3962 = vmatprep.subr.mxu0 0.0
    %3963 = vmatpush1.msra.mxu0 0.0
    %3964 = vmatprep.subr.mxu0 0.0
    %3965 = vmatpush1.msra.mxu0 0.0
    %3966 = vmatprep.subr.mxu0 0.0
    %3967 = vmatpush1.msra.mxu0 0.0
    %3968 = vmatprep.subr.mxu0 0.0
    %3969 = vmatpush1.msra.mxu0 0.0
    %3970 = vmatprep.subr.mxu0 0.0
    %3971 = vmatpush1.msra.mxu0 0.0
    %3972 = vmatprep.subr.mxu0 0.0
    %3973 = vmatpush1.msra.mxu0 0.0
    %3974 = vmatprep.subr.mxu0 0.0
    %3975 = vmatpush1.msra.mxu0 0.0
    %3976 = vmatprep.subr.mxu0 0.0
    %3977 = vmatpush1.msra.mxu0 0.0
    %3978 = vmatprep.subr.mxu0 0.0
    %3979 = vmatpush1.msra.mxu0 0.0
    %3980 = vmatprep.subr.mxu0 0.0
    %3981 = vmatpush1.msra.mxu0 0.0
    %3982 = vmatprep.subr.mxu0 0.0
    %3983 = vmatpush1.msra.mxu0 0.0
    %3984 = vmatprep.mubr.f32.mxu0 0.0
    %v3985 = vand.u32 %v2035, 4294901760
    %v3986 = vsub.f32 %v2035, %v3985
    %v3987 = vand.u32 %v3986, 4294901760
    %3988 = vmatmul.mubr.f32.gmra.mrb[0].mxu0 %v3987
    %v3989 = vpop.f32.mrb[0].mxu0
    %v3990 = vadd.f32 %v3913, %v3989
    %v3991 = vpop.f32.mrb[0].mxu0
    %3992 = vdwg.mxu0
    %3993 = vmatprep.subr.mxu0 0.0
    %v3994 = vand.u32 %v1974, 4294901760
    %v3995 = vsub.f32 %v1974, %v3994
    %v3996 = vand.u32 %v3995, 4294901760
    %3997 = vmatpush1.msra.mxu0 %v3996
    %3998 = vmatprep.subr.mxu0 0.0
    %v3999 = vand.u32 %v1981, 4294901760
    %v4000 = vsub.f32 %v1981, %v3999
    %v4001 = vand.u32 %v4000, 4294901760
    %4002 = vmatpush1.msra.mxu0 %v4001
    %4003 = vmatprep.subr.mxu0 0.0
    %v4004 = vand.u32 %v1988, 4294901760
    %v4005 = vsub.f32 %v1988, %v4004
    %v4006 = vand.u32 %v4005, 4294901760
    %4007 = vmatpush1.msra.mxu0 %v4006
    %4008 = vmatprep.subr.mxu0 0.0
    %v4009 = vand.u32 %v1995, 4294901760
    %v4010 = vsub.f32 %v1995, %v4009
    %v4011 = vand.u32 %v4010, 4294901760
    %4012 = vmatpush1.msra.mxu0 %v4011
    %4013 = vmatprep.subr.mxu0 0.0
    %4014 = vmatpush1.msra.mxu0 0.0
    %4015 = vmatprep.subr.mxu0 0.0
    %4016 = vmatpush1.msra.mxu0 0.0
    %4017 = vmatprep.subr.mxu0 0.0
    %4018 = vmatpush1.msra.mxu0 0.0
    %4019 = vmatprep.subr.mxu0 0.0
    %4020 = vmatpush1.msra.mxu0 0.0
    %4021 = vmatprep.subr.mxu0 0.0
    %4022 = vmatpush1.msra.mxu0 0.0
    %4023 = vmatprep.subr.mxu0 0.0
    %4024 = vmatpush1.msra.mxu0 0.0
    %4025 = vmatprep.subr.mxu0 0.0
    %4026 = vmatpush1.msra.mxu0 0.0
    %4027 = vmatprep.subr.mxu0 0.0
    %4028 = vmatpush1.msra.mxu0 0.0
    %4029 = vmatprep.subr.mxu0 0.0
    %4030 = vmatpush1.msra.mxu0 0.0
    %4031 = vmatprep.subr.mxu0 0.0
    %4032 = vmatpush1.msra.mxu0 0.0
    %4033 = vmatprep.subr.mxu0 0.0
    %4034 = vmatpush1.msra.mxu0 0.0
    %4035 = vmatprep.subr.mxu0 0.0
    %4036 = vmatpush1.msra.mxu0 0.0
    %4037 = vmatprep.subr.mxu0 0.0
    %4038 = vmatpush1.msra.mxu0 0.0
    %4039 = vmatprep.subr.mxu0 0.0
    %4040 = vmatpush1.msra.mxu0 0.0
    %4041 = vmatprep.subr.mxu0 0.0
    %4042 = vmatpush1.msra.mxu0 0.0
    %4043 = vmatprep.subr.mxu0 0.0
    %4044 = vmatpush1.msra.mxu0 0.0
    %4045 = vmatprep.subr.mxu0 0.0
    %4046 = vmatpush1.msra.mxu0 0.0
    %4047 = vmatprep.subr.mxu0 0.0
    %4048 = vmatpush1.msra.mxu0 0.0
    %4049 = vmatprep.subr.mxu0 0.0
    %4050 = vmatpush1.msra.mxu0 0.0
    %4051 = vmatprep.subr.mxu0 0.0
    %4052 = vmatpush1.msra.mxu0 0.0
    %4053 = vmatprep.subr.mxu0 0.0
    %4054 = vmatpush1.msra.mxu0 0.0
    %4055 = vmatprep.subr.mxu0 0.0
    %4056 = vmatpush1.msra.mxu0 0.0
    %4057 = vmatprep.subr.mxu0 0.0
    %4058 = vmatpush1.msra.mxu0 0.0
    %4059 = vmatprep.subr.mxu0 0.0
    %4060 = vmatpush1.msra.mxu0 0.0
    %4061 = vmatprep.subr.mxu0 0.0
    %4062 = vmatpush1.msra.mxu0 0.0
    %4063 = vmatprep.subr.mxu0 0.0
    %4064 = vmatpush1.msra.mxu0 0.0
    %4065 = vmatprep.subr.mxu0 0.0
    %4066 = vmatpush1.msra.mxu0 0.0
    %4067 = vmatprep.subr.mxu0 0.0
    %4068 = vmatpush1.msra.mxu0 0.0
    %4069 = vmatprep.mubr.f32.mxu0 0.0
    %v4070 = vand.u32 %v2035, 4294901760
    %4071 = vmatmul.mubr.f32.gmra.mrb[0].mxu0 %v4070
    %v4072 = vpop.f32.mrb[0].mxu0
    %v4073 = vadd.f32 %v3990, %v4072
    %v4074 = vpop.f32.mrb[0].mxu0
    %4075 = vdwg.mxu0
    %4076 = vmatprep.subr.mxu0 0.0
    %v4077 = vand.u32 %v1974, 4294901760
    %4078 = vmatpush1.msra.mxu0 %v4077
    %4079 = vmatprep.subr.mxu0 0.0
    %v4080 = vand.u32 %v1981, 4294901760
    %4081 = vmatpush1.msra.mxu0 %v4080
    %4082 = vmatprep.subr.mxu0 0.0
    %v4083 = vand.u32 %v1988, 4294901760
    %4084 = vmatpush1.msra.mxu0 %v4083
    %4085 = vmatprep.subr.mxu0 0.0
    %v4086 = vand.u32 %v1995, 4294901760
    %4087 = vmatpush1.msra.mxu0 %v4086
    %4088 = vmatprep.subr.mxu0 0.0
    %4089 = vmatpush1.msra.mxu0 0.0
    %4090 = vmatprep.subr.mxu0 0.0
    %4091 = vmatpush1.msra.mxu0 0.0
    %4092 = vmatprep.subr.mxu0 0.0
    %4093 = vmatpush1.msra.mxu0 0.0
    %4094 = vmatprep.subr.mxu0 0.0
    %4095 = vmatpush1.msra.mxu0 0.0
    %4096 = vmatprep.subr.mxu0 0.0
    %4097 = vmatpush1.msra.mxu0 0.0
    %4098 = vmatprep.subr.mxu0 0.0
    %4099 = vmatpush1.msra.mxu0 0.0
    %4100 = vmatprep.subr.mxu0 0.0
    %4101 = vmatpush1.msra.mxu0 0.0
    %4102 = vmatprep.subr.mxu0 0.0
    %4103 = vmatpush1.msra.mxu0 0.0
    %4104 = vmatprep.subr.mxu0 0.0
    %4105 = vmatpush1.msra.mxu0 0.0
    %4106 = vmatprep.subr.mxu0 0.0
    %4107 = vmatpush1.msra.mxu0 0.0
    %4108 = vmatprep.subr.mxu0 0.0
    %4109 = vmatpush1.msra.mxu0 0.0
    %4110 = vmatprep.subr.mxu0 0.0
    %4111 = vmatpush1.msra.mxu0 0.0
    %4112 = vmatprep.subr.mxu0 0.0
    %4113 = vmatpush1.msra.mxu0 0.0
    %4114 = vmatprep.subr.mxu0 0.0
    %4115 = vmatpush1.msra.mxu0 0.0
    %4116 = vmatprep.subr.mxu0 0.0
    %4117 = vmatpush1.msra.mxu0 0.0
    %4118 = vmatprep.subr.mxu0 0.0
    %4119 = vmatpush1.msra.mxu0 0.0
    %4120 = vmatprep.subr.mxu0 0.0
    %4121 = vmatpush1.msra.mxu0 0.0
    %4122 = vmatprep.subr.mxu0 0.0
    %4123 = vmatpush1.msra.mxu0 0.0
    %4124 = vmatprep.subr.mxu0 0.0
    %4125 = vmatpush1.msra.mxu0 0.0
    %4126 = vmatprep.subr.mxu0 0.0
    %4127 = vmatpush1.msra.mxu0 0.0
    %4128 = vmatprep.subr.mxu0 0.0
    %4129 = vmatpush1.msra.mxu0 0.0
    %4130 = vmatprep.subr.mxu0 0.0
    %4131 = vmatpush1.msra.mxu0 0.0
    %4132 = vmatprep.subr.mxu0 0.0
    %4133 = vmatpush1.msra.mxu0 0.0
    %4134 = vmatprep.subr.mxu0 0.0
    %4135 = vmatpush1.msra.mxu0 0.0
    %4136 = vmatprep.subr.mxu0 0.0
    %4137 = vmatpush1.msra.mxu0 0.0
    %4138 = vmatprep.subr.mxu0 0.0
    %4139 = vmatpush1.msra.mxu0 0.0
    %4140 = vmatprep.subr.mxu0 0.0
    %4141 = vmatpush1.msra.mxu0 0.0
    %4142 = vmatprep.subr.mxu0 0.0
    %4143 = vmatpush1.msra.mxu0 0.0
    %4144 = vmatprep.mubr.f32.mxu0 0.0
    %v4145 = vand.u32 %v2035, 4294901760
    %4146 = vmatmul.mubr.f32.gmra.mrb[0].mxu0 %v4145
    %v4147 = vpop.f32.mrb[0].mxu0
    %v4148 = vadd.f32 %v4073, %v4147
    %v4149 = vpop.f32.mrb[0].mxu0
    %4150 = vdwg.mxu0
    %v4151 = vmax.f32 %v2576, 0.0
    %v4152 = vmax.f32 %v2578, 0.0
    %v4153 = vmax.f32 %v3119, 0.0
    %v4154 = vmax.f32 %v3121, 0.0
    %v4155 = vmax.f32 %v3662, 0.0
    %v4156 = vmax.f32 %v3664, 0.0
    %v4157 = vmax.f32 %v4148, 0.0
    %v4158 = vld [vmem:[%s5] sm:$0xff]
    %v4159 = vld [vmem:[%s5 + $0x8] sm:$0xff]
    %v4160 = vld [vmem:[%s5 + $0x10] sm:$0xff]
    %v4161 = vld [vmem:[%s5 + $0x18] sm:$0xff]
    %v4162 = vld [vmem:[%s5 + $0x20] sm:$0xff]
    %v4163 = vld [vmem:[%s5 + $0x28] sm:$0xff]
    %v4164 = vld [vmem:[%s5 + $0x30] sm:$0xff]
    %v4165 = vld [vmem:[%s5 + $0x38] sm:$0xff]
    %v4166 = vld [vmem:[%s5 + $0x40] sm:$0xff]
    %v4167 = vld [vmem:[%s5 + $0x48] sm:$0xff]
    %v4168 = vld [vmem:[%s5 + $0x50] sm:$0xff]
    %v4169 = vld [vmem:[%s5 + $0x58] sm:$0xff]
    %v4170 = vld [vmem:[%s5 + $0x60] sm:$0xff]
    %v4171 = vld [vmem:[%s5 + $0x68] sm:$0xff]
    %v4172 = vld [vmem:[%s5 + $0x70] sm:$0xff]
    %v4173 = vld [vmem:[%s5 + $0x78] sm:$0xff]
    %v4174 = vld [vmem:[%s5 + $0x80] sm:$0xff]
    %v4175 = vld [vmem:[%s5 + $0x88] sm:$0xff]
    %v4176 = vld [vmem:[%s5 + $0x90] sm:$0xff]
    %v4177 = vld [vmem:[%s5 + $0x98] sm:$0xff]
    %v4178 = vld [vmem:[%s5 + $0xa0] sm:$0xff]
    %v4179 = vld [vmem:[%s5 + $0xa8] sm:$0xff]
    %v4180 = vld [vmem:[%s5 + $0xb0] sm:$0xff]
    %v4181 = vld [vmem:[%s5 + $0xb8] sm:$0xff]
    %v4182 = vld [vmem:[%s5 + $0xc0] sm:$0xff]
    %v4183 = vld [vmem:[%s5 + $0xc8] sm:$0xff]
    %v4184 = vld [vmem:[%s5 + $0xd0] sm:$0xff]
    %v4185 = vld [vmem:[%s5 + $0xd8] sm:$0xff]
    %v4186 = vld [vmem:[%s5 + $0xe0] sm:$0xff]
    %v4187 = vld [vmem:[%s5 + $0xe8] sm:$0xff]
    %v4188 = vld [vmem:[%s5 + $0xf0] sm:$0xff]
    %v4189 = vld [vmem:[%s5 + $0xf8] sm:$0xff]
    %v4190 = vld [vmem:[%s5 + $0x100] sm:$0xff]
    %v4191 = vld [vmem:[%s5 + $0x108] sm:$0xff]
    %v4192 = vld [vmem:[%s5 + $0x110] sm:$0xff]
    %v4193 = vld [vmem:[%s5 + $0x118] sm:$0xff]
    %v4194 = vld [vmem:[%s5 + $0x120] sm:$0xff]
    %v4195 = vld [vmem:[%s5 + $0x128] sm:$0xff]
    %v4196 = vld [vmem:[%s5 + $0x130] sm:$0xff]
    %v4197 = vld [vmem:[%s5 + $0x138] sm:$0xff]
    %v4198 = vld [vmem:[%s5 + $0x140] sm:$0xff]
    %v4199 = vld [vmem:[%s5 + $0x148] sm:$0xff]
    %v4200 = vld [vmem:[%s5 + $0x150] sm:$0xff]
    %v4201 = vld [vmem:[%s5 + $0x158] sm:$0xff]
    %v4202 = vld [vmem:[%s5 + $0x160] sm:$0xff]
    %v4203 = vld [vmem:[%s5 + $0x168] sm:$0xff]
    %v4204 = vld [vmem:[%s5 + $0x170] sm:$0xff]
    %v4205 = vld [vmem:[%s5 + $0x178] sm:$0xff]
    %v4206 = vld [vmem:[%s5 + $0x180] sm:$0xff]
    %v4207 = vld [vmem:[%s5 + $0x188] sm:$0xff]
    %v4208 = vld [vmem:[%s5 + $0x190] sm:$0xff]
    %v4209 = vld [vmem:[%s5 + $0x198] sm:$0xff]
    %v4210 = vld [vmem:[%s5 + $0x1a0] sm:$0xff]
    %v4211 = vld [vmem:[%s5 + $0x1a8] sm:$0xff]
    %v4212 = vld [vmem:[%s5 + $0x1b0] sm:$0xff]
    %v4213 = vld [vmem:[%s5 + $0x1b8] sm:$0xff]
    %v4214 = vld [vmem:[%s5 + $0x1c0] sm:$0xff]
    %v4215 = vld [vmem:[%s5 + $0x1c8] sm:$0xff]
    %v4216 = vld [vmem:[%s5 + $0x1d0] sm:$0xff]
    %v4217 = vld [vmem:[%s5 + $0x1d8] sm:$0xff]
    %v4218 = vld [vmem:[%s5 + $0x1e0] sm:$0xff]
    %v4219 = vld [vmem:[%s5 + $0x1e8] sm:$0xff]
    %v4220 = vld [vmem:[%s5 + $0x1f0] sm:$0xff]
    %v4221 = vld [vmem:[%s5 + $0x1f8] sm:$0xff]
    %v4222 = vld [vmem:[%s5 + $0x200] sm:$0xff]
    %v4223 = vld [vmem:[%s5 + $0x208] sm:$0xff]
    %v4224 = vld [vmem:[%s5 + $0x210] sm:$0xff]
    %v4225 = vld [vmem:[%s5 + $0x218] sm:$0xff]
    %v4226 = vld [vmem:[%s5 + $0x220] sm:$0xff]
    %v4227 = vld [vmem:[%s5 + $0x228] sm:$0xff]
    %v4228 = vld [vmem:[%s5 + $0x230] sm:$0xff]
    %v4229 = vld [vmem:[%s5 + $0x238] sm:$0xff]
    %v4230 = vld [vmem:[%s5 + $0x240] sm:$0xff]
    %v4231 = vld [vmem:[%s5 + $0x248] sm:$0xff]
    %v4232 = vld [vmem:[%s5 + $0x250] sm:$0xff]
    %v4233 = vld [vmem:[%s5 + $0x258] sm:$0xff]
    %v4234 = vld [vmem:[%s5 + $0x260] sm:$0xff]
    %v4235 = vld [vmem:[%s5 + $0x268] sm:$0xff]
    %v4236 = vld [vmem:[%s5 + $0x270] sm:$0xff]
    %v4237 = vld [vmem:[%s5 + $0x278] sm:$0xff]
    %v4238 = vld [vmem:[%s5 + $0x280] sm:$0xff]
    %v4239 = vld [vmem:[%s5 + $0x288] sm:$0xff]
    %v4240 = vld [vmem:[%s5 + $0x290] sm:$0xff]
    %v4241 = vld [vmem:[%s5 + $0x298] sm:$0xff]
    %v4242 = vld [vmem:[%s5 + $0x2a0] sm:$0xff]
    %v4243 = vld [vmem:[%s5 + $0x2a8] sm:$0xff]
    %v4244 = vld [vmem:[%s5 + $0x2b0] sm:$0xff]
    %v4245 = vld [vmem:[%s5 + $0x2b8] sm:$0xff]
    %v4246 = vld [vmem:[%s5 + $0x2c0] sm:$0xff]
    %v4247 = vld [vmem:[%s5 + $0x2c8] sm:$0xff]
    %v4248 = vld [vmem:[%s5 + $0x2d0] sm:$0xff]
    %v4249 = vld [vmem:[%s5 + $0x2d8] sm:$0xff]
    %v4250 = vld [vmem:[%s5 + $0x2e0] sm:$0xff]
    %v4251 = vld [vmem:[%s5 + $0x2e8] sm:$0xff]
    %v4252 = vld [vmem:[%s5 + $0x2f0] sm:$0xff]
    %v4253 = vld [vmem:[%s5 + $0x2f8] sm:$0xff]
    %v4254 = vld [vmem:[%s5 + $0x300] sm:$0xff]
    %v4255 = vld [vmem:[%s5 + $0x308] sm:$0xff]
    %v4256 = vld [vmem:[%s5 + $0x310] sm:$0xff]
    %v4257 = vld [vmem:[%s5 + $0x318] sm:$0xff]
    %v4258 = vld [vmem:[%s6] sm:$0x1]
    %v4260 = vlaneseq
    %v4261 = vshrl.u32 %v4260, 7
    %v4262 = vsub.s32 0, %v4261
    %v4263 = vrot.slane %v4258, %v4262
    %v4266 = vsel %vm2033, %v4157, 0
    %4268 = vmatprep.subr.mxu0 0.0
    %v4269 = vand.u32 %v4158, 4294901760
    %4270 = vmatpush1.msra.mxu0 %v4269
    %4271 = vmatprep.subr.mxu0 0.0
    %v4272 = vand.u32 %v4159, 4294901760
    %4273 = vmatpush1.msra.mxu0 %v4272
    %4274 = vmatprep.subr.mxu0 0.0
    %v4275 = vand.u32 %v4160, 4294901760
    %4276 = vmatpush1.msra.mxu0 %v4275
    %4277 = vmatprep.subr.mxu0 0.0
    %v4278 = vand.u32 %v4161, 4294901760
    %4279 = vmatpush1.msra.mxu0 %v4278
    %4280 = vmatprep.subr.mxu0 0.0
    %v4281 = vand.u32 %v4162, 4294901760
    %4282 = vmatpush1.msra.mxu0 %v4281
    %4283 = vmatprep.subr.mxu0 0.0
    %v4284 = vand.u32 %v4163, 4294901760
    %4285 = vmatpush1.msra.mxu0 %v4284
    %4286 = vmatprep.subr.mxu0 0.0
    %v4287 = vand.u32 %v4164, 4294901760
    %4288 = vmatpush1.msra.mxu0 %v4287
    %4289 = vmatprep.subr.mxu0 0.0
    %v4290 = vand.u32 %v4165, 4294901760
    %4291 = vmatpush1.msra.mxu0 %v4290
    %4292 = vmatprep.subr.mxu0 0.0
    %v4293 = vand.u32 %v4166, 4294901760
    %4294 = vmatpush1.msra.mxu0 %v4293
    %4295 = vmatprep.subr.mxu0 0.0
    %v4296 = vand.u32 %v4167, 4294901760
    %4297 = vmatpush1.msra.mxu0 %v4296
    %4298 = vmatprep.subr.mxu0 0.0
    %v4299 = vand.u32 %v4168, 4294901760
    %4300 = vmatpush1.msra.mxu0 %v4299
    %4301 = vmatprep.subr.mxu0 0.0
    %v4302 = vand.u32 %v4169, 4294901760
    %4303 = vmatpush1.msra.mxu0 %v4302
    %4304 = vmatprep.subr.mxu0 0.0
    %v4305 = vand.u32 %v4170, 4294901760
    %4306 = vmatpush1.msra.mxu0 %v4305
    %4307 = vmatprep.subr.mxu0 0.0
    %v4308 = vand.u32 %v4171, 4294901760
    %4309 = vmatpush1.msra.mxu0 %v4308
    %4310 = vmatprep.subr.mxu0 0.0
    %v4311 = vand.u32 %v4172, 4294901760
    %4312 = vmatpush1.msra.mxu0 %v4311
    %4313 = vmatprep.subr.mxu0 0.0
    %v4314 = vand.u32 %v4173, 4294901760
    %4315 = vmatpush1.msra.mxu0 %v4314
    %4316 = vmatprep.subr.mxu0 0.0
    %v4317 = vand.u32 %v4174, 4294901760
    %4318 = vmatpush1.msra.mxu0 %v4317
    %4319 = vmatprep.subr.mxu0 0.0
    %v4320 = vand.u32 %v4175, 4294901760
    %4321 = vmatpush1.msra.mxu0 %v4320
    %4322 = vmatprep.subr.mxu0 0.0
    %v4323 = vand.u32 %v4176, 4294901760
    %4324 = vmatpush1.msra.mxu0 %v4323
    %4325 = vmatprep.subr.mxu0 0.0
    %v4326 = vand.u32 %v4177, 4294901760
    %4327 = vmatpush1.msra.mxu0 %v4326
    %4328 = vmatprep.subr.mxu0 0.0
    %v4329 = vand.u32 %v4178, 4294901760
    %4330 = vmatpush1.msra.mxu0 %v4329
    %4331 = vmatprep.subr.mxu0 0.0
    %v4332 = vand.u32 %v4179, 4294901760
    %4333 = vmatpush1.msra.mxu0 %v4332
    %4334 = vmatprep.subr.mxu0 0.0
    %v4335 = vand.u32 %v4180, 4294901760
    %4336 = vmatpush1.msra.mxu0 %v4335
    %4337 = vmatprep.subr.mxu0 0.0
    %v4338 = vand.u32 %v4181, 4294901760
    %4339 = vmatpush1.msra.mxu0 %v4338
    %4340 = vmatprep.subr.mxu0 0.0
    %v4341 = vand.u32 %v4182, 4294901760
    %4342 = vmatpush1.msra.mxu0 %v4341
    %4343 = vmatprep.subr.mxu0 0.0
    %v4344 = vand.u32 %v4183, 4294901760
    %4345 = vmatpush1.msra.mxu0 %v4344
    %4346 = vmatprep.subr.mxu0 0.0
    %v4347 = vand.u32 %v4184, 4294901760
    %4348 = vmatpush1.msra.mxu0 %v4347
    %4349 = vmatprep.subr.mxu0 0.0
    %v4350 = vand.u32 %v4185, 4294901760
    %4351 = vmatpush1.msra.mxu0 %v4350
    %4352 = vmatprep.subr.mxu0 0.0
    %v4353 = vand.u32 %v4186, 4294901760
    %4354 = vmatpush1.msra.mxu0 %v4353
    %4355 = vmatprep.subr.mxu0 0.0
    %v4356 = vand.u32 %v4187, 4294901760
    %4357 = vmatpush1.msra.mxu0 %v4356
    %4358 = vmatprep.subr.mxu0 0.0
    %v4359 = vand.u32 %v4188, 4294901760
    %4360 = vmatpush1.msra.mxu0 %v4359
    %4361 = vmatprep.subr.mxu0 0.0
    %v4362 = vand.u32 %v4189, 4294901760
    %4363 = vmatpush1.msra.mxu0 %v4362
    %v4364 = vand.u32 %v4152, 4294901760
    %v4365 = vsub.f32 %v4152, %v4364
    %v4366 = vand.u32 %v4365, 4294901760
    %v4367 = vsub.f32 %v4365, %v4366
    %v4368 = vand.u32 %v4367, 4294901760
    %4369 = vmatprep.mubr.f32.mxu0 %v4368
    %v4370 = vand.u32 %v4151, 4294901760
    %v4371 = vsub.f32 %v4151, %v4370
    %v4372 = vand.u32 %v4371, 4294901760
    %v4373 = vsub.f32 %v4371, %v4372
    %v4374 = vand.u32 %v4373, 4294901760
    %4375 = vmatmul.mubr.f32.gmra.mrb[0].mxu0 %v4374
    %v4376 = vpop.f32.mrb[0].mxu0
    %v4377 = vadd.f32 %v4263, %v4376
    %v4378 = vpop.f32.mrb[0].mxu0
    %4379 = vdwg.mxu0
    %4380 = vmatprep.subr.mxu0 0.0
    %v4381 = vand.u32 %v4158, 4294901760
    %v4382 = vsub.f32 %v4158, %v4381
    %v4383 = vand.u32 %v4382, 4294901760
    %v4384 = vsub.f32 %v4382, %v4383
    %v4385 = vand.u32 %v4384, 4294901760
    %4386 = vmatpush1.msra.mxu0 %v4385
    %4387 = vmatprep.subr.mxu0 0.0
    %v4388 = vand.u32 %v4159, 4294901760
    %v4389 = vsub.f32 %v4159, %v4388
    %v4390 = vand.u32 %v4389, 4294901760
    %v4391 = vsub.f32 %v4389, %v4390
    %v4392 = vand.u32 %v4391, 4294901760
    %4393 = vmatpush1.msra.mxu0 %v4392
    %4394 = vmatprep.subr.mxu0 0.0
    %v4395 = vand.u32 %v4160, 4294901760
    %v4396 = vsub.f32 %v4160, %v4395
    %v4397 = vand.u32 %v4396, 4294901760
    %v4398 = vsub.f32 %v4396, %v4397
    %v4399 = vand.u32 %v4398, 4294901760
    %4400 = vmatpush1.msra.mxu0 %v4399
    %4401 = vmatprep.subr.mxu0 0.0
    %v4402 = vand.u32 %v4161, 4294901760
    %v4403 = vsub.f32 %v4161, %v4402
    %v4404 = vand.u32 %v4403, 4294901760
    %v4405 = vsub.f32 %v4403, %v4404
    %v4406 = vand.u32 %v4405, 4294901760
    %4407 = vmatpush1.msra.mxu0 %v4406
    %4408 = vmatprep.subr.mxu0 0.0
    %v4409 = vand.u32 %v4162, 4294901760
    %v4410 = vsub.f32 %v4162, %v4409
    %v4411 = vand.u32 %v4410, 4294901760
    %v4412 = vsub.f32 %v4410, %v4411
    %v4413 = vand.u32 %v4412, 4294901760
    %4414 = vmatpush1.msra.mxu0 %v4413
    %4415 = vmatprep.subr.mxu0 0.0
    %v4416 = vand.u32 %v4163, 4294901760
    %v4417 = vsub.f32 %v4163, %v4416
    %v4418 = vand.u32 %v4417, 4294901760
    %v4419 = vsub.f32 %v4417, %v4418
    %v4420 = vand.u32 %v4419, 4294901760
    %4421 = vmatpush1.msra.mxu0 %v4420
    %4422 = vmatprep.subr.mxu0 0.0
    %v4423 = vand.u32 %v4164, 4294901760
    %v4424 = vsub.f32 %v4164, %v4423
    %v4425 = vand.u32 %v4424, 4294901760
    %v4426 = vsub.f32 %v4424, %v4425
    %v4427 = vand.u32 %v4426, 4294901760
    %4428 = vmatpush1.msra.mxu0 %v4427
    %4429 = vmatprep.subr.mxu0 0.0
    %v4430 = vand.u32 %v4165, 4294901760
    %v4431 = vsub.f32 %v4165, %v4430
    %v4432 = vand.u32 %v4431, 4294901760
    %v4433 = vsub.f32 %v4431, %v4432
    %v4434 = vand.u32 %v4433, 4294901760
    %4435 = vmatpush1.msra.mxu0 %v4434
    %4436 = vmatprep.subr.mxu0 0.0
    %v4437 = vand.u32 %v4166, 4294901760
    %v4438 = vsub.f32 %v4166, %v4437
    %v4439 = vand.u32 %v4438, 4294901760
    %v4440 = vsub.f32 %v4438, %v4439
    %v4441 = vand.u32 %v4440, 4294901760
    %4442 = vmatpush1.msra.mxu0 %v4441
    %4443 = vmatprep.subr.mxu0 0.0
    %v4444 = vand.u32 %v4167, 4294901760
    %v4445 = vsub.f32 %v4167, %v4444
    %v4446 = vand.u32 %v4445, 4294901760
    %v4447 = vsub.f32 %v4445, %v4446
    %v4448 = vand.u32 %v4447, 4294901760
    %4449 = vmatpush1.msra.mxu0 %v4448
    %4450 = vmatprep.subr.mxu0 0.0
    %v4451 = vand.u32 %v4168, 4294901760
    %v4452 = vsub.f32 %v4168, %v4451
    %v4453 = vand.u32 %v4452, 4294901760
    %v4454 = vsub.f32 %v4452, %v4453
    %v4455 = vand.u32 %v4454, 4294901760
    %4456 = vmatpush1.msra.mxu0 %v4455
    %4457 = vmatprep.subr.mxu0 0.0
    %v4458 = vand.u32 %v4169, 4294901760
    %v4459 = vsub.f32 %v4169, %v4458
    %v4460 = vand.u32 %v4459, 4294901760
    %v4461 = vsub.f32 %v4459, %v4460
    %v4462 = vand.u32 %v4461, 4294901760
    %4463 = vmatpush1.msra.mxu0 %v4462
    %4464 = vmatprep.subr.mxu0 0.0
    %v4465 = vand.u32 %v4170, 4294901760
    %v4466 = vsub.f32 %v4170, %v4465
    %v4467 = vand.u32 %v4466, 4294901760
    %v4468 = vsub.f32 %v4466, %v4467
    %v4469 = vand.u32 %v4468, 4294901760
    %4470 = vmatpush1.msra.mxu0 %v4469
    %4471 = vmatprep.subr.mxu0 0.0
    %v4472 = vand.u32 %v4171, 4294901760
    %v4473 = vsub.f32 %v4171, %v4472
    %v4474 = vand.u32 %v4473, 4294901760
    %v4475 = vsub.f32 %v4473, %v4474
    %v4476 = vand.u32 %v4475, 4294901760
    %4477 = vmatpush1.msra.mxu0 %v4476
    %4478 = vmatprep.subr.mxu0 0.0
    %v4479 = vand.u32 %v4172, 4294901760
    %v4480 = vsub.f32 %v4172, %v4479
    %v4481 = vand.u32 %v4480, 4294901760
    %v4482 = vsub.f32 %v4480, %v4481
    %v4483 = vand.u32 %v4482, 4294901760
    %4484 = vmatpush1.msra.mxu0 %v4483
    %4485 = vmatprep.subr.mxu0 0.0
    %v4486 = vand.u32 %v4173, 4294901760
    %v4487 = vsub.f32 %v4173, %v4486
    %v4488 = vand.u32 %v4487, 4294901760
    %v4489 = vsub.f32 %v4487, %v4488
    %v4490 = vand.u32 %v4489, 4294901760
    %4491 = vmatpush1.msra.mxu0 %v4490
    %4492 = vmatprep.subr.mxu0 0.0
    %v4493 = vand.u32 %v4174, 4294901760
    %v4494 = vsub.f32 %v4174, %v4493
    %v4495 = vand.u32 %v4494, 4294901760
    %v4496 = vsub.f32 %v4494, %v4495
    %v4497 = vand.u32 %v4496, 4294901760
    %4498 = vmatpush1.msra.mxu0 %v4497
    %4499 = vmatprep.subr.mxu0 0.0
    %v4500 = vand.u32 %v4175, 4294901760
    %v4501 = vsub.f32 %v4175, %v4500
    %v4502 = vand.u32 %v4501, 4294901760
    %v4503 = vsub.f32 %v4501, %v4502
    %v4504 = vand.u32 %v4503, 4294901760
    %4505 = vmatpush1.msra.mxu0 %v4504
    %4506 = vmatprep.subr.mxu0 0.0
    %v4507 = vand.u32 %v4176, 4294901760
    %v4508 = vsub.f32 %v4176, %v4507
    %v4509 = vand.u32 %v4508, 4294901760
    %v4510 = vsub.f32 %v4508, %v4509
    %v4511 = vand.u32 %v4510, 4294901760
    %4512 = vmatpush1.msra.mxu0 %v4511
    %4513 = vmatprep.subr.mxu0 0.0
    %v4514 = vand.u32 %v4177, 4294901760
    %v4515 = vsub.f32 %v4177, %v4514
    %v4516 = vand.u32 %v4515, 4294901760
    %v4517 = vsub.f32 %v4515, %v4516
    %v4518 = vand.u32 %v4517, 4294901760
    %4519 = vmatpush1.msra.mxu0 %v4518
    %4520 = vmatprep.subr.mxu0 0.0
    %v4521 = vand.u32 %v4178, 4294901760
    %v4522 = vsub.f32 %v4178, %v4521
    %v4523 = vand.u32 %v4522, 4294901760
    %v4524 = vsub.f32 %v4522, %v4523
    %v4525 = vand.u32 %v4524, 4294901760
    %4526 = vmatpush1.msra.mxu0 %v4525
    %4527 = vmatprep.subr.mxu0 0.0
    %v4528 = vand.u32 %v4179, 4294901760
    %v4529 = vsub.f32 %v4179, %v4528
    %v4530 = vand.u32 %v4529, 4294901760
    %v4531 = vsub.f32 %v4529, %v4530
    %v4532 = vand.u32 %v4531, 4294901760
    %4533 = vmatpush1.msra.mxu0 %v4532
    %4534 = vmatprep.subr.mxu0 0.0
    %v4535 = vand.u32 %v4180, 4294901760
    %v4536 = vsub.f32 %v4180, %v4535
    %v4537 = vand.u32 %v4536, 4294901760
    %v4538 = vsub.f32 %v4536, %v4537
    %v4539 = vand.u32 %v4538, 4294901760
    %4540 = vmatpush1.msra.mxu0 %v4539
    %4541 = vmatprep.subr.mxu0 0.0
    %v4542 = vand.u32 %v4181, 4294901760
    %v4543 = vsub.f32 %v4181, %v4542
    %v4544 = vand.u32 %v4543, 4294901760
    %v4545 = vsub.f32 %v4543, %v4544
    %v4546 = vand.u32 %v4545, 4294901760
    %4547 = vmatpush1.msra.mxu0 %v4546
    %4548 = vmatprep.subr.mxu0 0.0
    %v4549 = vand.u32 %v4182, 4294901760
    %v4550 = vsub.f32 %v4182, %v4549
    %v4551 = vand.u32 %v4550, 4294901760
    %v4552 = vsub.f32 %v4550, %v4551
    %v4553 = vand.u32 %v4552, 4294901760
    %4554 = vmatpush1.msra.mxu0 %v4553
    %4555 = vmatprep.subr.mxu0 0.0
    %v4556 = vand.u32 %v4183, 4294901760
    %v4557 = vsub.f32 %v4183, %v4556
    %v4558 = vand.u32 %v4557, 4294901760
    %v4559 = vsub.f32 %v4557, %v4558
    %v4560 = vand.u32 %v4559, 4294901760
    %4561 = vmatpush1.msra.mxu0 %v4560
    %4562 = vmatprep.subr.mxu0 0.0
    %v4563 = vand.u32 %v4184, 4294901760
    %v4564 = vsub.f32 %v4184, %v4563
    %v4565 = vand.u32 %v4564, 4294901760
    %v4566 = vsub.f32 %v4564, %v4565
    %v4567 = vand.u32 %v4566, 4294901760
    %4568 = vmatpush1.msra.mxu0 %v4567
    %4569 = vmatprep.subr.mxu0 0.0
    %v4570 = vand.u32 %v4185, 4294901760
    %v4571 = vsub.f32 %v4185, %v4570
    %v4572 = vand.u32 %v4571, 4294901760
    %v4573 = vsub.f32 %v4571, %v4572
    %v4574 = vand.u32 %v4573, 4294901760
    %4575 = vmatpush1.msra.mxu0 %v4574
    %4576 = vmatprep.subr.mxu0 0.0
    %v4577 = vand.u32 %v4186, 4294901760
    %v4578 = vsub.f32 %v4186, %v4577
    %v4579 = vand.u32 %v4578, 4294901760
    %v4580 = vsub.f32 %v4578, %v4579
    %v4581 = vand.u32 %v4580, 4294901760
    %4582 = vmatpush1.msra.mxu0 %v4581
    %4583 = vmatprep.subr.mxu0 0.0
    %v4584 = vand.u32 %v4187, 4294901760
    %v4585 = vsub.f32 %v4187, %v4584
    %v4586 = vand.u32 %v4585, 4294901760
    %v4587 = vsub.f32 %v4585, %v4586
    %v4588 = vand.u32 %v4587, 4294901760
    %4589 = vmatpush1.msra.mxu0 %v4588
    %4590 = vmatprep.subr.mxu0 0.0
    %v4591 = vand.u32 %v4188, 4294901760
    %v4592 = vsub.f32 %v4188, %v4591
    %v4593 = vand.u32 %v4592, 4294901760
    %v4594 = vsub.f32 %v4592, %v4593
    %v4595 = vand.u32 %v4594, 4294901760
    %4596 = vmatpush1.msra.mxu0 %v4595
    %4597 = vmatprep.subr.mxu0 0.0
    %v4598 = vand.u32 %v4189, 4294901760
    %v4599 = vsub.f32 %v4189, %v4598
    %v4600 = vand.u32 %v4599, 4294901760
    %v4601 = vsub.f32 %v4599, %v4600
    %v4602 = vand.u32 %v4601, 4294901760
    %4603 = vmatpush1.msra.mxu0 %v4602
    %v4604 = vand.u32 %v4152, 4294901760
    %4605 = vmatprep.mubr.f32.mxu0 %v4604
    %v4606 = vand.u32 %v4151, 4294901760
    %4607 = vmatmul.mubr.f32.gmra.mrb[0].mxu0 %v4606
    %v4608 = vpop.f32.mrb[0].mxu0
    %v4609 = vadd.f32 %v4377, %v4608
    %v4610 = vpop.f32.mrb[0].mxu0
    %4611 = vdwg.mxu0
    %4612 = vmatprep.subr.mxu0 0.0
    %v4613 = vand.u32 %v4158, 4294901760
    %v4614 = vsub.f32 %v4158, %v4613
    %4615 = vmatpush1.msra.mxu0 %v4614
    %4616 = vmatprep.subr.mxu0 0.0
    %v4617 = vand.u32 %v4159, 4294901760
    %v4618 = vsub.f32 %v4159, %v4617
    %4619 = vmatpush1.msra.mxu0 %v4618
    %4620 = vmatprep.subr.mxu0 0.0
    %v4621 = vand.u32 %v4160, 4294901760
    %v4622 = vsub.f32 %v4160, %v4621
    %4623 = vmatpush1.msra.mxu0 %v4622
    %4624 = vmatprep.subr.mxu0 0.0
    %v4625 = vand.u32 %v4161, 4294901760
    %v4626 = vsub.f32 %v4161, %v4625
    %4627 = vmatpush1.msra.mxu0 %v4626
    %4628 = vmatprep.subr.mxu0 0.0
    %v4629 = vand.u32 %v4162, 4294901760
    %v4630 = vsub.f32 %v4162, %v4629
    %4631 = vmatpush1.msra.mxu0 %v4630
    %4632 = vmatprep.subr.mxu0 0.0
    %v4633 = vand.u32 %v4163, 4294901760
    %v4634 = vsub.f32 %v4163, %v4633
    %4635 = vmatpush1.msra.mxu0 %v4634
    %4636 = vmatprep.subr.mxu0 0.0
    %v4637 = vand.u32 %v4164, 4294901760
    %v4638 = vsub.f32 %v4164, %v4637
    %4639 = vmatpush1.msra.mxu0 %v4638
    %4640 = vmatprep.subr.mxu0 0.0
    %v4641 = vand.u32 %v4165, 4294901760
    %v4642 = vsub.f32 %v4165, %v4641
    %4643 = vmatpush1.msra.mxu0 %v4642
    %4644 = vmatprep.subr.mxu0 0.0
    %v4645 = vand.u32 %v4166, 4294901760
    %v4646 = vsub.f32 %v4166, %v4645
    %4647 = vmatpush1.msra.mxu0 %v4646
    %4648 = vmatprep.subr.mxu0 0.0
    %v4649 = vand.u32 %v4167, 4294901760
    %v4650 = vsub.f32 %v4167, %v4649
    %4651 = vmatpush1.msra.mxu0 %v4650
    %4652 = vmatprep.subr.mxu0 0.0
    %v4653 = vand.u32 %v4168, 4294901760
    %v4654 = vsub.f32 %v4168, %v4653
    %4655 = vmatpush1.msra.mxu0 %v4654
    %4656 = vmatprep.subr.mxu0 0.0
    %v4657 = vand.u32 %v4169, 4294901760
    %v4658 = vsub.f32 %v4169, %v4657
    %4659 = vmatpush1.msra.mxu0 %v4658
    %4660 = vmatprep.subr.mxu0 0.0
    %v4661 = vand.u32 %v4170, 4294901760
    %v4662 = vsub.f32 %v4170, %v4661
    %4663 = vmatpush1.msra.mxu0 %v4662
    %4664 = vmatprep.subr.mxu0 0.0
    %v4665 = vand.u32 %v4171, 4294901760
    %v4666 = vsub.f32 %v4171, %v4665
    %4667 = vmatpush1.msra.mxu0 %v4666
    %4668 = vmatprep.subr.mxu0 0.0
    %v4669 = vand.u32 %v4172, 4294901760
    %v4670 = vsub.f32 %v4172, %v4669
    %4671 = vmatpush1.msra.mxu0 %v4670
    %4672 = vmatprep.subr.mxu0 0.0
    %v4673 = vand.u32 %v4173, 4294901760
    %v4674 = vsub.f32 %v4173, %v4673
    %4675 = vmatpush1.msra.mxu0 %v4674
    %4676 = vmatprep.subr.mxu0 0.0
    %v4677 = vand.u32 %v4174, 4294901760
    %v4678 = vsub.f32 %v4174, %v4677
    %4679 = vmatpush1.msra.mxu0 %v4678
    %4680 = vmatprep.subr.mxu0 0.0
    %v4681 = vand.u32 %v4175, 4294901760
    %v4682 = vsub.f32 %v4175, %v4681
    %4683 = vmatpush1.msra.mxu0 %v4682
    %4684 = vmatprep.subr.mxu0 0.0
    %v4685 = vand.u32 %v4176, 4294901760
    %v4686 = vsub.f32 %v4176, %v4685
    %4687 = vmatpush1.msra.mxu0 %v4686
    %4688 = vmatprep.subr.mxu0 0.0
    %v4689 = vand.u32 %v4177, 4294901760
    %v4690 = vsub.f32 %v4177, %v4689
    %4691 = vmatpush1.msra.mxu0 %v4690
    %4692 = vmatprep.subr.mxu0 0.0
    %v4693 = vand.u32 %v4178, 4294901760
    %v4694 = vsub.f32 %v4178, %v4693
    %4695 = vmatpush1.msra.mxu0 %v4694
    %4696 = vmatprep.subr.mxu0 0.0
    %v4697 = vand.u32 %v4179, 4294901760
    %v4698 = vsub.f32 %v4179, %v4697
    %4699 = vmatpush1.msra.mxu0 %v4698
    %4700 = vmatprep.subr.mxu0 0.0
    %v4701 = vand.u32 %v4180, 4294901760
    %v4702 = vsub.f32 %v4180, %v4701
    %4703 = vmatpush1.msra.mxu0 %v4702
    %4704 = vmatprep.subr.mxu0 0.0
    %v4705 = vand.u32 %v4181, 4294901760
    %v4706 = vsub.f32 %v4181, %v4705
    %4707 = vmatpush1.msra.mxu0 %v4706
    %4708 = vmatprep.subr.mxu0 0.0
    %v4709 = vand.u32 %v4182, 4294901760
    %v4710 = vsub.f32 %v4182, %v4709
    %4711 = vmatpush1.msra.mxu0 %v4710
    %4712 = vmatprep.subr.mxu0 0.0
    %v4713 = vand.u32 %v4183, 4294901760
    %v4714 = vsub.f32 %v4183, %v4713
    %4715 = vmatpush1.msra.mxu0 %v4714
    %4716 = vmatprep.subr.mxu0 0.0
    %v4717 = vand.u32 %v4184, 4294901760
    %v4718 = vsub.f32 %v4184, %v4717
    %4719 = vmatpush1.msra.mxu0 %v4718
    %4720 = vmatprep.subr.mxu0 0.0
    %v4721 = vand.u32 %v4185, 4294901760
    %v4722 = vsub.f32 %v4185, %v4721
    %4723 = vmatpush1.msra.mxu0 %v4722
    %4724 = vmatprep.subr.mxu0 0.0
    %v4725 = vand.u32 %v4186, 4294901760
    %v4726 = vsub.f32 %v4186, %v4725
    %4727 = vmatpush1.msra.mxu0 %v4726
    %4728 = vmatprep.subr.mxu0 0.0
    %v4729 = vand.u32 %v4187, 4294901760
    %v4730 = vsub.f32 %v4187, %v4729
    %4731 = vmatpush1.msra.mxu0 %v4730
    %4732 = vmatprep.subr.mxu0 0.0
    %v4733 = vand.u32 %v4188, 4294901760
    %v4734 = vsub.f32 %v4188, %v4733
    %4735 = vmatpush1.msra.mxu0 %v4734
    %4736 = vmatprep.subr.mxu0 0.0
    %v4737 = vand.u32 %v4189, 4294901760
    %v4738 = vsub.f32 %v4189, %v4737
    %4739 = vmatpush1.msra.mxu0 %v4738
    %v4740 = vand.u32 %v4152, 4294901760
    %v4741 = vsub.f32 %v4152, %v4740
    %4742 = vmatprep.mubr.f32.mxu0 %v4741
    %v4743 = vand.u32 %v4151, 4294901760
    %v4744 = vsub.f32 %v4151, %v4743
    %4745 = vmatmul.mubr.f32.gmra.mrb[0].mxu0 %v4744
    %v4746 = vpop.f32.mrb[0].mxu0
    %v4747 = vadd.f32 %v4609, %v4746
    %v4748 = vpop.f32.mrb[0].mxu0
    %4749 = vdwg.mxu0
    %4750 = vmatprep.subr.mxu0 0.0
    %v4751 = vand.u32 %v4158, 4294901760
    %4752 = vmatpush1.msra.mxu0 %v4751
    %4753 = vmatprep.subr.mxu0 0.0
    %v4754 = vand.u32 %v4159, 4294901760
    %4755 = vmatpush1.msra.mxu0 %v4754
    %4756 = vmatprep.subr.mxu0 0.0
    %v4757 = vand.u32 %v4160, 4294901760
    %4758 = vmatpush1.msra.mxu0 %v4757
    %4759 = vmatprep.subr.mxu0 0.0
    %v4760 = vand.u32 %v4161, 4294901760
    %4761 = vmatpush1.msra.mxu0 %v4760
    %4762 = vmatprep.subr.mxu0 0.0
    %v4763 = vand.u32 %v4162, 4294901760
    %4764 = vmatpush1.msra.mxu0 %v4763
    %4765 = vmatprep.subr.mxu0 0.0
    %v4766 = vand.u32 %v4163, 4294901760
    %4767 = vmatpush1.msra.mxu0 %v4766
    %4768 = vmatprep.subr.mxu0 0.0
    %v4769 = vand.u32 %v4164, 4294901760
    %4770 = vmatpush1.msra.mxu0 %v4769
    %4771 = vmatprep.subr.mxu0 0.0
    %v4772 = vand.u32 %v4165, 4294901760
    %4773 = vmatpush1.msra.mxu0 %v4772
    %4774 = vmatprep.subr.mxu0 0.0
    %v4775 = vand.u32 %v4166, 4294901760
    %4776 = vmatpush1.msra.mxu0 %v4775
    %4777 = vmatprep.subr.mxu0 0.0
    %v4778 = vand.u32 %v4167, 4294901760
    %4779 = vmatpush1.msra.mxu0 %v4778
    %4780 = vmatprep.subr.mxu0 0.0
    %v4781 = vand.u32 %v4168, 4294901760
    %4782 = vmatpush1.msra.mxu0 %v4781
    %4783 = vmatprep.subr.mxu0 0.0
    %v4784 = vand.u32 %v4169, 4294901760
    %4785 = vmatpush1.msra.mxu0 %v4784
    %4786 = vmatprep.subr.mxu0 0.0
    %v4787 = vand.u32 %v4170, 4294901760
    %4788 = vmatpush1.msra.mxu0 %v4787
    %4789 = vmatprep.subr.mxu0 0.0
    %v4790 = vand.u32 %v4171, 4294901760
    %4791 = vmatpush1.msra.mxu0 %v4790
    %4792 = vmatprep.subr.mxu0 0.0
    %v4793 = vand.u32 %v4172, 4294901760
    %4794 = vmatpush1.msra.mxu0 %v4793
    %4795 = vmatprep.subr.mxu0 0.0
    %v4796 = vand.u32 %v4173, 4294901760
    %4797 = vmatpush1.msra.mxu0 %v4796
    %4798 = vmatprep.subr.mxu0 0.0
    %v4799 = vand.u32 %v4174, 4294901760
    %4800 = vmatpush1.msra.mxu0 %v4799
    %4801 = vmatprep.subr.mxu0 0.0
    %v4802 = vand.u32 %v4175, 4294901760
    %4803 = vmatpush1.msra.mxu0 %v4802
    %4804 = vmatprep.subr.mxu0 0.0
    %v4805 = vand.u32 %v4176, 4294901760
    %4806 = vmatpush1.msra.mxu0 %v4805
    %4807 = vmatprep.subr.mxu0 0.0
    %v4808 = vand.u32 %v4177, 4294901760
    %4809 = vmatpush1.msra.mxu0 %v4808
    %4810 = vmatprep.subr.mxu0 0.0
    %v4811 = vand.u32 %v4178, 4294901760
    %4812 = vmatpush1.msra.mxu0 %v4811
    %4813 = vmatprep.subr.mxu0 0.0
    %v4814 = vand.u32 %v4179, 4294901760
    %4815 = vmatpush1.msra.mxu0 %v4814
    %4816 = vmatprep.subr.mxu0 0.0
    %v4817 = vand.u32 %v4180, 4294901760
    %4818 = vmatpush1.msra.mxu0 %v4817
    %4819 = vmatprep.subr.mxu0 0.0
    %v4820 = vand.u32 %v4181, 4294901760
    %4821 = vmatpush1.msra.mxu0 %v4820
    %4822 = vmatprep.subr.mxu0 0.0
    %v4823 = vand.u32 %v4182, 4294901760
    %4824 = vmatpush1.msra.mxu0 %v4823
    %4825 = vmatprep.subr.mxu0 0.0
    %v4826 = vand.u32 %v4183, 4294901760
    %4827 = vmatpush1.msra.mxu0 %v4826
    %4828 = vmatprep.subr.mxu0 0.0
    %v4829 = vand.u32 %v4184, 4294901760
    %4830 = vmatpush1.msra.mxu0 %v4829
    %4831 = vmatprep.subr.mxu0 0.0
    %v4832 = vand.u32 %v4185, 4294901760
    %4833 = vmatpush1.msra.mxu0 %v4832
    %4834 = vmatprep.subr.mxu0 0.0
    %v4835 = vand.u32 %v4186, 4294901760
    %4836 = vmatpush1.msra.mxu0 %v4835
    %4837 = vmatprep.subr.mxu0 0.0
    %v4838 = vand.u32 %v4187, 4294901760
    %4839 = vmatpush1.msra.mxu0 %v4838
    %4840 = vmatprep.subr.mxu0 0.0
    %v4841 = vand.u32 %v4188, 4294901760
    %4842 = vmatpush1.msra.mxu0 %v4841
    %4843 = vmatprep.subr.mxu0 0.0
    %v4844 = vand.u32 %v4189, 4294901760
    %4845 = vmatpush1.msra.mxu0 %v4844
    %v4846 = vand.u32 %v4152, 4294901760
    %v4847 = vsub.f32 %v4152, %v4846
    %v4848 = vand.u32 %v4847, 4294901760
    %4849 = vmatprep.mubr.f32.mxu0 %v4848
    %v4850 = vand.u32 %v4151, 4294901760
    %v4851 = vsub.f32 %v4151, %v4850
    %v4852 = vand.u32 %v4851, 4294901760
    %4853 = vmatmul.mubr.f32.gmra.mrb[0].mxu0 %v4852
    %v4854 = vpop.f32.mrb[0].mxu0
    %v4855 = vadd.f32 %v4747, %v4854
    %v4856 = vpop.f32.mrb[0].mxu0
    %4857 = vdwg.mxu0
    %4858 = vmatprep.subr.mxu0 0.0
    %v4859 = vand.u32 %v4158, 4294901760
    %v4860 = vsub.f32 %v4158, %v4859
    %v4861 = vand.u32 %v4860, 4294901760
    %4862 = vmatpush1.msra.mxu0 %v4861
    %4863 = vmatprep.subr.mxu0 0.0
    %v4864 = vand.u32 %v4159, 4294901760
    %v4865 = vsub.f32 %v4159, %v4864
    %v4866 = vand.u32 %v4865, 4294901760
    %4867 = vmatpush1.msra.mxu0 %v4866
    %4868 = vmatprep.subr.mxu0 0.0
    %v4869 = vand.u32 %v4160, 4294901760
    %v4870 = vsub.f32 %v4160, %v4869
    %v4871 = vand.u32 %v4870, 4294901760
    %4872 = vmatpush1.msra.mxu0 %v4871
    %4873 = vmatprep.subr.mxu0 0.0
    %v4874 = vand.u32 %v4161, 4294901760
    %v4875 = vsub.f32 %v4161, %v4874
    %v4876 = vand.u32 %v4875, 4294901760
    %4877 = vmatpush1.msra.mxu0 %v4876
    %4878 = vmatprep.subr.mxu0 0.0
    %v4879 = vand.u32 %v4162, 4294901760
    %v4880 = vsub.f32 %v4162, %v4879
    %v4881 = vand.u32 %v4880, 4294901760
    %4882 = vmatpush1.msra.mxu0 %v4881
    %4883 = vmatprep.subr.mxu0 0.0
    %v4884 = vand.u32 %v4163, 4294901760
    %v4885 = vsub.f32 %v4163, %v4884
    %v4886 = vand.u32 %v4885, 4294901760
    %4887 = vmatpush1.msra.mxu0 %v4886
    %4888 = vmatprep.subr.mxu0 0.0
    %v4889 = vand.u32 %v4164, 4294901760
    %v4890 = vsub.f32 %v4164, %v4889
    %v4891 = vand.u32 %v4890, 4294901760
    %4892 = vmatpush1.msra.mxu0 %v4891
    %4893 = vmatprep.subr.mxu0 0.0
    %v4894 = vand.u32 %v4165, 4294901760
    %v4895 = vsub.f32 %v4165, %v4894
    %v4896 = vand.u32 %v4895, 4294901760
    %4897 = vmatpush1.msra.mxu0 %v4896
    %4898 = vmatprep.subr.mxu0 0.0
    %v4899 = vand.u32 %v4166, 4294901760
    %v4900 = vsub.f32 %v4166, %v4899
    %v4901 = vand.u32 %v4900, 4294901760
    %4902 = vmatpush1.msra.mxu0 %v4901
    %4903 = vmatprep.subr.mxu0 0.0
    %v4904 = vand.u32 %v4167, 4294901760
    %v4905 = vsub.f32 %v4167, %v4904
    %v4906 = vand.u32 %v4905, 4294901760
    %4907 = vmatpush1.msra.mxu0 %v4906
    %4908 = vmatprep.subr.mxu0 0.0
    %v4909 = vand.u32 %v4168, 4294901760
    %v4910 = vsub.f32 %v4168, %v4909
    %v4911 = vand.u32 %v4910, 4294901760
    %4912 = vmatpush1.msra.mxu0 %v4911
    %4913 = vmatprep.subr.mxu0 0.0
    %v4914 = vand.u32 %v4169, 4294901760
    %v4915 = vsub.f32 %v4169, %v4914
    %v4916 = vand.u32 %v4915, 4294901760
    %4917 = vmatpush1.msra.mxu0 %v4916
    %4918 = vmatprep.subr.mxu0 0.0
    %v4919 = vand.u32 %v4170, 4294901760
    %v4920 = vsub.f32 %v4170, %v4919
    %v4921 = vand.u32 %v4920, 4294901760
    %4922 = vmatpush1.msra.mxu0 %v4921
    %4923 = vmatprep.subr.mxu0 0.0
    %v4924 = vand.u32 %v4171, 4294901760
    %v4925 = vsub.f32 %v4171, %v4924
    %v4926 = vand.u32 %v4925, 4294901760
    %4927 = vmatpush1.msra.mxu0 %v4926
    %4928 = vmatprep.subr.mxu0 0.0
    %v4929 = vand.u32 %v4172, 4294901760
    %v4930 = vsub.f32 %v4172, %v4929
    %v4931 = vand.u32 %v4930, 4294901760
    %4932 = vmatpush1.msra.mxu0 %v4931
    %4933 = vmatprep.subr.mxu0 0.0
    %v4934 = vand.u32 %v4173, 4294901760
    %v4935 = vsub.f32 %v4173, %v4934
    %v4936 = vand.u32 %v4935, 4294901760
    %4937 = vmatpush1.msra.mxu0 %v4936
    %4938 = vmatprep.subr.mxu0 0.0
    %v4939 = vand.u32 %v4174, 4294901760
    %v4940 = vsub.f32 %v4174, %v4939
    %v4941 = vand.u32 %v4940, 4294901760
    %4942 = vmatpush1.msra.mxu0 %v4941
    %4943 = vmatprep.subr.mxu0 0.0
    %v4944 = vand.u32 %v4175, 4294901760
    %v4945 = vsub.f32 %v4175, %v4944
    %v4946 = vand.u32 %v4945, 4294901760
    %4947 = vmatpush1.msra.mxu0 %v4946
    %4948 = vmatprep.subr.mxu0 0.0
    %v4949 = vand.u32 %v4176, 4294901760
    %v4950 = vsub.f32 %v4176, %v4949
    %v4951 = vand.u32 %v4950, 4294901760
    %4952 = vmatpush1.msra.mxu0 %v4951
    %4953 = vmatprep.subr.mxu0 0.0
    %v4954 = vand.u32 %v4177, 4294901760
    %v4955 = vsub.f32 %v4177, %v4954
    %v4956 = vand.u32 %v4955, 4294901760
    %4957 = vmatpush1.msra.mxu0 %v4956
    %4958 = vmatprep.subr.mxu0 0.0
    %v4959 = vand.u32 %v4178, 4294901760
    %v4960 = vsub.f32 %v4178, %v4959
    %v4961 = vand.u32 %v4960, 4294901760
    %4962 = vmatpush1.msra.mxu0 %v4961
    %4963 = vmatprep.subr.mxu0 0.0
    %v4964 = vand.u32 %v4179, 4294901760
    %v4965 = vsub.f32 %v4179, %v4964
    %v4966 = vand.u32 %v4965, 4294901760
    %4967 = vmatpush1.msra.mxu0 %v4966
    %4968 = vmatprep.subr.mxu0 0.0
    %v4969 = vand.u32 %v4180, 4294901760
    %v4970 = vsub.f32 %v4180, %v4969
    %v4971 = vand.u32 %v4970, 4294901760
    %4972 = vmatpush1.msra.mxu0 %v4971
    %4973 = vmatprep.subr.mxu0 0.0
    %v4974 = vand.u32 %v4181, 4294901760
    %v4975 = vsub.f32 %v4181, %v4974
    %v4976 = vand.u32 %v4975, 4294901760
    %4977 = vmatpush1.msra.mxu0 %v4976
    %4978 = vmatprep.subr.mxu0 0.0
    %v4979 = vand.u32 %v4182, 4294901760
    %v4980 = vsub.f32 %v4182, %v4979
    %v4981 = vand.u32 %v4980, 4294901760
    %4982 = vmatpush1.msra.mxu0 %v4981
    %4983 = vmatprep.subr.mxu0 0.0
    %v4984 = vand.u32 %v4183, 4294901760
    %v4985 = vsub.f32 %v4183, %v4984
    %v4986 = vand.u32 %v4985, 4294901760
    %4987 = vmatpush1.msra.mxu0 %v4986
    %4988 = vmatprep.subr.mxu0 0.0
    %v4989 = vand.u32 %v4184, 4294901760
    %v4990 = vsub.f32 %v4184, %v4989
    %v4991 = vand.u32 %v4990, 4294901760
    %4992 = vmatpush1.msra.mxu0 %v4991
    %4993 = vmatprep.subr.mxu0 0.0
    %v4994 = vand.u32 %v4185, 4294901760
    %v4995 = vsub.f32 %v4185, %v4994
    %v4996 = vand.u32 %v4995, 4294901760
    %4997 = vmatpush1.msra.mxu0 %v4996
    %4998 = vmatprep.subr.mxu0 0.0
    %v4999 = vand.u32 %v4186, 4294901760
    %v5000 = vsub.f32 %v4186, %v4999
    %v5001 = vand.u32 %v5000, 4294901760
    %5002 = vmatpush1.msra.mxu0 %v5001
    %5003 = vmatprep.subr.mxu0 0.0
    %v5004 = vand.u32 %v4187, 4294901760
    %v5005 = vsub.f32 %v4187, %v5004
    %v5006 = vand.u32 %v5005, 4294901760
    %5007 = vmatpush1.msra.mxu0 %v5006
    %5008 = vmatprep.subr.mxu0 0.0
    %v5009 = vand.u32 %v4188, 4294901760
    %v5010 = vsub.f32 %v4188, %v5009
    %v5011 = vand.u32 %v5010, 4294901760
    %5012 = vmatpush1.msra.mxu0 %v5011
    %5013 = vmatprep.subr.mxu0 0.0
    %v5014 = vand.u32 %v4189, 4294901760
    %v5015 = vsub.f32 %v4189, %v5014
    %v5016 = vand.u32 %v5015, 4294901760
    %5017 = vmatpush1.msra.mxu0 %v5016
    %v5018 = vand.u32 %v4152, 4294901760
    %5019 = vmatprep.mubr.f32.mxu0 %v5018
    %v5020 = vand.u32 %v4151, 4294901760
    %5021 = vmatmul.mubr.f32.gmra.mrb[0].mxu0 %v5020
    %v5022 = vpop.f32.mrb[0].mxu0
    %v5023 = vadd.f32 %v4855, %v5022
    %v5024 = vpop.f32.mrb[0].mxu0
    %5025 = vdwg.mxu0
    %5026 = vmatprep.subr.mxu0 0.0
    %v5027 = vand.u32 %v4158, 4294901760
    %5028 = vmatpush1.msra.mxu0 %v5027
    %5029 = vmatprep.subr.mxu0 0.0
    %v5030 = vand.u32 %v4159, 4294901760
    %5031 = vmatpush1.msra.mxu0 %v5030
    %5032 = vmatprep.subr.mxu0 0.0
    %v5033 = vand.u32 %v4160, 4294901760
    %5034 = vmatpush1.msra.mxu0 %v5033
    %5035 = vmatprep.subr.mxu0 0.0
    %v5036 = vand.u32 %v4161, 4294901760
    %5037 = vmatpush1.msra.mxu0 %v5036
    %5038 = vmatprep.subr.mxu0 0.0
    %v5039 = vand.u32 %v4162, 4294901760
    %5040 = vmatpush1.msra.mxu0 %v5039
    %5041 = vmatprep.subr.mxu0 0.0
    %v5042 = vand.u32 %v4163, 4294901760
    %5043 = vmatpush1.msra.mxu0 %v5042
    %5044 = vmatprep.subr.mxu0 0.0
    %v5045 = vand.u32 %v4164, 4294901760
    %5046 = vmatpush1.msra.mxu0 %v5045
    %5047 = vmatprep.subr.mxu0 0.0
    %v5048 = vand.u32 %v4165, 4294901760
    %5049 = vmatpush1.msra.mxu0 %v5048
    %5050 = vmatprep.subr.mxu0 0.0
    %v5051 = vand.u32 %v4166, 4294901760
    %5052 = vmatpush1.msra.mxu0 %v5051
    %5053 = vmatprep.subr.mxu0 0.0
    %v5054 = vand.u32 %v4167, 4294901760
    %5055 = vmatpush1.msra.mxu0 %v5054
    %5056 = vmatprep.subr.mxu0 0.0
    %v5057 = vand.u32 %v4168, 4294901760
    %5058 = vmatpush1.msra.mxu0 %v5057
    %5059 = vmatprep.subr.mxu0 0.0
    %v5060 = vand.u32 %v4169, 4294901760
    %5061 = vmatpush1.msra.mxu0 %v5060
    %5062 = vmatprep.subr.mxu0 0.0
    %v5063 = vand.u32 %v4170, 4294901760
    %5064 = vmatpush1.msra.mxu0 %v5063
    %5065 = vmatprep.subr.mxu0 0.0
    %v5066 = vand.u32 %v4171, 4294901760
    %5067 = vmatpush1.msra.mxu0 %v5066
    %5068 = vmatprep.subr.mxu0 0.0
    %v5069 = vand.u32 %v4172, 4294901760
    %5070 = vmatpush1.msra.mxu0 %v5069
    %5071 = vmatprep.subr.mxu0 0.0
    %v5072 = vand.u32 %v4173, 4294901760
    %5073 = vmatpush1.msra.mxu0 %v5072
    %5074 = vmatprep.subr.mxu0 0.0
    %v5075 = vand.u32 %v4174, 4294901760
    %5076 = vmatpush1.msra.mxu0 %v5075
    %5077 = vmatprep.subr.mxu0 0.0
    %v5078 = vand.u32 %v4175, 4294901760
    %5079 = vmatpush1.msra.mxu0 %v5078
    %5080 = vmatprep.subr.mxu0 0.0
    %v5081 = vand.u32 %v4176, 4294901760
    %5082 = vmatpush1.msra.mxu0 %v5081
    %5083 = vmatprep.subr.mxu0 0.0
    %v5084 = vand.u32 %v4177, 4294901760
    %5085 = vmatpush1.msra.mxu0 %v5084
    %5086 = vmatprep.subr.mxu0 0.0
    %v5087 = vand.u32 %v4178, 4294901760
    %5088 = vmatpush1.msra.mxu0 %v5087
    %5089 = vmatprep.subr.mxu0 0.0
    %v5090 = vand.u32 %v4179, 4294901760
    %5091 = vmatpush1.msra.mxu0 %v5090
    %5092 = vmatprep.subr.mxu0 0.0
    %v5093 = vand.u32 %v4180, 4294901760
    %5094 = vmatpush1.msra.mxu0 %v5093
    %5095 = vmatprep.subr.mxu0 0.0
    %v5096 = vand.u32 %v4181, 4294901760
    %5097 = vmatpush1.msra.mxu0 %v5096
    %5098 = vmatprep.subr.mxu0 0.0
    %v5099 = vand.u32 %v4182, 4294901760
    %5100 = vmatpush1.msra.mxu0 %v5099
    %5101 = vmatprep.subr.mxu0 0.0
    %v5102 = vand.u32 %v4183, 4294901760
    %5103 = vmatpush1.msra.mxu0 %v5102
    %5104 = vmatprep.subr.mxu0 0.0
    %v5105 = vand.u32 %v4184, 4294901760
    %5106 = vmatpush1.msra.mxu0 %v5105
    %5107 = vmatprep.subr.mxu0 0.0
    %v5108 = vand.u32 %v4185, 4294901760
    %5109 = vmatpush1.msra.mxu0 %v5108
    %5110 = vmatprep.subr.mxu0 0.0
    %v5111 = vand.u32 %v4186, 4294901760
    %5112 = vmatpush1.msra.mxu0 %v5111
    %5113 = vmatprep.subr.mxu0 0.0
    %v5114 = vand.u32 %v4187, 4294901760
    %5115 = vmatpush1.msra.mxu0 %v5114
    %5116 = vmatprep.subr.mxu0 0.0
    %v5117 = vand.u32 %v4188, 4294901760
    %5118 = vmatpush1.msra.mxu0 %v5117
    %5119 = vmatprep.subr.mxu0 0.0
    %v5120 = vand.u32 %v4189, 4294901760
    %5121 = vmatpush1.msra.mxu0 %v5120
    %v5122 = vand.u32 %v4152, 4294901760
    %5123 = vmatprep.mubr.f32.mxu0 %v5122
    %v5124 = vand.u32 %v4151, 4294901760
    %5125 = vmatmul.mubr.f32.gmra.mrb[0].mxu0 %v5124
    %v5126 = vpop.f32.mrb[0].mxu0
    %v5127 = vadd.f32 %v5023, %v5126
    %v5128 = vpop.f32.mrb[0].mxu0
    %5129 = vdwg.mxu0
    %5130 = vmatprep.subr.mxu0 0.0
    %v5131 = vand.u32 %v4190, 4294901760
    %5132 = vmatpush1.msra.mxu0 %v5131
    %5133 = vmatprep.subr.mxu0 0.0
    %v5134 = vand.u32 %v4191, 4294901760
    %5135 = vmatpush1.msra.mxu0 %v5134
    %5136 = vmatprep.subr.mxu0 0.0
    %v5137 = vand.u32 %v4192, 4294901760
    %5138 = vmatpush1.msra.mxu0 %v5137
    %5139 = vmatprep.subr.mxu0 0.0
    %v5140 = vand.u32 %v4193, 4294901760
    %5141 = vmatpush1.msra.mxu0 %v5140
    %5142 = vmatprep.subr.mxu0 0.0
    %v5143 = vand.u32 %v4194, 4294901760
    %5144 = vmatpush1.msra.mxu0 %v5143
    %5145 = vmatprep.subr.mxu0 0.0
    %v5146 = vand.u32 %v4195, 4294901760
    %5147 = vmatpush1.msra.mxu0 %v5146
    %5148 = vmatprep.subr.mxu0 0.0
    %v5149 = vand.u32 %v4196, 4294901760
    %5150 = vmatpush1.msra.mxu0 %v5149
    %5151 = vmatprep.subr.mxu0 0.0
    %v5152 = vand.u32 %v4197, 4294901760
    %5153 = vmatpush1.msra.mxu0 %v5152
    %5154 = vmatprep.subr.mxu0 0.0
    %v5155 = vand.u32 %v4198, 4294901760
    %5156 = vmatpush1.msra.mxu0 %v5155
    %5157 = vmatprep.subr.mxu0 0.0
    %v5158 = vand.u32 %v4199, 4294901760
    %5159 = vmatpush1.msra.mxu0 %v5158
    %5160 = vmatprep.subr.mxu0 0.0
    %v5161 = vand.u32 %v4200, 4294901760
    %5162 = vmatpush1.msra.mxu0 %v5161
    %5163 = vmatprep.subr.mxu0 0.0
    %v5164 = vand.u32 %v4201, 4294901760
    %5165 = vmatpush1.msra.mxu0 %v5164
    %5166 = vmatprep.subr.mxu0 0.0
    %v5167 = vand.u32 %v4202, 4294901760
    %5168 = vmatpush1.msra.mxu0 %v5167
    %5169 = vmatprep.subr.mxu0 0.0
    %v5170 = vand.u32 %v4203, 4294901760
    %5171 = vmatpush1.msra.mxu0 %v5170
    %5172 = vmatprep.subr.mxu0 0.0
    %v5173 = vand.u32 %v4204, 4294901760
    %5174 = vmatpush1.msra.mxu0 %v5173
    %5175 = vmatprep.subr.mxu0 0.0
    %v5176 = vand.u32 %v4205, 4294901760
    %5177 = vmatpush1.msra.mxu0 %v5176
    %5178 = vmatprep.subr.mxu0 0.0
    %v5179 = vand.u32 %v4206, 4294901760
    %5180 = vmatpush1.msra.mxu0 %v5179
    %5181 = vmatprep.subr.mxu0 0.0
    %v5182 = vand.u32 %v4207, 4294901760
    %5183 = vmatpush1.msra.mxu0 %v5182
    %5184 = vmatprep.subr.mxu0 0.0
    %v5185 = vand.u32 %v4208, 4294901760
    %5186 = vmatpush1.msra.mxu0 %v5185
    %5187 = vmatprep.subr.mxu0 0.0
    %v5188 = vand.u32 %v4209, 4294901760
    %5189 = vmatpush1.msra.mxu0 %v5188
    %5190 = vmatprep.subr.mxu0 0.0
    %v5191 = vand.u32 %v4210, 4294901760
    %5192 = vmatpush1.msra.mxu0 %v5191
    %5193 = vmatprep.subr.mxu0 0.0
    %v5194 = vand.u32 %v4211, 4294901760
    %5195 = vmatpush1.msra.mxu0 %v5194
    %5196 = vmatprep.subr.mxu0 0.0
    %v5197 = vand.u32 %v4212, 4294901760
    %5198 = vmatpush1.msra.mxu0 %v5197
    %5199 = vmatprep.subr.mxu0 0.0
    %v5200 = vand.u32 %v4213, 4294901760
    %5201 = vmatpush1.msra.mxu0 %v5200
    %5202 = vmatprep.subr.mxu0 0.0
    %v5203 = vand.u32 %v4214, 4294901760
    %5204 = vmatpush1.msra.mxu0 %v5203
    %5205 = vmatprep.subr.mxu0 0.0
    %v5206 = vand.u32 %v4215, 4294901760
    %5207 = vmatpush1.msra.mxu0 %v5206
    %5208 = vmatprep.subr.mxu0 0.0
    %v5209 = vand.u32 %v4216, 4294901760
    %5210 = vmatpush1.msra.mxu0 %v5209
    %5211 = vmatprep.subr.mxu0 0.0
    %v5212 = vand.u32 %v4217, 4294901760
    %5213 = vmatpush1.msra.mxu0 %v5212
    %5214 = vmatprep.subr.mxu0 0.0
    %v5215 = vand.u32 %v4218, 4294901760
    %5216 = vmatpush1.msra.mxu0 %v5215
    %5217 = vmatprep.subr.mxu0 0.0
    %v5218 = vand.u32 %v4219, 4294901760
    %5219 = vmatpush1.msra.mxu0 %v5218
    %5220 = vmatprep.subr.mxu0 0.0
    %v5221 = vand.u32 %v4220, 4294901760
    %5222 = vmatpush1.msra.mxu0 %v5221
    %5223 = vmatprep.subr.mxu0 0.0
    %v5224 = vand.u32 %v4221, 4294901760
    %5225 = vmatpush1.msra.mxu0 %v5224
    %v5226 = vand.u32 %v4154, 4294901760
    %v5227 = vsub.f32 %v4154, %v5226
    %v5228 = vand.u32 %v5227, 4294901760
    %v5229 = vsub.f32 %v5227, %v5228
    %v5230 = vand.u32 %v5229, 4294901760
    %5231 = vmatprep.mubr.f32.mxu0 %v5230
    %v5232 = vand.u32 %v4153, 4294901760
    %v5233 = vsub.f32 %v4153, %v5232
    %v5234 = vand.u32 %v5233, 4294901760
    %v5235 = vsub.f32 %v5233, %v5234
    %v5236 = vand.u32 %v5235, 4294901760
    %5237 = vmatmul.mubr.f32.gmra.mrb[0].mxu0 %v5236
    %v5238 = vpop.f32.mrb[0].mxu0
    %v5239 = vadd.f32 %v5127, %v5238
    %v5240 = vpop.f32.mrb[0].mxu0
    %5241 = vdwg.mxu0
    %5242 = vmatprep.subr.mxu0 0.0
    %v5243 = vand.u32 %v4190, 4294901760
    %v5244 = vsub.f32 %v4190, %v5243
    %v5245 = vand.u32 %v5244, 4294901760
    %v5246 = vsub.f32 %v5244, %v5245
    %v5247 = vand.u32 %v5246, 4294901760
    %5248 = vmatpush1.msra.mxu0 %v5247
    %5249 = vmatprep.subr.mxu0 0.0
    %v5250 = vand.u32 %v4191, 4294901760
    %v5251 = vsub.f32 %v4191, %v5250
    %v5252 = vand.u32 %v5251, 4294901760
    %v5253 = vsub.f32 %v5251, %v5252
    %v5254 = vand.u32 %v5253, 4294901760
    %5255 = vmatpush1.msra.mxu0 %v5254
    %5256 = vmatprep.subr.mxu0 0.0
    %v5257 = vand.u32 %v4192, 4294901760
    %v5258 = vsub.f32 %v4192, %v5257
    %v5259 = vand.u32 %v5258, 4294901760
    %v5260 = vsub.f32 %v5258, %v5259
    %v5261 = vand.u32 %v5260, 4294901760
    %5262 = vmatpush1.msra.mxu0 %v5261
    %5263 = vmatprep.subr.mxu0 0.0
    %v5264 = vand.u32 %v4193, 4294901760
    %v5265 = vsub.f32 %v4193, %v5264
    %v5266 = vand.u32 %v5265, 4294901760
    %v5267 = vsub.f32 %v5265, %v5266
    %v5268 = vand.u32 %v5267, 4294901760
    %5269 = vmatpush1.msra.mxu0 %v5268
    %5270 = vmatprep.subr.mxu0 0.0
    %v5271 = vand.u32 %v4194, 4294901760
    %v5272 = vsub.f32 %v4194, %v5271
    %v5273 = vand.u32 %v5272, 4294901760
    %v5274 = vsub.f32 %v5272, %v5273
    %v5275 = vand.u32 %v5274, 4294901760
    %5276 = vmatpush1.msra.mxu0 %v5275
    %5277 = vmatprep.subr.mxu0 0.0
    %v5278 = vand.u32 %v4195, 4294901760
    %v5279 = vsub.f32 %v4195, %v5278
    %v5280 = vand.u32 %v5279, 4294901760
    %v5281 = vsub.f32 %v5279, %v5280
    %v5282 = vand.u32 %v5281, 4294901760
    %5283 = vmatpush1.msra.mxu0 %v5282
    %5284 = vmatprep.subr.mxu0 0.0
    %v5285 = vand.u32 %v4196, 4294901760
    %v5286 = vsub.f32 %v4196, %v5285
    %v5287 = vand.u32 %v5286, 4294901760
    %v5288 = vsub.f32 %v5286, %v5287
    %v5289 = vand.u32 %v5288, 4294901760
    %5290 = vmatpush1.msra.mxu0 %v5289
    %5291 = vmatprep.subr.mxu0 0.0
    %v5292 = vand.u32 %v4197, 4294901760
    %v5293 = vsub.f32 %v4197, %v5292
    %v5294 = vand.u32 %v5293, 4294901760
    %v5295 = vsub.f32 %v5293, %v5294
    %v5296 = vand.u32 %v5295, 4294901760
    %5297 = vmatpush1.msra.mxu0 %v5296
    %5298 = vmatprep.subr.mxu0 0.0
    %v5299 = vand.u32 %v4198, 4294901760
    %v5300 = vsub.f32 %v4198, %v5299
    %v5301 = vand.u32 %v5300, 4294901760
    %v5302 = vsub.f32 %v5300, %v5301
    %v5303 = vand.u32 %v5302, 4294901760
    %5304 = vmatpush1.msra.mxu0 %v5303
    %5305 = vmatprep.subr.mxu0 0.0
    %v5306 = vand.u32 %v4199, 4294901760
    %v5307 = vsub.f32 %v4199, %v5306
    %v5308 = vand.u32 %v5307, 4294901760
    %v5309 = vsub.f32 %v5307, %v5308
    %v5310 = vand.u32 %v5309, 4294901760
    %5311 = vmatpush1.msra.mxu0 %v5310
    %5312 = vmatprep.subr.mxu0 0.0
    %v5313 = vand.u32 %v4200, 4294901760
    %v5314 = vsub.f32 %v4200, %v5313
    %v5315 = vand.u32 %v5314, 4294901760
    %v5316 = vsub.f32 %v5314, %v5315
    %v5317 = vand.u32 %v5316, 4294901760
    %5318 = vmatpush1.msra.mxu0 %v5317
    %5319 = vmatprep.subr.mxu0 0.0
    %v5320 = vand.u32 %v4201, 4294901760
    %v5321 = vsub.f32 %v4201, %v5320
    %v5322 = vand.u32 %v5321, 4294901760
    %v5323 = vsub.f32 %v5321, %v5322
    %v5324 = vand.u32 %v5323, 4294901760
    %5325 = vmatpush1.msra.mxu0 %v5324
    %5326 = vmatprep.subr.mxu0 0.0
    %v5327 = vand.u32 %v4202, 4294901760
    %v5328 = vsub.f32 %v4202, %v5327
    %v5329 = vand.u32 %v5328, 4294901760
    %v5330 = vsub.f32 %v5328, %v5329
    %v5331 = vand.u32 %v5330, 4294901760
    %5332 = vmatpush1.msra.mxu0 %v5331
    %5333 = vmatprep.subr.mxu0 0.0
    %v5334 = vand.u32 %v4203, 4294901760
    %v5335 = vsub.f32 %v4203, %v5334
    %v5336 = vand.u32 %v5335, 4294901760
    %v5337 = vsub.f32 %v5335, %v5336
    %v5338 = vand.u32 %v5337, 4294901760
    %5339 = vmatpush1.msra.mxu0 %v5338
    %5340 = vmatprep.subr.mxu0 0.0
    %v5341 = vand.u32 %v4204, 4294901760
    %v5342 = vsub.f32 %v4204, %v5341
    %v5343 = vand.u32 %v5342, 4294901760
    %v5344 = vsub.f32 %v5342, %v5343
    %v5345 = vand.u32 %v5344, 4294901760
    %5346 = vmatpush1.msra.mxu0 %v5345
    %5347 = vmatprep.subr.mxu0 0.0
    %v5348 = vand.u32 %v4205, 4294901760
    %v5349 = vsub.f32 %v4205, %v5348
    %v5350 = vand.u32 %v5349, 4294901760
    %v5351 = vsub.f32 %v5349, %v5350
    %v5352 = vand.u32 %v5351, 4294901760
    %5353 = vmatpush1.msra.mxu0 %v5352
    %5354 = vmatprep.subr.mxu0 0.0
    %v5355 = vand.u32 %v4206, 4294901760
    %v5356 = vsub.f32 %v4206, %v5355
    %v5357 = vand.u32 %v5356, 4294901760
    %v5358 = vsub.f32 %v5356, %v5357
    %v5359 = vand.u32 %v5358, 4294901760
    %5360 = vmatpush1.msra.mxu0 %v5359
    %5361 = vmatprep.subr.mxu0 0.0
    %v5362 = vand.u32 %v4207, 4294901760
    %v5363 = vsub.f32 %v4207, %v5362
    %v5364 = vand.u32 %v5363, 4294901760
    %v5365 = vsub.f32 %v5363, %v5364
    %v5366 = vand.u32 %v5365, 4294901760
    %5367 = vmatpush1.msra.mxu0 %v5366
    %5368 = vmatprep.subr.mxu0 0.0
    %v5369 = vand.u32 %v4208, 4294901760
    %v5370 = vsub.f32 %v4208, %v5369
    %v5371 = vand.u32 %v5370, 4294901760
    %v5372 = vsub.f32 %v5370, %v5371
    %v5373 = vand.u32 %v5372, 4294901760
    %5374 = vmatpush1.msra.mxu0 %v5373
    %5375 = vmatprep.subr.mxu0 0.0
    %v5376 = vand.u32 %v4209, 4294901760
    %v5377 = vsub.f32 %v4209, %v5376
    %v5378 = vand.u32 %v5377, 4294901760
    %v5379 = vsub.f32 %v5377, %v5378
    %v5380 = vand.u32 %v5379, 4294901760
    %5381 = vmatpush1.msra.mxu0 %v5380
    %5382 = vmatprep.subr.mxu0 0.0
    %v5383 = vand.u32 %v4210, 4294901760
    %v5384 = vsub.f32 %v4210, %v5383
    %v5385 = vand.u32 %v5384, 4294901760
    %v5386 = vsub.f32 %v5384, %v5385
    %v5387 = vand.u32 %v5386, 4294901760
    %5388 = vmatpush1.msra.mxu0 %v5387
    %5389 = vmatprep.subr.mxu0 0.0
    %v5390 = vand.u32 %v4211, 4294901760
    %v5391 = vsub.f32 %v4211, %v5390
    %v5392 = vand.u32 %v5391, 4294901760
    %v5393 = vsub.f32 %v5391, %v5392
    %v5394 = vand.u32 %v5393, 4294901760
    %5395 = vmatpush1.msra.mxu0 %v5394
    %5396 = vmatprep.subr.mxu0 0.0
    %v5397 = vand.u32 %v4212, 4294901760
    %v5398 = vsub.f32 %v4212, %v5397
    %v5399 = vand.u32 %v5398, 4294901760
    %v5400 = vsub.f32 %v5398, %v5399
    %v5401 = vand.u32 %v5400, 4294901760
    %5402 = vmatpush1.msra.mxu0 %v5401
    %5403 = vmatprep.subr.mxu0 0.0
    %v5404 = vand.u32 %v4213, 4294901760
    %v5405 = vsub.f32 %v4213, %v5404
    %v5406 = vand.u32 %v5405, 4294901760
    %v5407 = vsub.f32 %v5405, %v5406
    %v5408 = vand.u32 %v5407, 4294901760
    %5409 = vmatpush1.msra.mxu0 %v5408
    %5410 = vmatprep.subr.mxu0 0.0
    %v5411 = vand.u32 %v4214, 4294901760
    %v5412 = vsub.f32 %v4214, %v5411
    %v5413 = vand.u32 %v5412, 4294901760
    %v5414 = vsub.f32 %v5412, %v5413
    %v5415 = vand.u32 %v5414, 4294901760
    %5416 = vmatpush1.msra.mxu0 %v5415
    %5417 = vmatprep.subr.mxu0 0.0
    %v5418 = vand.u32 %v4215, 4294901760
    %v5419 = vsub.f32 %v4215, %v5418
    %v5420 = vand.u32 %v5419, 4294901760
    %v5421 = vsub.f32 %v5419, %v5420
    %v5422 = vand.u32 %v5421, 4294901760
    %5423 = vmatpush1.msra.mxu0 %v5422
    %5424 = vmatprep.subr.mxu0 0.0
    %v5425 = vand.u32 %v4216, 4294901760
    %v5426 = vsub.f32 %v4216, %v5425
    %v5427 = vand.u32 %v5426, 4294901760
    %v5428 = vsub.f32 %v5426, %v5427
    %v5429 = vand.u32 %v5428, 4294901760
    %5430 = vmatpush1.msra.mxu0 %v5429
    %5431 = vmatprep.subr.mxu0 0.0
    %v5432 = vand.u32 %v4217, 4294901760
    %v5433 = vsub.f32 %v4217, %v5432
    %v5434 = vand.u32 %v5433, 4294901760
    %v5435 = vsub.f32 %v5433, %v5434
    %v5436 = vand.u32 %v5435, 4294901760
    %5437 = vmatpush1.msra.mxu0 %v5436
    %5438 = vmatprep.subr.mxu0 0.0
    %v5439 = vand.u32 %v4218, 4294901760
    %v5440 = vsub.f32 %v4218, %v5439
    %v5441 = vand.u32 %v5440, 4294901760
    %v5442 = vsub.f32 %v5440, %v5441
    %v5443 = vand.u32 %v5442, 4294901760
    %5444 = vmatpush1.msra.mxu0 %v5443
    %5445 = vmatprep.subr.mxu0 0.0
    %v5446 = vand.u32 %v4219, 4294901760
    %v5447 = vsub.f32 %v4219, %v5446
    %v5448 = vand.u32 %v5447, 4294901760
    %v5449 = vsub.f32 %v5447, %v5448
    %v5450 = vand.u32 %v5449, 4294901760
    %5451 = vmatpush1.msra.mxu0 %v5450
    %5452 = vmatprep.subr.mxu0 0.0
    %v5453 = vand.u32 %v4220, 4294901760
    %v5454 = vsub.f32 %v4220, %v5453
    %v5455 = vand.u32 %v5454, 4294901760
    %v5456 = vsub.f32 %v5454, %v5455
    %v5457 = vand.u32 %v5456, 4294901760
    %5458 = vmatpush1.msra.mxu0 %v5457
    %5459 = vmatprep.subr.mxu0 0.0
    %v5460 = vand.u32 %v4221, 4294901760
    %v5461 = vsub.f32 %v4221, %v5460
    %v5462 = vand.u32 %v5461, 4294901760
    %v5463 = vsub.f32 %v5461, %v5462
    %v5464 = vand.u32 %v5463, 4294901760
    %5465 = vmatpush1.msra.mxu0 %v5464
    %v5466 = vand.u32 %v4154, 4294901760
    %5467 = vmatprep.mubr.f32.mxu0 %v5466
    %v5468 = vand.u32 %v4153, 4294901760
    %5469 = vmatmul.mubr.f32.gmra.mrb[0].mxu0 %v5468
    %v5470 = vpop.f32.mrb[0].mxu0
    %v5471 = vadd.f32 %v5239, %v5470
    %v5472 = vpop.f32.mrb[0].mxu0
    %5473 = vdwg.mxu0
    %5474 = vmatprep.subr.mxu0 0.0
    %v5475 = vand.u32 %v4190, 4294901760
    %v5476 = vsub.f32 %v4190, %v5475
    %5477 = vmatpush1.msra.mxu0 %v5476
    %5478 = vmatprep.subr.mxu0 0.0
    %v5479 = vand.u32 %v4191, 4294901760
    %v5480 = vsub.f32 %v4191, %v5479
    %5481 = vmatpush1.msra.mxu0 %v5480
    %5482 = vmatprep.subr.mxu0 0.0
    %v5483 = vand.u32 %v4192, 4294901760
    %v5484 = vsub.f32 %v4192, %v5483
    %5485 = vmatpush1.msra.mxu0 %v5484
    %5486 = vmatprep.subr.mxu0 0.0
    %v5487 = vand.u32 %v4193, 4294901760
    %v5488 = vsub.f32 %v4193, %v5487
    %5489 = vmatpush1.msra.mxu0 %v5488
    %5490 = vmatprep.subr.mxu0 0.0
    %v5491 = vand.u32 %v4194, 4294901760
    %v5492 = vsub.f32 %v4194, %v5491
    %5493 = vmatpush1.msra.mxu0 %v5492
    %5494 = vmatprep.subr.mxu0 0.0
    %v5495 = vand.u32 %v4195, 4294901760
    %v5496 = vsub.f32 %v4195, %v5495
    %5497 = vmatpush1.msra.mxu0 %v5496
    %5498 = vmatprep.subr.mxu0 0.0
    %v5499 = vand.u32 %v4196, 4294901760
    %v5500 = vsub.f32 %v4196, %v5499
    %5501 = vmatpush1.msra.mxu0 %v5500
    %5502 = vmatprep.subr.mxu0 0.0
    %v5503 = vand.u32 %v4197, 4294901760
    %v5504 = vsub.f32 %v4197, %v5503
    %5505 = vmatpush1.msra.mxu0 %v5504
    %5506 = vmatprep.subr.mxu0 0.0
    %v5507 = vand.u32 %v4198, 4294901760
    %v5508 = vsub.f32 %v4198, %v5507
    %5509 = vmatpush1.msra.mxu0 %v5508
    %5510 = vmatprep.subr.mxu0 0.0
    %v5511 = vand.u32 %v4199, 4294901760
    %v5512 = vsub.f32 %v4199, %v5511
    %5513 = vmatpush1.msra.mxu0 %v5512
    %5514 = vmatprep.subr.mxu0 0.0
    %v5515 = vand.u32 %v4200, 4294901760
    %v5516 = vsub.f32 %v4200, %v5515
    %5517 = vmatpush1.msra.mxu0 %v5516
    %5518 = vmatprep.subr.mxu0 0.0
    %v5519 = vand.u32 %v4201, 4294901760
    %v5520 = vsub.f32 %v4201, %v5519
    %5521 = vmatpush1.msra.mxu0 %v5520
    %5522 = vmatprep.subr.mxu0 0.0
    %v5523 = vand.u32 %v4202, 4294901760
    %v5524 = vsub.f32 %v4202, %v5523
    %5525 = vmatpush1.msra.mxu0 %v5524
    %5526 = vmatprep.subr.mxu0 0.0
    %v5527 = vand.u32 %v4203, 4294901760
    %v5528 = vsub.f32 %v4203, %v5527
    %5529 = vmatpush1.msra.mxu0 %v5528
    %5530 = vmatprep.subr.mxu0 0.0
    %v5531 = vand.u32 %v4204, 4294901760
    %v5532 = vsub.f32 %v4204, %v5531
    %5533 = vmatpush1.msra.mxu0 %v5532
    %5534 = vmatprep.subr.mxu0 0.0
    %v5535 = vand.u32 %v4205, 4294901760
    %v5536 = vsub.f32 %v4205, %v5535
    %5537 = vmatpush1.msra.mxu0 %v5536
    %5538 = vmatprep.subr.mxu0 0.0
    %v5539 = vand.u32 %v4206, 4294901760
    %v5540 = vsub.f32 %v4206, %v5539
    %5541 = vmatpush1.msra.mxu0 %v5540
    %5542 = vmatprep.subr.mxu0 0.0
    %v5543 = vand.u32 %v4207, 4294901760
    %v5544 = vsub.f32 %v4207, %v5543
    %5545 = vmatpush1.msra.mxu0 %v5544
    %5546 = vmatprep.subr.mxu0 0.0
    %v5547 = vand.u32 %v4208, 4294901760
    %v5548 = vsub.f32 %v4208, %v5547
    %5549 = vmatpush1.msra.mxu0 %v5548
    %5550 = vmatprep.subr.mxu0 0.0
    %v5551 = vand.u32 %v4209, 4294901760
    %v5552 = vsub.f32 %v4209, %v5551
    %5553 = vmatpush1.msra.mxu0 %v5552
    %5554 = vmatprep.subr.mxu0 0.0
    %v5555 = vand.u32 %v4210, 4294901760
    %v5556 = vsub.f32 %v4210, %v5555
    %5557 = vmatpush1.msra.mxu0 %v5556
    %5558 = vmatprep.subr.mxu0 0.0
    %v5559 = vand.u32 %v4211, 4294901760
    %v5560 = vsub.f32 %v4211, %v5559
    %5561 = vmatpush1.msra.mxu0 %v5560
    %5562 = vmatprep.subr.mxu0 0.0
    %v5563 = vand.u32 %v4212, 4294901760
    %v5564 = vsub.f32 %v4212, %v5563
    %5565 = vmatpush1.msra.mxu0 %v5564
    %5566 = vmatprep.subr.mxu0 0.0
    %v5567 = vand.u32 %v4213, 4294901760
    %v5568 = vsub.f32 %v4213, %v5567
    %5569 = vmatpush1.msra.mxu0 %v5568
    %5570 = vmatprep.subr.mxu0 0.0
    %v5571 = vand.u32 %v4214, 4294901760
    %v5572 = vsub.f32 %v4214, %v5571
    %5573 = vmatpush1.msra.mxu0 %v5572
    %5574 = vmatprep.subr.mxu0 0.0
    %v5575 = vand.u32 %v4215, 4294901760
    %v5576 = vsub.f32 %v4215, %v5575
    %5577 = vmatpush1.msra.mxu0 %v5576
    %5578 = vmatprep.subr.mxu0 0.0
    %v5579 = vand.u32 %v4216, 4294901760
    %v5580 = vsub.f32 %v4216, %v5579
    %5581 = vmatpush1.msra.mxu0 %v5580
    %5582 = vmatprep.subr.mxu0 0.0
    %v5583 = vand.u32 %v4217, 4294901760
    %v5584 = vsub.f32 %v4217, %v5583
    %5585 = vmatpush1.msra.mxu0 %v5584
    %5586 = vmatprep.subr.mxu0 0.0
    %v5587 = vand.u32 %v4218, 4294901760
    %v5588 = vsub.f32 %v4218, %v5587
    %5589 = vmatpush1.msra.mxu0 %v5588
    %5590 = vmatprep.subr.mxu0 0.0
    %v5591 = vand.u32 %v4219, 4294901760
    %v5592 = vsub.f32 %v4219, %v5591
    %5593 = vmatpush1.msra.mxu0 %v5592
    %5594 = vmatprep.subr.mxu0 0.0
    %v5595 = vand.u32 %v4220, 4294901760
    %v5596 = vsub.f32 %v4220, %v5595
    %5597 = vmatpush1.msra.mxu0 %v5596
    %5598 = vmatprep.subr.mxu0 0.0
    %v5599 = vand.u32 %v4221, 4294901760
    %v5600 = vsub.f32 %v4221, %v5599
    %5601 = vmatpush1.msra.mxu0 %v5600
    %v5602 = vand.u32 %v4154, 4294901760
    %v5603 = vsub.f32 %v4154, %v5602
    %5604 = vmatprep.mubr.f32.mxu0 %v5603
    %v5605 = vand.u32 %v4153, 4294901760
    %v5606 = vsub.f32 %v4153, %v5605
    %5607 = vmatmul.mubr.f32.gmra.mrb[0].mxu0 %v5606
    %v5608 = vpop.f32.mrb[0].mxu0
    %v5609 = vadd.f32 %v5471, %v5608
    %v5610 = vpop.f32.mrb[0].mxu0
    %5611 = vdwg.mxu0
    %5612 = vmatprep.subr.mxu0 0.0
    %v5613 = vand.u32 %v4190, 4294901760
    %5614 = vmatpush1.msra.mxu0 %v5613
    %5615 = vmatprep.subr.mxu0 0.0
    %v5616 = vand.u32 %v4191, 4294901760
    %5617 = vmatpush1.msra.mxu0 %v5616
    %5618 = vmatprep.subr.mxu0 0.0
    %v5619 = vand.u32 %v4192, 4294901760
    %5620 = vmatpush1.msra.mxu0 %v5619
    %5621 = vmatprep.subr.mxu0 0.0
    %v5622 = vand.u32 %v4193, 4294901760
    %5623 = vmatpush1.msra.mxu0 %v5622
    %5624 = vmatprep.subr.mxu0 0.0
    %v5625 = vand.u32 %v4194, 4294901760
    %5626 = vmatpush1.msra.mxu0 %v5625
    %5627 = vmatprep.subr.mxu0 0.0
    %v5628 = vand.u32 %v4195, 4294901760
    %5629 = vmatpush1.msra.mxu0 %v5628
    %5630 = vmatprep.subr.mxu0 0.0
    %v5631 = vand.u32 %v4196, 4294901760
    %5632 = vmatpush1.msra.mxu0 %v5631
    %5633 = vmatprep.subr.mxu0 0.0
    %v5634 = vand.u32 %v4197, 4294901760
    %5635 = vmatpush1.msra.mxu0 %v5634
    %5636 = vmatprep.subr.mxu0 0.0
    %v5637 = vand.u32 %v4198, 4294901760
    %5638 = vmatpush1.msra.mxu0 %v5637
    %5639 = vmatprep.subr.mxu0 0.0
    %v5640 = vand.u32 %v4199, 4294901760
    %5641 = vmatpush1.msra.mxu0 %v5640
    %5642 = vmatprep.subr.mxu0 0.0
    %v5643 = vand.u32 %v4200, 4294901760
    %5644 = vmatpush1.msra.mxu0 %v5643
    %5645 = vmatprep.subr.mxu0 0.0
    %v5646 = vand.u32 %v4201, 4294901760
    %5647 = vmatpush1.msra.mxu0 %v5646
    %5648 = vmatprep.subr.mxu0 0.0
    %v5649 = vand.u32 %v4202, 4294901760
    %5650 = vmatpush1.msra.mxu0 %v5649
    %5651 = vmatprep.subr.mxu0 0.0
    %v5652 = vand.u32 %v4203, 4294901760
    %5653 = vmatpush1.msra.mxu0 %v5652
    %5654 = vmatprep.subr.mxu0 0.0
    %v5655 = vand.u32 %v4204, 4294901760
    %5656 = vmatpush1.msra.mxu0 %v5655
    %5657 = vmatprep.subr.mxu0 0.0
    %v5658 = vand.u32 %v4205, 4294901760
    %5659 = vmatpush1.msra.mxu0 %v5658
    %5660 = vmatprep.subr.mxu0 0.0
    %v5661 = vand.u32 %v4206, 4294901760
    %5662 = vmatpush1.msra.mxu0 %v5661
    %5663 = vmatprep.subr.mxu0 0.0
    %v5664 = vand.u32 %v4207, 4294901760
    %5665 = vmatpush1.msra.mxu0 %v5664
    %5666 = vmatprep.subr.mxu0 0.0
    %v5667 = vand.u32 %v4208, 4294901760
    %5668 = vmatpush1.msra.mxu0 %v5667
    %5669 = vmatprep.subr.mxu0 0.0
    %v5670 = vand.u32 %v4209, 4294901760
    %5671 = vmatpush1.msra.mxu0 %v5670
    %5672 = vmatprep.subr.mxu0 0.0
    %v5673 = vand.u32 %v4210, 4294901760
    %5674 = vmatpush1.msra.mxu0 %v5673
    %5675 = vmatprep.subr.mxu0 0.0
    %v5676 = vand.u32 %v4211, 4294901760
    %5677 = vmatpush1.msra.mxu0 %v5676
    %5678 = vmatprep.subr.mxu0 0.0
    %v5679 = vand.u32 %v4212, 4294901760
    %5680 = vmatpush1.msra.mxu0 %v5679
    %5681 = vmatprep.subr.mxu0 0.0
    %v5682 = vand.u32 %v4213, 4294901760
    %5683 = vmatpush1.msra.mxu0 %v5682
    %5684 = vmatprep.subr.mxu0 0.0
    %v5685 = vand.u32 %v4214, 4294901760
    %5686 = vmatpush1.msra.mxu0 %v5685
    %5687 = vmatprep.subr.mxu0 0.0
    %v5688 = vand.u32 %v4215, 4294901760
    %5689 = vmatpush1.msra.mxu0 %v5688
    %5690 = vmatprep.subr.mxu0 0.0
    %v5691 = vand.u32 %v4216, 4294901760
    %5692 = vmatpush1.msra.mxu0 %v5691
    %5693 = vmatprep.subr.mxu0 0.0
    %v5694 = vand.u32 %v4217, 4294901760
    %5695 = vmatpush1.msra.mxu0 %v5694
    %5696 = vmatprep.subr.mxu0 0.0
    %v5697 = vand.u32 %v4218, 4294901760
    %5698 = vmatpush1.msra.mxu0 %v5697
    %5699 = vmatprep.subr.mxu0 0.0
    %v5700 = vand.u32 %v4219, 4294901760
    %5701 = vmatpush1.msra.mxu0 %v5700
    %5702 = vmatprep.subr.mxu0 0.0
    %v5703 = vand.u32 %v4220, 4294901760
    %5704 = vmatpush1.msra.mxu0 %v5703
    %5705 = vmatprep.subr.mxu0 0.0
    %v5706 = vand.u32 %v4221, 4294901760
    %5707 = vmatpush1.msra.mxu0 %v5706
    %v5708 = vand.u32 %v4154, 4294901760
    %v5709 = vsub.f32 %v4154, %v5708
    %v5710 = vand.u32 %v5709, 4294901760
    %5711 = vmatprep.mubr.f32.mxu0 %v5710
    %v5712 = vand.u32 %v4153, 4294901760
    %v5713 = vsub.f32 %v4153, %v5712
    %v5714 = vand.u32 %v5713, 4294901760
    %5715 = vmatmul.mubr.f32.gmra.mrb[0].mxu0 %v5714
    %v5716 = vpop.f32.mrb[0].mxu0
    %v5717 = vadd.f32 %v5609, %v5716
    %v5718 = vpop.f32.mrb[0].mxu0
    %5719 = vdwg.mxu0
    %5720 = vmatprep.subr.mxu0 0.0
    %v5721 = vand.u32 %v4190, 4294901760
    %v5722 = vsub.f32 %v4190, %v5721
    %v5723 = vand.u32 %v5722, 4294901760
    %5724 = vmatpush1.msra.mxu0 %v5723
    %5725 = vmatprep.subr.mxu0 0.0
    %v5726 = vand.u32 %v4191, 4294901760
    %v5727 = vsub.f32 %v4191, %v5726
    %v5728 = vand.u32 %v5727, 4294901760
    %5729 = vmatpush1.msra.mxu0 %v5728
    %5730 = vmatprep.subr.mxu0 0.0
    %v5731 = vand.u32 %v4192, 4294901760
    %v5732 = vsub.f32 %v4192, %v5731
    %v5733 = vand.u32 %v5732, 4294901760
    %5734 = vmatpush1.msra.mxu0 %v5733
    %5735 = vmatprep.subr.mxu0 0.0
    %v5736 = vand.u32 %v4193, 4294901760
    %v5737 = vsub.f32 %v4193, %v5736
    %v5738 = vand.u32 %v5737, 4294901760
    %5739 = vmatpush1.msra.mxu0 %v5738
    %5740 = vmatprep.subr.mxu0 0.0
    %v5741 = vand.u32 %v4194, 4294901760
    %v5742 = vsub.f32 %v4194, %v5741
    %v5743 = vand.u32 %v5742, 4294901760
    %5744 = vmatpush1.msra.mxu0 %v5743
    %5745 = vmatprep.subr.mxu0 0.0
    %v5746 = vand.u32 %v4195, 4294901760
    %v5747 = vsub.f32 %v4195, %v5746
    %v5748 = vand.u32 %v5747, 4294901760
    %5749 = vmatpush1.msra.mxu0 %v5748
    %5750 = vmatprep.subr.mxu0 0.0
    %v5751 = vand.u32 %v4196, 4294901760
    %v5752 = vsub.f32 %v4196, %v5751
    %v5753 = vand.u32 %v5752, 4294901760
    %5754 = vmatpush1.msra.mxu0 %v5753
    %5755 = vmatprep.subr.mxu0 0.0
    %v5756 = vand.u32 %v4197, 4294901760
    %v5757 = vsub.f32 %v4197, %v5756
    %v5758 = vand.u32 %v5757, 4294901760
    %5759 = vmatpush1.msra.mxu0 %v5758
    %5760 = vmatprep.subr.mxu0 0.0
    %v5761 = vand.u32 %v4198, 4294901760
    %v5762 = vsub.f32 %v4198, %v5761
    %v5763 = vand.u32 %v5762, 4294901760
    %5764 = vmatpush1.msra.mxu0 %v5763
    %5765 = vmatprep.subr.mxu0 0.0
    %v5766 = vand.u32 %v4199, 4294901760
    %v5767 = vsub.f32 %v4199, %v5766
    %v5768 = vand.u32 %v5767, 4294901760
    %5769 = vmatpush1.msra.mxu0 %v5768
    %5770 = vmatprep.subr.mxu0 0.0
    %v5771 = vand.u32 %v4200, 4294901760
    %v5772 = vsub.f32 %v4200, %v5771
    %v5773 = vand.u32 %v5772, 4294901760
    %5774 = vmatpush1.msra.mxu0 %v5773
    %5775 = vmatprep.subr.mxu0 0.0
    %v5776 = vand.u32 %v4201, 4294901760
    %v5777 = vsub.f32 %v4201, %v5776
    %v5778 = vand.u32 %v5777, 4294901760
    %5779 = vmatpush1.msra.mxu0 %v5778
    %5780 = vmatprep.subr.mxu0 0.0
    %v5781 = vand.u32 %v4202, 4294901760
    %v5782 = vsub.f32 %v4202, %v5781
    %v5783 = vand.u32 %v5782, 4294901760
    %5784 = vmatpush1.msra.mxu0 %v5783
    %5785 = vmatprep.subr.mxu0 0.0
    %v5786 = vand.u32 %v4203, 4294901760
    %v5787 = vsub.f32 %v4203, %v5786
    %v5788 = vand.u32 %v5787, 4294901760
    %5789 = vmatpush1.msra.mxu0 %v5788
    %5790 = vmatprep.subr.mxu0 0.0
    %v5791 = vand.u32 %v4204, 4294901760
    %v5792 = vsub.f32 %v4204, %v5791
    %v5793 = vand.u32 %v5792, 4294901760
    %5794 = vmatpush1.msra.mxu0 %v5793
    %5795 = vmatprep.subr.mxu0 0.0
    %v5796 = vand.u32 %v4205, 4294901760
    %v5797 = vsub.f32 %v4205, %v5796
    %v5798 = vand.u32 %v5797, 4294901760
    %5799 = vmatpush1.msra.mxu0 %v5798
    %5800 = vmatprep.subr.mxu0 0.0
    %v5801 = vand.u32 %v4206, 4294901760
    %v5802 = vsub.f32 %v4206, %v5801
    %v5803 = vand.u32 %v5802, 4294901760
    %5804 = vmatpush1.msra.mxu0 %v5803
    %5805 = vmatprep.subr.mxu0 0.0
    %v5806 = vand.u32 %v4207, 4294901760
    %v5807 = vsub.f32 %v4207, %v5806
    %v5808 = vand.u32 %v5807, 4294901760
    %5809 = vmatpush1.msra.mxu0 %v5808
    %5810 = vmatprep.subr.mxu0 0.0
    %v5811 = vand.u32 %v4208, 4294901760
    %v5812 = vsub.f32 %v4208, %v5811
    %v5813 = vand.u32 %v5812, 4294901760
    %5814 = vmatpush1.msra.mxu0 %v5813
    %5815 = vmatprep.subr.mxu0 0.0
    %v5816 = vand.u32 %v4209, 4294901760
    %v5817 = vsub.f32 %v4209, %v5816
    %v5818 = vand.u32 %v5817, 4294901760
    %5819 = vmatpush1.msra.mxu0 %v5818
    %5820 = vmatprep.subr.mxu0 0.0
    %v5821 = vand.u32 %v4210, 4294901760
    %v5822 = vsub.f32 %v4210, %v5821
    %v5823 = vand.u32 %v5822, 4294901760
    %5824 = vmatpush1.msra.mxu0 %v5823
    %5825 = vmatprep.subr.mxu0 0.0
    %v5826 = vand.u32 %v4211, 4294901760
    %v5827 = vsub.f32 %v4211, %v5826
    %v5828 = vand.u32 %v5827, 4294901760
    %5829 = vmatpush1.msra.mxu0 %v5828
    %5830 = vmatprep.subr.mxu0 0.0
    %v5831 = vand.u32 %v4212, 4294901760
    %v5832 = vsub.f32 %v4212, %v5831
    %v5833 = vand.u32 %v5832, 4294901760
    %5834 = vmatpush1.msra.mxu0 %v5833
    %5835 = vmatprep.subr.mxu0 0.0
    %v5836 = vand.u32 %v4213, 4294901760
    %v5837 = vsub.f32 %v4213, %v5836
    %v5838 = vand.u32 %v5837, 4294901760
    %5839 = vmatpush1.msra.mxu0 %v5838
    %5840 = vmatprep.subr.mxu0 0.0
    %v5841 = vand.u32 %v4214, 4294901760
    %v5842 = vsub.f32 %v4214, %v5841
    %v5843 = vand.u32 %v5842, 4294901760
    %5844 = vmatpush1.msra.mxu0 %v5843
    %5845 = vmatprep.subr.mxu0 0.0
    %v5846 = vand.u32 %v4215, 4294901760
    %v5847 = vsub.f32 %v4215, %v5846
    %v5848 = vand.u32 %v5847, 4294901760
    %5849 = vmatpush1.msra.mxu0 %v5848
    %5850 = vmatprep.subr.mxu0 0.0
    %v5851 = vand.u32 %v4216, 4294901760
    %v5852 = vsub.f32 %v4216, %v5851
    %v5853 = vand.u32 %v5852, 4294901760
    %5854 = vmatpush1.msra.mxu0 %v5853
    %5855 = vmatprep.subr.mxu0 0.0
    %v5856 = vand.u32 %v4217, 4294901760
    %v5857 = vsub.f32 %v4217, %v5856
    %v5858 = vand.u32 %v5857, 4294901760
    %5859 = vmatpush1.msra.mxu0 %v5858
    %5860 = vmatprep.subr.mxu0 0.0
    %v5861 = vand.u32 %v4218, 4294901760
    %v5862 = vsub.f32 %v4218, %v5861
    %v5863 = vand.u32 %v5862, 4294901760
    %5864 = vmatpush1.msra.mxu0 %v5863
    %5865 = vmatprep.subr.mxu0 0.0
    %v5866 = vand.u32 %v4219, 4294901760
    %v5867 = vsub.f32 %v4219, %v5866
    %v5868 = vand.u32 %v5867, 4294901760
    %5869 = vmatpush1.msra.mxu0 %v5868
    %5870 = vmatprep.subr.mxu0 0.0
    %v5871 = vand.u32 %v4220, 4294901760
    %v5872 = vsub.f32 %v4220, %v5871
    %v5873 = vand.u32 %v5872, 4294901760
    %5874 = vmatpush1.msra.mxu0 %v5873
    %5875 = vmatprep.subr.mxu0 0.0
    %v5876 = vand.u32 %v4221, 4294901760
    %v5877 = vsub.f32 %v4221, %v5876
    %v5878 = vand.u32 %v5877, 4294901760
    %5879 = vmatpush1.msra.mxu0 %v5878
    %v5880 = vand.u32 %v4154, 4294901760
    %5881 = vmatprep.mubr.f32.mxu0 %v5880
    %v5882 = vand.u32 %v4153, 4294901760
    %5883 = vmatmul.mubr.f32.gmra.mrb[0].mxu0 %v5882
    %v5884 = vpop.f32.mrb[0].mxu0
    %v5885 = vadd.f32 %v5717, %v5884
    %v5886 = vpop.f32.mrb[0].mxu0
    %5887 = vdwg.mxu0
    %5888 = vmatprep.subr.mxu0 0.0
    %v5889 = vand.u32 %v4190, 4294901760
    %5890 = vmatpush1.msra.mxu0 %v5889
    %5891 = vmatprep.subr.mxu0 0.0
    %v5892 = vand.u32 %v4191, 4294901760
    %5893 = vmatpush1.msra.mxu0 %v5892
    %5894 = vmatprep.subr.mxu0 0.0
    %v5895 = vand.u32 %v4192, 4294901760
    %5896 = vmatpush1.msra.mxu0 %v5895
    %5897 = vmatprep.subr.mxu0 0.0
    %v5898 = vand.u32 %v4193, 4294901760
    %5899 = vmatpush1.msra.mxu0 %v5898
    %5900 = vmatprep.subr.mxu0 0.0
    %v5901 = vand.u32 %v4194, 4294901760
    %5902 = vmatpush1.msra.mxu0 %v5901
    %5903 = vmatprep.subr.mxu0 0.0
    %v5904 = vand.u32 %v4195, 4294901760
    %5905 = vmatpush1.msra.mxu0 %v5904
    %5906 = vmatprep.subr.mxu0 0.0
    %v5907 = vand.u32 %v4196, 4294901760
    %5908 = vmatpush1.msra.mxu0 %v5907
    %5909 = vmatprep.subr.mxu0 0.0
    %v5910 = vand.u32 %v4197, 4294901760
    %5911 = vmatpush1.msra.mxu0 %v5910
    %5912 = vmatprep.subr.mxu0 0.0
    %v5913 = vand.u32 %v4198, 4294901760
    %5914 = vmatpush1.msra.mxu0 %v5913
    %5915 = vmatprep.subr.mxu0 0.0
    %v5916 = vand.u32 %v4199, 4294901760
    %5917 = vmatpush1.msra.mxu0 %v5916
    %5918 = vmatprep.subr.mxu0 0.0
    %v5919 = vand.u32 %v4200, 4294901760
    %5920 = vmatpush1.msra.mxu0 %v5919
    %5921 = vmatprep.subr.mxu0 0.0
    %v5922 = vand.u32 %v4201, 4294901760
    %5923 = vmatpush1.msra.mxu0 %v5922
    %5924 = vmatprep.subr.mxu0 0.0
    %v5925 = vand.u32 %v4202, 4294901760
    %5926 = vmatpush1.msra.mxu0 %v5925
    %5927 = vmatprep.subr.mxu0 0.0
    %v5928 = vand.u32 %v4203, 4294901760
    %5929 = vmatpush1.msra.mxu0 %v5928
    %5930 = vmatprep.subr.mxu0 0.0
    %v5931 = vand.u32 %v4204, 4294901760
    %5932 = vmatpush1.msra.mxu0 %v5931
    %5933 = vmatprep.subr.mxu0 0.0
    %v5934 = vand.u32 %v4205, 4294901760
    %5935 = vmatpush1.msra.mxu0 %v5934
    %5936 = vmatprep.subr.mxu0 0.0
    %v5937 = vand.u32 %v4206, 4294901760
    %5938 = vmatpush1.msra.mxu0 %v5937
    %5939 = vmatprep.subr.mxu0 0.0
    %v5940 = vand.u32 %v4207, 4294901760
    %5941 = vmatpush1.msra.mxu0 %v5940
    %5942 = vmatprep.subr.mxu0 0.0
    %v5943 = vand.u32 %v4208, 4294901760
    %5944 = vmatpush1.msra.mxu0 %v5943
    %5945 = vmatprep.subr.mxu0 0.0
    %v5946 = vand.u32 %v4209, 4294901760
    %5947 = vmatpush1.msra.mxu0 %v5946
    %5948 = vmatprep.subr.mxu0 0.0
    %v5949 = vand.u32 %v4210, 4294901760
    %5950 = vmatpush1.msra.mxu0 %v5949
    %5951 = vmatprep.subr.mxu0 0.0
    %v5952 = vand.u32 %v4211, 4294901760
    %5953 = vmatpush1.msra.mxu0 %v5952
    %5954 = vmatprep.subr.mxu0 0.0
    %v5955 = vand.u32 %v4212, 4294901760
    %5956 = vmatpush1.msra.mxu0 %v5955
    %5957 = vmatprep.subr.mxu0 0.0
    %v5958 = vand.u32 %v4213, 4294901760
    %5959 = vmatpush1.msra.mxu0 %v5958
    %5960 = vmatprep.subr.mxu0 0.0
    %v5961 = vand.u32 %v4214, 4294901760
    %5962 = vmatpush1.msra.mxu0 %v5961
    %5963 = vmatprep.subr.mxu0 0.0
    %v5964 = vand.u32 %v4215, 4294901760
    %5965 = vmatpush1.msra.mxu0 %v5964
    %5966 = vmatprep.subr.mxu0 0.0
    %v5967 = vand.u32 %v4216, 4294901760
    %5968 = vmatpush1.msra.mxu0 %v5967
    %5969 = vmatprep.subr.mxu0 0.0
    %v5970 = vand.u32 %v4217, 4294901760
    %5971 = vmatpush1.msra.mxu0 %v5970
    %5972 = vmatprep.subr.mxu0 0.0
    %v5973 = vand.u32 %v4218, 4294901760
    %5974 = vmatpush1.msra.mxu0 %v5973
    %5975 = vmatprep.subr.mxu0 0.0
    %v5976 = vand.u32 %v4219, 4294901760
    %5977 = vmatpush1.msra.mxu0 %v5976
    %5978 = vmatprep.subr.mxu0 0.0
    %v5979 = vand.u32 %v4220, 4294901760
    %5980 = vmatpush1.msra.mxu0 %v5979
    %5981 = vmatprep.subr.mxu0 0.0
    %v5982 = vand.u32 %v4221, 4294901760
    %5983 = vmatpush1.msra.mxu0 %v5982
    %v5984 = vand.u32 %v4154, 4294901760
    %5985 = vmatprep.mubr.f32.mxu0 %v5984
    %v5986 = vand.u32 %v4153, 4294901760
    %5987 = vmatmul.mubr.f32.gmra.mrb[0].mxu0 %v5986
    %v5988 = vpop.f32.mrb[0].mxu0
    %v5989 = vadd.f32 %v5885, %v5988
    %v5990 = vpop.f32.mrb[0].mxu0
    %5991 = vdwg.mxu0
    %5992 = vmatprep.subr.mxu0 0.0
    %v5993 = vand.u32 %v4222, 4294901760
    %5994 = vmatpush1.msra.mxu0 %v5993
    %5995 = vmatprep.subr.mxu0 0.0
    %v5996 = vand.u32 %v4223, 4294901760
    %5997 = vmatpush1.msra.mxu0 %v5996
    %5998 = vmatprep.subr.mxu0 0.0
    %v5999 = vand.u32 %v4224, 4294901760
    %6000 = vmatpush1.msra.mxu0 %v5999
    %6001 = vmatprep.subr.mxu0 0.0
    %v6002 = vand.u32 %v4225, 4294901760
    %6003 = vmatpush1.msra.mxu0 %v6002
    %6004 = vmatprep.subr.mxu0 0.0
    %v6005 = vand.u32 %v4226, 4294901760
    %6006 = vmatpush1.msra.mxu0 %v6005
    %6007 = vmatprep.subr.mxu0 0.0
    %v6008 = vand.u32 %v4227, 4294901760
    %6009 = vmatpush1.msra.mxu0 %v6008
    %6010 = vmatprep.subr.mxu0 0.0
    %v6011 = vand.u32 %v4228, 4294901760
    %6012 = vmatpush1.msra.mxu0 %v6011
    %6013 = vmatprep.subr.mxu0 0.0
    %v6014 = vand.u32 %v4229, 4294901760
    %6015 = vmatpush1.msra.mxu0 %v6014
    %6016 = vmatprep.subr.mxu0 0.0
    %v6017 = vand.u32 %v4230, 4294901760
    %6018 = vmatpush1.msra.mxu0 %v6017
    %6019 = vmatprep.subr.mxu0 0.0
    %v6020 = vand.u32 %v4231, 4294901760
    %6021 = vmatpush1.msra.mxu0 %v6020
    %6022 = vmatprep.subr.mxu0 0.0
    %v6023 = vand.u32 %v4232, 4294901760
    %6024 = vmatpush1.msra.mxu0 %v6023
    %6025 = vmatprep.subr.mxu0 0.0
    %v6026 = vand.u32 %v4233, 4294901760
    %6027 = vmatpush1.msra.mxu0 %v6026
    %6028 = vmatprep.subr.mxu0 0.0
    %v6029 = vand.u32 %v4234, 4294901760
    %6030 = vmatpush1.msra.mxu0 %v6029
    %6031 = vmatprep.subr.mxu0 0.0
    %v6032 = vand.u32 %v4235, 4294901760
    %6033 = vmatpush1.msra.mxu0 %v6032
    %6034 = vmatprep.subr.mxu0 0.0
    %v6035 = vand.u32 %v4236, 4294901760
    %6036 = vmatpush1.msra.mxu0 %v6035
    %6037 = vmatprep.subr.mxu0 0.0
    %v6038 = vand.u32 %v4237, 4294901760
    %6039 = vmatpush1.msra.mxu0 %v6038
    %6040 = vmatprep.subr.mxu0 0.0
    %v6041 = vand.u32 %v4238, 4294901760
    %6042 = vmatpush1.msra.mxu0 %v6041
    %6043 = vmatprep.subr.mxu0 0.0
    %v6044 = vand.u32 %v4239, 4294901760
    %6045 = vmatpush1.msra.mxu0 %v6044
    %6046 = vmatprep.subr.mxu0 0.0
    %v6047 = vand.u32 %v4240, 4294901760
    %6048 = vmatpush1.msra.mxu0 %v6047
    %6049 = vmatprep.subr.mxu0 0.0
    %v6050 = vand.u32 %v4241, 4294901760
    %6051 = vmatpush1.msra.mxu0 %v6050
    %6052 = vmatprep.subr.mxu0 0.0
    %v6053 = vand.u32 %v4242, 4294901760
    %6054 = vmatpush1.msra.mxu0 %v6053
    %6055 = vmatprep.subr.mxu0 0.0
    %v6056 = vand.u32 %v4243, 4294901760
    %6057 = vmatpush1.msra.mxu0 %v6056
    %6058 = vmatprep.subr.mxu0 0.0
    %v6059 = vand.u32 %v4244, 4294901760
    %6060 = vmatpush1.msra.mxu0 %v6059
    %6061 = vmatprep.subr.mxu0 0.0
    %v6062 = vand.u32 %v4245, 4294901760
    %6063 = vmatpush1.msra.mxu0 %v6062
    %6064 = vmatprep.subr.mxu0 0.0
    %v6065 = vand.u32 %v4246, 4294901760
    %6066 = vmatpush1.msra.mxu0 %v6065
    %6067 = vmatprep.subr.mxu0 0.0
    %v6068 = vand.u32 %v4247, 4294901760
    %6069 = vmatpush1.msra.mxu0 %v6068
    %6070 = vmatprep.subr.mxu0 0.0
    %v6071 = vand.u32 %v4248, 4294901760
    %6072 = vmatpush1.msra.mxu0 %v6071
    %6073 = vmatprep.subr.mxu0 0.0
    %v6074 = vand.u32 %v4249, 4294901760
    %6075 = vmatpush1.msra.mxu0 %v6074
    %6076 = vmatprep.subr.mxu0 0.0
    %v6077 = vand.u32 %v4250, 4294901760
    %6078 = vmatpush1.msra.mxu0 %v6077
    %6079 = vmatprep.subr.mxu0 0.0
    %v6080 = vand.u32 %v4251, 4294901760
    %6081 = vmatpush1.msra.mxu0 %v6080
    %6082 = vmatprep.subr.mxu0 0.0
    %v6083 = vand.u32 %v4252, 4294901760
    %6084 = vmatpush1.msra.mxu0 %v6083
    %6085 = vmatprep.subr.mxu0 0.0
    %v6086 = vand.u32 %v4253, 4294901760
    %6087 = vmatpush1.msra.mxu0 %v6086
    %v6088 = vand.u32 %v4156, 4294901760
    %v6089 = vsub.f32 %v4156, %v6088
    %v6090 = vand.u32 %v6089, 4294901760
    %v6091 = vsub.f32 %v6089, %v6090
    %v6092 = vand.u32 %v6091, 4294901760
    %6093 = vmatprep.mubr.f32.mxu0 %v6092
    %v6094 = vand.u32 %v4155, 4294901760
    %v6095 = vsub.f32 %v4155, %v6094
    %v6096 = vand.u32 %v6095, 4294901760
    %v6097 = vsub.f32 %v6095, %v6096
    %v6098 = vand.u32 %v6097, 4294901760
    %6099 = vmatmul.mubr.f32.gmra.mrb[0].mxu0 %v6098
    %v6100 = vpop.f32.mrb[0].mxu0
    %v6101 = vadd.f32 %v5989, %v6100
    %v6102 = vpop.f32.mrb[0].mxu0
    %6103 = vdwg.mxu0
    %6104 = vmatprep.subr.mxu0 0.0
    %v6105 = vand.u32 %v4222, 4294901760
    %v6106 = vsub.f32 %v4222, %v6105
    %v6107 = vand.u32 %v6106, 4294901760
    %v6108 = vsub.f32 %v6106, %v6107
    %v6109 = vand.u32 %v6108, 4294901760
    %6110 = vmatpush1.msra.mxu0 %v6109
    %6111 = vmatprep.subr.mxu0 0.0
    %v6112 = vand.u32 %v4223, 4294901760
    %v6113 = vsub.f32 %v4223, %v6112
    %v6114 = vand.u32 %v6113, 4294901760
    %v6115 = vsub.f32 %v6113, %v6114
    %v6116 = vand.u32 %v6115, 4294901760
    %6117 = vmatpush1.msra.mxu0 %v6116
    %6118 = vmatprep.subr.mxu0 0.0
    %v6119 = vand.u32 %v4224, 4294901760
    %v6120 = vsub.f32 %v4224, %v6119
    %v6121 = vand.u32 %v6120, 4294901760
    %v6122 = vsub.f32 %v6120, %v6121
    %v6123 = vand.u32 %v6122, 4294901760
    %6124 = vmatpush1.msra.mxu0 %v6123
    %6125 = vmatprep.subr.mxu0 0.0
    %v6126 = vand.u32 %v4225, 4294901760
    %v6127 = vsub.f32 %v4225, %v6126
    %v6128 = vand.u32 %v6127, 4294901760
    %v6129 = vsub.f32 %v6127, %v6128
    %v6130 = vand.u32 %v6129, 4294901760
    %6131 = vmatpush1.msra.mxu0 %v6130
    %6132 = vmatprep.subr.mxu0 0.0
    %v6133 = vand.u32 %v4226, 4294901760
    %v6134 = vsub.f32 %v4226, %v6133
    %v6135 = vand.u32 %v6134, 4294901760
    %v6136 = vsub.f32 %v6134, %v6135
    %v6137 = vand.u32 %v6136, 4294901760
    %6138 = vmatpush1.msra.mxu0 %v6137
    %6139 = vmatprep.subr.mxu0 0.0
    %v6140 = vand.u32 %v4227, 4294901760
    %v6141 = vsub.f32 %v4227, %v6140
    %v6142 = vand.u32 %v6141, 4294901760
    %v6143 = vsub.f32 %v6141, %v6142
    %v6144 = vand.u32 %v6143, 4294901760
    %6145 = vmatpush1.msra.mxu0 %v6144
    %6146 = vmatprep.subr.mxu0 0.0
    %v6147 = vand.u32 %v4228, 4294901760
    %v6148 = vsub.f32 %v4228, %v6147
    %v6149 = vand.u32 %v6148, 4294901760
    %v6150 = vsub.f32 %v6148, %v6149
    %v6151 = vand.u32 %v6150, 4294901760
    %6152 = vmatpush1.msra.mxu0 %v6151
    %6153 = vmatprep.subr.mxu0 0.0
    %v6154 = vand.u32 %v4229, 4294901760
    %v6155 = vsub.f32 %v4229, %v6154
    %v6156 = vand.u32 %v6155, 4294901760
    %v6157 = vsub.f32 %v6155, %v6156
    %v6158 = vand.u32 %v6157, 4294901760
    %6159 = vmatpush1.msra.mxu0 %v6158
    %6160 = vmatprep.subr.mxu0 0.0
    %v6161 = vand.u32 %v4230, 4294901760
    %v6162 = vsub.f32 %v4230, %v6161
    %v6163 = vand.u32 %v6162, 4294901760
    %v6164 = vsub.f32 %v6162, %v6163
    %v6165 = vand.u32 %v6164, 4294901760
    %6166 = vmatpush1.msra.mxu0 %v6165
    %6167 = vmatprep.subr.mxu0 0.0
    %v6168 = vand.u32 %v4231, 4294901760
    %v6169 = vsub.f32 %v4231, %v6168
    %v6170 = vand.u32 %v6169, 4294901760
    %v6171 = vsub.f32 %v6169, %v6170
    %v6172 = vand.u32 %v6171, 4294901760
    %6173 = vmatpush1.msra.mxu0 %v6172
    %6174 = vmatprep.subr.mxu0 0.0
    %v6175 = vand.u32 %v4232, 4294901760
    %v6176 = vsub.f32 %v4232, %v6175
    %v6177 = vand.u32 %v6176, 4294901760
    %v6178 = vsub.f32 %v6176, %v6177
    %v6179 = vand.u32 %v6178, 4294901760
    %6180 = vmatpush1.msra.mxu0 %v6179
    %6181 = vmatprep.subr.mxu0 0.0
    %v6182 = vand.u32 %v4233, 4294901760
    %v6183 = vsub.f32 %v4233, %v6182
    %v6184 = vand.u32 %v6183, 4294901760
    %v6185 = vsub.f32 %v6183, %v6184
    %v6186 = vand.u32 %v6185, 4294901760
    %6187 = vmatpush1.msra.mxu0 %v6186
    %6188 = vmatprep.subr.mxu0 0.0
    %v6189 = vand.u32 %v4234, 4294901760
    %v6190 = vsub.f32 %v4234, %v6189
    %v6191 = vand.u32 %v6190, 4294901760
    %v6192 = vsub.f32 %v6190, %v6191
    %v6193 = vand.u32 %v6192, 4294901760
    %6194 = vmatpush1.msra.mxu0 %v6193
    %6195 = vmatprep.subr.mxu0 0.0
    %v6196 = vand.u32 %v4235, 4294901760
    %v6197 = vsub.f32 %v4235, %v6196
    %v6198 = vand.u32 %v6197, 4294901760
    %v6199 = vsub.f32 %v6197, %v6198
    %v6200 = vand.u32 %v6199, 4294901760
    %6201 = vmatpush1.msra.mxu0 %v6200
    %6202 = vmatprep.subr.mxu0 0.0
    %v6203 = vand.u32 %v4236, 4294901760
    %v6204 = vsub.f32 %v4236, %v6203
    %v6205 = vand.u32 %v6204, 4294901760
    %v6206 = vsub.f32 %v6204, %v6205
    %v6207 = vand.u32 %v6206, 4294901760
    %6208 = vmatpush1.msra.mxu0 %v6207
    %6209 = vmatprep.subr.mxu0 0.0
    %v6210 = vand.u32 %v4237, 4294901760
    %v6211 = vsub.f32 %v4237, %v6210
    %v6212 = vand.u32 %v6211, 4294901760
    %v6213 = vsub.f32 %v6211, %v6212
    %v6214 = vand.u32 %v6213, 4294901760
    %6215 = vmatpush1.msra.mxu0 %v6214
    %6216 = vmatprep.subr.mxu0 0.0
    %v6217 = vand.u32 %v4238, 4294901760
    %v6218 = vsub.f32 %v4238, %v6217
    %v6219 = vand.u32 %v6218, 4294901760
    %v6220 = vsub.f32 %v6218, %v6219
    %v6221 = vand.u32 %v6220, 4294901760
    %6222 = vmatpush1.msra.mxu0 %v6221
    %6223 = vmatprep.subr.mxu0 0.0
    %v6224 = vand.u32 %v4239, 4294901760
    %v6225 = vsub.f32 %v4239, %v6224
    %v6226 = vand.u32 %v6225, 4294901760
    %v6227 = vsub.f32 %v6225, %v6226
    %v6228 = vand.u32 %v6227, 4294901760
    %6229 = vmatpush1.msra.mxu0 %v6228
    %6230 = vmatprep.subr.mxu0 0.0
    %v6231 = vand.u32 %v4240, 4294901760
    %v6232 = vsub.f32 %v4240, %v6231
    %v6233 = vand.u32 %v6232, 4294901760
    %v6234 = vsub.f32 %v6232, %v6233
    %v6235 = vand.u32 %v6234, 4294901760
    %6236 = vmatpush1.msra.mxu0 %v6235
    %6237 = vmatprep.subr.mxu0 0.0
    %v6238 = vand.u32 %v4241, 4294901760
    %v6239 = vsub.f32 %v4241, %v6238
    %v6240 = vand.u32 %v6239, 4294901760
    %v6241 = vsub.f32 %v6239, %v6240
    %v6242 = vand.u32 %v6241, 4294901760
    %6243 = vmatpush1.msra.mxu0 %v6242
    %6244 = vmatprep.subr.mxu0 0.0
    %v6245 = vand.u32 %v4242, 4294901760
    %v6246 = vsub.f32 %v4242, %v6245
    %v6247 = vand.u32 %v6246, 4294901760
    %v6248 = vsub.f32 %v6246, %v6247
    %v6249 = vand.u32 %v6248, 4294901760
    %6250 = vmatpush1.msra.mxu0 %v6249
    %6251 = vmatprep.subr.mxu0 0.0
    %v6252 = vand.u32 %v4243, 4294901760
    %v6253 = vsub.f32 %v4243, %v6252
    %v6254 = vand.u32 %v6253, 4294901760
    %v6255 = vsub.f32 %v6253, %v6254
    %v6256 = vand.u32 %v6255, 4294901760
    %6257 = vmatpush1.msra.mxu0 %v6256
    %6258 = vmatprep.subr.mxu0 0.0
    %v6259 = vand.u32 %v4244, 4294901760
    %v6260 = vsub.f32 %v4244, %v6259
    %v6261 = vand.u32 %v6260, 4294901760
    %v6262 = vsub.f32 %v6260, %v6261
    %v6263 = vand.u32 %v6262, 4294901760
    %6264 = vmatpush1.msra.mxu0 %v6263
    %6265 = vmatprep.subr.mxu0 0.0
    %v6266 = vand.u32 %v4245, 4294901760
    %v6267 = vsub.f32 %v4245, %v6266
    %v6268 = vand.u32 %v6267, 4294901760
    %v6269 = vsub.f32 %v6267, %v6268
    %v6270 = vand.u32 %v6269, 4294901760
    %6271 = vmatpush1.msra.mxu0 %v6270
    %6272 = vmatprep.subr.mxu0 0.0
    %v6273 = vand.u32 %v4246, 4294901760
    %v6274 = vsub.f32 %v4246, %v6273
    %v6275 = vand.u32 %v6274, 4294901760
    %v6276 = vsub.f32 %v6274, %v6275
    %v6277 = vand.u32 %v6276, 4294901760
    %6278 = vmatpush1.msra.mxu0 %v6277
    %6279 = vmatprep.subr.mxu0 0.0
    %v6280 = vand.u32 %v4247, 4294901760
    %v6281 = vsub.f32 %v4247, %v6280
    %v6282 = vand.u32 %v6281, 4294901760
    %v6283 = vsub.f32 %v6281, %v6282
    %v6284 = vand.u32 %v6283, 4294901760
    %6285 = vmatpush1.msra.mxu0 %v6284
    %6286 = vmatprep.subr.mxu0 0.0
    %v6287 = vand.u32 %v4248, 4294901760
    %v6288 = vsub.f32 %v4248, %v6287
    %v6289 = vand.u32 %v6288, 4294901760
    %v6290 = vsub.f32 %v6288, %v6289
    %v6291 = vand.u32 %v6290, 4294901760
    %6292 = vmatpush1.msra.mxu0 %v6291
    %6293 = vmatprep.subr.mxu0 0.0
    %v6294 = vand.u32 %v4249, 4294901760
    %v6295 = vsub.f32 %v4249, %v6294
    %v6296 = vand.u32 %v6295, 4294901760
    %v6297 = vsub.f32 %v6295, %v6296
    %v6298 = vand.u32 %v6297, 4294901760
    %6299 = vmatpush1.msra.mxu0 %v6298
    %6300 = vmatprep.subr.mxu0 0.0
    %v6301 = vand.u32 %v4250, 4294901760
    %v6302 = vsub.f32 %v4250, %v6301
    %v6303 = vand.u32 %v6302, 4294901760
    %v6304 = vsub.f32 %v6302, %v6303
    %v6305 = vand.u32 %v6304, 4294901760
    %6306 = vmatpush1.msra.mxu0 %v6305
    %6307 = vmatprep.subr.mxu0 0.0
    %v6308 = vand.u32 %v4251, 4294901760
    %v6309 = vsub.f32 %v4251, %v6308
    %v6310 = vand.u32 %v6309, 4294901760
    %v6311 = vsub.f32 %v6309, %v6310
    %v6312 = vand.u32 %v6311, 4294901760
    %6313 = vmatpush1.msra.mxu0 %v6312
    %6314 = vmatprep.subr.mxu0 0.0
    %v6315 = vand.u32 %v4252, 4294901760
    %v6316 = vsub.f32 %v4252, %v6315
    %v6317 = vand.u32 %v6316, 4294901760
    %v6318 = vsub.f32 %v6316, %v6317
    %v6319 = vand.u32 %v6318, 4294901760
    %6320 = vmatpush1.msra.mxu0 %v6319
    %6321 = vmatprep.subr.mxu0 0.0
    %v6322 = vand.u32 %v4253, 4294901760
    %v6323 = vsub.f32 %v4253, %v6322
    %v6324 = vand.u32 %v6323, 4294901760
    %v6325 = vsub.f32 %v6323, %v6324
    %v6326 = vand.u32 %v6325, 4294901760
    %6327 = vmatpush1.msra.mxu0 %v6326
    %v6328 = vand.u32 %v4156, 4294901760
    %6329 = vmatprep.mubr.f32.mxu0 %v6328
    %v6330 = vand.u32 %v4155, 4294901760
    %6331 = vmatmul.mubr.f32.gmra.mrb[0].mxu0 %v6330
    %v6332 = vpop.f32.mrb[0].mxu0
    %v6333 = vadd.f32 %v6101, %v6332
    %v6334 = vpop.f32.mrb[0].mxu0
    %6335 = vdwg.mxu0
    %6336 = vmatprep.subr.mxu0 0.0
    %v6337 = vand.u32 %v4222, 4294901760
    %v6338 = vsub.f32 %v4222, %v6337
    %6339 = vmatpush1.msra.mxu0 %v6338
    %6340 = vmatprep.subr.mxu0 0.0
    %v6341 = vand.u32 %v4223, 4294901760
    %v6342 = vsub.f32 %v4223, %v6341
    %6343 = vmatpush1.msra.mxu0 %v6342
    %6344 = vmatprep.subr.mxu0 0.0
    %v6345 = vand.u32 %v4224, 4294901760
    %v6346 = vsub.f32 %v4224, %v6345
    %6347 = vmatpush1.msra.mxu0 %v6346
    %6348 = vmatprep.subr.mxu0 0.0
    %v6349 = vand.u32 %v4225, 4294901760
    %v6350 = vsub.f32 %v4225, %v6349
    %6351 = vmatpush1.msra.mxu0 %v6350
    %6352 = vmatprep.subr.mxu0 0.0
    %v6353 = vand.u32 %v4226, 4294901760
    %v6354 = vsub.f32 %v4226, %v6353
    %6355 = vmatpush1.msra.mxu0 %v6354
    %6356 = vmatprep.subr.mxu0 0.0
    %v6357 = vand.u32 %v4227, 4294901760
    %v6358 = vsub.f32 %v4227, %v6357
    %6359 = vmatpush1.msra.mxu0 %v6358
    %6360 = vmatprep.subr.mxu0 0.0
    %v6361 = vand.u32 %v4228, 4294901760
    %v6362 = vsub.f32 %v4228, %v6361
    %6363 = vmatpush1.msra.mxu0 %v6362
    %6364 = vmatprep.subr.mxu0 0.0
    %v6365 = vand.u32 %v4229, 4294901760
    %v6366 = vsub.f32 %v4229, %v6365
    %6367 = vmatpush1.msra.mxu0 %v6366
    %6368 = vmatprep.subr.mxu0 0.0
    %v6369 = vand.u32 %v4230, 4294901760
    %v6370 = vsub.f32 %v4230, %v6369
    %6371 = vmatpush1.msra.mxu0 %v6370
    %6372 = vmatprep.subr.mxu0 0.0
    %v6373 = vand.u32 %v4231, 4294901760
    %v6374 = vsub.f32 %v4231, %v6373
    %6375 = vmatpush1.msra.mxu0 %v6374
    %6376 = vmatprep.subr.mxu0 0.0
    %v6377 = vand.u32 %v4232, 4294901760
    %v6378 = vsub.f32 %v4232, %v6377
    %6379 = vmatpush1.msra.mxu0 %v6378
    %6380 = vmatprep.subr.mxu0 0.0
    %v6381 = vand.u32 %v4233, 4294901760
    %v6382 = vsub.f32 %v4233, %v6381
    %6383 = vmatpush1.msra.mxu0 %v6382
    %6384 = vmatprep.subr.mxu0 0.0
    %v6385 = vand.u32 %v4234, 4294901760
    %v6386 = vsub.f32 %v4234, %v6385
    %6387 = vmatpush1.msra.mxu0 %v6386
    %6388 = vmatprep.subr.mxu0 0.0
    %v6389 = vand.u32 %v4235, 4294901760
    %v6390 = vsub.f32 %v4235, %v6389
    %6391 = vmatpush1.msra.mxu0 %v6390
    %6392 = vmatprep.subr.mxu0 0.0
    %v6393 = vand.u32 %v4236, 4294901760
    %v6394 = vsub.f32 %v4236, %v6393
    %6395 = vmatpush1.msra.mxu0 %v6394
    %6396 = vmatprep.subr.mxu0 0.0
    %v6397 = vand.u32 %v4237, 4294901760
    %v6398 = vsub.f32 %v4237, %v6397
    %6399 = vmatpush1.msra.mxu0 %v6398
    %6400 = vmatprep.subr.mxu0 0.0
    %v6401 = vand.u32 %v4238, 4294901760
    %v6402 = vsub.f32 %v4238, %v6401
    %6403 = vmatpush1.msra.mxu0 %v6402
    %6404 = vmatprep.subr.mxu0 0.0
    %v6405 = vand.u32 %v4239, 4294901760
    %v6406 = vsub.f32 %v4239, %v6405
    %6407 = vmatpush1.msra.mxu0 %v6406
    %6408 = vmatprep.subr.mxu0 0.0
    %v6409 = vand.u32 %v4240, 4294901760
    %v6410 = vsub.f32 %v4240, %v6409
    %6411 = vmatpush1.msra.mxu0 %v6410
    %6412 = vmatprep.subr.mxu0 0.0
    %v6413 = vand.u32 %v4241, 4294901760
    %v6414 = vsub.f32 %v4241, %v6413
    %6415 = vmatpush1.msra.mxu0 %v6414
    %6416 = vmatprep.subr.mxu0 0.0
    %v6417 = vand.u32 %v4242, 4294901760
    %v6418 = vsub.f32 %v4242, %v6417
    %6419 = vmatpush1.msra.mxu0 %v6418
    %6420 = vmatprep.subr.mxu0 0.0
    %v6421 = vand.u32 %v4243, 4294901760
    %v6422 = vsub.f32 %v4243, %v6421
    %6423 = vmatpush1.msra.mxu0 %v6422
    %6424 = vmatprep.subr.mxu0 0.0
    %v6425 = vand.u32 %v4244, 4294901760
    %v6426 = vsub.f32 %v4244, %v6425
    %6427 = vmatpush1.msra.mxu0 %v6426
    %6428 = vmatprep.subr.mxu0 0.0
    %v6429 = vand.u32 %v4245, 4294901760
    %v6430 = vsub.f32 %v4245, %v6429
    %6431 = vmatpush1.msra.mxu0 %v6430
    %6432 = vmatprep.subr.mxu0 0.0
    %v6433 = vand.u32 %v4246, 4294901760
    %v6434 = vsub.f32 %v4246, %v6433
    %6435 = vmatpush1.msra.mxu0 %v6434
    %6436 = vmatprep.subr.mxu0 0.0
    %v6437 = vand.u32 %v4247, 4294901760
    %v6438 = vsub.f32 %v4247, %v6437
    %6439 = vmatpush1.msra.mxu0 %v6438
    %6440 = vmatprep.subr.mxu0 0.0
    %v6441 = vand.u32 %v4248, 4294901760
    %v6442 = vsub.f32 %v4248, %v6441
    %6443 = vmatpush1.msra.mxu0 %v6442
    %6444 = vmatprep.subr.mxu0 0.0
    %v6445 = vand.u32 %v4249, 4294901760
    %v6446 = vsub.f32 %v4249, %v6445
    %6447 = vmatpush1.msra.mxu0 %v6446
    %6448 = vmatprep.subr.mxu0 0.0
    %v6449 = vand.u32 %v4250, 4294901760
    %v6450 = vsub.f32 %v4250, %v6449
    %6451 = vmatpush1.msra.mxu0 %v6450
    %6452 = vmatprep.subr.mxu0 0.0
    %v6453 = vand.u32 %v4251, 4294901760
    %v6454 = vsub.f32 %v4251, %v6453
    %6455 = vmatpush1.msra.mxu0 %v6454
    %6456 = vmatprep.subr.mxu0 0.0
    %v6457 = vand.u32 %v4252, 4294901760
    %v6458 = vsub.f32 %v4252, %v6457
    %6459 = vmatpush1.msra.mxu0 %v6458
    %6460 = vmatprep.subr.mxu0 0.0
    %v6461 = vand.u32 %v4253, 4294901760
    %v6462 = vsub.f32 %v4253, %v6461
    %6463 = vmatpush1.msra.mxu0 %v6462
    %v6464 = vand.u32 %v4156, 4294901760
    %v6465 = vsub.f32 %v4156, %v6464
    %6466 = vmatprep.mubr.f32.mxu0 %v6465
    %v6467 = vand.u32 %v4155, 4294901760
    %v6468 = vsub.f32 %v4155, %v6467
    %6469 = vmatmul.mubr.f32.gmra.mrb[0].mxu0 %v6468
    %v6470 = vpop.f32.mrb[0].mxu0
    %v6471 = vadd.f32 %v6333, %v6470
    %v6472 = vpop.f32.mrb[0].mxu0
    %6473 = vdwg.mxu0
    %6474 = vmatprep.subr.mxu0 0.0
    %v6475 = vand.u32 %v4222, 4294901760
    %6476 = vmatpush1.msra.mxu0 %v6475
    %6477 = vmatprep.subr.mxu0 0.0
    %v6478 = vand.u32 %v4223, 4294901760
    %6479 = vmatpush1.msra.mxu0 %v6478
    %6480 = vmatprep.subr.mxu0 0.0
    %v6481 = vand.u32 %v4224, 4294901760
    %6482 = vmatpush1.msra.mxu0 %v6481
    %6483 = vmatprep.subr.mxu0 0.0
    %v6484 = vand.u32 %v4225, 4294901760
    %6485 = vmatpush1.msra.mxu0 %v6484
    %6486 = vmatprep.subr.mxu0 0.0
    %v6487 = vand.u32 %v4226, 4294901760
    %6488 = vmatpush1.msra.mxu0 %v6487
    %6489 = vmatprep.subr.mxu0 0.0
    %v6490 = vand.u32 %v4227, 4294901760
    %6491 = vmatpush1.msra.mxu0 %v6490
    %6492 = vmatprep.subr.mxu0 0.0
    %v6493 = vand.u32 %v4228, 4294901760
    %6494 = vmatpush1.msra.mxu0 %v6493
    %6495 = vmatprep.subr.mxu0 0.0
    %v6496 = vand.u32 %v4229, 4294901760
    %6497 = vmatpush1.msra.mxu0 %v6496
    %6498 = vmatprep.subr.mxu0 0.0
    %v6499 = vand.u32 %v4230, 4294901760
    %6500 = vmatpush1.msra.mxu0 %v6499
    %6501 = vmatprep.subr.mxu0 0.0
    %v6502 = vand.u32 %v4231, 4294901760
    %6503 = vmatpush1.msra.mxu0 %v6502
    %6504 = vmatprep.subr.mxu0 0.0
    %v6505 = vand.u32 %v4232, 4294901760
    %6506 = vmatpush1.msra.mxu0 %v6505
    %6507 = vmatprep.subr.mxu0 0.0
    %v6508 = vand.u32 %v4233, 4294901760
    %6509 = vmatpush1.msra.mxu0 %v6508
    %6510 = vmatprep.subr.mxu0 0.0
    %v6511 = vand.u32 %v4234, 4294901760
    %6512 = vmatpush1.msra.mxu0 %v6511
    %6513 = vmatprep.subr.mxu0 0.0
    %v6514 = vand.u32 %v4235, 4294901760
    %6515 = vmatpush1.msra.mxu0 %v6514
    %6516 = vmatprep.subr.mxu0 0.0
    %v6517 = vand.u32 %v4236, 4294901760
    %6518 = vmatpush1.msra.mxu0 %v6517
    %6519 = vmatprep.subr.mxu0 0.0
    %v6520 = vand.u32 %v4237, 4294901760
    %6521 = vmatpush1.msra.mxu0 %v6520
    %6522 = vmatprep.subr.mxu0 0.0
    %v6523 = vand.u32 %v4238, 4294901760
    %6524 = vmatpush1.msra.mxu0 %v6523
    %6525 = vmatprep.subr.mxu0 0.0
    %v6526 = vand.u32 %v4239, 4294901760
    %6527 = vmatpush1.msra.mxu0 %v6526
    %6528 = vmatprep.subr.mxu0 0.0
    %v6529 = vand.u32 %v4240, 4294901760
    %6530 = vmatpush1.msra.mxu0 %v6529
    %6531 = vmatprep.subr.mxu0 0.0
    %v6532 = vand.u32 %v4241, 4294901760
    %6533 = vmatpush1.msra.mxu0 %v6532
    %6534 = vmatprep.subr.mxu0 0.0
    %v6535 = vand.u32 %v4242, 4294901760
    %6536 = vmatpush1.msra.mxu0 %v6535
    %6537 = vmatprep.subr.mxu0 0.0
    %v6538 = vand.u32 %v4243, 4294901760
    %6539 = vmatpush1.msra.mxu0 %v6538
    %6540 = vmatprep.subr.mxu0 0.0
    %v6541 = vand.u32 %v4244, 4294901760
    %6542 = vmatpush1.msra.mxu0 %v6541
    %6543 = vmatprep.subr.mxu0 0.0
    %v6544 = vand.u32 %v4245, 4294901760
    %6545 = vmatpush1.msra.mxu0 %v6544
    %6546 = vmatprep.subr.mxu0 0.0
    %v6547 = vand.u32 %v4246, 4294901760
    %6548 = vmatpush1.msra.mxu0 %v6547
    %6549 = vmatprep.subr.mxu0 0.0
    %v6550 = vand.u32 %v4247, 4294901760
    %6551 = vmatpush1.msra.mxu0 %v6550
    %6552 = vmatprep.subr.mxu0 0.0
    %v6553 = vand.u32 %v4248, 4294901760
    %6554 = vmatpush1.msra.mxu0 %v6553
    %6555 = vmatprep.subr.mxu0 0.0
    %v6556 = vand.u32 %v4249, 4294901760
    %6557 = vmatpush1.msra.mxu0 %v6556
    %6558 = vmatprep.subr.mxu0 0.0
    %v6559 = vand.u32 %v4250, 4294901760
    %6560 = vmatpush1.msra.mxu0 %v6559
    %6561 = vmatprep.subr.mxu0 0.0
    %v6562 = vand.u32 %v4251, 4294901760
    %6563 = vmatpush1.msra.mxu0 %v6562
    %6564 = vmatprep.subr.mxu0 0.0
    %v6565 = vand.u32 %v4252, 4294901760
    %6566 = vmatpush1.msra.mxu0 %v6565
    %6567 = vmatprep.subr.mxu0 0.0
    %v6568 = vand.u32 %v4253, 4294901760
    %6569 = vmatpush1.msra.mxu0 %v6568
    %v6570 = vand.u32 %v4156, 4294901760
    %v6571 = vsub.f32 %v4156, %v6570
    %v6572 = vand.u32 %v6571, 4294901760
    %6573 = vmatprep.mubr.f32.mxu0 %v6572
    %v6574 = vand.u32 %v4155, 4294901760
    %v6575 = vsub.f32 %v4155, %v6574
    %v6576 = vand.u32 %v6575, 4294901760
    %6577 = vmatmul.mubr.f32.gmra.mrb[0].mxu0 %v6576
    %v6578 = vpop.f32.mrb[0].mxu0
    %v6579 = vadd.f32 %v6471, %v6578
    %v6580 = vpop.f32.mrb[0].mxu0
    %6581 = vdwg.mxu0
    %6582 = vmatprep.subr.mxu0 0.0
    %v6583 = vand.u32 %v4222, 4294901760
    %v6584 = vsub.f32 %v4222, %v6583
    %v6585 = vand.u32 %v6584, 4294901760
    %6586 = vmatpush1.msra.mxu0 %v6585
    %6587 = vmatprep.subr.mxu0 0.0
    %v6588 = vand.u32 %v4223, 4294901760
    %v6589 = vsub.f32 %v4223, %v6588
    %v6590 = vand.u32 %v6589, 4294901760
    %6591 = vmatpush1.msra.mxu0 %v6590
    %6592 = vmatprep.subr.mxu0 0.0
    %v6593 = vand.u32 %v4224, 4294901760
    %v6594 = vsub.f32 %v4224, %v6593
    %v6595 = vand.u32 %v6594, 4294901760
    %6596 = vmatpush1.msra.mxu0 %v6595
    %6597 = vmatprep.subr.mxu0 0.0
    %v6598 = vand.u32 %v4225, 4294901760
    %v6599 = vsub.f32 %v4225, %v6598
    %v6600 = vand.u32 %v6599, 4294901760
    %6601 = vmatpush1.msra.mxu0 %v6600
    %6602 = vmatprep.subr.mxu0 0.0
    %v6603 = vand.u32 %v4226, 4294901760
    %v6604 = vsub.f32 %v4226, %v6603
    %v6605 = vand.u32 %v6604, 4294901760
    %6606 = vmatpush1.msra.mxu0 %v6605
    %6607 = vmatprep.subr.mxu0 0.0
    %v6608 = vand.u32 %v4227, 4294901760
    %v6609 = vsub.f32 %v4227, %v6608
    %v6610 = vand.u32 %v6609, 4294901760
    %6611 = vmatpush1.msra.mxu0 %v6610
    %6612 = vmatprep.subr.mxu0 0.0
    %v6613 = vand.u32 %v4228, 4294901760
    %v6614 = vsub.f32 %v4228, %v6613
    %v6615 = vand.u32 %v6614, 4294901760
    %6616 = vmatpush1.msra.mxu0 %v6615
    %6617 = vmatprep.subr.mxu0 0.0
    %v6618 = vand.u32 %v4229, 4294901760
    %v6619 = vsub.f32 %v4229, %v6618
    %v6620 = vand.u32 %v6619, 4294901760
    %6621 = vmatpush1.msra.mxu0 %v6620
    %6622 = vmatprep.subr.mxu0 0.0
    %v6623 = vand.u32 %v4230, 4294901760
    %v6624 = vsub.f32 %v4230, %v6623
    %v6625 = vand.u32 %v6624, 4294901760
    %6626 = vmatpush1.msra.mxu0 %v6625
    %6627 = vmatprep.subr.mxu0 0.0
    %v6628 = vand.u32 %v4231, 4294901760
    %v6629 = vsub.f32 %v4231, %v6628
    %v6630 = vand.u32 %v6629, 4294901760
    %6631 = vmatpush1.msra.mxu0 %v6630
    %6632 = vmatprep.subr.mxu0 0.0
    %v6633 = vand.u32 %v4232, 4294901760
    %v6634 = vsub.f32 %v4232, %v6633
    %v6635 = vand.u32 %v6634, 4294901760
    %6636 = vmatpush1.msra.mxu0 %v6635
    %6637 = vmatprep.subr.mxu0 0.0
    %v6638 = vand.u32 %v4233, 4294901760
    %v6639 = vsub.f32 %v4233, %v6638
    %v6640 = vand.u32 %v6639, 4294901760
    %6641 = vmatpush1.msra.mxu0 %v6640
    %6642 = vmatprep.subr.mxu0 0.0
    %v6643 = vand.u32 %v4234, 4294901760
    %v6644 = vsub.f32 %v4234, %v6643
    %v6645 = vand.u32 %v6644, 4294901760
    %6646 = vmatpush1.msra.mxu0 %v6645
    %6647 = vmatprep.subr.mxu0 0.0
    %v6648 = vand.u32 %v4235, 4294901760
    %v6649 = vsub.f32 %v4235, %v6648
    %v6650 = vand.u32 %v6649, 4294901760
    %6651 = vmatpush1.msra.mxu0 %v6650
    %6652 = vmatprep.subr.mxu0 0.0
    %v6653 = vand.u32 %v4236, 4294901760
    %v6654 = vsub.f32 %v4236, %v6653
    %v6655 = vand.u32 %v6654, 4294901760
    %6656 = vmatpush1.msra.mxu0 %v6655
    %6657 = vmatprep.subr.mxu0 0.0
    %v6658 = vand.u32 %v4237, 4294901760
    %v6659 = vsub.f32 %v4237, %v6658
    %v6660 = vand.u32 %v6659, 4294901760
    %6661 = vmatpush1.msra.mxu0 %v6660
    %6662 = vmatprep.subr.mxu0 0.0
    %v6663 = vand.u32 %v4238, 4294901760
    %v6664 = vsub.f32 %v4238, %v6663
    %v6665 = vand.u32 %v6664, 4294901760
    %6666 = vmatpush1.msra.mxu0 %v6665
    %6667 = vmatprep.subr.mxu0 0.0
    %v6668 = vand.u32 %v4239, 4294901760
    %v6669 = vsub.f32 %v4239, %v6668
    %v6670 = vand.u32 %v6669, 4294901760
    %6671 = vmatpush1.msra.mxu0 %v6670
    %6672 = vmatprep.subr.mxu0 0.0
    %v6673 = vand.u32 %v4240, 4294901760
    %v6674 = vsub.f32 %v4240, %v6673
    %v6675 = vand.u32 %v6674, 4294901760
    %6676 = vmatpush1.msra.mxu0 %v6675
    %6677 = vmatprep.subr.mxu0 0.0
    %v6678 = vand.u32 %v4241, 4294901760
    %v6679 = vsub.f32 %v4241, %v6678
    %v6680 = vand.u32 %v6679, 4294901760
    %6681 = vmatpush1.msra.mxu0 %v6680
    %6682 = vmatprep.subr.mxu0 0.0
    %v6683 = vand.u32 %v4242, 4294901760
    %v6684 = vsub.f32 %v4242, %v6683
    %v6685 = vand.u32 %v6684, 4294901760
    %6686 = vmatpush1.msra.mxu0 %v6685
    %6687 = vmatprep.subr.mxu0 0.0
    %v6688 = vand.u32 %v4243, 4294901760
    %v6689 = vsub.f32 %v4243, %v6688
    %v6690 = vand.u32 %v6689, 4294901760
    %6691 = vmatpush1.msra.mxu0 %v6690
    %6692 = vmatprep.subr.mxu0 0.0
    %v6693 = vand.u32 %v4244, 4294901760
    %v6694 = vsub.f32 %v4244, %v6693
    %v6695 = vand.u32 %v6694, 4294901760
    %6696 = vmatpush1.msra.mxu0 %v6695
    %6697 = vmatprep.subr.mxu0 0.0
    %v6698 = vand.u32 %v4245, 4294901760
    %v6699 = vsub.f32 %v4245, %v6698
    %v6700 = vand.u32 %v6699, 4294901760
    %6701 = vmatpush1.msra.mxu0 %v6700
    %6702 = vmatprep.subr.mxu0 0.0
    %v6703 = vand.u32 %v4246, 4294901760
    %v6704 = vsub.f32 %v4246, %v6703
    %v6705 = vand.u32 %v6704, 4294901760
    %6706 = vmatpush1.msra.mxu0 %v6705
    %6707 = vmatprep.subr.mxu0 0.0
    %v6708 = vand.u32 %v4247, 4294901760
    %v6709 = vsub.f32 %v4247, %v6708
    %v6710 = vand.u32 %v6709, 4294901760
    %6711 = vmatpush1.msra.mxu0 %v6710
    %6712 = vmatprep.subr.mxu0 0.0
    %v6713 = vand.u32 %v4248, 4294901760
    %v6714 = vsub.f32 %v4248, %v6713
    %v6715 = vand.u32 %v6714, 4294901760
    %6716 = vmatpush1.msra.mxu0 %v6715
    %6717 = vmatprep.subr.mxu0 0.0
    %v6718 = vand.u32 %v4249, 4294901760
    %v6719 = vsub.f32 %v4249, %v6718
    %v6720 = vand.u32 %v6719, 4294901760
    %6721 = vmatpush1.msra.mxu0 %v6720
    %6722 = vmatprep.subr.mxu0 0.0
    %v6723 = vand.u32 %v4250, 4294901760
    %v6724 = vsub.f32 %v4250, %v6723
    %v6725 = vand.u32 %v6724, 4294901760
    %6726 = vmatpush1.msra.mxu0 %v6725
    %6727 = vmatprep.subr.mxu0 0.0
    %v6728 = vand.u32 %v4251, 4294901760
    %v6729 = vsub.f32 %v4251, %v6728
    %v6730 = vand.u32 %v6729, 4294901760
    %6731 = vmatpush1.msra.mxu0 %v6730
    %6732 = vmatprep.subr.mxu0 0.0
    %v6733 = vand.u32 %v4252, 4294901760
    %v6734 = vsub.f32 %v4252, %v6733
    %v6735 = vand.u32 %v6734, 4294901760
    %6736 = vmatpush1.msra.mxu0 %v6735
    %6737 = vmatprep.subr.mxu0 0.0
    %v6738 = vand.u32 %v4253, 4294901760
    %v6739 = vsub.f32 %v4253, %v6738
    %v6740 = vand.u32 %v6739, 4294901760
    %6741 = vmatpush1.msra.mxu0 %v6740
    %v6742 = vand.u32 %v4156, 4294901760
    %6743 = vmatprep.mubr.f32.mxu0 %v6742
    %v6744 = vand.u32 %v4155, 4294901760
    %6745 = vmatmul.mubr.f32.gmra.mrb[0].mxu0 %v6744
    %v6746 = vpop.f32.mrb[0].mxu0
    %v6747 = vadd.f32 %v6579, %v6746
    %v6748 = vpop.f32.mrb[0].mxu0
    %6749 = vdwg.mxu0
    %6750 = vmatprep.subr.mxu0 0.0
    %v6751 = vand.u32 %v4222, 4294901760
    %6752 = vmatpush1.msra.mxu0 %v6751
    %6753 = vmatprep.subr.mxu0 0.0
    %v6754 = vand.u32 %v4223, 4294901760
    %6755 = vmatpush1.msra.mxu0 %v6754
    %6756 = vmatprep.subr.mxu0 0.0
    %v6757 = vand.u32 %v4224, 4294901760
    %6758 = vmatpush1.msra.mxu0 %v6757
    %6759 = vmatprep.subr.mxu0 0.0
    %v6760 = vand.u32 %v4225, 4294901760
    %6761 = vmatpush1.msra.mxu0 %v6760
    %6762 = vmatprep.subr.mxu0 0.0
    %v6763 = vand.u32 %v4226, 4294901760
    %6764 = vmatpush1.msra.mxu0 %v6763
    %6765 = vmatprep.subr.mxu0 0.0
    %v6766 = vand.u32 %v4227, 4294901760
    %6767 = vmatpush1.msra.mxu0 %v6766
    %6768 = vmatprep.subr.mxu0 0.0
    %v6769 = vand.u32 %v4228, 4294901760
    %6770 = vmatpush1.msra.mxu0 %v6769
    %6771 = vmatprep.subr.mxu0 0.0
    %v6772 = vand.u32 %v4229, 4294901760
    %6773 = vmatpush1.msra.mxu0 %v6772
    %6774 = vmatprep.subr.mxu0 0.0
    %v6775 = vand.u32 %v4230, 4294901760
    %6776 = vmatpush1.msra.mxu0 %v6775
    %6777 = vmatprep.subr.mxu0 0.0
    %v6778 = vand.u32 %v4231, 4294901760
    %6779 = vmatpush1.msra.mxu0 %v6778
    %6780 = vmatprep.subr.mxu0 0.0
    %v6781 = vand.u32 %v4232, 4294901760
    %6782 = vmatpush1.msra.mxu0 %v6781
    %6783 = vmatprep.subr.mxu0 0.0
    %v6784 = vand.u32 %v4233, 4294901760
    %6785 = vmatpush1.msra.mxu0 %v6784
    %6786 = vmatprep.subr.mxu0 0.0
    %v6787 = vand.u32 %v4234, 4294901760
    %6788 = vmatpush1.msra.mxu0 %v6787
    %6789 = vmatprep.subr.mxu0 0.0
    %v6790 = vand.u32 %v4235, 4294901760
    %6791 = vmatpush1.msra.mxu0 %v6790
    %6792 = vmatprep.subr.mxu0 0.0
    %v6793 = vand.u32 %v4236, 4294901760
    %6794 = vmatpush1.msra.mxu0 %v6793
    %6795 = vmatprep.subr.mxu0 0.0
    %v6796 = vand.u32 %v4237, 4294901760
    %6797 = vmatpush1.msra.mxu0 %v6796
    %6798 = vmatprep.subr.mxu0 0.0
    %v6799 = vand.u32 %v4238, 4294901760
    %6800 = vmatpush1.msra.mxu0 %v6799
    %6801 = vmatprep.subr.mxu0 0.0
    %v6802 = vand.u32 %v4239, 4294901760
    %6803 = vmatpush1.msra.mxu0 %v6802
    %6804 = vmatprep.subr.mxu0 0.0
    %v6805 = vand.u32 %v4240, 4294901760
    %6806 = vmatpush1.msra.mxu0 %v6805
    %6807 = vmatprep.subr.mxu0 0.0
    %v6808 = vand.u32 %v4241, 4294901760
    %6809 = vmatpush1.msra.mxu0 %v6808
    %6810 = vmatprep.subr.mxu0 0.0
    %v6811 = vand.u32 %v4242, 4294901760
    %6812 = vmatpush1.msra.mxu0 %v6811
    %6813 = vmatprep.subr.mxu0 0.0
    %v6814 = vand.u32 %v4243, 4294901760
    %6815 = vmatpush1.msra.mxu0 %v6814
    %6816 = vmatprep.subr.mxu0 0.0
    %v6817 = vand.u32 %v4244, 4294901760
    %6818 = vmatpush1.msra.mxu0 %v6817
    %6819 = vmatprep.subr.mxu0 0.0
    %v6820 = vand.u32 %v4245, 4294901760
    %6821 = vmatpush1.msra.mxu0 %v6820
    %6822 = vmatprep.subr.mxu0 0.0
    %v6823 = vand.u32 %v4246, 4294901760
    %6824 = vmatpush1.msra.mxu0 %v6823
    %6825 = vmatprep.subr.mxu0 0.0
    %v6826 = vand.u32 %v4247, 4294901760
    %6827 = vmatpush1.msra.mxu0 %v6826
    %6828 = vmatprep.subr.mxu0 0.0
    %v6829 = vand.u32 %v4248, 4294901760
    %6830 = vmatpush1.msra.mxu0 %v6829
    %6831 = vmatprep.subr.mxu0 0.0
    %v6832 = vand.u32 %v4249, 4294901760
    %6833 = vmatpush1.msra.mxu0 %v6832
    %6834 = vmatprep.subr.mxu0 0.0
    %v6835 = vand.u32 %v4250, 4294901760
    %6836 = vmatpush1.msra.mxu0 %v6835
    %6837 = vmatprep.subr.mxu0 0.0
    %v6838 = vand.u32 %v4251, 4294901760
    %6839 = vmatpush1.msra.mxu0 %v6838
    %6840 = vmatprep.subr.mxu0 0.0
    %v6841 = vand.u32 %v4252, 4294901760
    %6842 = vmatpush1.msra.mxu0 %v6841
    %6843 = vmatprep.subr.mxu0 0.0
    %v6844 = vand.u32 %v4253, 4294901760
    %6845 = vmatpush1.msra.mxu0 %v6844
    %v6846 = vand.u32 %v4156, 4294901760
    %6847 = vmatprep.mubr.f32.mxu0 %v6846
    %v6848 = vand.u32 %v4155, 4294901760
    %6849 = vmatmul.mubr.f32.gmra.mrb[0].mxu0 %v6848
    %v6850 = vpop.f32.mrb[0].mxu0
    %v6851 = vadd.f32 %v6747, %v6850
    %v6852 = vpop.f32.mrb[0].mxu0
    %6853 = vdwg.mxu0
    %6854 = vmatprep.subr.mxu0 0.0
    %v6855 = vand.u32 %v4254, 4294901760
    %6856 = vmatpush1.msra.mxu0 %v6855
    %6857 = vmatprep.subr.mxu0 0.0
    %v6858 = vand.u32 %v4255, 4294901760
    %6859 = vmatpush1.msra.mxu0 %v6858
    %6860 = vmatprep.subr.mxu0 0.0
    %v6861 = vand.u32 %v4256, 4294901760
    %6862 = vmatpush1.msra.mxu0 %v6861
    %6863 = vmatprep.subr.mxu0 0.0
    %v6864 = vand.u32 %v4257, 4294901760
    %6865 = vmatpush1.msra.mxu0 %v6864
    %6866 = vmatprep.subr.mxu0 0.0
    %6867 = vmatpush1.msra.mxu0 0.0
    %6868 = vmatprep.subr.mxu0 0.0
    %6869 = vmatpush1.msra.mxu0 0.0
    %6870 = vmatprep.subr.mxu0 0.0
    %6871 = vmatpush1.msra.mxu0 0.0
    %6872 = vmatprep.subr.mxu0 0.0
    %6873 = vmatpush1.msra.mxu0 0.0
    %6874 = vmatprep.subr.mxu0 0.0
    %6875 = vmatpush1.msra.mxu0 0.0
    %6876 = vmatprep.subr.mxu0 0.0
    %6877 = vmatpush1.msra.mxu0 0.0
    %6878 = vmatprep.subr.mxu0 0.0
    %6879 = vmatpush1.msra.mxu0 0.0
    %6880 = vmatprep.subr.mxu0 0.0
    %6881 = vmatpush1.msra.mxu0 0.0
    %6882 = vmatprep.subr.mxu0 0.0
    %6883 = vmatpush1.msra.mxu0 0.0
    %6884 = vmatprep.subr.mxu0 0.0
    %6885 = vmatpush1.msra.mxu0 0.0
    %6886 = vmatprep.subr.mxu0 0.0
    %6887 = vmatpush1.msra.mxu0 0.0
    %6888 = vmatprep.subr.mxu0 0.0
    %6889 = vmatpush1.msra.mxu0 0.0
    %6890 = vmatprep.subr.mxu0 0.0
    %6891 = vmatpush1.msra.mxu0 0.0
    %6892 = vmatprep.subr.mxu0 0.0
    %6893 = vmatpush1.msra.mxu0 0.0
    %6894 = vmatprep.subr.mxu0 0.0
    %6895 = vmatpush1.msra.mxu0 0.0
    %6896 = vmatprep.subr.mxu0 0.0
    %6897 = vmatpush1.msra.mxu0 0.0
    %6898 = vmatprep.subr.mxu0 0.0
    %6899 = vmatpush1.msra.mxu0 0.0
    %6900 = vmatprep.subr.mxu0 0.0
    %6901 = vmatpush1.msra.mxu0 0.0
    %6902 = vmatprep.subr.mxu0 0.0
    %6903 = vmatpush1.msra.mxu0 0.0
    %6904 = vmatprep.subr.mxu0 0.0
    %6905 = vmatpush1.msra.mxu0 0.0
    %6906 = vmatprep.subr.mxu0 0.0
    %6907 = vmatpush1.msra.mxu0 0.0
    %6908 = vmatprep.subr.mxu0 0.0
    %6909 = vmatpush1.msra.mxu0 0.0
    %6910 = vmatprep.subr.mxu0 0.0
    %6911 = vmatpush1.msra.mxu0 0.0
    %6912 = vmatprep.subr.mxu0 0.0
    %6913 = vmatpush1.msra.mxu0 0.0
    %6914 = vmatprep.subr.mxu0 0.0
    %6915 = vmatpush1.msra.mxu0 0.0
    %6916 = vmatprep.subr.mxu0 0.0
    %6917 = vmatpush1.msra.mxu0 0.0
    %6918 = vmatprep.subr.mxu0 0.0
    %6919 = vmatpush1.msra.mxu0 0.0
    %6920 = vmatprep.subr.mxu0 0.0
    %6921 = vmatpush1.msra.mxu0 0.0
    %6922 = vmatprep.mubr.f32.mxu0 0.0
    %v6923 = vand.u32 %v4266, 4294901760
    %v6924 = vsub.f32 %v4266, %v6923
    %v6925 = vand.u32 %v6924, 4294901760
    %v6926 = vsub.f32 %v6924, %v6925
    %v6927 = vand.u32 %v6926, 4294901760
    %6928 = vmatmul.mubr.f32.gmra.mrb[0].mxu0 %v6927
    %v6929 = vpop.f32.mrb[0].mxu0
    %v6930 = vadd.f32 %v6851, %v6929
    %v6931 = vpop.f32.mrb[0].mxu0
    %6932 = vdwg.mxu0
    %6933 = vmatprep.subr.mxu0 0.0
    %v6934 = vand.u32 %v4254, 4294901760
    %v6935 = vsub.f32 %v4254, %v6934
    %v6936 = vand.u32 %v6935, 4294901760
    %v6937 = vsub.f32 %v6935, %v6936
    %v6938 = vand.u32 %v6937, 4294901760
    %6939 = vmatpush1.msra.mxu0 %v6938
    %6940 = vmatprep.subr.mxu0 0.0
    %v6941 = vand.u32 %v4255, 4294901760
    %v6942 = vsub.f32 %v4255, %v6941
    %v6943 = vand.u32 %v6942, 4294901760
    %v6944 = vsub.f32 %v6942, %v6943
    %v6945 = vand.u32 %v6944, 4294901760
    %6946 = vmatpush1.msra.mxu0 %v6945
    %6947 = vmatprep.subr.mxu0 0.0
    %v6948 = vand.u32 %v4256, 4294901760
    %v6949 = vsub.f32 %v4256, %v6948
    %v6950 = vand.u32 %v6949, 4294901760
    %v6951 = vsub.f32 %v6949, %v6950
    %v6952 = vand.u32 %v6951, 4294901760
    %6953 = vmatpush1.msra.mxu0 %v6952
    %6954 = vmatprep.subr.mxu0 0.0
    %v6955 = vand.u32 %v4257, 4294901760
    %v6956 = vsub.f32 %v4257, %v6955
    %v6957 = vand.u32 %v6956, 4294901760
    %v6958 = vsub.f32 %v6956, %v6957
    %v6959 = vand.u32 %v6958, 4294901760
    %6960 = vmatpush1.msra.mxu0 %v6959
    %6961 = vmatprep.subr.mxu0 0.0
    %6962 = vmatpush1.msra.mxu0 0.0
    %6963 = vmatprep.subr.mxu0 0.0
    %6964 = vmatpush1.msra.mxu0 0.0
    %6965 = vmatprep.subr.mxu0 0.0
    %6966 = vmatpush1.msra.mxu0 0.0
    %6967 = vmatprep.subr.mxu0 0.0
    %6968 = vmatpush1.msra.mxu0 0.0
    %6969 = vmatprep.subr.mxu0 0.0
    %6970 = vmatpush1.msra.mxu0 0.0
    %6971 = vmatprep.subr.mxu0 0.0
    %6972 = vmatpush1.msra.mxu0 0.0
    %6973 = vmatprep.subr.mxu0 0.0
    %6974 = vmatpush1.msra.mxu0 0.0
    %6975 = vmatprep.subr.mxu0 0.0
    %6976 = vmatpush1.msra.mxu0 0.0
    %6977 = vmatprep.subr.mxu0 0.0
    %6978 = vmatpush1.msra.mxu0 0.0
    %6979 = vmatprep.subr.mxu0 0.0
    %6980 = vmatpush1.msra.mxu0 0.0
    %6981 = vmatprep.subr.mxu0 0.0
    %6982 = vmatpush1.msra.mxu0 0.0
    %6983 = vmatprep.subr.mxu0 0.0
    %6984 = vmatpush1.msra.mxu0 0.0
    %6985 = vmatprep.subr.mxu0 0.0
    %6986 = vmatpush1.msra.mxu0 0.0
    %6987 = vmatprep.subr.mxu0 0.0
    %6988 = vmatpush1.msra.mxu0 0.0
    %6989 = vmatprep.subr.mxu0 0.0
    %6990 = vmatpush1.msra.mxu0 0.0
    %6991 = vmatprep.subr.mxu0 0.0
    %6992 = vmatpush1.msra.mxu0 0.0
    %6993 = vmatprep.subr.mxu0 0.0
    %6994 = vmatpush1.msra.mxu0 0.0
    %6995 = vmatprep.subr.mxu0 0.0
    %6996 = vmatpush1.msra.mxu0 0.0
    %6997 = vmatprep.subr.mxu0 0.0
    %6998 = vmatpush1.msra.mxu0 0.0
    %6999 = vmatprep.subr.mxu0 0.0
    %7000 = vmatpush1.msra.mxu0 0.0
    %7001 = vmatprep.subr.mxu0 0.0
    %7002 = vmatpush1.msra.mxu0 0.0
    %7003 = vmatprep.subr.mxu0 0.0
    %7004 = vmatpush1.msra.mxu0 0.0
    %7005 = vmatprep.subr.mxu0 0.0
    %7006 = vmatpush1.msra.mxu0 0.0
    %7007 = vmatprep.subr.mxu0 0.0
    %7008 = vmatpush1.msra.mxu0 0.0
    %7009 = vmatprep.subr.mxu0 0.0
    %7010 = vmatpush1.msra.mxu0 0.0
    %7011 = vmatprep.subr.mxu0 0.0
    %7012 = vmatpush1.msra.mxu0 0.0
    %7013 = vmatprep.subr.mxu0 0.0
    %7014 = vmatpush1.msra.mxu0 0.0
    %7015 = vmatprep.subr.mxu0 0.0
    %7016 = vmatpush1.msra.mxu0 0.0
    %7017 = vmatprep.mubr.f32.mxu0 0.0
    %v7018 = vand.u32 %v4266, 4294901760
    %7019 = vmatmul.mubr.f32.gmra.mrb[0].mxu0 %v7018
    %v7020 = vpop.f32.mrb[0].mxu0
    %v7021 = vadd.f32 %v6930, %v7020
    %v7022 = vpop.f32.mrb[0].mxu0
    %7023 = vdwg.mxu0
    %7024 = vmatprep.subr.mxu0 0.0
    %v7025 = vand.u32 %v4254, 4294901760
    %v7026 = vsub.f32 %v4254, %v7025
    %7027 = vmatpush1.msra.mxu0 %v7026
    %7028 = vmatprep.subr.mxu0 0.0
    %v7029 = vand.u32 %v4255, 4294901760
    %v7030 = vsub.f32 %v4255, %v7029
    %7031 = vmatpush1.msra.mxu0 %v7030
    %7032 = vmatprep.subr.mxu0 0.0
    %v7033 = vand.u32 %v4256, 4294901760
    %v7034 = vsub.f32 %v4256, %v7033
    %7035 = vmatpush1.msra.mxu0 %v7034
    %7036 = vmatprep.subr.mxu0 0.0
    %v7037 = vand.u32 %v4257, 4294901760
    %v7038 = vsub.f32 %v4257, %v7037
    %7039 = vmatpush1.msra.mxu0 %v7038
    %7040 = vmatprep.subr.mxu0 0.0
    %7041 = vmatpush1.msra.mxu0 0.0
    %7042 = vmatprep.subr.mxu0 0.0
    %7043 = vmatpush1.msra.mxu0 0.0
    %7044 = vmatprep.subr.mxu0 0.0
    %7045 = vmatpush1.msra.mxu0 0.0
    %7046 = vmatprep.subr.mxu0 0.0
    %7047 = vmatpush1.msra.mxu0 0.0
    %7048 = vmatprep.subr.mxu0 0.0
    %7049 = vmatpush1.msra.mxu0 0.0
    %7050 = vmatprep.subr.mxu0 0.0
    %7051 = vmatpush1.msra.mxu0 0.0
    %7052 = vmatprep.subr.mxu0 0.0
    %7053 = vmatpush1.msra.mxu0 0.0
    %7054 = vmatprep.subr.mxu0 0.0
    %7055 = vmatpush1.msra.mxu0 0.0
    %7056 = vmatprep.subr.mxu0 0.0
    %7057 = vmatpush1.msra.mxu0 0.0
    %7058 = vmatprep.subr.mxu0 0.0
    %7059 = vmatpush1.msra.mxu0 0.0
    %7060 = vmatprep.subr.mxu0 0.0
    %7061 = vmatpush1.msra.mxu0 0.0
    %7062 = vmatprep.subr.mxu0 0.0
    %7063 = vmatpush1.msra.mxu0 0.0
    %7064 = vmatprep.subr.mxu0 0.0
    %7065 = vmatpush1.msra.mxu0 0.0
    %7066 = vmatprep.subr.mxu0 0.0
    %7067 = vmatpush1.msra.mxu0 0.0
    %7068 = vmatprep.subr.mxu0 0.0
    %7069 = vmatpush1.msra.mxu0 0.0
    %7070 = vmatprep.subr.mxu0 0.0
    %7071 = vmatpush1.msra.mxu0 0.0
    %7072 = vmatprep.subr.mxu0 0.0
    %7073 = vmatpush1.msra.mxu0 0.0
    %7074 = vmatprep.subr.mxu0 0.0
    %7075 = vmatpush1.msra.mxu0 0.0
    %7076 = vmatprep.subr.mxu0 0.0
    %7077 = vmatpush1.msra.mxu0 0.0
    %7078 = vmatprep.subr.mxu0 0.0
    %7079 = vmatpush1.msra.mxu0 0.0
    %7080 = vmatprep.subr.mxu0 0.0
    %7081 = vmatpush1.msra.mxu0 0.0
    %7082 = vmatprep.subr.mxu0 0.0
    %7083 = vmatpush1.msra.mxu0 0.0
    %7084 = vmatprep.subr.mxu0 0.0
    %7085 = vmatpush1.msra.mxu0 0.0
    %7086 = vmatprep.subr.mxu0 0.0
    %7087 = vmatpush1.msra.mxu0 0.0
    %7088 = vmatprep.subr.mxu0 0.0
    %7089 = vmatpush1.msra.mxu0 0.0
    %7090 = vmatprep.subr.mxu0 0.0
    %7091 = vmatpush1.msra.mxu0 0.0
    %7092 = vmatprep.subr.mxu0 0.0
    %7093 = vmatpush1.msra.mxu0 0.0
    %7094 = vmatprep.subr.mxu0 0.0
    %7095 = vmatpush1.msra.mxu0 0.0
    %7096 = vmatprep.mubr.f32.mxu0 0.0
    %v7097 = vand.u32 %v4266, 4294901760
    %v7098 = vsub.f32 %v4266, %v7097
    %7099 = vmatmul.mubr.f32.gmra.mrb[0].mxu0 %v7098
    %v7100 = vpop.f32.mrb[0].mxu0
    %v7101 = vadd.f32 %v7021, %v7100
    %v7102 = vpop.f32.mrb[0].mxu0
    %7103 = vdwg.mxu0
    %7104 = vmatprep.subr.mxu0 0.0
    %v7105 = vand.u32 %v4254, 4294901760
    %7106 = vmatpush1.msra.mxu0 %v7105
    %7107 = vmatprep.subr.mxu0 0.0
    %v7108 = vand.u32 %v4255, 4294901760
    %7109 = vmatpush1.msra.mxu0 %v7108
    %7110 = vmatprep.subr.mxu0 0.0
    %v7111 = vand.u32 %v4256, 4294901760
    %7112 = vmatpush1.msra.mxu0 %v7111
    %7113 = vmatprep.subr.mxu0 0.0
    %v7114 = vand.u32 %v4257, 4294901760
    %7115 = vmatpush1.msra.mxu0 %v7114
    %7116 = vmatprep.subr.mxu0 0.0
    %7117 = vmatpush1.msra.mxu0 0.0
    %7118 = vmatprep.subr.mxu0 0.0
    %7119 = vmatpush1.msra.mxu0 0.0
    %7120 = vmatprep.subr.mxu0 0.0
    %7121 = vmatpush1.msra.mxu0 0.0
    %7122 = vmatprep.subr.mxu0 0.0
    %7123 = vmatpush1.msra.mxu0 0.0
    %7124 = vmatprep.subr.mxu0 0.0
    %7125 = vmatpush1.msra.mxu0 0.0
    %7126 = vmatprep.subr.mxu0 0.0
    %7127 = vmatpush1.msra.mxu0 0.0
    %7128 = vmatprep.subr.mxu0 0.0
    %7129 = vmatpush1.msra.mxu0 0.0
    %7130 = vmatprep.subr.mxu0 0.0
    %7131 = vmatpush1.msra.mxu0 0.0
    %7132 = vmatprep.subr.mxu0 0.0
    %7133 = vmatpush1.msra.mxu0 0.0
    %7134 = vmatprep.subr.mxu0 0.0
    %7135 = vmatpush1.msra.mxu0 0.0
    %7136 = vmatprep.subr.mxu0 0.0
    %7137 = vmatpush1.msra.mxu0 0.0
    %7138 = vmatprep.subr.mxu0 0.0
    %7139 = vmatpush1.msra.mxu0 0.0
    %7140 = vmatprep.subr.mxu0 0.0
    %7141 = vmatpush1.msra.mxu0 0.0
    %7142 = vmatprep.subr.mxu0 0.0
    %7143 = vmatpush1.msra.mxu0 0.0
    %7144 = vmatprep.subr.mxu0 0.0
    %7145 = vmatpush1.msra.mxu0 0.0
    %7146 = vmatprep.subr.mxu0 0.0
    %7147 = vmatpush1.msra.mxu0 0.0
    %7148 = vmatprep.subr.mxu0 0.0
    %7149 = vmatpush1.msra.mxu0 0.0
    %7150 = vmatprep.subr.mxu0 0.0
    %7151 = vmatpush1.msra.mxu0 0.0
    %7152 = vmatprep.subr.mxu0 0.0
    %7153 = vmatpush1.msra.mxu0 0.0
    %7154 = vmatprep.subr.mxu0 0.0
    %7155 = vmatpush1.msra.mxu0 0.0
    %7156 = vmatprep.subr.mxu0 0.0
    %7157 = vmatpush1.msra.mxu0 0.0
    %7158 = vmatprep.subr.mxu0 0.0
    %7159 = vmatpush1.msra.mxu0 0.0
    %7160 = vmatprep.subr.mxu0 0.0
    %7161 = vmatpush1.msra.mxu0 0.0
    %7162 = vmatprep.subr.mxu0 0.0
    %7163 = vmatpush1.msra.mxu0 0.0
    %7164 = vmatprep.subr.mxu0 0.0
    %7165 = vmatpush1.msra.mxu0 0.0
    %7166 = vmatprep.subr.mxu0 0.0
    %7167 = vmatpush1.msra.mxu0 0.0
    %7168 = vmatprep.subr.mxu0 0.0
    %7169 = vmatpush1.msra.mxu0 0.0
    %7170 = vmatprep.subr.mxu0 0.0
    %7171 = vmatpush1.msra.mxu0 0.0
    %7172 = vmatprep.mubr.f32.mxu0 0.0
    %v7173 = vand.u32 %v4266, 4294901760
    %v7174 = vsub.f32 %v4266, %v7173
    %v7175 = vand.u32 %v7174, 4294901760
    %7176 = vmatmul.mubr.f32.gmra.mrb[0].mxu0 %v7175
    %v7177 = vpop.f32.mrb[0].mxu0
    %v7178 = vadd.f32 %v7101, %v7177
    %v7179 = vpop.f32.mrb[0].mxu0
    %7180 = vdwg.mxu0
    %7181 = vmatprep.subr.mxu0 0.0
    %v7182 = vand.u32 %v4254, 4294901760
    %v7183 = vsub.f32 %v4254, %v7182
    %v7184 = vand.u32 %v7183, 4294901760
    %7185 = vmatpush1.msra.mxu0 %v7184
    %7186 = vmatprep.subr.mxu0 0.0
    %v7187 = vand.u32 %v4255, 4294901760
    %v7188 = vsub.f32 %v4255, %v7187
    %v7189 = vand.u32 %v7188, 4294901760
    %7190 = vmatpush1.msra.mxu0 %v7189
    %7191 = vmatprep.subr.mxu0 0.0
    %v7192 = vand.u32 %v4256, 4294901760
    %v7193 = vsub.f32 %v4256, %v7192
    %v7194 = vand.u32 %v7193, 4294901760
    %7195 = vmatpush1.msra.mxu0 %v7194
    %7196 = vmatprep.subr.mxu0 0.0
    %v7197 = vand.u32 %v4257, 4294901760
    %v7198 = vsub.f32 %v4257, %v7197
    %v7199 = vand.u32 %v7198, 4294901760
    %7200 = vmatpush1.msra.mxu0 %v7199
    %7201 = vmatprep.subr.mxu0 0.0
    %7202 = vmatpush1.msra.mxu0 0.0
    %7203 = vmatprep.subr.mxu0 0.0
    %7204 = vmatpush1.msra.mxu0 0.0
    %7205 = vmatprep.subr.mxu0 0.0
    %7206 = vmatpush1.msra.mxu0 0.0
    %7207 = vmatprep.subr.mxu0 0.0
    %7208 = vmatpush1.msra.mxu0 0.0
    %7209 = vmatprep.subr.mxu0 0.0
    %7210 = vmatpush1.msra.mxu0 0.0
    %7211 = vmatprep.subr.mxu0 0.0
    %7212 = vmatpush1.msra.mxu0 0.0
    %7213 = vmatprep.subr.mxu0 0.0
    %7214 = vmatpush1.msra.mxu0 0.0
    %7215 = vmatprep.subr.mxu0 0.0
    %7216 = vmatpush1.msra.mxu0 0.0
    %7217 = vmatprep.subr.mxu0 0.0
    %7218 = vmatpush1.msra.mxu0 0.0
    %7219 = vmatprep.subr.mxu0 0.0
    %7220 = vmatpush1.msra.mxu0 0.0
    %7221 = vmatprep.subr.mxu0 0.0
    %7222 = vmatpush1.msra.mxu0 0.0
    %7223 = vmatprep.subr.mxu0 0.0
    %7224 = vmatpush1.msra.mxu0 0.0
    %7225 = vmatprep.subr.mxu0 0.0
    %7226 = vmatpush1.msra.mxu0 0.0
    %7227 = vmatprep.subr.mxu0 0.0
    %7228 = vmatpush1.msra.mxu0 0.0
    %7229 = vmatprep.subr.mxu0 0.0
    %7230 = vmatpush1.msra.mxu0 0.0
    %7231 = vmatprep.subr.mxu0 0.0
    %7232 = vmatpush1.msra.mxu0 0.0
    %7233 = vmatprep.subr.mxu0 0.0
    %7234 = vmatpush1.msra.mxu0 0.0
    %7235 = vmatprep.subr.mxu0 0.0
    %7236 = vmatpush1.msra.mxu0 0.0
    %7237 = vmatprep.subr.mxu0 0.0
    %7238 = vmatpush1.msra.mxu0 0.0
    %7239 = vmatprep.subr.mxu0 0.0
    %7240 = vmatpush1.msra.mxu0 0.0
    %7241 = vmatprep.subr.mxu0 0.0
    %7242 = vmatpush1.msra.mxu0 0.0
    %7243 = vmatprep.subr.mxu0 0.0
    %7244 = vmatpush1.msra.mxu0 0.0
    %7245 = vmatprep.subr.mxu0 0.0
    %7246 = vmatpush1.msra.mxu0 0.0
    %7247 = vmatprep.subr.mxu0 0.0
    %7248 = vmatpush1.msra.mxu0 0.0
    %7249 = vmatprep.subr.mxu0 0.0
    %7250 = vmatpush1.msra.mxu0 0.0
    %7251 = vmatprep.subr.mxu0 0.0
    %7252 = vmatpush1.msra.mxu0 0.0
    %7253 = vmatprep.subr.mxu0 0.0
    %7254 = vmatpush1.msra.mxu0 0.0
    %7255 = vmatprep.subr.mxu0 0.0
    %7256 = vmatpush1.msra.mxu0 0.0
    %7257 = vmatprep.mubr.f32.mxu0 0.0
    %v7258 = vand.u32 %v4266, 4294901760
    %7259 = vmatmul.mubr.f32.gmra.mrb[0].mxu0 %v7258
    %v7260 = vpop.f32.mrb[0].mxu0
    %v7261 = vadd.f32 %v7178, %v7260
    %v7262 = vpop.f32.mrb[0].mxu0
    %7263 = vdwg.mxu0
    %7264 = vmatprep.subr.mxu0 0.0
    %v7265 = vand.u32 %v4254, 4294901760
    %7266 = vmatpush1.msra.mxu0 %v7265
    %7267 = vmatprep.subr.mxu0 0.0
    %v7268 = vand.u32 %v4255, 4294901760
    %7269 = vmatpush1.msra.mxu0 %v7268
    %7270 = vmatprep.subr.mxu0 0.0
    %v7271 = vand.u32 %v4256, 4294901760
    %7272 = vmatpush1.msra.mxu0 %v7271
    %7273 = vmatprep.subr.mxu0 0.0
    %v7274 = vand.u32 %v4257, 4294901760
    %7275 = vmatpush1.msra.mxu0 %v7274
    %7276 = vmatprep.subr.mxu0 0.0
    %7277 = vmatpush1.msra.mxu0 0.0
    %7278 = vmatprep.subr.mxu0 0.0
    %7279 = vmatpush1.msra.mxu0 0.0
    %7280 = vmatprep.subr.mxu0 0.0
    %7281 = vmatpush1.msra.mxu0 0.0
    %7282 = vmatprep.subr.mxu0 0.0
    %7283 = vmatpush1.msra.mxu0 0.0
    %7284 = vmatprep.subr.mxu0 0.0
    %7285 = vmatpush1.msra.mxu0 0.0
    %7286 = vmatprep.subr.mxu0 0.0
    %7287 = vmatpush1.msra.mxu0 0.0
    %7288 = vmatprep.subr.mxu0 0.0
    %7289 = vmatpush1.msra.mxu0 0.0
    %7290 = vmatprep.subr.mxu0 0.0
    %7291 = vmatpush1.msra.mxu0 0.0
    %7292 = vmatprep.subr.mxu0 0.0
    %7293 = vmatpush1.msra.mxu0 0.0
    %7294 = vmatprep.subr.mxu0 0.0
    %7295 = vmatpush1.msra.mxu0 0.0
    %7296 = vmatprep.subr.mxu0 0.0
    %7297 = vmatpush1.msra.mxu0 0.0
    %7298 = vmatprep.subr.mxu0 0.0
    %7299 = vmatpush1.msra.mxu0 0.0
    %7300 = vmatprep.subr.mxu0 0.0
    %7301 = vmatpush1.msra.mxu0 0.0
    %7302 = vmatprep.subr.mxu0 0.0
    %7303 = vmatpush1.msra.mxu0 0.0
    %7304 = vmatprep.subr.mxu0 0.0
    %7305 = vmatpush1.msra.mxu0 0.0
    %7306 = vmatprep.subr.mxu0 0.0
    %7307 = vmatpush1.msra.mxu0 0.0
    %7308 = vmatprep.subr.mxu0 0.0
    %7309 = vmatpush1.msra.mxu0 0.0
    %7310 = vmatprep.subr.mxu0 0.0
    %7311 = vmatpush1.msra.mxu0 0.0
    %7312 = vmatprep.subr.mxu0 0.0
    %7313 = vmatpush1.msra.mxu0 0.0
    %7314 = vmatprep.subr.mxu0 0.0
    %7315 = vmatpush1.msra.mxu0 0.0
    %7316 = vmatprep.subr.mxu0 0.0
    %7317 = vmatpush1.msra.mxu0 0.0
    %7318 = vmatprep.subr.mxu0 0.0
    %7319 = vmatpush1.msra.mxu0 0.0
    %7320 = vmatprep.subr.mxu0 0.0
    %7321 = vmatpush1.msra.mxu0 0.0
    %7322 = vmatprep.subr.mxu0 0.0
    %7323 = vmatpush1.msra.mxu0 0.0
    %7324 = vmatprep.subr.mxu0 0.0
    %7325 = vmatpush1.msra.mxu0 0.0
    %7326 = vmatprep.subr.mxu0 0.0
    %7327 = vmatpush1.msra.mxu0 0.0
    %7328 = vmatprep.subr.mxu0 0.0
    %7329 = vmatpush1.msra.mxu0 0.0
    %7330 = vmatprep.subr.mxu0 0.0
    %7331 = vmatpush1.msra.mxu0 0.0
    %7332 = vmatprep.mubr.f32.mxu0 0.0
    %v7333 = vand.u32 %v4266, 4294901760
    %7334 = vmatmul.mubr.f32.gmra.mrb[0].mxu0 %v7333
    %v7335 = vpop.f32.mrb[0].mxu0
    %v7336 = vadd.f32 %v7261, %v7335
    %v7337 = vpop.f32.mrb[0].mxu0
    %7338 = vdwg.mxu0
    %v7339 = vmax.f32 %v7336, 0.0
    %v7340 = vld [vmem:[%s7] sm:$0xff]
    %v7341 = vld [vmem:[%s8] sm:$0x1]
    %v7343 = vlaneseq
    %v7344 = vshrl.u32 %v7343, 7
    %v7345 = vsub.s32 0, %v7344
    %v7346 = vrot.slane %v7341, %v7345
    %v7349 = vsel %vm1962, %v7339, 0
    %7351 = vmatprep.subr.mxu0 0.0
    %v7352 = vand.u32 %v7340, 4294901760
    %7353 = vmatpush1.msra.mxu0 %v7352
    %7354 = vmatprep.subr.mxu0 0.0
    %7355 = vmatpush1.msra.mxu0 0.0
    %7356 = vmatprep.subr.mxu0 0.0
    %7357 = vmatpush1.msra.mxu0 0.0
    %7358 = vmatprep.subr.mxu0 0.0
    %7359 = vmatpush1.msra.mxu0 0.0
    %7360 = vmatprep.subr.mxu0 0.0
    %7361 = vmatpush1.msra.mxu0 0.0
    %7362 = vmatprep.subr.mxu0 0.0
    %7363 = vmatpush1.msra.mxu0 0.0
    %7364 = vmatprep.subr.mxu0 0.0
    %7365 = vmatpush1.msra.mxu0 0.0
    %7366 = vmatprep.subr.mxu0 0.0
    %7367 = vmatpush1.msra.mxu0 0.0
    %7368 = vmatprep.subr.mxu0 0.0
    %7369 = vmatpush1.msra.mxu0 0.0
    %7370 = vmatprep.subr.mxu0 0.0
    %7371 = vmatpush1.msra.mxu0 0.0
    %7372 = vmatprep.subr.mxu0 0.0
    %7373 = vmatpush1.msra.mxu0 0.0
    %7374 = vmatprep.subr.mxu0 0.0
    %7375 = vmatpush1.msra.mxu0 0.0
    %7376 = vmatprep.subr.mxu0 0.0
    %7377 = vmatpush1.msra.mxu0 0.0
    %7378 = vmatprep.subr.mxu0 0.0
    %7379 = vmatpush1.msra.mxu0 0.0
    %7380 = vmatprep.subr.mxu0 0.0
    %7381 = vmatpush1.msra.mxu0 0.0
    %7382 = vmatprep.subr.mxu0 0.0
    %7383 = vmatpush1.msra.mxu0 0.0
    %7384 = vmatprep.subr.mxu0 0.0
    %7385 = vmatpush1.msra.mxu0 0.0
    %7386 = vmatprep.subr.mxu0 0.0
    %7387 = vmatpush1.msra.mxu0 0.0
    %7388 = vmatprep.subr.mxu0 0.0
    %7389 = vmatpush1.msra.mxu0 0.0
    %7390 = vmatprep.subr.mxu0 0.0
    %7391 = vmatpush1.msra.mxu0 0.0
    %7392 = vmatprep.subr.mxu0 0.0
    %7393 = vmatpush1.msra.mxu0 0.0
    %7394 = vmatprep.subr.mxu0 0.0
    %7395 = vmatpush1.msra.mxu0 0.0
    %7396 = vmatprep.subr.mxu0 0.0
    %7397 = vmatpush1.msra.mxu0 0.0
    %7398 = vmatprep.subr.mxu0 0.0
    %7399 = vmatpush1.msra.mxu0 0.0
    %7400 = vmatprep.subr.mxu0 0.0
    %7401 = vmatpush1.msra.mxu0 0.0
    %7402 = vmatprep.subr.mxu0 0.0
    %7403 = vmatpush1.msra.mxu0 0.0
    %7404 = vmatprep.subr.mxu0 0.0
    %7405 = vmatpush1.msra.mxu0 0.0
    %7406 = vmatprep.subr.mxu0 0.0
    %7407 = vmatpush1.msra.mxu0 0.0
    %7408 = vmatprep.subr.mxu0 0.0
    %7409 = vmatpush1.msra.mxu0 0.0
    %7410 = vmatprep.subr.mxu0 0.0
    %7411 = vmatpush1.msra.mxu0 0.0
    %7412 = vmatprep.subr.mxu0 0.0
    %7413 = vmatpush1.msra.mxu0 0.0
    %7414 = vmatprep.subr.mxu0 0.0
    %7415 = vmatpush1.msra.mxu0 0.0
    %7416 = vmatprep.mubr.f32.mxu0 0.0
    %v7417 = vand.u32 %v7349, 4294901760
    %v7418 = vsub.f32 %v7349, %v7417
    %v7419 = vand.u32 %v7418, 4294901760
    %v7420 = vsub.f32 %v7418, %v7419
    %v7421 = vand.u32 %v7420, 4294901760
    %7422 = vmatmul.mubr.f32.gmra.mrb[0].mxu0 %v7421
    %v7423 = vpop.f32.mrb[0].mxu0
    %v7424 = vadd.f32 %v7346, %v7423
    %v7425 = vpop.f32.mrb[0].mxu0
    %7426 = vdwg.mxu0
    %7427 = vmatprep.subr.mxu0 0.0
    %v7428 = vand.u32 %v7340, 4294901760
    %v7429 = vsub.f32 %v7340, %v7428
    %v7430 = vand.u32 %v7429, 4294901760
    %v7431 = vsub.f32 %v7429, %v7430
    %v7432 = vand.u32 %v7431, 4294901760
    %7433 = vmatpush1.msra.mxu0 %v7432
    %7434 = vmatprep.subr.mxu0 0.0
    %7435 = vmatpush1.msra.mxu0 0.0
    %7436 = vmatprep.subr.mxu0 0.0
    %7437 = vmatpush1.msra.mxu0 0.0
    %7438 = vmatprep.subr.mxu0 0.0
    %7439 = vmatpush1.msra.mxu0 0.0
    %7440 = vmatprep.subr.mxu0 0.0
    %7441 = vmatpush1.msra.mxu0 0.0
    %7442 = vmatprep.subr.mxu0 0.0
    %7443 = vmatpush1.msra.mxu0 0.0
    %7444 = vmatprep.subr.mxu0 0.0
    %7445 = vmatpush1.msra.mxu0 0.0
    %7446 = vmatprep.subr.mxu0 0.0
    %7447 = vmatpush1.msra.mxu0 0.0
    %7448 = vmatprep.subr.mxu0 0.0
    %7449 = vmatpush1.msra.mxu0 0.0
    %7450 = vmatprep.subr.mxu0 0.0
    %7451 = vmatpush1.msra.mxu0 0.0
    %7452 = vmatprep.subr.mxu0 0.0
    %7453 = vmatpush1.msra.mxu0 0.0
    %7454 = vmatprep.subr.mxu0 0.0
    %7455 = vmatpush1.msra.mxu0 0.0
    %7456 = vmatprep.subr.mxu0 0.0
    %7457 = vmatpush1.msra.mxu0 0.0
    %7458 = vmatprep.subr.mxu0 0.0
    %7459 = vmatpush1.msra.mxu0 0.0
    %7460 = vmatprep.subr.mxu0 0.0
    %7461 = vmatpush1.msra.mxu0 0.0
    %7462 = vmatprep.subr.mxu0 0.0
    %7463 = vmatpush1.msra.mxu0 0.0
    %7464 = vmatprep.subr.mxu0 0.0
    %7465 = vmatpush1.msra.mxu0 0.0
    %7466 = vmatprep.subr.mxu0 0.0
    %7467 = vmatpush1.msra.mxu0 0.0
    %7468 = vmatprep.subr.mxu0 0.0
    %7469 = vmatpush1.msra.mxu0 0.0
    %7470 = vmatprep.subr.mxu0 0.0
    %7471 = vmatpush1.msra.mxu0 0.0
    %7472 = vmatprep.subr.mxu0 0.0
    %7473 = vmatpush1.msra.mxu0 0.0
    %7474 = vmatprep.subr.mxu0 0.0
    %7475 = vmatpush1.msra.mxu0 0.0
    %7476 = vmatprep.subr.mxu0 0.0
    %7477 = vmatpush1.msra.mxu0 0.0
    %7478 = vmatprep.subr.mxu0 0.0
    %7479 = vmatpush1.msra.mxu0 0.0
    %7480 = vmatprep.subr.mxu0 0.0
    %7481 = vmatpush1.msra.mxu0 0.0
    %7482 = vmatprep.subr.mxu0 0.0
    %7483 = vmatpush1.msra.mxu0 0.0
    %7484 = vmatprep.subr.mxu0 0.0
    %7485 = vmatpush1.msra.mxu0 0.0
    %7486 = vmatprep.subr.mxu0 0.0
    %7487 = vmatpush1.msra.mxu0 0.0
    %7488 = vmatprep.subr.mxu0 0.0
    %7489 = vmatpush1.msra.mxu0 0.0
    %7490 = vmatprep.subr.mxu0 0.0
    %7491 = vmatpush1.msra.mxu0 0.0
    %7492 = vmatprep.subr.mxu0 0.0
    %7493 = vmatpush1.msra.mxu0 0.0
    %7494 = vmatprep.subr.mxu0 0.0
    %7495 = vmatpush1.msra.mxu0 0.0
    %7496 = vmatprep.mubr.f32.mxu0 0.0
    %v7497 = vand.u32 %v7349, 4294901760
    %7498 = vmatmul.mubr.f32.gmra.mrb[0].mxu0 %v7497
    %v7499 = vpop.f32.mrb[0].mxu0
    %v7500 = vadd.f32 %v7424, %v7499
    %v7501 = vpop.f32.mrb[0].mxu0
    %7502 = vdwg.mxu0
    %7503 = vmatprep.subr.mxu0 0.0
    %v7504 = vand.u32 %v7340, 4294901760
    %v7505 = vsub.f32 %v7340, %v7504
    %7506 = vmatpush1.msra.mxu0 %v7505
    %7507 = vmatprep.subr.mxu0 0.0
    %7508 = vmatpush1.msra.mxu0 0.0
    %7509 = vmatprep.subr.mxu0 0.0
    %7510 = vmatpush1.msra.mxu0 0.0
    %7511 = vmatprep.subr.mxu0 0.0
    %7512 = vmatpush1.msra.mxu0 0.0
    %7513 = vmatprep.subr.mxu0 0.0
    %7514 = vmatpush1.msra.mxu0 0.0
    %7515 = vmatprep.subr.mxu0 0.0
    %7516 = vmatpush1.msra.mxu0 0.0
    %7517 = vmatprep.subr.mxu0 0.0
    %7518 = vmatpush1.msra.mxu0 0.0
    %7519 = vmatprep.subr.mxu0 0.0
    %7520 = vmatpush1.msra.mxu0 0.0
    %7521 = vmatprep.subr.mxu0 0.0
    %7522 = vmatpush1.msra.mxu0 0.0
    %7523 = vmatprep.subr.mxu0 0.0
    %7524 = vmatpush1.msra.mxu0 0.0
    %7525 = vmatprep.subr.mxu0 0.0
    %7526 = vmatpush1.msra.mxu0 0.0
    %7527 = vmatprep.subr.mxu0 0.0
    %7528 = vmatpush1.msra.mxu0 0.0
    %7529 = vmatprep.subr.mxu0 0.0
    %7530 = vmatpush1.msra.mxu0 0.0
    %7531 = vmatprep.subr.mxu0 0.0
    %7532 = vmatpush1.msra.mxu0 0.0
    %7533 = vmatprep.subr.mxu0 0.0
    %7534 = vmatpush1.msra.mxu0 0.0
    %7535 = vmatprep.subr.mxu0 0.0
    %7536 = vmatpush1.msra.mxu0 0.0
    %7537 = vmatprep.subr.mxu0 0.0
    %7538 = vmatpush1.msra.mxu0 0.0
    %7539 = vmatprep.subr.mxu0 0.0
    %7540 = vmatpush1.msra.mxu0 0.0
    %7541 = vmatprep.subr.mxu0 0.0
    %7542 = vmatpush1.msra.mxu0 0.0
    %7543 = vmatprep.subr.mxu0 0.0
    %7544 = vmatpush1.msra.mxu0 0.0
    %7545 = vmatprep.subr.mxu0 0.0
    %7546 = vmatpush1.msra.mxu0 0.0
    %7547 = vmatprep.subr.mxu0 0.0
    %7548 = vmatpush1.msra.mxu0 0.0
    %7549 = vmatprep.subr.mxu0 0.0
    %7550 = vmatpush1.msra.mxu0 0.0
    %7551 = vmatprep.subr.mxu0 0.0
    %7552 = vmatpush1.msra.mxu0 0.0
    %7553 = vmatprep.subr.mxu0 0.0
    %7554 = vmatpush1.msra.mxu0 0.0
    %7555 = vmatprep.subr.mxu0 0.0
    %7556 = vmatpush1.msra.mxu0 0.0
    %7557 = vmatprep.subr.mxu0 0.0
    %7558 = vmatpush1.msra.mxu0 0.0
    %7559 = vmatprep.subr.mxu0 0.0
    %7560 = vmatpush1.msra.mxu0 0.0
    %7561 = vmatprep.subr.mxu0 0.0
    %7562 = vmatpush1.msra.mxu0 0.0
    %7563 = vmatprep.subr.mxu0 0.0
    %7564 = vmatpush1.msra.mxu0 0.0
    %7565 = vmatprep.subr.mxu0 0.0
    %7566 = vmatpush1.msra.mxu0 0.0
    %7567 = vmatprep.subr.mxu0 0.0
    %7568 = vmatpush1.msra.mxu0 0.0
    %7569 = vmatprep.mubr.f32.mxu0 0.0
    %v7570 = vand.u32 %v7349, 4294901760
    %v7571 = vsub.f32 %v7349, %v7570
    %7572 = vmatmul.mubr.f32.gmra.mrb[0].mxu0 %v7571
    %v7573 = vpop.f32.mrb[0].mxu0
    %v7574 = vadd.f32 %v7500, %v7573
    %v7575 = vpop.f32.mrb[0].mxu0
    %7576 = vdwg.mxu0
    %7577 = vmatprep.subr.mxu0 0.0
    %v7578 = vand.u32 %v7340, 4294901760
    %7579 = vmatpush1.msra.mxu0 %v7578
    %7580 = vmatprep.subr.mxu0 0.0
    %7581 = vmatpush1.msra.mxu0 0.0
    %7582 = vmatprep.subr.mxu0 0.0
    %7583 = vmatpush1.msra.mxu0 0.0
    %7584 = vmatprep.subr.mxu0 0.0
    %7585 = vmatpush1.msra.mxu0 0.0
    %7586 = vmatprep.subr.mxu0 0.0
    %7587 = vmatpush1.msra.mxu0 0.0
    %7588 = vmatprep.subr.mxu0 0.0
    %7589 = vmatpush1.msra.mxu0 0.0
    %7590 = vmatprep.subr.mxu0 0.0
    %7591 = vmatpush1.msra.mxu0 0.0
    %7592 = vmatprep.subr.mxu0 0.0
    %7593 = vmatpush1.msra.mxu0 0.0
    %7594 = vmatprep.subr.mxu0 0.0
    %7595 = vmatpush1.msra.mxu0 0.0
    %7596 = vmatprep.subr.mxu0 0.0
    %7597 = vmatpush1.msra.mxu0 0.0
    %7598 = vmatprep.subr.mxu0 0.0
    %7599 = vmatpush1.msra.mxu0 0.0
    %7600 = vmatprep.subr.mxu0 0.0
    %7601 = vmatpush1.msra.mxu0 0.0
    %7602 = vmatprep.subr.mxu0 0.0
    %7603 = vmatpush1.msra.mxu0 0.0
    %7604 = vmatprep.subr.mxu0 0.0
    %7605 = vmatpush1.msra.mxu0 0.0
    %7606 = vmatprep.subr.mxu0 0.0
    %7607 = vmatpush1.msra.mxu0 0.0
    %7608 = vmatprep.subr.mxu0 0.0
    %7609 = vmatpush1.msra.mxu0 0.0
    %7610 = vmatprep.subr.mxu0 0.0
    %7611 = vmatpush1.msra.mxu0 0.0
    %7612 = vmatprep.subr.mxu0 0.0
    %7613 = vmatpush1.msra.mxu0 0.0
    %7614 = vmatprep.subr.mxu0 0.0
    %7615 = vmatpush1.msra.mxu0 0.0
    %7616 = vmatprep.subr.mxu0 0.0
    %7617 = vmatpush1.msra.mxu0 0.0
    %7618 = vmatprep.subr.mxu0 0.0
    %7619 = vmatpush1.msra.mxu0 0.0
    %7620 = vmatprep.subr.mxu0 0.0
    %7621 = vmatpush1.msra.mxu0 0.0
    %7622 = vmatprep.subr.mxu0 0.0
    %7623 = vmatpush1.msra.mxu0 0.0
    %7624 = vmatprep.subr.mxu0 0.0
    %7625 = vmatpush1.msra.mxu0 0.0
    %7626 = vmatprep.subr.mxu0 0.0
    %7627 = vmatpush1.msra.mxu0 0.0
    %7628 = vmatprep.subr.mxu0 0.0
    %7629 = vmatpush1.msra.mxu0 0.0
    %7630 = vmatprep.subr.mxu0 0.0
    %7631 = vmatpush1.msra.mxu0 0.0
    %7632 = vmatprep.subr.mxu0 0.0
    %7633 = vmatpush1.msra.mxu0 0.0
    %7634 = vmatprep.subr.mxu0 0.0
    %7635 = vmatpush1.msra.mxu0 0.0
    %7636 = vmatprep.subr.mxu0 0.0
    %7637 = vmatpush1.msra.mxu0 0.0
    %7638 = vmatprep.subr.mxu0 0.0
    %7639 = vmatpush1.msra.mxu0 0.0
    %7640 = vmatprep.subr.mxu0 0.0
    %7641 = vmatpush1.msra.mxu0 0.0
    %7642 = vmatprep.mubr.f32.mxu0 0.0
    %v7643 = vand.u32 %v7349, 4294901760
    %v7644 = vsub.f32 %v7349, %v7643
    %v7645 = vand.u32 %v7644, 4294901760
    %7646 = vmatmul.mubr.f32.gmra.mrb[0].mxu0 %v7645
    %v7647 = vpop.f32.mrb[0].mxu0
    %v7648 = vadd.f32 %v7574, %v7647
    %v7649 = vpop.f32.mrb[0].mxu0
    %7650 = vdwg.mxu0
    %7651 = vmatprep.subr.mxu0 0.0
    %v7652 = vand.u32 %v7340, 4294901760
    %v7653 = vsub.f32 %v7340, %v7652
    %v7654 = vand.u32 %v7653, 4294901760
    %7655 = vmatpush1.msra.mxu0 %v7654
    %7656 = vmatprep.subr.mxu0 0.0
    %7657 = vmatpush1.msra.mxu0 0.0
    %7658 = vmatprep.subr.mxu0 0.0
    %7659 = vmatpush1.msra.mxu0 0.0
    %7660 = vmatprep.subr.mxu0 0.0
    %7661 = vmatpush1.msra.mxu0 0.0
    %7662 = vmatprep.subr.mxu0 0.0
    %7663 = vmatpush1.msra.mxu0 0.0
    %7664 = vmatprep.subr.mxu0 0.0
    %7665 = vmatpush1.msra.mxu0 0.0
    %7666 = vmatprep.subr.mxu0 0.0
    %7667 = vmatpush1.msra.mxu0 0.0
    %7668 = vmatprep.subr.mxu0 0.0
    %7669 = vmatpush1.msra.mxu0 0.0
    %7670 = vmatprep.subr.mxu0 0.0
    %7671 = vmatpush1.msra.mxu0 0.0
    %7672 = vmatprep.subr.mxu0 0.0
    %7673 = vmatpush1.msra.mxu0 0.0
    %7674 = vmatprep.subr.mxu0 0.0
    %7675 = vmatpush1.msra.mxu0 0.0
    %7676 = vmatprep.subr.mxu0 0.0
    %7677 = vmatpush1.msra.mxu0 0.0
    %7678 = vmatprep.subr.mxu0 0.0
    %7679 = vmatpush1.msra.mxu0 0.0
    %7680 = vmatprep.subr.mxu0 0.0
    %7681 = vmatpush1.msra.mxu0 0.0
    %7682 = vmatprep.subr.mxu0 0.0
    %7683 = vmatpush1.msra.mxu0 0.0
    %7684 = vmatprep.subr.mxu0 0.0
    %7685 = vmatpush1.msra.mxu0 0.0
    %7686 = vmatprep.subr.mxu0 0.0
    %7687 = vmatpush1.msra.mxu0 0.0
    %7688 = vmatprep.subr.mxu0 0.0
    %7689 = vmatpush1.msra.mxu0 0.0
    %7690 = vmatprep.subr.mxu0 0.0
    %7691 = vmatpush1.msra.mxu0 0.0
    %7692 = vmatprep.subr.mxu0 0.0
    %7693 = vmatpush1.msra.mxu0 0.0
    %7694 = vmatprep.subr.mxu0 0.0
    %7695 = vmatpush1.msra.mxu0 0.0
    %7696 = vmatprep.subr.mxu0 0.0
    %7697 = vmatpush1.msra.mxu0 0.0
    %7698 = vmatprep.subr.mxu0 0.0
    %7699 = vmatpush1.msra.mxu0 0.0
    %7700 = vmatprep.subr.mxu0 0.0
    %7701 = vmatpush1.msra.mxu0 0.0
    %7702 = vmatprep.subr.mxu0 0.0
    %7703 = vmatpush1.msra.mxu0 0.0
    %7704 = vmatprep.subr.mxu0 0.0
    %7705 = vmatpush1.msra.mxu0 0.0
    %7706 = vmatprep.subr.mxu0 0.0
    %7707 = vmatpush1.msra.mxu0 0.0
    %7708 = vmatprep.subr.mxu0 0.0
    %7709 = vmatpush1.msra.mxu0 0.0
    %7710 = vmatprep.subr.mxu0 0.0
    %7711 = vmatpush1.msra.mxu0 0.0
    %7712 = vmatprep.subr.mxu0 0.0
    %7713 = vmatpush1.msra.mxu0 0.0
    %7714 = vmatprep.subr.mxu0 0.0
    %7715 = vmatpush1.msra.mxu0 0.0
    %7716 = vmatprep.subr.mxu0 0.0
    %7717 = vmatpush1.msra.mxu0 0.0
    %7718 = vmatprep.mubr.f32.mxu0 0.0
    %v7719 = vand.u32 %v7349, 4294901760
    %7720 = vmatmul.mubr.f32.gmra.mrb[0].mxu0 %v7719
    %v7721 = vpop.f32.mrb[0].mxu0
    %v7722 = vadd.f32 %v7648, %v7721
    %v7723 = vpop.f32.mrb[0].mxu0
    %7724 = vdwg.mxu0
    %7725 = vmatprep.subr.mxu0 0.0
    %v7726 = vand.u32 %v7340, 4294901760
    %7727 = vmatpush1.msra.mxu0 %v7726
    %7728 = vmatprep.subr.mxu0 0.0
    %7729 = vmatpush1.msra.mxu0 0.0
    %7730 = vmatprep.subr.mxu0 0.0
    %7731 = vmatpush1.msra.mxu0 0.0
    %7732 = vmatprep.subr.mxu0 0.0
    %7733 = vmatpush1.msra.mxu0 0.0
    %7734 = vmatprep.subr.mxu0 0.0
    %7735 = vmatpush1.msra.mxu0 0.0
    %7736 = vmatprep.subr.mxu0 0.0
    %7737 = vmatpush1.msra.mxu0 0.0
    %7738 = vmatprep.subr.mxu0 0.0
    %7739 = vmatpush1.msra.mxu0 0.0
    %7740 = vmatprep.subr.mxu0 0.0
    %7741 = vmatpush1.msra.mxu0 0.0
    %7742 = vmatprep.subr.mxu0 0.0
    %7743 = vmatpush1.msra.mxu0 0.0
    %7744 = vmatprep.subr.mxu0 0.0
    %7745 = vmatpush1.msra.mxu0 0.0
    %7746 = vmatprep.subr.mxu0 0.0
    %7747 = vmatpush1.msra.mxu0 0.0
    %7748 = vmatprep.subr.mxu0 0.0
    %7749 = vmatpush1.msra.mxu0 0.0
    %7750 = vmatprep.subr.mxu0 0.0
    %7751 = vmatpush1.msra.mxu0 0.0
    %7752 = vmatprep.subr.mxu0 0.0
    %7753 = vmatpush1.msra.mxu0 0.0
    %7754 = vmatprep.subr.mxu0 0.0
    %7755 = vmatpush1.msra.mxu0 0.0
    %7756 = vmatprep.subr.mxu0 0.0
    %7757 = vmatpush1.msra.mxu0 0.0
    %7758 = vmatprep.subr.mxu0 0.0
    %7759 = vmatpush1.msra.mxu0 0.0
    %7760 = vmatprep.subr.mxu0 0.0
    %7761 = vmatpush1.msra.mxu0 0.0
    %7762 = vmatprep.subr.mxu0 0.0
    %7763 = vmatpush1.msra.mxu0 0.0
    %7764 = vmatprep.subr.mxu0 0.0
    %7765 = vmatpush1.msra.mxu0 0.0
    %7766 = vmatprep.subr.mxu0 0.0
    %7767 = vmatpush1.msra.mxu0 0.0
    %7768 = vmatprep.subr.mxu0 0.0
    %7769 = vmatpush1.msra.mxu0 0.0
    %7770 = vmatprep.subr.mxu0 0.0
    %7771 = vmatpush1.msra.mxu0 0.0
    %7772 = vmatprep.subr.mxu0 0.0
    %7773 = vmatpush1.msra.mxu0 0.0
    %7774 = vmatprep.subr.mxu0 0.0
    %7775 = vmatpush1.msra.mxu0 0.0
    %7776 = vmatprep.subr.mxu0 0.0
    %7777 = vmatpush1.msra.mxu0 0.0
    %7778 = vmatprep.subr.mxu0 0.0
    %7779 = vmatpush1.msra.mxu0 0.0
    %7780 = vmatprep.subr.mxu0 0.0
    %7781 = vmatpush1.msra.mxu0 0.0
    %7782 = vmatprep.subr.mxu0 0.0
    %7783 = vmatpush1.msra.mxu0 0.0
    %7784 = vmatprep.subr.mxu0 0.0
    %7785 = vmatpush1.msra.mxu0 0.0
    %7786 = vmatprep.subr.mxu0 0.0
    %7787 = vmatpush1.msra.mxu0 0.0
    %7788 = vmatprep.subr.mxu0 0.0
    %7789 = vmatpush1.msra.mxu0 0.0
    %7790 = vmatprep.mubr.f32.mxu0 0.0
    %v7791 = vand.u32 %v7349, 4294901760
    %7792 = vmatmul.mubr.f32.gmra.mrb[0].mxu0 %v7791
    %v7793 = vpop.f32.mrb[0].mxu0
    %v7794 = vadd.f32 %v7722, %v7793
    %v7795 = vpop.f32.mrb[0].mxu0
    %7796 = vdwg.mxu0
    %7797 = vst [vmem:[#allocation2] sm:$0xff] %v7794
    // Predicated region
    $region38: #{tpu_custom_call.1} parent=1 // pred_check
      _
    $region39: #{tpu_custom_call.1} parent=1 // pred_check_branch
      %7799 = sbr.rel (0) target = $region41
    $region40: #{tpu_custom_call.1} parent=1 // pred_region
      %s7801 = ssub.s32 128, 128
      %7802 = vsyncadd [#allocation3], %s7801
      %s7804 = sshll.u32 [#allocation2], 4
      %s7805 = int_to_ptr.vmem [resolvable:$true] %s7804
      %7807 = dma.vmem_to_hbm [thread:$0]  %s7805, 128, %s9, [#allocation3]
    $region41: #{tpu_custom_call.1} parent=1 // pred_fallthru
      _
    // Predicated region
    $region42: #{tpu_custom_call.1} parent=1 // pred_check
      _
    $region43: #{tpu_custom_call.1} parent=1 // pred_check_branch
      %7809 = sbr.rel (0) target = $region45
    $region44: #{tpu_custom_call.1} parent=1 // pred_region
      %7810 = dma.done [#allocation3], 128
    $region45: #{tpu_custom_call.1} parent=1 // pred_fallthru
      _
    %7811 = vsyncpa [#allocation3], 1

</llo_original>
